<compile_context>
chip_gen: v5e
topology: v5e:2x2
jax: 0.10.0
libtpu: 0.0.40
codegen_flags: <defaults>
</compile_context>

<pallas_src>
import functools

import jax
import jax.numpy as jnp
from jax.experimental import pallas as pl
from jax.experimental.pallas import tpu as pltpu


# ---------------------------------------------------------------------------
# helpers
# ---------------------------------------------------------------------------
def _round_up(x, m):
    return (x + m - 1) // m * m


def _pick_tile(extent, cap, quantum):
    """Largest divisor of `extent` that is <= cap and a multiple of `quantum`."""
    t = min(extent, cap)
    t -= t % quantum
    t = max(t, quantum)
    while extent % t:
        t -= quantum
    return t


# ---------------------------------------------------------------------------
# Pallas kernels
# ---------------------------------------------------------------------------
def _conv_shift_gemm_kernel(x_ref, w_ref, b_ref, o_ref, acc_ref, *,
                            num_kd, row_shift):
    """out[r, :] = relu(sum_kd x[r + kd*row_shift, :] @ w[kd] + bias), bf16 store.

    x_ref  : (rows_in, Kp)     bf16 — this batch's lane-concat activation (resident)
    w_ref  : (num_kd, Kp, Np)  bf16 — one weight slab per depth tap (resident)
    b_ref  : (1, Np)           f32
    o_ref  : (tm, Np)          bf16 — one lane-dense output row tile
    acc_ref: (tm, Np)          f32  — VMEM accumulator (keeps vregs free of a
                                      256 KB live value across the kd dots)
    """
    tm = o_ref.shape[0]
    base = pl.program_id(1) * tm
    for kd in range(num_kd):                       # fused im2col taps along depth
        start = pl.multiple_of(base + kd * row_shift, 8)
        a = x_ref[pl.ds(start, tm), :]             # sublane-aligned shifted view
        contrib = jnp.dot(a, w_ref[kd], preferred_element_type=jnp.float32)
        if kd == 0:
            acc_ref[...] = contrib
        else:
            acc_ref[...] += contrib
    # f32 epilogue (v5e friendly), cast to bf16 on the lane-dense store
    o_ref[...] = jnp.maximum(acc_ref[...] + b_ref[...], 0.0).astype(o_ref.dtype)


def _fused_mlp_kernel(x_ref, w1_ref, b1_ref, w2_ref, b2_ref, w3_ref, b3_ref,
                      o_ref, h1_ref):
    """fc3(relu(fc2(relu(fc1(x))))) in one grid, streaming fc2/fc3 weight tiles.

    Grid axis = fc2 output-column tiles (== fc3 K tiles). fc1 runs once at step 0
    into a VMEM scratch; fc3 is accumulated into the resident output block.
    """
    j = pl.program_id(0)

    @pl.when(j == 0)
    def _():
        h1 = jnp.dot(x_ref[...], w1_ref[...], preferred_element_type=jnp.float32)
        h1 = jnp.maximum(h1 + b1_ref[...], 0.0)
        h1_ref[...] = h1.astype(jnp.bfloat16)
        o_ref[...] = jnp.zeros_like(o_ref)

    h2 = jnp.dot(h1_ref[...], w2_ref[...], preferred_element_type=jnp.float32)
    h2 = jnp.maximum(h2 + b2_ref[...], 0.0)
    o_ref[...] += jnp.dot(h2.astype(jnp.bfloat16), w3_ref[...],
                          preferred_element_type=jnp.float32)

    @pl.when(j == pl.num_programs(0) - 1)
    def _():
        # TODO(synk): Dropout(p=0.25) is identity in inference mode; no RNG drawn.
        o_ref[...] += b3_ref[...]


# ---------------------------------------------------------------------------
# Pallas wrappers
# ---------------------------------------------------------------------------
def conv_shift_gemm(x_rows, wcol, bias, *, num_kd, row_shift, rows_out):
    """x_rows: (B, rows_in, Kp) bf16 -> (B, rows_out, Np) bf16."""
    B, rows_in, kp = x_rows.shape
    _, _, npad = wcol.shape
    tm = _pick_tile(rows_out, 512, 8)
    kernel = functools.partial(_conv_shift_gemm_kernel,
                               num_kd=num_kd, row_shift=row_shift)
    return pl.pallas_call(
        kernel,
        out_shape=jax.ShapeDtypeStruct((B, rows_out, npad), jnp.bfloat16),
        grid=(B, rows_out // tm),
        in_specs=[
            pl.BlockSpec((None, rows_in, kp), lambda b, i: (b, 0, 0)),   # per-batch resident
            pl.BlockSpec((num_kd, kp, npad), lambda b, i: (0, 0, 0)),    # resident
            pl.BlockSpec((1, npad), lambda b, i: (0, 0)),
        ],
        out_specs=pl.BlockSpec((None, tm, npad), lambda b, i: (b, i, 0)),
        scratch_shapes=[pltpu.VMEM((tm, npad), jnp.float32)],
        compiler_params=pltpu.CompilerParams(
            dimension_semantics=("parallel", "parallel")),
    )(x_rows, wcol, bias)


def fused_mlp(x, w1, b1, w2, b2, w3, b3, *, tn_cap=512):
    """relu/relu/linear three-layer MLP fused into a single pallas_call.

    x: (B, K1) bf16; w* pre-transposed (in, out) bf16 with lane-dense out dims;
    b* are (1, out) f32. Returns (B, N3) f32.
    """
    B, k1 = x.shape
    n1 = w1.shape[1]
    n2 = w2.shape[1]
    n3 = w3.shape[1]
    tn = _pick_tile(n2, tn_cap, 128)
    return pl.pallas_call(
        _fused_mlp_kernel,
        out_shape=jax.ShapeDtypeStruct((B, n3), jnp.float32),
        grid=(n2 // tn,),                    # reduction axis for the fc3 accumulate
        in_specs=[
            pl.BlockSpec((B, k1), lambda j: (0, 0)),      # x      (resident)
            pl.BlockSpec((k1, n1), lambda j: (0, 0)),     # fc1 W  (resident)
            pl.BlockSpec((1, n1), lambda j: (0, 0)),      # fc1 b
            pl.BlockSpec((n1, tn), lambda j: (0, j)),     # fc2 W  (streamed)
            pl.BlockSpec((1, tn), lambda j: (0, j)),      # fc2 b
            pl.BlockSpec((tn, n3), lambda j: (j, 0)),     # fc3 W  (streamed)
            pl.BlockSpec((1, n3), lambda j: (0, 0)),      # fc3 b
        ],
        out_specs=pl.BlockSpec((B, n3), lambda j: (0, 0)),   # resident accumulator
        scratch_shapes=[pltpu.VMEM((B, n1), jnp.bfloat16)],  # fc1 activations
        compiler_params=pltpu.CompilerParams(
            dimension_semantics=("arbitrary",)),
    )(x, w1, b1, w2, b2, w3, b3)


# ---------------------------------------------------------------------------
# Conv3d (channels last) via lane-concat + in-kernel depth-shift accumulation
# ---------------------------------------------------------------------------
def conv3d_relu(x, wcol, bias, *, k, p, cout):
    """relu(Conv3d(x)); x: (B, D, H, W, Cin) bf16 -> (B, Do, Ho, Wo, cout) bf16."""
    B, D, H, W, cin = x.shape
    Do, Ho, Wo = D + 2 * p - k + 1, H + 2 * p - k + 1, W + 2 * p - k + 1
    Wop = _round_up(Wo, 8)                 # sublane-friendly row stride
    Hg = Ho
    Dg = D + 2 * p                         # = Do + k - 1 input depth rows
    # single spatial zero-pad; extra right-W pad keeps every kw slice in range
    xp = jnp.pad(x, ((0, 0), (p, p), (p, p),
                     (p, Wop + k - 1 - W - p), (0, 0)))
    # gather the (kh, kw) taps into the lane dim: columns ordered (kh, kw, cin)
    cols = [xp[:, :, kh:kh + Hg, kw:kw + Wop, :]
            for kh in range(k) for kw in range(k)]
    xc = jnp.concatenate(cols, axis=-1)              # (B, Dg, Hg, Wop, k*k*cin)
    kc = k * k * cin
    kp_ = wcol.shape[1]                              # K zero-padded to mult of 128
    rows_in = Dg * Hg * Wop
    rows_out = Do * Hg * Wop                         # only real output rows
    xf = jnp.pad(xc.reshape(B, rows_in, kc), ((0, 0), (0, 0), (0, kp_ - kc)))
    out = conv_shift_gemm(xf, wcol, bias,
                          num_kd=k, row_shift=Hg * Wop, rows_out=rows_out)
    # drop padded W columns and padded output channels (no scrap depth rows)
    return out.reshape(B, Do, Hg, Wop, -1)[:, :, :, :Wo, :cout]


def max_pool3d_2(x):
    """F.max_pool3d(x, 2) on channels-last x (lane-dense pairwise maxima, bf16)."""
    B, D, H, W, C = x.shape
    x = x[:, : (D // 2) * 2, : (H // 2) * 2, : (W // 2) * 2, :]
    x = jnp.maximum(x[:, 0::2], x[:, 1::2])
    x = jnp.maximum(x[:, :, 0::2], x[:, :, 1::2])
    x = jnp.maximum(x[:, :, :, 0::2], x[:, :, :, 1::2])
    return x


# ---------------------------------------------------------------------------
# Parameter creation / preparation (all layout work done once, outside jit)
# ---------------------------------------------------------------------------
def fold_bn_into_conv(w, b, gamma, beta, mean, var, eps=1e-5):
    """Eval-mode BatchNorm applied to the conv *input*, folded into the conv.

    Valid here because batchnorm1 sits immediately before conv2 in the module's
    forward (pool -> batchnorm1 -> conv2), with no ReLU/pool in between.
    """
    scale = gamma / jnp.sqrt(var + eps)            # (Cin,)
    shift = beta - mean * scale                    # (Cin,)
    w_f = w * scale[None, :, None, None, None]
    b_f = b + jnp.einsum("oidhw,i->o", w, shift)
    return w_f, b_f


def _prep_conv(w, b):
    """torch (Cout,Cin,kd,kh,kw) -> (kd, Kpad, Npad) bf16 + (1, Npad) f32 bias."""
    cout, cin, k = w.shape[0], w.shape[1], w.shape[2]
    kc = k * k * cin
    kpad = _round_up(kc, 128)
    npad = _round_up(cout, 128)
    wt = jnp.transpose(w, (2, 3, 4, 1, 0)).reshape(k, kc, cout)  # (kd,(kh,kw,ci),co)
    wt = jnp.pad(wt, ((0, 0), (0, kpad - kc), (0, npad - cout))).astype(jnp.bfloat16)
    bp = jnp.pad(b, (0, npad - cout)).reshape(1, npad).astype(jnp.float32)
    return wt, bp


def _prep_fc(w, b):
    """torch (out,in) -> pre-transposed (in, Npad) bf16 + (1, Npad) f32 bias."""
    nout, _ = w.shape
    npad = _round_up(nout, 128)
    wt = jnp.pad(w.T, ((0, 0), (0, npad - nout))).astype(jnp.bfloat16)
    bp = jnp.pad(b, (0, npad - nout)).reshape(1, npad).astype(jnp.float32)
    return wt, bp


def make_params(key, output_size):
    ks = jax.random.split(key, 12)

    def u(k, shape, fan_in):
        bound = 1.0 / float(fan_in) ** 0.5
        return jax.random.uniform(k, shape, jnp.float32, -bound, bound)

    return {
        "w1": u(ks[0], (32, 3, 5, 5, 5), 3 * 125), "b1": u(ks[1], (32,), 3 * 125),
        "w2": u(ks[2], (64, 32, 3, 3, 3), 32 * 27), "b2": u(ks[3], (64,), 32 * 27),
        "w3": u(ks[4], (128, 64, 3, 3, 3), 64 * 27), "b3": u(ks[5], (128,), 64 * 27),
        "fc1_w": u(ks[6], (1024, 256), 256), "fc1_b": u(ks[7], (1024,), 256),
        "fc2_w": u(ks[8], (2048, 1024), 1024), "fc2_b": u(ks[9], (2048,), 1024),
        "fc3_w": u(ks[10], (output_size, 2048), 2048),
        "fc3_b": u(ks[11], (output_size,), 2048),
    }


def prepare_params(raw):
    # BatchNorm3d(32), eval mode, default buffers/affine params -> fold into conv2.
    gamma, beta = jnp.ones((32,), jnp.float32), jnp.zeros((32,), jnp.float32)
    mean, var = jnp.zeros((32,), jnp.float32), jnp.ones((32,), jnp.float32)
    w2, b2 = fold_bn_into_conv(raw["w2"], raw["b2"], gamma, beta, mean, var)
    p = {}
    p["c1_w"], p["c1_b"] = _prep_conv(raw["w1"], raw["b1"])
    p["c2_w"], p["c2_b"] = _prep_conv(w2, b2)
    p["c3_w"], p["c3_b"] = _prep_conv(raw["w3"], raw["b3"])
    p["fc1_w"], p["fc1_b"] = _prep_fc(raw["fc1_w"], raw["fc1_b"])
    p["fc2_w"], p["fc2_b"] = _prep_fc(raw["fc2_w"], raw["fc2_b"])
    p["fc3_w"], p["fc3_b"] = _prep_fc(raw["fc3_w"], raw["fc3_b"])
    return p


# ---------------------------------------------------------------------------
# Forward pass (matches the PyTorch module in inference mode)
# ---------------------------------------------------------------------------
def convolution3d_forward(x, params, *, output_size):
    # x: (B, 3, D, H, W) NCDHW (torch) -> channels-last + bf16 exactly once
    x = jnp.transpose(x, (0, 2, 3, 4, 1)).astype(jnp.bfloat16)
    x = conv3d_relu(x, params["c1_w"], params["c1_b"], k=5, p=1, cout=32)
    x = max_pool3d_2(x)
    # batchnorm1 (eval) is folded into conv2's weights/bias
    x = conv3d_relu(x, params["c2_w"], params["c2_b"], k=3, p=1, cout=64)
    x = max_pool3d_2(x)
    x = conv3d_relu(x, params["c3_w"], params["c3_b"], k=3, p=1, cout=128)
    x = max_pool3d_2(x)
    B = x.shape[0]
    # torch x.view(B, -1) flattens (C, D, H, W)-major; restore that order
    x = jnp.transpose(x, (0, 4, 1, 2, 3)).reshape(B, -1)          # (B, 256) bf16
    # fc1 -> relu -> fc2 -> relu -> dropout(identity) -> fc3, one pallas_call
    x = fused_mlp(x, params["fc1_w"], params["fc1_b"],
                  params["fc2_w"], params["fc2_b"],
                  params["fc3_w"], params["fc3_b"])
    return x[:, :output_size]


# ---------------------------------------------------------------------------
# Pure-JAX f32 reference (for correctness validation)
# ---------------------------------------------------------------------------
def reference_forward(x, raw):
    def conv3d(x, w, b, p):
        out = jax.lax.conv_general_dilated(
            x, w, window_strides=(1, 1, 1), padding=[(p, p)] * 3,
            dimension_numbers=("NCDHW", "OIDHW", "NCDHW"))
        return out + b[None, :, None, None, None]

    def pool(x):
        return jax.lax.reduce_window(x, -jnp.inf, jax.lax.max,
                                     (1, 1, 2, 2, 2), (1, 1, 2, 2, 2), "VALID")

    x = jax.nn.relu(conv3d(x, raw["w1"], raw["b1"], 1))
    x = pool(x)
    x = x / jnp.sqrt(1.0 + 1e-5)          # BatchNorm3d(32), eval, default buffers
    x = jax.nn.relu(conv3d(x, raw["w2"], raw["b2"], 1))
    x = pool(x)
    x = jax.nn.relu(conv3d(x, raw["w3"], raw["b3"], 1))
    x = pool(x)
    x = x.reshape(x.shape[0], -1)
    x = jax.nn.relu(x @ raw["fc1_w"].T + raw["fc1_b"])
    x = jax.nn.relu(x @ raw["fc2_w"].T + raw["fc2_b"])
    return x @ raw["fc3_w"].T + raw["fc3_b"]


if __name__ == "__main__":
    key = jax.random.PRNGKey(0)
    B, output_size = 2, 16
    # Spatial (10, 10, 18): conv1(k5,p1) -> (8,8,16); three pool(2)+conv(k3,p1)
    # stages end at (1,1,2), so flatten = 128 * 2 = 256 = fc1 input size.
    x = jax.random.normal(jax.random.fold_in(key, 100),
                          (B, 3, 10, 10, 18), jnp.float32)
    raw = make_params(key, output_size)
    params = prepare_params(raw)

    fwd = jax.jit(functools.partial(convolution3d_forward,
                                    output_size=output_size))
    out = jax.block_until_ready(fwd(x, params))
    assert out.shape == (B, output_size), out.shape
    assert bool(jnp.all(jnp.isfinite(out)))

    # validate against the f32 reference (bf16 activations/weights => loose tol)
    ref = jax.block_until_ready(jax.jit(reference_forward)(x, raw))
    max_err = float(jnp.max(jnp.abs(out - ref)))
    scale = float(jnp.max(jnp.abs(ref)))
    assert max_err <= 5e-3 + 0.05 * scale, (max_err, scale)

    print("KERNEL_OK")
</pallas_src>

<mosaic_0001>
module attributes {stable_mosaic.version = 11 : i64} {
  func.func @_conv_shift_gemm_kernel(%arg0: i32, %arg1: i32, %arg2: memref<1x1536x128xbf16, #tpu.memory_space<vmem>>, %arg3: memref<5x128x128xbf16, #tpu.memory_space<vmem>>, %arg4: memref<1x128xf32, #tpu.memory_space<vmem>>, %arg5: memref<1x512x128xbf16, #tpu.memory_space<vmem>>, %arg6: memref<512x128xf32, #tpu.memory_space<vmem>>) attributes {dimension_semantics = [#tpu.dimension_semantics<parallel>, #tpu.dimension_semantics<parallel>], iteration_bounds = array<i64: 2, 2>, scalar_prefetch = 0 : i64, scratch_operands = 1 : i64, tpu.core_type = #tpu.core_type<tc>, window_params = [{transform_indices = @transform_0, window_bounds = array<i64: 1, 1536, 128>}, {pipeline_mode = #tpu.pipeline_mode<synchronous>, transform_indices = @transform_1, window_bounds = array<i64: 5, 128, 128>}, {pipeline_mode = #tpu.pipeline_mode<synchronous>, transform_indices = @transform_2, window_bounds = array<i64: 1, 128>}, {transform_indices = @transform_3, window_bounds = array<i64: 1, 512, 128>}]} {
    %c512_i32 = arith.constant 512 : i32
    %0 = arith.muli %arg1, %c512_i32 : i32
    %c0_i32 = arith.constant 0 : i32
    %1 = arith.addi %0, %c0_i32 : i32
    %2 = tpu.assume_multiple %1, 8 : i32
    %c0 = arith.constant 0 : index
    %3 = arith.index_cast %2 : i32 to index
    %c0_0 = arith.constant 0 : index
    %4 = vector.load %arg2[%c0, %3, %c0_0] : memref<1x1536x128xbf16, #tpu.memory_space<vmem>>, vector<1x512x128xbf16>
    %5 = vector.shape_cast %4 : vector<1x512x128xbf16> to vector<512x128xbf16>
    %c0_1 = arith.constant 0 : index
    %c0_2 = arith.constant 0 : index
    %c0_3 = arith.constant 0 : index
    %6 = vector.load %arg3[%c0_1, %c0_2, %c0_3] : memref<5x128x128xbf16, #tpu.memory_space<vmem>>, vector<1x128x128xbf16>
    %7 = vector.shape_cast %6 : vector<1x128x128xbf16> to vector<128x128xbf16>
    %cst = arith.constant dense<0.000000e+00> : vector<512x128xf32>
    %8 = tpu.matmul %5, %7, %cst {dimension_numbers = #tpu.dot_dimension_numbers<[1], [0], [0], [1], [0, 0, 1, 1], [], []>} : vector<512x128xbf16>, vector<128x128xbf16>, vector<512x128xf32> -> vector<512x128xf32>
    %c0_4 = arith.constant 0 : index
    %c0_5 = arith.constant 0 : index
    %9 = vector.load %arg6[%c0_4, %c0_5] : memref<512x128xf32, #tpu.memory_space<vmem>>, vector<512x128xf32>
    tpu.vector_store %arg6[%c0_4, %c0_5], %8 {strides = array<i32>} : memref<512x128xf32, #tpu.memory_space<vmem>>, vector<512x128xf32>,
    %c128_i32 = arith.constant 128 : i32
    %10 = arith.addi %0, %c128_i32 : i32
    %11 = tpu.assume_multiple %10, 8 : i32
    %c0_6 = arith.constant 0 : index
    %12 = arith.index_cast %11 : i32 to index
    %c0_7 = arith.constant 0 : index
    %13 = vector.load %arg2[%c0_6, %12, %c0_7] : memref<1x1536x128xbf16, #tpu.memory_space<vmem>>, vector<1x512x128xbf16>
    %14 = vector.shape_cast %13 : vector<1x512x128xbf16> to vector<512x128xbf16>
    %c1 = arith.constant 1 : index
    %c0_8 = arith.constant 0 : index
    %c0_9 = arith.constant 0 : index
    %15 = vector.load %arg3[%c1, %c0_8, %c0_9] : memref<5x128x128xbf16, #tpu.memory_space<vmem>>, vector<1x128x128xbf16>
    %16 = vector.shape_cast %15 : vector<1x128x128xbf16> to vector<128x128xbf16>
    %cst_10 = arith.constant dense<0.000000e+00> : vector<512x128xf32>
    %17 = tpu.matmul %14, %16, %cst_10 {dimension_numbers = #tpu.dot_dimension_numbers<[1], [0], [0], [1], [0, 0, 1, 1], [], []>} : vector<512x128xbf16>, vector<128x128xbf16>, vector<512x128xf32> -> vector<512x128xf32>
    %c0_11 = arith.constant 0 : index
    %c0_12 = arith.constant 0 : index
    %18 = vector.load %arg6[%c0_11, %c0_12] : memref<512x128xf32, #tpu.memory_space<vmem>>, vector<512x128xf32>
    %19 = arith.addf %18, %17 : vector<512x128xf32>
    %c0_13 = arith.constant 0 : index
    %c0_14 = arith.constant 0 : index
    %20 = vector.load %arg6[%c0_13, %c0_14] : memref<512x128xf32, #tpu.memory_space<vmem>>, vector<512x128xf32>
    tpu.vector_store %arg6[%c0_13, %c0_14], %19 {strides = array<i32>} : memref<512x128xf32, #tpu.memory_space<vmem>>, vector<512x128xf32>,
    %c256_i32 = arith.constant 256 : i32
    %21 = arith.addi %0, %c256_i32 : i32
    %22 = tpu.assume_multiple %21, 8 : i32
    %c0_15 = arith.constant 0 : index
    %23 = arith.index_cast %22 : i32 to index
    %c0_16 = arith.constant 0 : index
    %24 = vector.load %arg2[%c0_15, %23, %c0_16] : memref<1x1536x128xbf16, #tpu.memory_space<vmem>>, vector<1x512x128xbf16>
    %25 = vector.shape_cast %24 : vector<1x512x128xbf16> to vector<512x128xbf16>
    %c2 = arith.constant 2 : index
    %c0_17 = arith.constant 0 : index
    %c0_18 = arith.constant 0 : index
    %26 = vector.load %arg3[%c2, %c0_17, %c0_18] : memref<5x128x128xbf16, #tpu.memory_space<vmem>>, vector<1x128x128xbf16>
    %27 = vector.shape_cast %26 : vector<1x128x128xbf16> to vector<128x128xbf16>
    %cst_19 = arith.constant dense<0.000000e+00> : vector<512x128xf32>
    %28 = tpu.matmul %25, %27, %cst_19 {dimension_numbers = #tpu.dot_dimension_numbers<[1], [0], [0], [1], [0, 0, 1, 1], [], []>} : vector<512x128xbf16>, vector<128x128xbf16>, vector<512x128xf32> -> vector<512x128xf32>
    %c0_20 = arith.constant 0 : index
    %c0_21 = arith.constant 0 : index
    %29 = vector.load %arg6[%c0_20, %c0_21] : memref<512x128xf32, #tpu.memory_space<vmem>>, vector<512x128xf32>
    %30 = arith.addf %29, %28 : vector<512x128xf32>
    %c0_22 = arith.constant 0 : index
    %c0_23 = arith.constant 0 : index
    %31 = vector.load %arg6[%c0_22, %c0_23] : memref<512x128xf32, #tpu.memory_space<vmem>>, vector<512x128xf32>
    tpu.vector_store %arg6[%c0_22, %c0_23], %30 {strides = array<i32>} : memref<512x128xf32, #tpu.memory_space<vmem>>, vector<512x128xf32>,
    %c384_i32 = arith.constant 384 : i32
    %32 = arith.addi %0, %c384_i32 : i32
    %33 = tpu.assume_multiple %32, 8 : i32
    %c0_24 = arith.constant 0 : index
    %34 = arith.index_cast %33 : i32 to index
    %c0_25 = arith.constant 0 : index
    %35 = vector.load %arg2[%c0_24, %34, %c0_25] : memref<1x1536x128xbf16, #tpu.memory_space<vmem>>, vector<1x512x128xbf16>
    %36 = vector.shape_cast %35 : vector<1x512x128xbf16> to vector<512x128xbf16>
    %c3 = arith.constant 3 : index
    %c0_26 = arith.constant 0 : index
    %c0_27 = arith.constant 0 : index
    %37 = vector.load %arg3[%c3, %c0_26, %c0_27] : memref<5x128x128xbf16, #tpu.memory_space<vmem>>, vector<1x128x128xbf16>
    %38 = vector.shape_cast %37 : vector<1x128x128xbf16> to vector<128x128xbf16>
    %cst_28 = arith.constant dense<0.000000e+00> : vector<512x128xf32>
    %39 = tpu.matmul %36, %38, %cst_28 {dimension_numbers = #tpu.dot_dimension_numbers<[1], [0], [0], [1], [0, 0, 1, 1], [], []>} : vector<512x128xbf16>, vector<128x128xbf16>, vector<512x128xf32> -> vector<512x128xf32>
    %c0_29 = arith.constant 0 : index
    %c0_30 = arith.constant 0 : index
    %40 = vector.load %arg6[%c0_29, %c0_30] : memref<512x128xf32, #tpu.memory_space<vmem>>, vector<512x128xf32>
    %41 = arith.addf %40, %39 : vector<512x128xf32>
    %c0_31 = arith.constant 0 : index
    %c0_32 = arith.constant 0 : index
    %42 = vector.load %arg6[%c0_31, %c0_32] : memref<512x128xf32, #tpu.memory_space<vmem>>, vector<512x128xf32>
    tpu.vector_store %arg6[%c0_31, %c0_32], %41 {strides = array<i32>} : memref<512x128xf32, #tpu.memory_space<vmem>>, vector<512x128xf32>,
    %c512_i32_33 = arith.constant 512 : i32
    %43 = arith.addi %0, %c512_i32_33 : i32
    %44 = tpu.assume_multiple %43, 8 : i32
    %c0_34 = arith.constant 0 : index
    %45 = arith.index_cast %44 : i32 to index
    %c0_35 = arith.constant 0 : index
    %46 = vector.load %arg2[%c0_34, %45, %c0_35] : memref<1x1536x128xbf16, #tpu.memory_space<vmem>>, vector<1x512x128xbf16>
    %47 = vector.shape_cast %46 : vector<1x512x128xbf16> to vector<512x128xbf16>
    %c4 = arith.constant 4 : index
    %c0_36 = arith.constant 0 : index
    %c0_37 = arith.constant 0 : index
    %48 = vector.load %arg3[%c4, %c0_36, %c0_37] : memref<5x128x128xbf16, #tpu.memory_space<vmem>>, vector<1x128x128xbf16>
    %49 = vector.shape_cast %48 : vector<1x128x128xbf16> to vector<128x128xbf16>
    %cst_38 = arith.constant dense<0.000000e+00> : vector<512x128xf32>
    %50 = tpu.matmul %47, %49, %cst_38 {dimension_numbers = #tpu.dot_dimension_numbers<[1], [0], [0], [1], [0, 0, 1, 1], [], []>} : vector<512x128xbf16>, vector<128x128xbf16>, vector<512x128xf32> -> vector<512x128xf32>
    %c0_39 = arith.constant 0 : index
    %c0_40 = arith.constant 0 : index
    %51 = vector.load %arg6[%c0_39, %c0_40] : memref<512x128xf32, #tpu.memory_space<vmem>>, vector<512x128xf32>
    %52 = arith.addf %51, %50 : vector<512x128xf32>
    %c0_41 = arith.constant 0 : index
    %c0_42 = arith.constant 0 : index
    %53 = vector.load %arg6[%c0_41, %c0_42] : memref<512x128xf32, #tpu.memory_space<vmem>>, vector<512x128xf32>
    tpu.vector_store %arg6[%c0_41, %c0_42], %52 {strides = array<i32>} : memref<512x128xf32, #tpu.memory_space<vmem>>, vector<512x128xf32>,
    %c0_43 = arith.constant 0 : index
    %c0_44 = arith.constant 0 : index
    %54 = vector.load %arg6[%c0_43, %c0_44] : memref<512x128xf32, #tpu.memory_space<vmem>>, vector<512x128xf32>
    %c0_45 = arith.constant 0 : index
    %c0_46 = arith.constant 0 : index
    %55 = vector.load %arg4[%c0_45, %c0_46] : memref<1x128xf32, #tpu.memory_space<vmem>>, vector<1x128xf32>
    %56 = vector.broadcast %55 : vector<1x128xf32> to vector<512x128xf32>
    %57 = arith.addf %54, %56 : vector<512x128xf32>
    %cst_47 = arith.constant 0.000000e+00 : f32
    %58 = vector.broadcast %cst_47 : f32 to vector<512x128xf32>
    %59 = arith.maximumf %57, %58 : vector<512x128xf32>
    %60 = arith.truncf %59 : vector<512x128xf32> to vector<512x128xbf16>
    %c0_48 = arith.constant 0 : index
    %c0_49 = arith.constant 0 : index
    %c0_50 = arith.constant 0 : index
    %61 = vector.load %arg5[%c0_48, %c0_49, %c0_50] : memref<1x512x128xbf16, #tpu.memory_space<vmem>>, vector<1x512x128xbf16>
    %62 = vector.shape_cast %61 : vector<1x512x128xbf16> to vector<512x128xbf16>
    %63 = vector.shape_cast %60 : vector<512x128xbf16> to vector<1x512x128xbf16>
    tpu.vector_store %arg5[%c0_48, %c0_49, %c0_50], %63 {strides = array<i32>} : memref<1x512x128xbf16, #tpu.memory_space<vmem>>, vector<1x512x128xbf16>,
    return
  }
  func.func @transform_0(%arg0: i32, %arg1: i32) -> (i32, i32, i32) {
    %c0_i32 = arith.constant 0 : i32
    %c0_i32_0 = arith.constant 0 : i32
    %c0_i32_1 = arith.constant 0 : i32
    return %arg0, %c0_i32, %c0_i32_0 : i32, i32, i32
  }
  func.func @transform_1(%arg0: i32, %arg1: i32) -> (i32, i32, i32) {
    %c0_i32 = arith.constant 0 : i32
    %c0_i32_0 = arith.constant 0 : i32
    %c0_i32_1 = arith.constant 0 : i32
    %c0_i32_2 = arith.constant 0 : i32
    return %c0_i32, %c0_i32_0, %c0_i32_1 : i32, i32, i32
  }
  func.func @transform_2(%arg0: i32, %arg1: i32) -> (i32, i32) {
    %c0_i32 = arith.constant 0 : i32
    %c0_i32_0 = arith.constant 0 : i32
    %c0_i32_1 = arith.constant 0 : i32
    return %c0_i32, %c0_i32_0 : i32, i32
  }
  func.func @transform_3(%arg0: i32, %arg1: i32) -> (i32, i32, i32) {
    %c0_i32 = arith.constant 0 : i32
    %c0_i32_0 = arith.constant 0 : i32
    return %arg0, %arg1, %c0_i32 : i32, i32, i32
  }
}

module attributes {stable_mosaic.version = 11 : i64} {
  func.func @_conv_shift_gemm_kernel(%arg0: i32, %arg1: i32, %arg2: memref<1x192x384xbf16, #tpu.memory_space<vmem>>, %arg3: memref<3x384x128xbf16, #tpu.memory_space<vmem>>, %arg4: memref<1x128xf32, #tpu.memory_space<vmem>>, %arg5: memref<1x128x128xbf16, #tpu.memory_space<vmem>>, %arg6: memref<128x128xf32, #tpu.memory_space<vmem>>) attributes {dimension_semantics = [#tpu.dimension_semantics<parallel>, #tpu.dimension_semantics<parallel>], iteration_bounds = array<i64: 2, 1>, scalar_prefetch = 0 : i64, scratch_operands = 1 : i64, tpu.core_type = #tpu.core_type<tc>, window_params = [{transform_indices = @transform_0, window_bounds = array<i64: 1, 192, 384>}, {pipeline_mode = #tpu.pipeline_mode<synchronous>, transform_indices = @transform_1, window_bounds = array<i64: 3, 384, 128>}, {pipeline_mode = #tpu.pipeline_mode<synchronous>, transform_indices = @transform_2, window_bounds = array<i64: 1, 128>}, {transform_indices = @transform_3, window_bounds = array<i64: 1, 128, 128>}]} {
    %c128_i32 = arith.constant 128 : i32
    %0 = arith.muli %arg1, %c128_i32 : i32
    %c0_i32 = arith.constant 0 : i32
    %1 = arith.addi %0, %c0_i32 : i32
    %2 = tpu.assume_multiple %1, 8 : i32
    %c0 = arith.constant 0 : index
    %3 = arith.index_cast %2 : i32 to index
    %c0_0 = arith.constant 0 : index
    %4 = vector.load %arg2[%c0, %3, %c0_0] : memref<1x192x384xbf16, #tpu.memory_space<vmem>>, vector<1x128x384xbf16>
    %5 = vector.shape_cast %4 : vector<1x128x384xbf16> to vector<128x384xbf16>
    %c0_1 = arith.constant 0 : index
    %c0_2 = arith.constant 0 : index
    %c0_3 = arith.constant 0 : index
    %6 = vector.load %arg3[%c0_1, %c0_2, %c0_3] : memref<3x384x128xbf16, #tpu.memory_space<vmem>>, vector<1x384x128xbf16>
    %7 = vector.shape_cast %6 : vector<1x384x128xbf16> to vector<384x128xbf16>
    %cst = arith.constant dense<0.000000e+00> : vector<128x128xf32>
    %8 = tpu.matmul %5, %7, %cst {dimension_numbers = #tpu.dot_dimension_numbers<[1], [0], [0], [1], [0, 0, 1, 1], [], []>} : vector<128x384xbf16>, vector<384x128xbf16>, vector<128x128xf32> -> vector<128x128xf32>
    %c0_4 = arith.constant 0 : index
    %c0_5 = arith.constant 0 : index
    %9 = vector.load %arg6[%c0_4, %c0_5] : memref<128x128xf32, #tpu.memory_space<vmem>>, vector<128x128xf32>
    tpu.vector_store %arg6[%c0_4, %c0_5], %8 {strides = array<i32>} : memref<128x128xf32, #tpu.memory_space<vmem>>, vector<128x128xf32>,
    %c32_i32 = arith.constant 32 : i32
    %10 = arith.addi %0, %c32_i32 : i32
    %11 = tpu.assume_multiple %10, 8 : i32
    %c0_6 = arith.constant 0 : index
    %12 = arith.index_cast %11 : i32 to index
    %c0_7 = arith.constant 0 : index
    %13 = vector.load %arg2[%c0_6, %12, %c0_7] : memref<1x192x384xbf16, #tpu.memory_space<vmem>>, vector<1x128x384xbf16>
    %14 = vector.shape_cast %13 : vector<1x128x384xbf16> to vector<128x384xbf16>
    %c1 = arith.constant 1 : index
    %c0_8 = arith.constant 0 : index
    %c0_9 = arith.constant 0 : index
    %15 = vector.load %arg3[%c1, %c0_8, %c0_9] : memref<3x384x128xbf16, #tpu.memory_space<vmem>>, vector<1x384x128xbf16>
    %16 = vector.shape_cast %15 : vector<1x384x128xbf16> to vector<384x128xbf16>
    %cst_10 = arith.constant dense<0.000000e+00> : vector<128x128xf32>
    %17 = tpu.matmul %14, %16, %cst_10 {dimension_numbers = #tpu.dot_dimension_numbers<[1], [0], [0], [1], [0, 0, 1, 1], [], []>} : vector<128x384xbf16>, vector<384x128xbf16>, vector<128x128xf32> -> vector<128x128xf32>
    %c0_11 = arith.constant 0 : index
    %c0_12 = arith.constant 0 : index
    %18 = vector.load %arg6[%c0_11, %c0_12] : memref<128x128xf32, #tpu.memory_space<vmem>>, vector<128x128xf32>
    %19 = arith.addf %18, %17 : vector<128x128xf32>
    %c0_13 = arith.constant 0 : index
    %c0_14 = arith.constant 0 : index
    %20 = vector.load %arg6[%c0_13, %c0_14] : memref<128x128xf32, #tpu.memory_space<vmem>>, vector<128x128xf32>
    tpu.vector_store %arg6[%c0_13, %c0_14], %19 {strides = array<i32>} : memref<128x128xf32, #tpu.memory_space<vmem>>, vector<128x128xf32>,
    %c64_i32 = arith.constant 64 : i32
    %21 = arith.addi %0, %c64_i32 : i32
    %22 = tpu.assume_multiple %21, 8 : i32
    %c0_15 = arith.constant 0 : index
    %23 = arith.index_cast %22 : i32 to index
    %c0_16 = arith.constant 0 : index
    %24 = vector.load %arg2[%c0_15, %23, %c0_16] : memref<1x192x384xbf16, #tpu.memory_space<vmem>>, vector<1x128x384xbf16>
    %25 = vector.shape_cast %24 : vector<1x128x384xbf16> to vector<128x384xbf16>
    %c2 = arith.constant 2 : index
    %c0_17 = arith.constant 0 : index
    %c0_18 = arith.constant 0 : index
    %26 = vector.load %arg3[%c2, %c0_17, %c0_18] : memref<3x384x128xbf16, #tpu.memory_space<vmem>>, vector<1x384x128xbf16>
    %27 = vector.shape_cast %26 : vector<1x384x128xbf16> to vector<384x128xbf16>
    %cst_19 = arith.constant dense<0.000000e+00> : vector<128x128xf32>
    %28 = tpu.matmul %25, %27, %cst_19 {dimension_numbers = #tpu.dot_dimension_numbers<[1], [0], [0], [1], [0, 0, 1, 1], [], []>} : vector<128x384xbf16>, vector<384x128xbf16>, vector<128x128xf32> -> vector<128x128xf32>
    %c0_20 = arith.constant 0 : index
    %c0_21 = arith.constant 0 : index
    %29 = vector.load %arg6[%c0_20, %c0_21] : memref<128x128xf32, #tpu.memory_space<vmem>>, vector<128x128xf32>
    %30 = arith.addf %29, %28 : vector<128x128xf32>
    %c0_22 = arith.constant 0 : index
    %c0_23 = arith.constant 0 : index
    %31 = vector.load %arg6[%c0_22, %c0_23] : memref<128x128xf32, #tpu.memory_space<vmem>>, vector<128x128xf32>
    tpu.vector_store %arg6[%c0_22, %c0_23], %30 {strides = array<i32>} : memref<128x128xf32, #tpu.memory_space<vmem>>, vector<128x128xf32>,
    %c0_24 = arith.constant 0 : index
    %c0_25 = arith.constant 0 : index
    %32 = vector.load %arg6[%c0_24, %c0_25] : memref<128x128xf32, #tpu.memory_space<vmem>>, vector<128x128xf32>
    %c0_26 = arith.constant 0 : index
    %c0_27 = arith.constant 0 : index
    %33 = vector.load %arg4[%c0_26, %c0_27] : memref<1x128xf32, #tpu.memory_space<vmem>>, vector<1x128xf32>
    %34 = vector.broadcast %33 : vector<1x128xf32> to vector<128x128xf32>
    %35 = arith.addf %32, %34 : vector<128x128xf32>
    %cst_28 = arith.constant 0.000000e+00 : f32
    %36 = vector.broadcast %cst_28 : f32 to vector<128x128xf32>
    %37 = arith.maximumf %35, %36 : vector<128x128xf32>
    %38 = arith.truncf %37 : vector<128x128xf32> to vector<128x128xbf16>
    %c0_29 = arith.constant 0 : index
    %c0_30 = arith.constant 0 : index
    %c0_31 = arith.constant 0 : index
    %39 = vector.load %arg5[%c0_29, %c0_30, %c0_31] : memref<1x128x128xbf16, #tpu.memory_space<vmem>>, vector<1x128x128xbf16>
    %40 = vector.shape_cast %39 : vector<1x128x128xbf16> to vector<128x128xbf16>
    %41 = vector.shape_cast %38 : vector<128x128xbf16> to vector<1x128x128xbf16>
    tpu.vector_store %arg5[%c0_29, %c0_30, %c0_31], %41 {strides = array<i32>} : memref<1x128x128xbf16, #tpu.memory_space<vmem>>, vector<1x128x128xbf16>,
    return
  }
  func.func @transform_0(%arg0: i32, %arg1: i32) -> (i32, i32, i32) {
    %c0_i32 = arith.constant 0 : i32
    %c0_i32_0 = arith.constant 0 : i32
    %c0_i32_1 = arith.constant 0 : i32
    return %arg0, %c0_i32, %c0_i32_0 : i32, i32, i32
  }
  func.func @transform_1(%arg0: i32, %arg1: i32) -> (i32, i32, i32) {
    %c0_i32 = arith.constant 0 : i32
    %c0_i32_0 = arith.constant 0 : i32
    %c0_i32_1 = arith.constant 0 : i32
    %c0_i32_2 = arith.constant 0 : i32
    return %c0_i32, %c0_i32_0, %c0_i32_1 : i32, i32, i32
  }
  func.func @transform_2(%arg0: i32, %arg1: i32) -> (i32, i32) {
    %c0_i32 = arith.constant 0 : i32
    %c0_i32_0 = arith.constant 0 : i32
    %c0_i32_1 = arith.constant 0 : i32
    return %c0_i32, %c0_i32_0 : i32, i32
  }
  func.func @transform_3(%arg0: i32, %arg1: i32) -> (i32, i32, i32) {
    %c0_i32 = arith.constant 0 : i32
    %c0_i32_0 = arith.constant 0 : i32
    return %arg0, %arg1, %c0_i32 : i32, i32, i32
  }
}

module attributes {stable_mosaic.version = 11 : i64} {
  func.func @_conv_shift_gemm_kernel(%arg0: i32, %arg1: i32, %arg2: memref<1x64x640xbf16, #tpu.memory_space<vmem>>, %arg3: memref<3x640x128xbf16, #tpu.memory_space<vmem>>, %arg4: memref<1x128xf32, #tpu.memory_space<vmem>>, %arg5: memref<1x32x128xbf16, #tpu.memory_space<vmem>>, %arg6: memref<32x128xf32, #tpu.memory_space<vmem>>) attributes {dimension_semantics = [#tpu.dimension_semantics<parallel>, #tpu.dimension_semantics<parallel>], iteration_bounds = array<i64: 2, 1>, scalar_prefetch = 0 : i64, scratch_operands = 1 : i64, tpu.core_type = #tpu.core_type<tc>, window_params = [{transform_indices = @transform_0, window_bounds = array<i64: 1, 64, 640>}, {pipeline_mode = #tpu.pipeline_mode<synchronous>, transform_indices = @transform_1, window_bounds = array<i64: 3, 640, 128>}, {pipeline_mode = #tpu.pipeline_mode<synchronous>, transform_indices = @transform_2, window_bounds = array<i64: 1, 128>}, {transform_indices = @transform_3, window_bounds = array<i64: 1, 32, 128>}]} {
    %c32_i32 = arith.constant 32 : i32
    %0 = arith.muli %arg1, %c32_i32 : i32
    %c0_i32 = arith.constant 0 : i32
    %1 = arith.addi %0, %c0_i32 : i32
    %2 = tpu.assume_multiple %1, 8 : i32
    %c0 = arith.constant 0 : index
    %3 = arith.index_cast %2 : i32 to index
    %c0_0 = arith.constant 0 : index
    %4 = vector.load %arg2[%c0, %3, %c0_0] : memref<1x64x640xbf16, #tpu.memory_space<vmem>>, vector<1x32x640xbf16>
    %5 = vector.shape_cast %4 : vector<1x32x640xbf16> to vector<32x640xbf16>
    %c0_1 = arith.constant 0 : index
    %c0_2 = arith.constant 0 : index
    %c0_3 = arith.constant 0 : index
    %6 = vector.load %arg3[%c0_1, %c0_2, %c0_3] : memref<3x640x128xbf16, #tpu.memory_space<vmem>>, vector<1x640x128xbf16>
    %7 = vector.shape_cast %6 : vector<1x640x128xbf16> to vector<640x128xbf16>
    %cst = arith.constant dense<0.000000e+00> : vector<32x128xf32>
    %8 = tpu.matmul %5, %7, %cst {dimension_numbers = #tpu.dot_dimension_numbers<[1], [0], [0], [1], [0, 0, 1, 1], [], []>} : vector<32x640xbf16>, vector<640x128xbf16>, vector<32x128xf32> -> vector<32x128xf32>
    %c0_4 = arith.constant 0 : index
    %c0_5 = arith.constant 0 : index
    %9 = vector.load %arg6[%c0_4, %c0_5] : memref<32x128xf32, #tpu.memory_space<vmem>>, vector<32x128xf32>
    tpu.vector_store %arg6[%c0_4, %c0_5], %8 {strides = array<i32>} : memref<32x128xf32, #tpu.memory_space<vmem>>, vector<32x128xf32>,
    %c16_i32 = arith.constant 16 : i32
    %10 = arith.addi %0, %c16_i32 : i32
    %11 = tpu.assume_multiple %10, 8 : i32
    %c0_6 = arith.constant 0 : index
    %12 = arith.index_cast %11 : i32 to index
    %c0_7 = arith.constant 0 : index
    %13 = vector.load %arg2[%c0_6, %12, %c0_7] : memref<1x64x640xbf16, #tpu.memory_space<vmem>>, vector<1x32x640xbf16>
    %14 = vector.shape_cast %13 : vector<1x32x640xbf16> to vector<32x640xbf16>
    %c1 = arith.constant 1 : index
    %c0_8 = arith.constant 0 : index
    %c0_9 = arith.constant 0 : index
    %15 = vector.load %arg3[%c1, %c0_8, %c0_9] : memref<3x640x128xbf16, #tpu.memory_space<vmem>>, vector<1x640x128xbf16>
    %16 = vector.shape_cast %15 : vector<1x640x128xbf16> to vector<640x128xbf16>
    %cst_10 = arith.constant dense<0.000000e+00> : vector<32x128xf32>
    %17 = tpu.matmul %14, %16, %cst_10 {dimension_numbers = #tpu.dot_dimension_numbers<[1], [0], [0], [1], [0, 0, 1, 1], [], []>} : vector<32x640xbf16>, vector<640x128xbf16>, vector<32x128xf32> -> vector<32x128xf32>
    %c0_11 = arith.constant 0 : index
    %c0_12 = arith.constant 0 : index
    %18 = vector.load %arg6[%c0_11, %c0_12] : memref<32x128xf32, #tpu.memory_space<vmem>>, vector<32x128xf32>
    %19 = arith.addf %18, %17 : vector<32x128xf32>
    %c0_13 = arith.constant 0 : index
    %c0_14 = arith.constant 0 : index
    %20 = vector.load %arg6[%c0_13, %c0_14] : memref<32x128xf32, #tpu.memory_space<vmem>>, vector<32x128xf32>
    tpu.vector_store %arg6[%c0_13, %c0_14], %19 {strides = array<i32>} : memref<32x128xf32, #tpu.memory_space<vmem>>, vector<32x128xf32>,
    %c32_i32_15 = arith.constant 32 : i32
    %21 = arith.addi %0, %c32_i32_15 : i32
    %22 = tpu.assume_multiple %21, 8 : i32
    %c0_16 = arith.constant 0 : index
    %23 = arith.index_cast %22 : i32 to index
    %c0_17 = arith.constant 0 : index
    %24 = vector.load %arg2[%c0_16, %23, %c0_17] : memref<1x64x640xbf16, #tpu.memory_space<vmem>>, vector<1x32x640xbf16>
    %25 = vector.shape_cast %24 : vector<1x32x640xbf16> to vector<32x640xbf16>
    %c2 = arith.constant 2 : index
    %c0_18 = arith.constant 0 : index
    %c0_19 = arith.constant 0 : index
    %26 = vector.load %arg3[%c2, %c0_18, %c0_19] : memref<3x640x128xbf16, #tpu.memory_space<vmem>>, vector<1x640x128xbf16>
    %27 = vector.shape_cast %26 : vector<1x640x128xbf16> to vector<640x128xbf16>
    %cst_20 = arith.constant dense<0.000000e+00> : vector<32x128xf32>
    %28 = tpu.matmul %25, %27, %cst_20 {dimension_numbers = #tpu.dot_dimension_numbers<[1], [0], [0], [1], [0, 0, 1, 1], [], []>} : vector<32x640xbf16>, vector<640x128xbf16>, vector<32x128xf32> -> vector<32x128xf32>
    %c0_21 = arith.constant 0 : index
    %c0_22 = arith.constant 0 : index
    %29 = vector.load %arg6[%c0_21, %c0_22] : memref<32x128xf32, #tpu.memory_space<vmem>>, vector<32x128xf32>
    %30 = arith.addf %29, %28 : vector<32x128xf32>
    %c0_23 = arith.constant 0 : index
    %c0_24 = arith.constant 0 : index
    %31 = vector.load %arg6[%c0_23, %c0_24] : memref<32x128xf32, #tpu.memory_space<vmem>>, vector<32x128xf32>
    tpu.vector_store %arg6[%c0_23, %c0_24], %30 {strides = array<i32>} : memref<32x128xf32, #tpu.memory_space<vmem>>, vector<32x128xf32>,
    %c0_25 = arith.constant 0 : index
    %c0_26 = arith.constant 0 : index
    %32 = vector.load %arg6[%c0_25, %c0_26] : memref<32x128xf32, #tpu.memory_space<vmem>>, vector<32x128xf32>
    %c0_27 = arith.constant 0 : index
    %c0_28 = arith.constant 0 : index
    %33 = vector.load %arg4[%c0_27, %c0_28] : memref<1x128xf32, #tpu.memory_space<vmem>>, vector<1x128xf32>
    %34 = vector.broadcast %33 : vector<1x128xf32> to vector<32x128xf32>
    %35 = arith.addf %32, %34 : vector<32x128xf32>
    %cst_29 = arith.constant 0.000000e+00 : f32
    %36 = vector.broadcast %cst_29 : f32 to vector<32x128xf32>
    %37 = arith.maximumf %35, %36 : vector<32x128xf32>
    %38 = arith.truncf %37 : vector<32x128xf32> to vector<32x128xbf16>
    %c0_30 = arith.constant 0 : index
    %c0_31 = arith.constant 0 : index
    %c0_32 = arith.constant 0 : index
    %39 = vector.load %arg5[%c0_30, %c0_31, %c0_32] : memref<1x32x128xbf16, #tpu.memory_space<vmem>>, vector<1x32x128xbf16>
    %40 = vector.shape_cast %39 : vector<1x32x128xbf16> to vector<32x128xbf16>
    %41 = vector.shape_cast %38 : vector<32x128xbf16> to vector<1x32x128xbf16>
    tpu.vector_store %arg5[%c0_30, %c0_31, %c0_32], %41 {strides = array<i32>} : memref<1x32x128xbf16, #tpu.memory_space<vmem>>, vector<1x32x128xbf16>,
    return
  }
  func.func @transform_0(%arg0: i32, %arg1: i32) -> (i32, i32, i32) {
    %c0_i32 = arith.constant 0 : i32
    %c0_i32_0 = arith.constant 0 : i32
    %c0_i32_1 = arith.constant 0 : i32
    return %arg0, %c0_i32, %c0_i32_0 : i32, i32, i32
  }
  func.func @transform_1(%arg0: i32, %arg1: i32) -> (i32, i32, i32) {
    %c0_i32 = arith.constant 0 : i32
    %c0_i32_0 = arith.constant 0 : i32
    %c0_i32_1 = arith.constant 0 : i32
    %c0_i32_2 = arith.constant 0 : i32
    return %c0_i32, %c0_i32_0, %c0_i32_1 : i32, i32, i32
  }
  func.func @transform_2(%arg0: i32, %arg1: i32) -> (i32, i32) {
    %c0_i32 = arith.constant 0 : i32
    %c0_i32_0 = arith.constant 0 : i32
    %c0_i32_1 = arith.constant 0 : i32
    return %c0_i32, %c0_i32_0 : i32, i32
  }
  func.func @transform_3(%arg0: i32, %arg1: i32) -> (i32, i32, i32) {
    %c0_i32 = arith.constant 0 : i32
    %c0_i32_0 = arith.constant 0 : i32
    return %arg0, %arg1, %c0_i32 : i32, i32, i32
  }
}

module attributes {stable_mosaic.version = 11 : i64} {
  func.func @_fused_mlp_kernel(%arg0: i32, %arg1: memref<2x256xbf16, #tpu.memory_space<vmem>>, %arg2: memref<256x1024xbf16, #tpu.memory_space<vmem>>, %arg3: memref<1x1024xf32, #tpu.memory_space<vmem>>, %arg4: memref<1024x512xbf16, #tpu.memory_space<vmem>>, %arg5: memref<1x512xf32, #tpu.memory_space<vmem>>, %arg6: memref<512x128xbf16, #tpu.memory_space<vmem>>, %arg7: memref<1x128xf32, #tpu.memory_space<vmem>>, %arg8: memref<2x128xf32, #tpu.memory_space<vmem>>, %arg9: memref<2x1024xbf16, #tpu.memory_space<vmem>>) attributes {dimension_semantics = [#tpu.dimension_semantics<arbitrary>], iteration_bounds = array<i64: 4>, scalar_prefetch = 0 : i64, scratch_operands = 1 : i64, tpu.core_type = #tpu.core_type<tc>, window_params = [{pipeline_mode = #tpu.pipeline_mode<synchronous>, transform_indices = @transform_0, window_bounds = array<i64: 2, 256>}, {pipeline_mode = #tpu.pipeline_mode<synchronous>, transform_indices = @transform_1, window_bounds = array<i64: 256, 1024>}, {pipeline_mode = #tpu.pipeline_mode<synchronous>, transform_indices = @transform_2, window_bounds = array<i64: 1, 1024>}, {transform_indices = @transform_3, window_bounds = array<i64: 1024, 512>}, {transform_indices = @transform_4, window_bounds = array<i64: 1, 512>}, {transform_indices = @transform_5, window_bounds = array<i64: 512, 128>}, {pipeline_mode = #tpu.pipeline_mode<synchronous>, transform_indices = @transform_6, window_bounds = array<i64: 1, 128>}, {pipeline_mode = #tpu.pipeline_mode<synchronous>, transform_indices = @transform_7, window_bounds = array<i64: 2, 128>}]} {
    %c0_i32 = arith.constant 0 : i32
    %0 = arith.cmpi eq, %arg0, %c0_i32 : i32
    %1 = arith.extui %0 : i1 to i32
    %c0_i32_0 = arith.constant 0 : i32
    %2 = arith.cmpi ne, %1, %c0_i32_0 : i32
    scf.if %2 {
      %c0_15 = arith.constant 0 : index
      %c0_16 = arith.constant 0 : index
      %20 = vector.load %arg1[%c0_15, %c0_16] : memref<2x256xbf16, #tpu.memory_space<vmem>>, vector<2x256xbf16>
      %c0_17 = arith.constant 0 : index
      %c0_18 = arith.constant 0 : index
      %21 = vector.load %arg2[%c0_17, %c0_18] : memref<256x1024xbf16, #tpu.memory_space<vmem>>, vector<256x1024xbf16>
      %cst_19 = arith.constant dense<0.000000e+00> : vector<2x1024xf32>
      %22 = tpu.matmul %20, %21, %cst_19 {dimension_numbers = #tpu.dot_dimension_numbers<[1], [0], [0], [1], [0, 0, 1, 1], [], []>} : vector<2x256xbf16>, vector<256x1024xbf16>, vector<2x1024xf32> -> vector<2x1024xf32>
      %c0_20 = arith.constant 0 : index
      %c0_21 = arith.constant 0 : index
      %23 = vector.load %arg3[%c0_20, %c0_21] : memref<1x1024xf32, #tpu.memory_space<vmem>>, vector<1x1024xf32>
      %24 = vector.broadcast %23 : vector<1x1024xf32> to vector<2x1024xf32>
      %25 = arith.addf %22, %24 : vector<2x1024xf32>
      %cst_22 = arith.constant 0.000000e+00 : f32
      %26 = vector.broadcast %cst_22 : f32 to vector<2x1024xf32>
      %27 = arith.maximumf %25, %26 : vector<2x1024xf32>
      %28 = arith.truncf %27 : vector<2x1024xf32> to vector<2x1024xbf16>
      %c0_23 = arith.constant 0 : index
      %c0_24 = arith.constant 0 : index
      %29 = vector.load %arg9[%c0_23, %c0_24] : memref<2x1024xbf16, #tpu.memory_space<vmem>>, vector<2x1024xbf16>
      tpu.vector_store %arg9[%c0_23, %c0_24], %28 {strides = array<i32>} : memref<2x1024xbf16, #tpu.memory_space<vmem>>, vector<2x1024xbf16>,
      %cst_25 = arith.constant 0.000000e+00 : f32
      %30 = vector.broadcast %cst_25 : f32 to vector<2x128xf32>
      %c0_26 = arith.constant 0 : index
      %c0_27 = arith.constant 0 : index
      %31 = vector.load %arg8[%c0_26, %c0_27] : memref<2x128xf32, #tpu.memory_space<vmem>>, vector<2x128xf32>
      tpu.vector_store %arg8[%c0_26, %c0_27], %30 {strides = array<i32>} : memref<2x128xf32, #tpu.memory_space<vmem>>, vector<2x128xf32>,
    } else {
    }
    %c0 = arith.constant 0 : index
    %c0_1 = arith.constant 0 : index
    %3 = vector.load %arg9[%c0, %c0_1] : memref<2x1024xbf16, #tpu.memory_space<vmem>>, vector<2x1024xbf16>
    %c0_2 = arith.constant 0 : index
    %c0_3 = arith.constant 0 : index
    %4 = vector.load %arg4[%c0_2, %c0_3] : memref<1024x512xbf16, #tpu.memory_space<vmem>>, vector<1024x512xbf16>
    %cst = arith.constant dense<0.000000e+00> : vector<2x512xf32>
    %5 = tpu.matmul %3, %4, %cst {dimension_numbers = #tpu.dot_dimension_numbers<[1], [0], [0], [1], [0, 0, 1, 1], [], []>} : vector<2x1024xbf16>, vector<1024x512xbf16>, vector<2x512xf32> -> vector<2x512xf32>
    %c0_4 = arith.constant 0 : index
    %c0_5 = arith.constant 0 : index
    %6 = vector.load %arg5[%c0_4, %c0_5] : memref<1x512xf32, #tpu.memory_space<vmem>>, vector<1x512xf32>
    %7 = vector.broadcast %6 : vector<1x512xf32> to vector<2x512xf32>
    %8 = arith.addf %5, %7 : vector<2x512xf32>
    %cst_6 = arith.constant 0.000000e+00 : f32
    %9 = vector.broadcast %cst_6 : f32 to vector<2x512xf32>
    %10 = arith.maximumf %8, %9 : vector<2x512xf32>
    %c0_7 = arith.constant 0 : index
    %c0_8 = arith.constant 0 : index
    %11 = vector.load %arg8[%c0_7, %c0_8] : memref<2x128xf32, #tpu.memory_space<vmem>>, vector<2x128xf32>
    %12 = arith.truncf %10 : vector<2x512xf32> to vector<2x512xbf16>
    %c0_9 = arith.constant 0 : index
    %c0_10 = arith.constant 0 : index
    %13 = vector.load %arg6[%c0_9, %c0_10] : memref<512x128xbf16, #tpu.memory_space<vmem>>, vector<512x128xbf16>
    %cst_11 = arith.constant dense<0.000000e+00> : vector<2x128xf32>
    %14 = tpu.matmul %12, %13, %cst_11 {dimension_numbers = #tpu.dot_dimension_numbers<[1], [0], [0], [1], [0, 0, 1, 1], [], []>} : vector<2x512xbf16>, vector<512x128xbf16>, vector<2x128xf32> -> vector<2x128xf32>
    %15 = arith.addf %11, %14 : vector<2x128xf32>
    %c0_12 = arith.constant 0 : index
    %c0_13 = arith.constant 0 : index
    %16 = vector.load %arg8[%c0_12, %c0_13] : memref<2x128xf32, #tpu.memory_space<vmem>>, vector<2x128xf32>
    tpu.vector_store %arg8[%c0_12, %c0_13], %15 {strides = array<i32>} : memref<2x128xf32, #tpu.memory_space<vmem>>, vector<2x128xf32>,
    %c3_i32 = arith.constant 3 : i32
    %17 = arith.cmpi eq, %arg0, %c3_i32 : i32
    %18 = arith.extui %17 : i1 to i32
    %c0_i32_14 = arith.constant 0 : i32
    %19 = arith.cmpi ne, %18, %c0_i32_14 : i32
    scf.if %19 {
      %c0_15 = arith.constant 0 : index
      %c0_16 = arith.constant 0 : index
      %20 = vector.load %arg8[%c0_15, %c0_16] : memref<2x128xf32, #tpu.memory_space<vmem>>, vector<2x128xf32>
      %c0_17 = arith.constant 0 : index
      %c0_18 = arith.constant 0 : index
      %21 = vector.load %arg7[%c0_17, %c0_18] : memref<1x128xf32, #tpu.memory_space<vmem>>, vector<1x128xf32>
      %22 = vector.broadcast %21 : vector<1x128xf32> to vector<2x128xf32>
      %23 = arith.addf %20, %22 : vector<2x128xf32>
      %c0_19 = arith.constant 0 : index
      %c0_20 = arith.constant 0 : index
      %24 = vector.load %arg8[%c0_19, %c0_20] : memref<2x128xf32, #tpu.memory_space<vmem>>, vector<2x128xf32>
      tpu.vector_store %arg8[%c0_19, %c0_20], %23 {strides = array<i32>} : memref<2x128xf32, #tpu.memory_space<vmem>>, vector<2x128xf32>,
    } else {
    }
    return
  }
  func.func @transform_0(%arg0: i32) -> (i32, i32) {
    %c0_i32 = arith.constant 0 : i32
    %c0_i32_0 = arith.constant 0 : i32
    %c0_i32_1 = arith.constant 0 : i32
    return %c0_i32, %c0_i32_0 : i32, i32
  }
  func.func @transform_1(%arg0: i32) -> (i32, i32) {
    %c0_i32 = arith.constant 0 : i32
    %c0_i32_0 = arith.constant 0 : i32
    %c0_i32_1 = arith.constant 0 : i32
    return %c0_i32, %c0_i32_0 : i32, i32
  }
  func.func @transform_2(%arg0: i32) -> (i32, i32) {
    %c0_i32 = arith.constant 0 : i32
    %c0_i32_0 = arith.constant 0 : i32
    %c0_i32_1 = arith.constant 0 : i32
    return %c0_i32, %c0_i32_0 : i32, i32
  }
  func.func @transform_3(%arg0: i32) -> (i32, i32) {
    %c0_i32 = arith.constant 0 : i32
    %c0_i32_0 = arith.constant 0 : i32
    return %c0_i32, %arg0 : i32, i32
  }
  func.func @transform_4(%arg0: i32) -> (i32, i32) {
    %c0_i32 = arith.constant 0 : i32
    %c0_i32_0 = arith.constant 0 : i32
    return %c0_i32, %arg0 : i32, i32
  }
  func.func @transform_5(%arg0: i32) -> (i32, i32) {
    %c0_i32 = arith.constant 0 : i32
    %c0_i32_0 = arith.constant 0 : i32
    return %arg0, %c0_i32 : i32, i32
  }
  func.func @transform_6(%arg0: i32) -> (i32, i32) {
    %c0_i32 = arith.constant 0 : i32
    %c0_i32_0 = arith.constant 0 : i32
    %c0_i32_1 = arith.constant 0 : i32
    return %c0_i32, %c0_i32_0 : i32, i32
  }
  func.func @transform_7(%arg0: i32) -> (i32, i32) {
    %c0_i32 = arith.constant 0 : i32
    %c0_i32_0 = arith.constant 0 : i32
    %c0_i32_1 = arith.constant 0 : i32
    return %c0_i32, %c0_i32_0 : i32, i32
  }
}

</mosaic_0001>

<llo_original>
// kernel: convolution3d_forward.4
$region0: #{convolution3d_forward.4}
  #allocation0 [shape = 'u32[]', space=smem, size = 0x4, offset = 0x4, fixed_abs, tag = 'smem constant byte address 0x4 - core index']
  #allocation1 [shape = 'u32[72,128]{1,0:T(1,128)}', space=vmem, size = 0x9000, scoped, tag = 'internal scratch']
  #allocation2 [shape = 'f32[512,128]{1,0:T(8,128)}', space=vmem, size = 0x40000, scoped, tag = 'scratch operand']
  %s0 = inlined_call_operand.vmem [shape: bf16[2,1536,128], index: 0, kind: input, shape index: {}]
  %s1 = inlined_call_operand.vmem [shape: bf16[5,128,128], index: 1, kind: input, shape index: {}]
  %s2 = inlined_call_operand.vmem [shape: f32[1,128], index: 2, kind: input, shape index: {}]
  %s3 = inlined_call_operand.vmem [shape: bf16[2,1024,128], index: 3, kind: output, shape index: {}]
  %s4 = sld [smem:[#allocation0]]
  $region45: #{convolution3d_forward.4} parent=0
    _
  %s6 = ssub.s32 1, %s4
  %s7 = scalar_select 0, %s6, %s4
  loop: start=0, step=1, limit=6
  $region2: #{convolution3d_forward.4} parent=0 // loop_pre_header
    _
  $region3: #{convolution3d_forward.4} parent=0 // loop_header
    %s9 = sphi 0, %s13
    %p10 = scmp.ge.s32.totalorder %s9, 6
    %s16 = sphi 0, %s28
    %s17 = sphi 0, %s24
    %s18 = sphi 0, %s16
    %s19 = sphi 0, %s17
    %s20 = sphi 0, %s18
    %s21 = sphi 0, %s19
    %s31 = sphi 0, %s33
    %s34 = sphi 0, %s31
    %s35 = sphi 0, %s34
    %s51 = sphi 0, %s35
    %s55 = sphi 0, %s55
    %s57 = sphi 0, %s55
    %s58 = sphi 0, %s57
    %s72 = sphi 0, %s58
    %s76 = sphi 0, %s76
    %s78 = sphi 0, %s76
    %s79 = sphi 0, %s78
    %s93 = sphi 0, %s79
    %s101 = sphi 0, %s103
    %s104 = sphi 0, %s101
    %s105 = sphi 0, %s104
    %s121 = sphi 0, %s105
  $region4: #{convolution3d_forward.4} parent=0 // loop_header_branch
    %12 = sbr.rel (%p10) target = $region8
  $region5: #{convolution3d_forward.4} parent=0 // loop_body
    %s14 = ssub.s32 %s9, 1
    %s15 = ssub.s32 %s9, 2
    %s22 = sadd.s32 1, %s17
    %p23 = scmp.ge.s32.totalorder %s22, 2
    %s24 = scalar_select %p23, 0, %s22
    %s25 = sadd.s32 1, %s16
    %s26 = scalar_select %p23, %s25, %s16
    %p27 = scmp.ge.s32.totalorder %s26, 2
    %s28 = scalar_select %p27, 0, %s26
    %s29 = ssub.s32 %s16, %s28
    %p30 = scmp.eq.s32.totalorder %s29, 0
    %s32 = sadd.s32 %s31, 1
    %s33 = scalar_select %p30, %s31, %s32
    %p36 = pneg %p30
    %p37 = scmp.eq.s32.totalorder %s9, 3
    %p38 = por %p36, %p37
    %p39 = scmp.ne.s32.totalorder %s31, %s34
    %p40 = scmp.eq.s32.totalorder %s9, 0
    %p41 = por %p39, %p40
    %p42 = scmp.ne.s32.totalorder %s31, %s34
    %p43 = scmp.eq.s32.totalorder %s14, 3
    %p44 = por %p42, %p43
    %p45 = scmp.ne.s32.totalorder %s34, %s35
    %p46 = scmp.eq.s32.totalorder %s14, 0
    %p47 = por %p45, %p46
    %p48 = scmp.ne.s32.totalorder %s34, %s35
    %p49 = scmp.eq.s32.totalorder %s15, 3
    %p50 = por %p48, %p49
    %p52 = scmp.ne.s32.totalorder %s35, %s51
    %p53 = scmp.eq.s32.totalorder %s15, 0
    %p54 = por %p52, %p53
    %s56 = sadd.s32 %s55, 1
    %p59 = scmp.eq.s32.totalorder %s9, 3
    %p60 = scmp.ne.s32.totalorder %s55, %s57
    %p61 = scmp.eq.s32.totalorder %s9, 0
    %p62 = por %p60, %p61
    %p63 = scmp.ne.s32.totalorder %s55, %s57
    %p64 = scmp.eq.s32.totalorder %s14, 3
    %p65 = por %p63, %p64
    %p66 = scmp.ne.s32.totalorder %s57, %s58
    %p67 = scmp.eq.s32.totalorder %s14, 0
    %p68 = por %p66, %p67
    %p69 = scmp.ne.s32.totalorder %s57, %s58
    %p70 = scmp.eq.s32.totalorder %s15, 3
    %p71 = por %p69, %p70
    %p73 = scmp.ne.s32.totalorder %s58, %s72
    %p74 = scmp.eq.s32.totalorder %s15, 0
    %p75 = por %p73, %p74
    %s77 = sadd.s32 %s76, 1
    %p80 = scmp.eq.s32.totalorder %s9, 3
    %p81 = scmp.ne.s32.totalorder %s76, %s78
    %p82 = scmp.eq.s32.totalorder %s9, 0
    %p83 = por %p81, %p82
    %p84 = scmp.ne.s32.totalorder %s76, %s78
    %p85 = scmp.eq.s32.totalorder %s14, 3
    %p86 = por %p84, %p85
    %p87 = scmp.ne.s32.totalorder %s78, %s79
    %p88 = scmp.eq.s32.totalorder %s14, 0
    %p89 = por %p87, %p88
    %p90 = scmp.ne.s32.totalorder %s78, %s79
    %p91 = scmp.eq.s32.totalorder %s15, 3
    %p92 = por %p90, %p91
    %p94 = scmp.ne.s32.totalorder %s79, %s93
    %p95 = scmp.eq.s32.totalorder %s15, 0
    %p96 = por %p94, %p95
    %s97 = ssub.s32 %s16, %s28
    %s98 = ssub.s32 %s17, %s24
    %s99 = sor.u32 %s97, %s98
    %p100 = scmp.eq.s32.totalorder %s99, 0
    %s102 = sadd.s32 %s101, 1
    %s103 = scalar_select %p100, %s101, %s102
    %p106 = pneg %p100
    %p107 = scmp.eq.s32.totalorder %s9, 3
    %p108 = por %p106, %p107
    %p109 = scmp.ne.s32.totalorder %s101, %s104
    %p110 = scmp.eq.s32.totalorder %s9, 0
    %p111 = por %p109, %p110
    %p112 = scmp.ne.s32.totalorder %s101, %s104
    %p113 = scmp.eq.s32.totalorder %s14, 3
    %p114 = por %p112, %p113
    %p115 = scmp.ne.s32.totalorder %s104, %s105
    %p116 = scmp.eq.s32.totalorder %s14, 0
    %p117 = por %p115, %p116
    %p118 = scmp.ne.s32.totalorder %s104, %s105
    %p119 = scmp.eq.s32.totalorder %s15, 3
    %p120 = por %p118, %p119
    %p122 = scmp.ne.s32.totalorder %s105, %s121
    %p123 = scmp.eq.s32.totalorder %s15, 0
    %p124 = por %p122, %p123
    %p125 = scmp.le.s32.totalorder 1, %s9
    %p126 = scmp.lt.s32.totalorder %s9, 5
    %p127 = pnand %p125, %p126
    %p128 = pneg %p127
    // Predicated region
    $region9: #{convolution3d_forward.4} parent=5 // pred_check
      _
    $region10: #{convolution3d_forward.4} parent=5 // pred_check_branch
      %130 = sbr.rel (%p127) target = $region12
    $region11: #{convolution3d_forward.4} parent=5 // pred_region
      %s131 = ssub.s32 %s9, 1
      // Predicated region
      $region13: #{convolution3d_forward.4} parent=11 // pred_check
        %p132 = pneg %p68
      $region14: #{convolution3d_forward.4} parent=11 // pred_check_branch
        %134 = sbr.rel (%p132) target = $region16
      $region15: #{convolution3d_forward.4} parent=11 // pred_region
        _
      $region16: #{convolution3d_forward.4} parent=11 // pred_fallthru
        _
      // Predicated region
      $region17: #{convolution3d_forward.4} parent=11 // pred_check
        %p135 = pneg %p89
      $region18: #{convolution3d_forward.4} parent=11 // pred_check_branch
        %137 = sbr.rel (%p135) target = $region20
      $region19: #{convolution3d_forward.4} parent=11 // pred_region
        _
      $region20: #{convolution3d_forward.4} parent=11 // pred_fallthru
        _
    $region12: #{convolution3d_forward.4} parent=5 // pred_fallthru
      _
    %p138 = scmp.lt.s32.totalorder %s9, 4
    // Predicated region
    $region21: #{convolution3d_forward.4} parent=5 // pred_check
      %p139 = pneg %p138
    $region22: #{convolution3d_forward.4} parent=5 // pred_check_branch
      %141 = sbr.rel (%p139) target = $region24
    $region23: #{convolution3d_forward.4} parent=5 // pred_region
      // Predicated region
      $region25: #{convolution3d_forward.4} parent=23 // pred_check
        %p142 = pneg %p41
      $region26: #{convolution3d_forward.4} parent=23 // pred_check_branch
        %144 = sbr.rel (%p142) target = $region28
      $region27: #{convolution3d_forward.4} parent=23 // pred_region
        %p145 = scmp.lt.s32.totalorder %s16, 1
        %s146 = scalar_select %p145, %s16, 1
        %s147 = smul.addr %s146, 192
        %s148 = smul.addr %s147, 4
        %s149 = scalar_lea.vmem %s0, %s148
      $region28: #{convolution3d_forward.4} parent=23 // pred_fallthru
        _
    $region24: #{convolution3d_forward.4} parent=5 // pred_fallthru
      _
    %p150 = scmp.le.s32.totalorder 1, %s9
    %p151 = scmp.lt.s32.totalorder %s9, 5
    %p152 = pnand %p150, %p151
    %p153 = pneg %p152
    // Predicated region
    $region29: #{convolution3d_forward.4} parent=5 // pred_check
      _
    $region30: #{convolution3d_forward.4} parent=5 // pred_check_branch
      %155 = sbr.rel (%p152) target = $region32
    $region31: #{convolution3d_forward.4} parent=5 // pred_region
      %s156 = ssub.s32 %s9, 1
      %p157 = scmp.lt.s32.totalorder %s18, 1
      %s158 = scalar_select %p157, %s18, 1
      %s159 = smul.addr %s158, 192
      %s160 = smul.addr %s159, 4
      %s161 = scalar_lea.vmem %s0, %s160
      %p162 = pneg %p47
      %p163 = pneg %p44
      %p164 = pneg %p68
      %p165 = pneg %p65
      %p166 = pneg %p89
      %p167 = pneg %p86
      %p168 = pneg %p117
      %p169 = pneg %p114
      %s170 = smul.u32 64, %s19
      %p171 = scmp.lt.s32.totalorder %s18, 1
      %s172 = scalar_select %p171, %s18, 1
      %p173 = scmp.lt.s32.totalorder %s170, 127
      %s174 = scalar_select %p173, %s170, 127
      %s175 = smul.addr %s172, 128
      %s176 = sadd.s32 %s174, %s175
      %s177 = smul.addr %s176, 4
      %s178 = scalar_lea.vmem %s3, %s177
      %p179 = scmp.lt.s32.totalorder %s18, 1
      %s180 = scalar_select %p179, %s18, 1
      %s181 = smul.addr %s180, 192
      %s182 = smul.addr %s181, 4
      %s183 = scalar_lea.vmem %s0, %s182
      %s184 = smul.u32 64, %s19
      %p185 = scmp.lt.s32.totalorder %s18, 1
      %s186 = scalar_select %p185, %s18, 1
      %p187 = scmp.lt.s32.totalorder %s184, 127
      %s188 = scalar_select %p187, %s184, 127
      %s189 = smul.addr %s186, 128
      %s190 = sadd.s32 %s188, %s189
      %s191 = smul.addr %s190, 4
      %s192 = scalar_lea.vmem %s3, %s191
      %s193 = smul.u32 64, %s19
      %s194 = smul.u32 %s19, 512
      %s195 = sshra.s32 %s194, 3
      %s196 = sand.u32 %s194, 7
      %s197 = smul.addr %s195, 4
      %s198 = scalar_lea.vmem %s183, %s197
      %v199 = vld [vmem:[%s198] sm:$0xf]
      %v200 = vld [vmem:[%s198 + $0x4] sm:$0xf]
      %v201 = vld [vmem:[%s198 + $0x8] sm:$0xf]
      %v202 = vld [vmem:[%s198 + $0xc] sm:$0xf]
      %v203 = vld [vmem:[%s198 + $0x10] sm:$0xf]
      %v204 = vld [vmem:[%s198 + $0x14] sm:$0xf]
      %v205 = vld [vmem:[%s198 + $0x18] sm:$0xf]
      %v206 = vld [vmem:[%s198 + $0x1c] sm:$0xf]
      %v207 = vld [vmem:[%s198 + $0x20] sm:$0xf]
      %v208 = vld [vmem:[%s198 + $0x24] sm:$0xf]
      %v209 = vld [vmem:[%s198 + $0x28] sm:$0xf]
      %v210 = vld [vmem:[%s198 + $0x2c] sm:$0xf]
      %v211 = vld [vmem:[%s198 + $0x30] sm:$0xf]
      %v212 = vld [vmem:[%s198 + $0x34] sm:$0xf]
      %v213 = vld [vmem:[%s198 + $0x38] sm:$0xf]
      %v214 = vld [vmem:[%s198 + $0x3c] sm:$0xf]
      %v215 = vld [vmem:[%s198 + $0x40] sm:$0xf]
      %v216 = vld [vmem:[%s198 + $0x44] sm:$0xf]
      %v217 = vld [vmem:[%s198 + $0x48] sm:$0xf]
      %v218 = vld [vmem:[%s198 + $0x4c] sm:$0xf]
      %v219 = vld [vmem:[%s198 + $0x50] sm:$0xf]
      %v220 = vld [vmem:[%s198 + $0x54] sm:$0xf]
      %v221 = vld [vmem:[%s198 + $0x58] sm:$0xf]
      %v222 = vld [vmem:[%s198 + $0x5c] sm:$0xf]
      %v223 = vld [vmem:[%s198 + $0x60] sm:$0xf]
      %v224 = vld [vmem:[%s198 + $0x64] sm:$0xf]
      %v225 = vld [vmem:[%s198 + $0x68] sm:$0xf]
      %v226 = vld [vmem:[%s198 + $0x6c] sm:$0xf]
      %v227 = vld [vmem:[%s198 + $0x70] sm:$0xf]
      %v228 = vld [vmem:[%s198 + $0x74] sm:$0xf]
      %v229 = vld [vmem:[%s198 + $0x78] sm:$0xf]
      %v230 = vld [vmem:[%s198 + $0x7c] sm:$0xf]
      %v231 = vld [vmem:[%s198 + $0x80] sm:$0xf]
      %v232 = vld [vmem:[%s198 + $0x84] sm:$0xf]
      %v233 = vld [vmem:[%s198 + $0x88] sm:$0xf]
      %v234 = vld [vmem:[%s198 + $0x8c] sm:$0xf]
      %v235 = vld [vmem:[%s198 + $0x90] sm:$0xf]
      %v236 = vld [vmem:[%s198 + $0x94] sm:$0xf]
      %v237 = vld [vmem:[%s198 + $0x98] sm:$0xf]
      %v238 = vld [vmem:[%s198 + $0x9c] sm:$0xf]
      %v239 = vld [vmem:[%s198 + $0xa0] sm:$0xf]
      %v240 = vld [vmem:[%s198 + $0xa4] sm:$0xf]
      %v241 = vld [vmem:[%s198 + $0xa8] sm:$0xf]
      %v242 = vld [vmem:[%s198 + $0xac] sm:$0xf]
      %v243 = vld [vmem:[%s198 + $0xb0] sm:$0xf]
      %v244 = vld [vmem:[%s198 + $0xb4] sm:$0xf]
      %v245 = vld [vmem:[%s198 + $0xb8] sm:$0xf]
      %v246 = vld [vmem:[%s198 + $0xbc] sm:$0xf]
      %v247 = vld [vmem:[%s198 + $0xc0] sm:$0xf]
      %v248 = vld [vmem:[%s198 + $0xc4] sm:$0xf]
      %v249 = vld [vmem:[%s198 + $0xc8] sm:$0xf]
      %v250 = vld [vmem:[%s198 + $0xcc] sm:$0xf]
      %v251 = vld [vmem:[%s198 + $0xd0] sm:$0xf]
      %v252 = vld [vmem:[%s198 + $0xd4] sm:$0xf]
      %v253 = vld [vmem:[%s198 + $0xd8] sm:$0xf]
      %v254 = vld [vmem:[%s198 + $0xdc] sm:$0xf]
      %v255 = vld [vmem:[%s198 + $0xe0] sm:$0xf]
      %v256 = vld [vmem:[%s198 + $0xe4] sm:$0xf]
      %v257 = vld [vmem:[%s198 + $0xe8] sm:$0xf]
      %v258 = vld [vmem:[%s198 + $0xec] sm:$0xf]
      %v259 = vld [vmem:[%s198 + $0xf0] sm:$0xf]
      %v260 = vld [vmem:[%s198 + $0xf4] sm:$0xf]
      %v261 = vld [vmem:[%s198 + $0xf8] sm:$0xf]
      %v262 = vld [vmem:[%s198 + $0xfc] sm:$0xf]
      %v263 = vld [vmem:[%s1] sm:$0xf]
      %v264 = vld [vmem:[%s1 + $0x4] sm:$0xf]
      %v265 = vld [vmem:[%s1 + $0x8] sm:$0xf]
      %v266 = vld [vmem:[%s1 + $0xc] sm:$0xf]
      %v267 = vld [vmem:[%s1 + $0x10] sm:$0xf]
      %v268 = vld [vmem:[%s1 + $0x14] sm:$0xf]
      %v269 = vld [vmem:[%s1 + $0x18] sm:$0xf]
      %v270 = vld [vmem:[%s1 + $0x1c] sm:$0xf]
      %v271 = vld [vmem:[%s1 + $0x20] sm:$0xf]
      %v272 = vld [vmem:[%s1 + $0x24] sm:$0xf]
      %v273 = vld [vmem:[%s1 + $0x28] sm:$0xf]
      %v274 = vld [vmem:[%s1 + $0x2c] sm:$0xf]
      %v275 = vld [vmem:[%s1 + $0x30] sm:$0xf]
      %v276 = vld [vmem:[%s1 + $0x34] sm:$0xf]
      %v277 = vld [vmem:[%s1 + $0x38] sm:$0xf]
      %v278 = vld [vmem:[%s1 + $0x3c] sm:$0xf]
      %v343 = vunpack.c.l.b16 %v199
      %v344 = vunpack.c.l.b16 %v200
      %v345 = vunpack.c.l.b16 %v201
      %v346 = vunpack.c.l.b16 %v202
      %v347 = vunpack.c.l.b16 %v203
      %v348 = vunpack.c.l.b16 %v204
      %v349 = vunpack.c.l.b16 %v205
      %v350 = vunpack.c.l.b16 %v206
      %v351 = vunpack.c.l.b16 %v207
      %v352 = vunpack.c.l.b16 %v208
      %v353 = vunpack.c.l.b16 %v209
      %v354 = vunpack.c.l.b16 %v210
      %v355 = vunpack.c.l.b16 %v211
      %v356 = vunpack.c.l.b16 %v212
      %v357 = vunpack.c.l.b16 %v213
      %v358 = vunpack.c.l.b16 %v214
      %v359 = vunpack.c.l.b16 %v215
      %v360 = vunpack.c.l.b16 %v216
      %v361 = vunpack.c.l.b16 %v217
      %v362 = vunpack.c.l.b16 %v218
      %v363 = vunpack.c.l.b16 %v219
      %v364 = vunpack.c.l.b16 %v220
      %v365 = vunpack.c.l.b16 %v221
      %v366 = vunpack.c.l.b16 %v222
      %v367 = vunpack.c.l.b16 %v223
      %v368 = vunpack.c.l.b16 %v224
      %v369 = vunpack.c.l.b16 %v225
      %v370 = vunpack.c.l.b16 %v226
      %v371 = vunpack.c.l.b16 %v227
      %v372 = vunpack.c.l.b16 %v228
      %v373 = vunpack.c.l.b16 %v229
      %v374 = vunpack.c.l.b16 %v230
      %v375 = vunpack.c.l.b16 %v231
      %v376 = vunpack.c.l.b16 %v232
      %v377 = vunpack.c.l.b16 %v233
      %v378 = vunpack.c.l.b16 %v234
      %v379 = vunpack.c.l.b16 %v235
      %v380 = vunpack.c.l.b16 %v236
      %v381 = vunpack.c.l.b16 %v237
      %v382 = vunpack.c.l.b16 %v238
      %v383 = vunpack.c.l.b16 %v239
      %v384 = vunpack.c.l.b16 %v240
      %v385 = vunpack.c.l.b16 %v241
      %v386 = vunpack.c.l.b16 %v242
      %v387 = vunpack.c.l.b16 %v243
      %v388 = vunpack.c.l.b16 %v244
      %v389 = vunpack.c.l.b16 %v245
      %v390 = vunpack.c.l.b16 %v246
      %v391 = vunpack.c.l.b16 %v247
      %v392 = vunpack.c.l.b16 %v248
      %v393 = vunpack.c.l.b16 %v249
      %v394 = vunpack.c.l.b16 %v250
      %v395 = vunpack.c.l.b16 %v251
      %v396 = vunpack.c.l.b16 %v252
      %v397 = vunpack.c.l.b16 %v253
      %v398 = vunpack.c.l.b16 %v254
      %v399 = vunpack.c.l.b16 %v255
      %v400 = vunpack.c.l.b16 %v256
      %v401 = vunpack.c.l.b16 %v257
      %v402 = vunpack.c.l.b16 %v258
      %v403 = vunpack.c.l.b16 %v259
      %v404 = vunpack.c.l.b16 %v260
      %v405 = vunpack.c.l.b16 %v261
      %v406 = vunpack.c.l.b16 %v262
      %v407 = vpack.c.b16 %v344, %v343
      %v408 = vpack.c.b16 %v346, %v345
      %v409 = vpack.c.b16 %v348, %v347
      %v410 = vpack.c.b16 %v350, %v349
      %v411 = vpack.c.b16 %v352, %v351
      %v412 = vpack.c.b16 %v354, %v353
      %v413 = vpack.c.b16 %v356, %v355
      %v414 = vpack.c.b16 %v358, %v357
      %v415 = vpack.c.b16 %v360, %v359
      %v416 = vpack.c.b16 %v362, %v361
      %v417 = vpack.c.b16 %v364, %v363
      %v418 = vpack.c.b16 %v366, %v365
      %v419 = vpack.c.b16 %v368, %v367
      %v420 = vpack.c.b16 %v370, %v369
      %v421 = vpack.c.b16 %v372, %v371
      %v422 = vpack.c.b16 %v374, %v373
      %v423 = vpack.c.b16 %v376, %v375
      %v424 = vpack.c.b16 %v378, %v377
      %v425 = vpack.c.b16 %v380, %v379
      %v426 = vpack.c.b16 %v382, %v381
      %v427 = vpack.c.b16 %v384, %v383
      %v428 = vpack.c.b16 %v386, %v385
      %v429 = vpack.c.b16 %v388, %v387
      %v430 = vpack.c.b16 %v390, %v389
      %v431 = vpack.c.b16 %v392, %v391
      %v432 = vpack.c.b16 %v394, %v393
      %v433 = vpack.c.b16 %v396, %v395
      %v434 = vpack.c.b16 %v398, %v397
      %v435 = vpack.c.b16 %v400, %v399
      %v436 = vpack.c.b16 %v402, %v401
      %v437 = vpack.c.b16 %v404, %v403
      %v438 = vpack.c.b16 %v406, %v405
      %v487 = vunpack.c.l.b16 %v263
      %v488 = vunpack.c.l.b16 %v264
      %v489 = vunpack.c.l.b16 %v265
      %v490 = vunpack.c.l.b16 %v266
      %v491 = vunpack.c.l.b16 %v267
      %v492 = vunpack.c.l.b16 %v268
      %v493 = vunpack.c.l.b16 %v269
      %v494 = vunpack.c.l.b16 %v270
      %v495 = vunpack.c.l.b16 %v271
      %v496 = vunpack.c.l.b16 %v272
      %v497 = vunpack.c.l.b16 %v273
      %v498 = vunpack.c.l.b16 %v274
      %v499 = vunpack.c.l.b16 %v275
      %v500 = vunpack.c.l.b16 %v276
      %v501 = vunpack.c.l.b16 %v277
      %v502 = vunpack.c.l.b16 %v278
      %v503 = vpack.c.b16 %v488, %v487
      %v504 = vpack.c.b16 %v490, %v489
      %v505 = vpack.c.b16 %v492, %v491
      %v506 = vpack.c.b16 %v494, %v493
      %v507 = vpack.c.b16 %v496, %v495
      %v508 = vpack.c.b16 %v498, %v497
      %v509 = vpack.c.b16 %v500, %v499
      %v510 = vpack.c.b16 %v502, %v501
      %519 = vmatpush.bf16.msra.mxu0 %v510
      %520 = vmatpush.bf16.msra.mxu0 %v509
      %521 = vmatpush.bf16.msra.mxu0 %v508
      %522 = vmatpush.bf16.msra.mxu0 %v507
      %523 = vmatpush.bf16.msra.mxu0 %v506
      %524 = vmatpush.bf16.msra.mxu0 %v505
      %525 = vmatpush.bf16.msra.mxu0 %v504
      %526 = vmatpush.bf16.msra.mxu0 %v503
      %527 = vmatmul.bf16.gmra.mxu0 %v407
      %v528 = vpop.f32.mrf.mxu0
      %v529 = vadd.f32 0.0, %v528
      %v530 = vpop.f32.mrf.mxu0
      %v531 = vadd.f32 0.0, %v530
      %532 = vmatmul.bf16.gmra.mxu0 %v408
      %v533 = vpop.f32.mrf.mxu0
      %v534 = vadd.f32 0.0, %v533
      %v535 = vpop.f32.mrf.mxu0
      %v536 = vadd.f32 0.0, %v535
      %537 = vmatmul.bf16.gmra.mxu0 %v409
      %v538 = vpop.f32.mrf.mxu0
      %v539 = vadd.f32 0.0, %v538
      %v540 = vpop.f32.mrf.mxu0
      %v541 = vadd.f32 0.0, %v540
      %542 = vmatmul.bf16.gmra.mxu0 %v410
      %v543 = vpop.f32.mrf.mxu0
      %v544 = vadd.f32 0.0, %v543
      %v545 = vpop.f32.mrf.mxu0
      %v546 = vadd.f32 0.0, %v545
      %547 = vmatmul.bf16.gmra.mxu0 %v411
      %v548 = vpop.f32.mrf.mxu0
      %v549 = vadd.f32 0.0, %v548
      %v550 = vpop.f32.mrf.mxu0
      %v551 = vadd.f32 0.0, %v550
      %552 = vmatmul.bf16.gmra.mxu0 %v412
      %v553 = vpop.f32.mrf.mxu0
      %v554 = vadd.f32 0.0, %v553
      %v555 = vpop.f32.mrf.mxu0
      %v556 = vadd.f32 0.0, %v555
      %557 = vmatmul.bf16.gmra.mxu0 %v413
      %v558 = vpop.f32.mrf.mxu0
      %v559 = vadd.f32 0.0, %v558
      %v560 = vpop.f32.mrf.mxu0
      %v561 = vadd.f32 0.0, %v560
      %562 = vmatmul.bf16.gmra.mxu0 %v414
      %v563 = vpop.f32.mrf.mxu0
      %v564 = vadd.f32 0.0, %v563
      %v565 = vpop.f32.mrf.mxu0
      %v566 = vadd.f32 0.0, %v565
      %567 = vmatmul.bf16.gmra.mxu0 %v415
      %v568 = vpop.f32.mrf.mxu0
      %v569 = vadd.f32 0.0, %v568
      %v570 = vpop.f32.mrf.mxu0
      %v571 = vadd.f32 0.0, %v570
      %572 = vmatmul.bf16.gmra.mxu0 %v416
      %v573 = vpop.f32.mrf.mxu0
      %v574 = vadd.f32 0.0, %v573
      %v575 = vpop.f32.mrf.mxu0
      %v576 = vadd.f32 0.0, %v575
      %577 = vmatmul.bf16.gmra.mxu0 %v417
      %v578 = vpop.f32.mrf.mxu0
      %v579 = vadd.f32 0.0, %v578
      %v580 = vpop.f32.mrf.mxu0
      %v581 = vadd.f32 0.0, %v580
      %582 = vmatmul.bf16.gmra.mxu0 %v418
      %v583 = vpop.f32.mrf.mxu0
      %v584 = vadd.f32 0.0, %v583
      %v585 = vpop.f32.mrf.mxu0
      %v586 = vadd.f32 0.0, %v585
      %587 = vmatmul.bf16.gmra.mxu0 %v419
      %v588 = vpop.f32.mrf.mxu0
      %v589 = vadd.f32 0.0, %v588
      %v590 = vpop.f32.mrf.mxu0
      %v591 = vadd.f32 0.0, %v590
      %592 = vmatmul.bf16.gmra.mxu0 %v420
      %v593 = vpop.f32.mrf.mxu0
      %v594 = vadd.f32 0.0, %v593
      %v595 = vpop.f32.mrf.mxu0
      %v596 = vadd.f32 0.0, %v595
      %597 = vmatmul.bf16.gmra.mxu0 %v421
      %v598 = vpop.f32.mrf.mxu0
      %v599 = vadd.f32 0.0, %v598
      %v600 = vpop.f32.mrf.mxu0
      %v601 = vadd.f32 0.0, %v600
      %602 = vmatmul.bf16.gmra.mxu0 %v422
      %v603 = vpop.f32.mrf.mxu0
      %v604 = vadd.f32 0.0, %v603
      %v605 = vpop.f32.mrf.mxu0
      %v606 = vadd.f32 0.0, %v605
      %607 = vmatmul.bf16.gmra.mxu0 %v423
      %v608 = vpop.f32.mrf.mxu0
      %v609 = vadd.f32 0.0, %v608
      %v610 = vpop.f32.mrf.mxu0
      %v611 = vadd.f32 0.0, %v610
      %612 = vmatmul.bf16.gmra.mxu0 %v424
      %v613 = vpop.f32.mrf.mxu0
      %v614 = vadd.f32 0.0, %v613
      %v615 = vpop.f32.mrf.mxu0
      %v616 = vadd.f32 0.0, %v615
      %617 = vmatmul.bf16.gmra.mxu0 %v425
      %v618 = vpop.f32.mrf.mxu0
      %v619 = vadd.f32 0.0, %v618
      %v620 = vpop.f32.mrf.mxu0
      %v621 = vadd.f32 0.0, %v620
      %622 = vmatmul.bf16.gmra.mxu0 %v426
      %v623 = vpop.f32.mrf.mxu0
      %v624 = vadd.f32 0.0, %v623
      %v625 = vpop.f32.mrf.mxu0
      %v626 = vadd.f32 0.0, %v625
      %627 = vmatmul.bf16.gmra.mxu0 %v427
      %v628 = vpop.f32.mrf.mxu0
      %v629 = vadd.f32 0.0, %v628
      %v630 = vpop.f32.mrf.mxu0
      %v631 = vadd.f32 0.0, %v630
      %632 = vmatmul.bf16.gmra.mxu0 %v428
      %v633 = vpop.f32.mrf.mxu0
      %v634 = vadd.f32 0.0, %v633
      %v635 = vpop.f32.mrf.mxu0
      %v636 = vadd.f32 0.0, %v635
      %637 = vmatmul.bf16.gmra.mxu0 %v429
      %v638 = vpop.f32.mrf.mxu0
      %v639 = vadd.f32 0.0, %v638
      %v640 = vpop.f32.mrf.mxu0
      %v641 = vadd.f32 0.0, %v640
      %642 = vmatmul.bf16.gmra.mxu0 %v430
      %v643 = vpop.f32.mrf.mxu0
      %v644 = vadd.f32 0.0, %v643
      %v645 = vpop.f32.mrf.mxu0
      %v646 = vadd.f32 0.0, %v645
      %647 = vmatmul.bf16.gmra.mxu0 %v431
      %v648 = vpop.f32.mrf.mxu0
      %v649 = vadd.f32 0.0, %v648
      %v650 = vpop.f32.mrf.mxu0
      %v651 = vadd.f32 0.0, %v650
      %652 = vmatmul.bf16.gmra.mxu0 %v432
      %v653 = vpop.f32.mrf.mxu0
      %v654 = vadd.f32 0.0, %v653
      %v655 = vpop.f32.mrf.mxu0
      %v656 = vadd.f32 0.0, %v655
      %657 = vmatmul.bf16.gmra.mxu0 %v433
      %v658 = vpop.f32.mrf.mxu0
      %v659 = vadd.f32 0.0, %v658
      %v660 = vpop.f32.mrf.mxu0
      %v661 = vadd.f32 0.0, %v660
      %662 = vmatmul.bf16.gmra.mxu0 %v434
      %v663 = vpop.f32.mrf.mxu0
      %v664 = vadd.f32 0.0, %v663
      %v665 = vpop.f32.mrf.mxu0
      %v666 = vadd.f32 0.0, %v665
      %667 = vmatmul.bf16.gmra.mxu0 %v435
      %v668 = vpop.f32.mrf.mxu0
      %v669 = vadd.f32 0.0, %v668
      %v670 = vpop.f32.mrf.mxu0
      %v671 = vadd.f32 0.0, %v670
      %672 = vmatmul.bf16.gmra.mxu0 %v436
      %v673 = vpop.f32.mrf.mxu0
      %v674 = vadd.f32 0.0, %v673
      %v675 = vpop.f32.mrf.mxu0
      %v676 = vadd.f32 0.0, %v675
      %677 = vmatmul.bf16.gmra.mxu0 %v437
      %v678 = vpop.f32.mrf.mxu0
      %v679 = vadd.f32 0.0, %v678
      %v680 = vpop.f32.mrf.mxu0
      %v681 = vadd.f32 0.0, %v680
      %682 = vmatmul.bf16.gmra.mxu0 %v438
      %v683 = vpop.f32.mrf.mxu0
      %v684 = vadd.f32 0.0, %v683
      %v685 = vpop.f32.mrf.mxu0
      %v686 = vadd.f32 0.0, %v685
      %687 = vdwg.mxu0
      %688 = vst [vmem:[#allocation2] sm:$0xff] %v529
      %689 = vst [vmem:[#allocation2 + $0x8] sm:$0xff] %v531
      %690 = vst [vmem:[#allocation2 + $0x10] sm:$0xff] %v534
      %691 = vst [vmem:[#allocation2 + $0x18] sm:$0xff] %v536
      %692 = vst [vmem:[#allocation2 + $0x20] sm:$0xff] %v539
      %693 = vst [vmem:[#allocation2 + $0x28] sm:$0xff] %v541
      %694 = vst [vmem:[#allocation2 + $0x30] sm:$0xff] %v544
      %695 = vst [vmem:[#allocation2 + $0x38] sm:$0xff] %v546
      %696 = vst [vmem:[#allocation2 + $0x40] sm:$0xff] %v549
      %697 = vst [vmem:[#allocation2 + $0x48] sm:$0xff] %v551
      %698 = vst [vmem:[#allocation2 + $0x50] sm:$0xff] %v554
      %699 = vst [vmem:[#allocation2 + $0x58] sm:$0xff] %v556
      %700 = vst [vmem:[#allocation2 + $0x60] sm:$0xff] %v559
      %701 = vst [vmem:[#allocation2 + $0x68] sm:$0xff] %v561
      %702 = vst [vmem:[#allocation2 + $0x70] sm:$0xff] %v564
      %703 = vst [vmem:[#allocation2 + $0x78] sm:$0xff] %v566
      %704 = vst [vmem:[#allocation2 + $0x80] sm:$0xff] %v569
      %705 = vst [vmem:[#allocation2 + $0x88] sm:$0xff] %v571
      %706 = vst [vmem:[#allocation2 + $0x90] sm:$0xff] %v574
      %707 = vst [vmem:[#allocation2 + $0x98] sm:$0xff] %v576
      %708 = vst [vmem:[#allocation2 + $0xa0] sm:$0xff] %v579
      %709 = vst [vmem:[#allocation2 + $0xa8] sm:$0xff] %v581
      %710 = vst [vmem:[#allocation2 + $0xb0] sm:$0xff] %v584
      %711 = vst [vmem:[#allocation2 + $0xb8] sm:$0xff] %v586
      %712 = vst [vmem:[#allocation2 + $0xc0] sm:$0xff] %v589
      %713 = vst [vmem:[#allocation2 + $0xc8] sm:$0xff] %v591
      %714 = vst [vmem:[#allocation2 + $0xd0] sm:$0xff] %v594
      %715 = vst [vmem:[#allocation2 + $0xd8] sm:$0xff] %v596
      %716 = vst [vmem:[#allocation2 + $0xe0] sm:$0xff] %v599
      %717 = vst [vmem:[#allocation2 + $0xe8] sm:$0xff] %v601
      %718 = vst [vmem:[#allocation2 + $0xf0] sm:$0xff] %v604
      %719 = vst [vmem:[#allocation2 + $0xf8] sm:$0xff] %v606
      %720 = vst [vmem:[#allocation2 + $0x100] sm:$0xff] %v609
      %721 = vst [vmem:[#allocation2 + $0x108] sm:$0xff] %v611
      %722 = vst [vmem:[#allocation2 + $0x110] sm:$0xff] %v614
      %723 = vst [vmem:[#allocation2 + $0x118] sm:$0xff] %v616
      %724 = vst [vmem:[#allocation2 + $0x120] sm:$0xff] %v619
      %725 = vst [vmem:[#allocation2 + $0x128] sm:$0xff] %v621
      %726 = vst [vmem:[#allocation2 + $0x130] sm:$0xff] %v624
      %727 = vst [vmem:[#allocation2 + $0x138] sm:$0xff] %v626
      %728 = vst [vmem:[#allocation2 + $0x140] sm:$0xff] %v629
      %729 = vst [vmem:[#allocation2 + $0x148] sm:$0xff] %v631
      %730 = vst [vmem:[#allocation2 + $0x150] sm:$0xff] %v634
      %731 = vst [vmem:[#allocation2 + $0x158] sm:$0xff] %v636
      %732 = vst [vmem:[#allocation2 + $0x160] sm:$0xff] %v639
      %733 = vst [vmem:[#allocation2 + $0x168] sm:$0xff] %v641
      %734 = vst [vmem:[#allocation2 + $0x170] sm:$0xff] %v644
      %735 = vst [vmem:[#allocation2 + $0x178] sm:$0xff] %v646
      %736 = vst [vmem:[#allocation2 + $0x180] sm:$0xff] %v649
      %737 = vst [vmem:[#allocation2 + $0x188] sm:$0xff] %v651
      %738 = vst [vmem:[#allocation2 + $0x190] sm:$0xff] %v654
      %739 = vst [vmem:[#allocation2 + $0x198] sm:$0xff] %v656
      %740 = vst [vmem:[#allocation2 + $0x1a0] sm:$0xff] %v659
      %741 = vst [vmem:[#allocation2 + $0x1a8] sm:$0xff] %v661
      %742 = vst [vmem:[#allocation2 + $0x1b0] sm:$0xff] %v664
      %743 = vst [vmem:[#allocation2 + $0x1b8] sm:$0xff] %v666
      %744 = vst [vmem:[#allocation2 + $0x1c0] sm:$0xff] %v669
      %745 = vst [vmem:[#allocation2 + $0x1c8] sm:$0xff] %v671
      %746 = vst [vmem:[#allocation2 + $0x1d0] sm:$0xff] %v674
      %747 = vst [vmem:[#allocation2 + $0x1d8] sm:$0xff] %v676
      %748 = vst [vmem:[#allocation2 + $0x1e0] sm:$0xff] %v679
      %749 = vst [vmem:[#allocation2 + $0x1e8] sm:$0xff] %v681
      %750 = vst [vmem:[#allocation2 + $0x1f0] sm:$0xff] %v684
      %751 = vst [vmem:[#allocation2 + $0x1f8] sm:$0xff] %v686
      %s752 = sadd.s32 %s194, 128
      %s753 = sshra.s32 %s752, 3
      %s754 = sand.u32 %s752, 7
      %s755 = smul.addr %s753, 4
      %s756 = scalar_lea.vmem %s183, %s755
      %v757 = vld [vmem:[%s756] sm:$0xf]
      %v758 = vld [vmem:[%s756 + $0x4] sm:$0xf]
      %v759 = vld [vmem:[%s756 + $0x8] sm:$0xf]
      %v760 = vld [vmem:[%s756 + $0xc] sm:$0xf]
      %v761 = vld [vmem:[%s756 + $0x10] sm:$0xf]
      %v762 = vld [vmem:[%s756 + $0x14] sm:$0xf]
      %v763 = vld [vmem:[%s756 + $0x18] sm:$0xf]
      %v764 = vld [vmem:[%s756 + $0x1c] sm:$0xf]
      %v765 = vld [vmem:[%s756 + $0x20] sm:$0xf]
      %v766 = vld [vmem:[%s756 + $0x24] sm:$0xf]
      %v767 = vld [vmem:[%s756 + $0x28] sm:$0xf]
      %v768 = vld [vmem:[%s756 + $0x2c] sm:$0xf]
      %v769 = vld [vmem:[%s756 + $0x30] sm:$0xf]
      %v770 = vld [vmem:[%s756 + $0x34] sm:$0xf]
      %v771 = vld [vmem:[%s756 + $0x38] sm:$0xf]
      %v772 = vld [vmem:[%s756 + $0x3c] sm:$0xf]
      %v773 = vld [vmem:[%s756 + $0x40] sm:$0xf]
      %v774 = vld [vmem:[%s756 + $0x44] sm:$0xf]
      %v775 = vld [vmem:[%s756 + $0x48] sm:$0xf]
      %v776 = vld [vmem:[%s756 + $0x4c] sm:$0xf]
      %v777 = vld [vmem:[%s756 + $0x50] sm:$0xf]
      %v778 = vld [vmem:[%s756 + $0x54] sm:$0xf]
      %v779 = vld [vmem:[%s756 + $0x58] sm:$0xf]
      %v780 = vld [vmem:[%s756 + $0x5c] sm:$0xf]
      %v781 = vld [vmem:[%s756 + $0x60] sm:$0xf]
      %v782 = vld [vmem:[%s756 + $0x64] sm:$0xf]
      %v783 = vld [vmem:[%s756 + $0x68] sm:$0xf]
      %v784 = vld [vmem:[%s756 + $0x6c] sm:$0xf]
      %v785 = vld [vmem:[%s756 + $0x70] sm:$0xf]
      %v786 = vld [vmem:[%s756 + $0x74] sm:$0xf]
      %v787 = vld [vmem:[%s756 + $0x78] sm:$0xf]
      %v788 = vld [vmem:[%s756 + $0x7c] sm:$0xf]
      %v789 = vld [vmem:[%s756 + $0x80] sm:$0xf]
      %v790 = vld [vmem:[%s756 + $0x84] sm:$0xf]
      %v791 = vld [vmem:[%s756 + $0x88] sm:$0xf]
      %v792 = vld [vmem:[%s756 + $0x8c] sm:$0xf]
      %v793 = vld [vmem:[%s756 + $0x90] sm:$0xf]
      %v794 = vld [vmem:[%s756 + $0x94] sm:$0xf]
      %v795 = vld [vmem:[%s756 + $0x98] sm:$0xf]
      %v796 = vld [vmem:[%s756 + $0x9c] sm:$0xf]
      %v797 = vld [vmem:[%s756 + $0xa0] sm:$0xf]
      %v798 = vld [vmem:[%s756 + $0xa4] sm:$0xf]
      %v799 = vld [vmem:[%s756 + $0xa8] sm:$0xf]
      %v800 = vld [vmem:[%s756 + $0xac] sm:$0xf]
      %v801 = vld [vmem:[%s756 + $0xb0] sm:$0xf]
      %v802 = vld [vmem:[%s756 + $0xb4] sm:$0xf]
      %v803 = vld [vmem:[%s756 + $0xb8] sm:$0xf]
      %v804 = vld [vmem:[%s756 + $0xbc] sm:$0xf]
      %v805 = vld [vmem:[%s756 + $0xc0] sm:$0xf]
      %v806 = vld [vmem:[%s756 + $0xc4] sm:$0xf]
      %v807 = vld [vmem:[%s756 + $0xc8] sm:$0xf]
      %v808 = vld [vmem:[%s756 + $0xcc] sm:$0xf]
      %v809 = vld [vmem:[%s756 + $0xd0] sm:$0xf]
      %v810 = vld [vmem:[%s756 + $0xd4] sm:$0xf]
      %v811 = vld [vmem:[%s756 + $0xd8] sm:$0xf]
      %v812 = vld [vmem:[%s756 + $0xdc] sm:$0xf]
      %v813 = vld [vmem:[%s756 + $0xe0] sm:$0xf]
      %v814 = vld [vmem:[%s756 + $0xe4] sm:$0xf]
      %v815 = vld [vmem:[%s756 + $0xe8] sm:$0xf]
      %v816 = vld [vmem:[%s756 + $0xec] sm:$0xf]
      %v817 = vld [vmem:[%s756 + $0xf0] sm:$0xf]
      %v818 = vld [vmem:[%s756 + $0xf4] sm:$0xf]
      %v819 = vld [vmem:[%s756 + $0xf8] sm:$0xf]
      %v820 = vld [vmem:[%s756 + $0xfc] sm:$0xf]
      %s821 = scalar_lea.vmem %s1, 64
      %v822 = vld [vmem:[%s821] sm:$0xf]
      %v823 = vld [vmem:[%s821 + $0x4] sm:$0xf]
      %v824 = vld [vmem:[%s821 + $0x8] sm:$0xf]
      %v825 = vld [vmem:[%s821 + $0xc] sm:$0xf]
      %v826 = vld [vmem:[%s821 + $0x10] sm:$0xf]
      %v827 = vld [vmem:[%s821 + $0x14] sm:$0xf]
      %v828 = vld [vmem:[%s821 + $0x18] sm:$0xf]
      %v829 = vld [vmem:[%s821 + $0x1c] sm:$0xf]
      %v830 = vld [vmem:[%s821 + $0x20] sm:$0xf]
      %v831 = vld [vmem:[%s821 + $0x24] sm:$0xf]
      %v832 = vld [vmem:[%s821 + $0x28] sm:$0xf]
      %v833 = vld [vmem:[%s821 + $0x2c] sm:$0xf]
      %v834 = vld [vmem:[%s821 + $0x30] sm:$0xf]
      %v835 = vld [vmem:[%s821 + $0x34] sm:$0xf]
      %v836 = vld [vmem:[%s821 + $0x38] sm:$0xf]
      %v837 = vld [vmem:[%s821 + $0x3c] sm:$0xf]
      %v902 = vunpack.c.l.b16 %v757
      %v903 = vunpack.c.l.b16 %v758
      %v904 = vunpack.c.l.b16 %v759
      %v905 = vunpack.c.l.b16 %v760
      %v906 = vunpack.c.l.b16 %v761
      %v907 = vunpack.c.l.b16 %v762
      %v908 = vunpack.c.l.b16 %v763
      %v909 = vunpack.c.l.b16 %v764
      %v910 = vunpack.c.l.b16 %v765
      %v911 = vunpack.c.l.b16 %v766
      %v912 = vunpack.c.l.b16 %v767
      %v913 = vunpack.c.l.b16 %v768
      %v914 = vunpack.c.l.b16 %v769
      %v915 = vunpack.c.l.b16 %v770
      %v916 = vunpack.c.l.b16 %v771
      %v917 = vunpack.c.l.b16 %v772
      %v918 = vunpack.c.l.b16 %v773
      %v919 = vunpack.c.l.b16 %v774
      %v920 = vunpack.c.l.b16 %v775
      %v921 = vunpack.c.l.b16 %v776
      %v922 = vunpack.c.l.b16 %v777
      %v923 = vunpack.c.l.b16 %v778
      %v924 = vunpack.c.l.b16 %v779
      %v925 = vunpack.c.l.b16 %v780
      %v926 = vunpack.c.l.b16 %v781
      %v927 = vunpack.c.l.b16 %v782
      %v928 = vunpack.c.l.b16 %v783
      %v929 = vunpack.c.l.b16 %v784
      %v930 = vunpack.c.l.b16 %v785
      %v931 = vunpack.c.l.b16 %v786
      %v932 = vunpack.c.l.b16 %v787
      %v933 = vunpack.c.l.b16 %v788
      %v934 = vunpack.c.l.b16 %v789
      %v935 = vunpack.c.l.b16 %v790
      %v936 = vunpack.c.l.b16 %v791
      %v937 = vunpack.c.l.b16 %v792
      %v938 = vunpack.c.l.b16 %v793
      %v939 = vunpack.c.l.b16 %v794
      %v940 = vunpack.c.l.b16 %v795
      %v941 = vunpack.c.l.b16 %v796
      %v942 = vunpack.c.l.b16 %v797
      %v943 = vunpack.c.l.b16 %v798
      %v944 = vunpack.c.l.b16 %v799
      %v945 = vunpack.c.l.b16 %v800
      %v946 = vunpack.c.l.b16 %v801
      %v947 = vunpack.c.l.b16 %v802
      %v948 = vunpack.c.l.b16 %v803
      %v949 = vunpack.c.l.b16 %v804
      %v950 = vunpack.c.l.b16 %v805
      %v951 = vunpack.c.l.b16 %v806
      %v952 = vunpack.c.l.b16 %v807
      %v953 = vunpack.c.l.b16 %v808
      %v954 = vunpack.c.l.b16 %v809
      %v955 = vunpack.c.l.b16 %v810
      %v956 = vunpack.c.l.b16 %v811
      %v957 = vunpack.c.l.b16 %v812
      %v958 = vunpack.c.l.b16 %v813
      %v959 = vunpack.c.l.b16 %v814
      %v960 = vunpack.c.l.b16 %v815
      %v961 = vunpack.c.l.b16 %v816
      %v962 = vunpack.c.l.b16 %v817
      %v963 = vunpack.c.l.b16 %v818
      %v964 = vunpack.c.l.b16 %v819
      %v965 = vunpack.c.l.b16 %v820
      %v966 = vpack.c.b16 %v903, %v902
      %v967 = vpack.c.b16 %v905, %v904
      %v968 = vpack.c.b16 %v907, %v906
      %v969 = vpack.c.b16 %v909, %v908
      %v970 = vpack.c.b16 %v911, %v910
      %v971 = vpack.c.b16 %v913, %v912
      %v972 = vpack.c.b16 %v915, %v914
      %v973 = vpack.c.b16 %v917, %v916
      %v974 = vpack.c.b16 %v919, %v918
      %v975 = vpack.c.b16 %v921, %v920
      %v976 = vpack.c.b16 %v923, %v922
      %v977 = vpack.c.b16 %v925, %v924
      %v978 = vpack.c.b16 %v927, %v926
      %v979 = vpack.c.b16 %v929, %v928
      %v980 = vpack.c.b16 %v931, %v930
      %v981 = vpack.c.b16 %v933, %v932
      %v982 = vpack.c.b16 %v935, %v934
      %v983 = vpack.c.b16 %v937, %v936
      %v984 = vpack.c.b16 %v939, %v938
      %v985 = vpack.c.b16 %v941, %v940
      %v986 = vpack.c.b16 %v943, %v942
      %v987 = vpack.c.b16 %v945, %v944
      %v988 = vpack.c.b16 %v947, %v946
      %v989 = vpack.c.b16 %v949, %v948
      %v990 = vpack.c.b16 %v951, %v950
      %v991 = vpack.c.b16 %v953, %v952
      %v992 = vpack.c.b16 %v955, %v954
      %v993 = vpack.c.b16 %v957, %v956
      %v994 = vpack.c.b16 %v959, %v958
      %v995 = vpack.c.b16 %v961, %v960
      %v996 = vpack.c.b16 %v963, %v962
      %v997 = vpack.c.b16 %v965, %v964
      %v1046 = vunpack.c.l.b16 %v822
      %v1047 = vunpack.c.l.b16 %v823
      %v1048 = vunpack.c.l.b16 %v824
      %v1049 = vunpack.c.l.b16 %v825
      %v1050 = vunpack.c.l.b16 %v826
      %v1051 = vunpack.c.l.b16 %v827
      %v1052 = vunpack.c.l.b16 %v828
      %v1053 = vunpack.c.l.b16 %v829
      %v1054 = vunpack.c.l.b16 %v830
      %v1055 = vunpack.c.l.b16 %v831
      %v1056 = vunpack.c.l.b16 %v832
      %v1057 = vunpack.c.l.b16 %v833
      %v1058 = vunpack.c.l.b16 %v834
      %v1059 = vunpack.c.l.b16 %v835
      %v1060 = vunpack.c.l.b16 %v836
      %v1061 = vunpack.c.l.b16 %v837
      %v1062 = vpack.c.b16 %v1047, %v1046
      %v1063 = vpack.c.b16 %v1049, %v1048
      %v1064 = vpack.c.b16 %v1051, %v1050
      %v1065 = vpack.c.b16 %v1053, %v1052
      %v1066 = vpack.c.b16 %v1055, %v1054
      %v1067 = vpack.c.b16 %v1057, %v1056
      %v1068 = vpack.c.b16 %v1059, %v1058
      %v1069 = vpack.c.b16 %v1061, %v1060
      %1078 = vmatpush.bf16.msra.mxu0 %v1069
      %1079 = vmatpush.bf16.msra.mxu0 %v1068
      %1080 = vmatpush.bf16.msra.mxu0 %v1067
      %1081 = vmatpush.bf16.msra.mxu0 %v1066
      %1082 = vmatpush.bf16.msra.mxu0 %v1065
      %1083 = vmatpush.bf16.msra.mxu0 %v1064
      %1084 = vmatpush.bf16.msra.mxu0 %v1063
      %1085 = vmatpush.bf16.msra.mxu0 %v1062
      %1086 = vmatmul.bf16.gmra.mxu0 %v966
      %v1087 = vpop.f32.mrf.mxu0
      %v1088 = vadd.f32 0.0, %v1087
      %v1089 = vpop.f32.mrf.mxu0
      %v1090 = vadd.f32 0.0, %v1089
      %1091 = vmatmul.bf16.gmra.mxu0 %v967
      %v1092 = vpop.f32.mrf.mxu0
      %v1093 = vadd.f32 0.0, %v1092
      %v1094 = vpop.f32.mrf.mxu0
      %v1095 = vadd.f32 0.0, %v1094
      %1096 = vmatmul.bf16.gmra.mxu0 %v968
      %v1097 = vpop.f32.mrf.mxu0
      %v1098 = vadd.f32 0.0, %v1097
      %v1099 = vpop.f32.mrf.mxu0
      %v1100 = vadd.f32 0.0, %v1099
      %1101 = vmatmul.bf16.gmra.mxu0 %v969
      %v1102 = vpop.f32.mrf.mxu0
      %v1103 = vadd.f32 0.0, %v1102
      %v1104 = vpop.f32.mrf.mxu0
      %v1105 = vadd.f32 0.0, %v1104
      %1106 = vmatmul.bf16.gmra.mxu0 %v970
      %v1107 = vpop.f32.mrf.mxu0
      %v1108 = vadd.f32 0.0, %v1107
      %v1109 = vpop.f32.mrf.mxu0
      %v1110 = vadd.f32 0.0, %v1109
      %1111 = vmatmul.bf16.gmra.mxu0 %v971
      %v1112 = vpop.f32.mrf.mxu0
      %v1113 = vadd.f32 0.0, %v1112
      %v1114 = vpop.f32.mrf.mxu0
      %v1115 = vadd.f32 0.0, %v1114
      %1116 = vmatmul.bf16.gmra.mxu0 %v972
      %v1117 = vpop.f32.mrf.mxu0
      %v1118 = vadd.f32 0.0, %v1117
      %v1119 = vpop.f32.mrf.mxu0
      %v1120 = vadd.f32 0.0, %v1119
      %1121 = vmatmul.bf16.gmra.mxu0 %v973
      %v1122 = vpop.f32.mrf.mxu0
      %v1123 = vadd.f32 0.0, %v1122
      %v1124 = vpop.f32.mrf.mxu0
      %v1125 = vadd.f32 0.0, %v1124
      %1126 = vmatmul.bf16.gmra.mxu0 %v974
      %v1127 = vpop.f32.mrf.mxu0
      %v1128 = vadd.f32 0.0, %v1127
      %v1129 = vpop.f32.mrf.mxu0
      %v1130 = vadd.f32 0.0, %v1129
      %1131 = vmatmul.bf16.gmra.mxu0 %v975
      %v1132 = vpop.f32.mrf.mxu0
      %v1133 = vadd.f32 0.0, %v1132
      %v1134 = vpop.f32.mrf.mxu0
      %v1135 = vadd.f32 0.0, %v1134
      %1136 = vmatmul.bf16.gmra.mxu0 %v976
      %v1137 = vpop.f32.mrf.mxu0
      %v1138 = vadd.f32 0.0, %v1137
      %v1139 = vpop.f32.mrf.mxu0
      %v1140 = vadd.f32 0.0, %v1139
      %1141 = vmatmul.bf16.gmra.mxu0 %v977
      %v1142 = vpop.f32.mrf.mxu0
      %v1143 = vadd.f32 0.0, %v1142
      %v1144 = vpop.f32.mrf.mxu0
      %v1145 = vadd.f32 0.0, %v1144
      %1146 = vmatmul.bf16.gmra.mxu0 %v978
      %v1147 = vpop.f32.mrf.mxu0
      %v1148 = vadd.f32 0.0, %v1147
      %v1149 = vpop.f32.mrf.mxu0
      %v1150 = vadd.f32 0.0, %v1149
      %1151 = vmatmul.bf16.gmra.mxu0 %v979
      %v1152 = vpop.f32.mrf.mxu0
      %v1153 = vadd.f32 0.0, %v1152
      %v1154 = vpop.f32.mrf.mxu0
      %v1155 = vadd.f32 0.0, %v1154
      %1156 = vmatmul.bf16.gmra.mxu0 %v980
      %v1157 = vpop.f32.mrf.mxu0
      %v1158 = vadd.f32 0.0, %v1157
      %v1159 = vpop.f32.mrf.mxu0
      %v1160 = vadd.f32 0.0, %v1159
      %1161 = vmatmul.bf16.gmra.mxu0 %v981
      %v1162 = vpop.f32.mrf.mxu0
      %v1163 = vadd.f32 0.0, %v1162
      %v1164 = vpop.f32.mrf.mxu0
      %v1165 = vadd.f32 0.0, %v1164
      %1166 = vmatmul.bf16.gmra.mxu0 %v982
      %v1167 = vpop.f32.mrf.mxu0
      %v1168 = vadd.f32 0.0, %v1167
      %v1169 = vpop.f32.mrf.mxu0
      %v1170 = vadd.f32 0.0, %v1169
      %1171 = vmatmul.bf16.gmra.mxu0 %v983
      %v1172 = vpop.f32.mrf.mxu0
      %v1173 = vadd.f32 0.0, %v1172
      %v1174 = vpop.f32.mrf.mxu0
      %v1175 = vadd.f32 0.0, %v1174
      %1176 = vmatmul.bf16.gmra.mxu0 %v984
      %v1177 = vpop.f32.mrf.mxu0
      %v1178 = vadd.f32 0.0, %v1177
      %v1179 = vpop.f32.mrf.mxu0
      %v1180 = vadd.f32 0.0, %v1179
      %1181 = vmatmul.bf16.gmra.mxu0 %v985
      %v1182 = vpop.f32.mrf.mxu0
      %v1183 = vadd.f32 0.0, %v1182
      %v1184 = vpop.f32.mrf.mxu0
      %v1185 = vadd.f32 0.0, %v1184
      %1186 = vmatmul.bf16.gmra.mxu0 %v986
      %v1187 = vpop.f32.mrf.mxu0
      %v1188 = vadd.f32 0.0, %v1187
      %v1189 = vpop.f32.mrf.mxu0
      %v1190 = vadd.f32 0.0, %v1189
      %1191 = vmatmul.bf16.gmra.mxu0 %v987
      %v1192 = vpop.f32.mrf.mxu0
      %v1193 = vadd.f32 0.0, %v1192
      %v1194 = vpop.f32.mrf.mxu0
      %v1195 = vadd.f32 0.0, %v1194
      %1196 = vmatmul.bf16.gmra.mxu0 %v988
      %v1197 = vpop.f32.mrf.mxu0
      %v1198 = vadd.f32 0.0, %v1197
      %v1199 = vpop.f32.mrf.mxu0
      %v1200 = vadd.f32 0.0, %v1199
      %1201 = vmatmul.bf16.gmra.mxu0 %v989
      %v1202 = vpop.f32.mrf.mxu0
      %v1203 = vadd.f32 0.0, %v1202
      %v1204 = vpop.f32.mrf.mxu0
      %v1205 = vadd.f32 0.0, %v1204
      %1206 = vmatmul.bf16.gmra.mxu0 %v990
      %v1207 = vpop.f32.mrf.mxu0
      %v1208 = vadd.f32 0.0, %v1207
      %v1209 = vpop.f32.mrf.mxu0
      %v1210 = vadd.f32 0.0, %v1209
      %1211 = vmatmul.bf16.gmra.mxu0 %v991
      %v1212 = vpop.f32.mrf.mxu0
      %v1213 = vadd.f32 0.0, %v1212
      %v1214 = vpop.f32.mrf.mxu0
      %v1215 = vadd.f32 0.0, %v1214
      %1216 = vmatmul.bf16.gmra.mxu0 %v992
      %v1217 = vpop.f32.mrf.mxu0
      %v1218 = vadd.f32 0.0, %v1217
      %v1219 = vpop.f32.mrf.mxu0
      %v1220 = vadd.f32 0.0, %v1219
      %1221 = vmatmul.bf16.gmra.mxu0 %v993
      %v1222 = vpop.f32.mrf.mxu0
      %v1223 = vadd.f32 0.0, %v1222
      %v1224 = vpop.f32.mrf.mxu0
      %v1225 = vadd.f32 0.0, %v1224
      %1226 = vmatmul.bf16.gmra.mxu0 %v994
      %v1227 = vpop.f32.mrf.mxu0
      %v1228 = vadd.f32 0.0, %v1227
      %v1229 = vpop.f32.mrf.mxu0
      %v1230 = vadd.f32 0.0, %v1229
      %1231 = vmatmul.bf16.gmra.mxu0 %v995
      %v1232 = vpop.f32.mrf.mxu0
      %v1233 = vadd.f32 0.0, %v1232
      %v1234 = vpop.f32.mrf.mxu0
      %v1235 = vadd.f32 0.0, %v1234
      %1236 = vmatmul.bf16.gmra.mxu0 %v996
      %v1237 = vpop.f32.mrf.mxu0
      %v1238 = vadd.f32 0.0, %v1237
      %v1239 = vpop.f32.mrf.mxu0
      %v1240 = vadd.f32 0.0, %v1239
      %1241 = vmatmul.bf16.gmra.mxu0 %v997
      %v1242 = vpop.f32.mrf.mxu0
      %v1243 = vadd.f32 0.0, %v1242
      %v1244 = vpop.f32.mrf.mxu0
      %v1245 = vadd.f32 0.0, %v1244
      %1246 = vdwg.mxu0
      %v1247 = vld [vmem:[#allocation2] sm:$0xff]
      %v1248 = vld [vmem:[#allocation2 + $0x8] sm:$0xff]
      %v1249 = vld [vmem:[#allocation2 + $0x10] sm:$0xff]
      %v1250 = vld [vmem:[#allocation2 + $0x18] sm:$0xff]
      %v1251 = vld [vmem:[#allocation2 + $0x20] sm:$0xff]
      %v1252 = vld [vmem:[#allocation2 + $0x28] sm:$0xff]
      %v1253 = vld [vmem:[#allocation2 + $0x30] sm:$0xff]
      %v1254 = vld [vmem:[#allocation2 + $0x38] sm:$0xff]
      %v1255 = vld [vmem:[#allocation2 + $0x40] sm:$0xff]
      %v1256 = vld [vmem:[#allocation2 + $0x48] sm:$0xff]
      %v1257 = vld [vmem:[#allocation2 + $0x50] sm:$0xff]
      %v1258 = vld [vmem:[#allocation2 + $0x58] sm:$0xff]
      %v1259 = vld [vmem:[#allocation2 + $0x60] sm:$0xff]
      %v1260 = vld [vmem:[#allocation2 + $0x68] sm:$0xff]
      %v1261 = vld [vmem:[#allocation2 + $0x70] sm:$0xff]
      %v1262 = vld [vmem:[#allocation2 + $0x78] sm:$0xff]
      %v1263 = vld [vmem:[#allocation2 + $0x80] sm:$0xff]
      %v1264 = vld [vmem:[#allocation2 + $0x88] sm:$0xff]
      %v1265 = vld [vmem:[#allocation2 + $0x90] sm:$0xff]
      %v1266 = vld [vmem:[#allocation2 + $0x98] sm:$0xff]
      %v1267 = vld [vmem:[#allocation2 + $0xa0] sm:$0xff]
      %v1268 = vld [vmem:[#allocation2 + $0xa8] sm:$0xff]
      %v1269 = vld [vmem:[#allocation2 + $0xb0] sm:$0xff]
      %v1270 = vld [vmem:[#allocation2 + $0xb8] sm:$0xff]
      %v1271 = vld [vmem:[#allocation2 + $0xc0] sm:$0xff]
      %v1272 = vld [vmem:[#allocation2 + $0xc8] sm:$0xff]
      %v1273 = vld [vmem:[#allocation2 + $0xd0] sm:$0xff]
      %v1274 = vld [vmem:[#allocation2 + $0xd8] sm:$0xff]
      %v1275 = vld [vmem:[#allocation2 + $0xe0] sm:$0xff]
      %v1276 = vld [vmem:[#allocation2 + $0xe8] sm:$0xff]
      %v1277 = vld [vmem:[#allocation2 + $0xf0] sm:$0xff]
      %v1278 = vld [vmem:[#allocation2 + $0xf8] sm:$0xff]
      %v1279 = vld [vmem:[#allocation2 + $0x100] sm:$0xff]
      %v1280 = vld [vmem:[#allocation2 + $0x108] sm:$0xff]
      %v1281 = vld [vmem:[#allocation2 + $0x110] sm:$0xff]
      %v1282 = vld [vmem:[#allocation2 + $0x118] sm:$0xff]
      %v1283 = vld [vmem:[#allocation2 + $0x120] sm:$0xff]
      %v1284 = vld [vmem:[#allocation2 + $0x128] sm:$0xff]
      %v1285 = vld [vmem:[#allocation2 + $0x130] sm:$0xff]
      %v1286 = vld [vmem:[#allocation2 + $0x138] sm:$0xff]
      %v1287 = vld [vmem:[#allocation2 + $0x140] sm:$0xff]
      %v1288 = vld [vmem:[#allocation2 + $0x148] sm:$0xff]
      %v1289 = vld [vmem:[#allocation2 + $0x150] sm:$0xff]
      %v1290 = vld [vmem:[#allocation2 + $0x158] sm:$0xff]
      %v1291 = vld [vmem:[#allocation2 + $0x160] sm:$0xff]
      %v1292 = vld [vmem:[#allocation2 + $0x168] sm:$0xff]
      %v1293 = vld [vmem:[#allocation2 + $0x170] sm:$0xff]
      %v1294 = vld [vmem:[#allocation2 + $0x178] sm:$0xff]
      %v1295 = vld [vmem:[#allocation2 + $0x180] sm:$0xff]
      %v1296 = vld [vmem:[#allocation2 + $0x188] sm:$0xff]
      %v1297 = vld [vmem:[#allocation2 + $0x190] sm:$0xff]
      %v1298 = vld [vmem:[#allocation2 + $0x198] sm:$0xff]
      %v1299 = vld [vmem:[#allocation2 + $0x1a0] sm:$0xff]
      %v1300 = vld [vmem:[#allocation2 + $0x1a8] sm:$0xff]
      %v1301 = vld [vmem:[#allocation2 + $0x1b0] sm:$0xff]
      %v1302 = vld [vmem:[#allocation2 + $0x1b8] sm:$0xff]
      %v1303 = vld [vmem:[#allocation2 + $0x1c0] sm:$0xff]
      %v1304 = vld [vmem:[#allocation2 + $0x1c8] sm:$0xff]
      %v1305 = vld [vmem:[#allocation2 + $0x1d0] sm:$0xff]
      %v1306 = vld [vmem:[#allocation2 + $0x1d8] sm:$0xff]
      %v1307 = vld [vmem:[#allocation2 + $0x1e0] sm:$0xff]
      %v1308 = vld [vmem:[#allocation2 + $0x1e8] sm:$0xff]
      %v1309 = vld [vmem:[#allocation2 + $0x1f0] sm:$0xff]
      %v1310 = vld [vmem:[#allocation2 + $0x1f8] sm:$0xff]
      %v1311 = vadd.f32 %v1247, %v1088
      %v1312 = vadd.f32 %v1248, %v1090
      %v1313 = vadd.f32 %v1249, %v1093
      %v1314 = vadd.f32 %v1250, %v1095
      %v1315 = vadd.f32 %v1251, %v1098
      %v1316 = vadd.f32 %v1252, %v1100
      %v1317 = vadd.f32 %v1253, %v1103
      %v1318 = vadd.f32 %v1254, %v1105
      %v1319 = vadd.f32 %v1255, %v1108
      %v1320 = vadd.f32 %v1256, %v1110
      %v1321 = vadd.f32 %v1257, %v1113
      %v1322 = vadd.f32 %v1258, %v1115
      %v1323 = vadd.f32 %v1259, %v1118
      %v1324 = vadd.f32 %v1260, %v1120
      %v1325 = vadd.f32 %v1261, %v1123
      %v1326 = vadd.f32 %v1262, %v1125
      %v1327 = vadd.f32 %v1263, %v1128
      %v1328 = vadd.f32 %v1264, %v1130
      %v1329 = vadd.f32 %v1265, %v1133
      %v1330 = vadd.f32 %v1266, %v1135
      %v1331 = vadd.f32 %v1267, %v1138
      %v1332 = vadd.f32 %v1268, %v1140
      %v1333 = vadd.f32 %v1269, %v1143
      %v1334 = vadd.f32 %v1270, %v1145
      %v1335 = vadd.f32 %v1271, %v1148
      %v1336 = vadd.f32 %v1272, %v1150
      %v1337 = vadd.f32 %v1273, %v1153
      %v1338 = vadd.f32 %v1274, %v1155
      %v1339 = vadd.f32 %v1275, %v1158
      %v1340 = vadd.f32 %v1276, %v1160
      %v1341 = vadd.f32 %v1277, %v1163
      %v1342 = vadd.f32 %v1278, %v1165
      %v1343 = vadd.f32 %v1279, %v1168
      %v1344 = vadd.f32 %v1280, %v1170
      %v1345 = vadd.f32 %v1281, %v1173
      %v1346 = vadd.f32 %v1282, %v1175
      %v1347 = vadd.f32 %v1283, %v1178
      %v1348 = vadd.f32 %v1284, %v1180
      %v1349 = vadd.f32 %v1285, %v1183
      %v1350 = vadd.f32 %v1286, %v1185
      %v1351 = vadd.f32 %v1287, %v1188
      %v1352 = vadd.f32 %v1288, %v1190
      %v1353 = vadd.f32 %v1289, %v1193
      %v1354 = vadd.f32 %v1290, %v1195
      %v1355 = vadd.f32 %v1291, %v1198
      %v1356 = vadd.f32 %v1292, %v1200
      %v1357 = vadd.f32 %v1293, %v1203
      %v1358 = vadd.f32 %v1294, %v1205
      %v1359 = vadd.f32 %v1295, %v1208
      %v1360 = vadd.f32 %v1296, %v1210
      %v1361 = vadd.f32 %v1297, %v1213
      %v1362 = vadd.f32 %v1298, %v1215
      %v1363 = vadd.f32 %v1299, %v1218
      %v1364 = vadd.f32 %v1300, %v1220
      %v1365 = vadd.f32 %v1301, %v1223
      %v1366 = vadd.f32 %v1302, %v1225
      %v1367 = vadd.f32 %v1303, %v1228
      %v1368 = vadd.f32 %v1304, %v1230
      %v1369 = vadd.f32 %v1305, %v1233
      %v1370 = vadd.f32 %v1306, %v1235
      %v1371 = vadd.f32 %v1307, %v1238
      %v1372 = vadd.f32 %v1308, %v1240
      %v1373 = vadd.f32 %v1309, %v1243
      %v1374 = vadd.f32 %v1310, %v1245
      %1375 = vst [vmem:[#allocation2] sm:$0xff] %v1311
      %1376 = vst [vmem:[#allocation2 + $0x8] sm:$0xff] %v1312
      %1377 = vst [vmem:[#allocation2 + $0x10] sm:$0xff] %v1313
      %1378 = vst [vmem:[#allocation2 + $0x18] sm:$0xff] %v1314
      %1379 = vst [vmem:[#allocation2 + $0x20] sm:$0xff] %v1315
      %1380 = vst [vmem:[#allocation2 + $0x28] sm:$0xff] %v1316
      %1381 = vst [vmem:[#allocation2 + $0x30] sm:$0xff] %v1317
      %1382 = vst [vmem:[#allocation2 + $0x38] sm:$0xff] %v1318
      %1383 = vst [vmem:[#allocation2 + $0x40] sm:$0xff] %v1319
      %1384 = vst [vmem:[#allocation2 + $0x48] sm:$0xff] %v1320
      %1385 = vst [vmem:[#allocation2 + $0x50] sm:$0xff] %v1321
      %1386 = vst [vmem:[#allocation2 + $0x58] sm:$0xff] %v1322
      %1387 = vst [vmem:[#allocation2 + $0x60] sm:$0xff] %v1323
      %1388 = vst [vmem:[#allocation2 + $0x68] sm:$0xff] %v1324
      %1389 = vst [vmem:[#allocation2 + $0x70] sm:$0xff] %v1325
      %1390 = vst [vmem:[#allocation2 + $0x78] sm:$0xff] %v1326
      %1391 = vst [vmem:[#allocation2 + $0x80] sm:$0xff] %v1327
      %1392 = vst [vmem:[#allocation2 + $0x88] sm:$0xff] %v1328
      %1393 = vst [vmem:[#allocation2 + $0x90] sm:$0xff] %v1329
      %1394 = vst [vmem:[#allocation2 + $0x98] sm:$0xff] %v1330
      %1395 = vst [vmem:[#allocation2 + $0xa0] sm:$0xff] %v1331
      %1396 = vst [vmem:[#allocation2 + $0xa8] sm:$0xff] %v1332
      %1397 = vst [vmem:[#allocation2 + $0xb0] sm:$0xff] %v1333
      %1398 = vst [vmem:[#allocation2 + $0xb8] sm:$0xff] %v1334
      %1399 = vst [vmem:[#allocation2 + $0xc0] sm:$0xff] %v1335
      %1400 = vst [vmem:[#allocation2 + $0xc8] sm:$0xff] %v1336
      %1401 = vst [vmem:[#allocation2 + $0xd0] sm:$0xff] %v1337
      %1402 = vst [vmem:[#allocation2 + $0xd8] sm:$0xff] %v1338
      %1403 = vst [vmem:[#allocation2 + $0xe0] sm:$0xff] %v1339
      %1404 = vst [vmem:[#allocation2 + $0xe8] sm:$0xff] %v1340
      %1405 = vst [vmem:[#allocation2 + $0xf0] sm:$0xff] %v1341
      %1406 = vst [vmem:[#allocation2 + $0xf8] sm:$0xff] %v1342
      %1407 = vst [vmem:[#allocation2 + $0x100] sm:$0xff] %v1343
      %1408 = vst [vmem:[#allocation2 + $0x108] sm:$0xff] %v1344
      %1409 = vst [vmem:[#allocation2 + $0x110] sm:$0xff] %v1345
      %1410 = vst [vmem:[#allocation2 + $0x118] sm:$0xff] %v1346
      %1411 = vst [vmem:[#allocation2 + $0x120] sm:$0xff] %v1347
      %1412 = vst [vmem:[#allocation2 + $0x128] sm:$0xff] %v1348
      %1413 = vst [vmem:[#allocation2 + $0x130] sm:$0xff] %v1349
      %1414 = vst [vmem:[#allocation2 + $0x138] sm:$0xff] %v1350
      %1415 = vst [vmem:[#allocation2 + $0x140] sm:$0xff] %v1351
      %1416 = vst [vmem:[#allocation2 + $0x148] sm:$0xff] %v1352
      %1417 = vst [vmem:[#allocation2 + $0x150] sm:$0xff] %v1353
      %1418 = vst [vmem:[#allocation2 + $0x158] sm:$0xff] %v1354
      %1419 = vst [vmem:[#allocation2 + $0x160] sm:$0xff] %v1355
      %1420 = vst [vmem:[#allocation2 + $0x168] sm:$0xff] %v1356
      %1421 = vst [vmem:[#allocation2 + $0x170] sm:$0xff] %v1357
      %1422 = vst [vmem:[#allocation2 + $0x178] sm:$0xff] %v1358
      %1423 = vst [vmem:[#allocation2 + $0x180] sm:$0xff] %v1359
      %1424 = vst [vmem:[#allocation2 + $0x188] sm:$0xff] %v1360
      %1425 = vst [vmem:[#allocation2 + $0x190] sm:$0xff] %v1361
      %1426 = vst [vmem:[#allocation2 + $0x198] sm:$0xff] %v1362
      %1427 = vst [vmem:[#allocation2 + $0x1a0] sm:$0xff] %v1363
      %1428 = vst [vmem:[#allocation2 + $0x1a8] sm:$0xff] %v1364
      %1429 = vst [vmem:[#allocation2 + $0x1b0] sm:$0xff] %v1365
      %1430 = vst [vmem:[#allocation2 + $0x1b8] sm:$0xff] %v1366
      %1431 = vst [vmem:[#allocation2 + $0x1c0] sm:$0xff] %v1367
      %1432 = vst [vmem:[#allocation2 + $0x1c8] sm:$0xff] %v1368
      %1433 = vst [vmem:[#allocation2 + $0x1d0] sm:$0xff] %v1369
      %1434 = vst [vmem:[#allocation2 + $0x1d8] sm:$0xff] %v1370
      %1435 = vst [vmem:[#allocation2 + $0x1e0] sm:$0xff] %v1371
      %1436 = vst [vmem:[#allocation2 + $0x1e8] sm:$0xff] %v1372
      %1437 = vst [vmem:[#allocation2 + $0x1f0] sm:$0xff] %v1373
      %1438 = vst [vmem:[#allocation2 + $0x1f8] sm:$0xff] %v1374
      %s1439 = sadd.s32 %s194, 256
      %s1440 = sshra.s32 %s1439, 3
      %s1441 = sand.u32 %s1439, 7
      %s1442 = smul.addr %s1440, 4
      %s1443 = scalar_lea.vmem %s183, %s1442
      %v1444 = vld [vmem:[%s1443] sm:$0xf]
      %v1445 = vld [vmem:[%s1443 + $0x4] sm:$0xf]
      %v1446 = vld [vmem:[%s1443 + $0x8] sm:$0xf]
      %v1447 = vld [vmem:[%s1443 + $0xc] sm:$0xf]
      %v1448 = vld [vmem:[%s1443 + $0x10] sm:$0xf]
      %v1449 = vld [vmem:[%s1443 + $0x14] sm:$0xf]
      %v1450 = vld [vmem:[%s1443 + $0x18] sm:$0xf]
      %v1451 = vld [vmem:[%s1443 + $0x1c] sm:$0xf]
      %v1452 = vld [vmem:[%s1443 + $0x20] sm:$0xf]
      %v1453 = vld [vmem:[%s1443 + $0x24] sm:$0xf]
      %v1454 = vld [vmem:[%s1443 + $0x28] sm:$0xf]
      %v1455 = vld [vmem:[%s1443 + $0x2c] sm:$0xf]
      %v1456 = vld [vmem:[%s1443 + $0x30] sm:$0xf]
      %v1457 = vld [vmem:[%s1443 + $0x34] sm:$0xf]
      %v1458 = vld [vmem:[%s1443 + $0x38] sm:$0xf]
      %v1459 = vld [vmem:[%s1443 + $0x3c] sm:$0xf]
      %v1460 = vld [vmem:[%s1443 + $0x40] sm:$0xf]
      %v1461 = vld [vmem:[%s1443 + $0x44] sm:$0xf]
      %v1462 = vld [vmem:[%s1443 + $0x48] sm:$0xf]
      %v1463 = vld [vmem:[%s1443 + $0x4c] sm:$0xf]
      %v1464 = vld [vmem:[%s1443 + $0x50] sm:$0xf]
      %v1465 = vld [vmem:[%s1443 + $0x54] sm:$0xf]
      %v1466 = vld [vmem:[%s1443 + $0x58] sm:$0xf]
      %v1467 = vld [vmem:[%s1443 + $0x5c] sm:$0xf]
      %v1468 = vld [vmem:[%s1443 + $0x60] sm:$0xf]
      %v1469 = vld [vmem:[%s1443 + $0x64] sm:$0xf]
      %v1470 = vld [vmem:[%s1443 + $0x68] sm:$0xf]
      %v1471 = vld [vmem:[%s1443 + $0x6c] sm:$0xf]
      %v1472 = vld [vmem:[%s1443 + $0x70] sm:$0xf]
      %v1473 = vld [vmem:[%s1443 + $0x74] sm:$0xf]
      %v1474 = vld [vmem:[%s1443 + $0x78] sm:$0xf]
      %v1475 = vld [vmem:[%s1443 + $0x7c] sm:$0xf]
      %v1476 = vld [vmem:[%s1443 + $0x80] sm:$0xf]
      %v1477 = vld [vmem:[%s1443 + $0x84] sm:$0xf]
      %v1478 = vld [vmem:[%s1443 + $0x88] sm:$0xf]
      %v1479 = vld [vmem:[%s1443 + $0x8c] sm:$0xf]
      %v1480 = vld [vmem:[%s1443 + $0x90] sm:$0xf]
      %v1481 = vld [vmem:[%s1443 + $0x94] sm:$0xf]
      %v1482 = vld [vmem:[%s1443 + $0x98] sm:$0xf]
      %v1483 = vld [vmem:[%s1443 + $0x9c] sm:$0xf]
      %v1484 = vld [vmem:[%s1443 + $0xa0] sm:$0xf]
      %v1485 = vld [vmem:[%s1443 + $0xa4] sm:$0xf]
      %v1486 = vld [vmem:[%s1443 + $0xa8] sm:$0xf]
      %v1487 = vld [vmem:[%s1443 + $0xac] sm:$0xf]
      %v1488 = vld [vmem:[%s1443 + $0xb0] sm:$0xf]
      %v1489 = vld [vmem:[%s1443 + $0xb4] sm:$0xf]
      %v1490 = vld [vmem:[%s1443 + $0xb8] sm:$0xf]
      %v1491 = vld [vmem:[%s1443 + $0xbc] sm:$0xf]
      %v1492 = vld [vmem:[%s1443 + $0xc0] sm:$0xf]
      %v1493 = vld [vmem:[%s1443 + $0xc4] sm:$0xf]
      %v1494 = vld [vmem:[%s1443 + $0xc8] sm:$0xf]
      %v1495 = vld [vmem:[%s1443 + $0xcc] sm:$0xf]
      %v1496 = vld [vmem:[%s1443 + $0xd0] sm:$0xf]
      %v1497 = vld [vmem:[%s1443 + $0xd4] sm:$0xf]
      %v1498 = vld [vmem:[%s1443 + $0xd8] sm:$0xf]
      %v1499 = vld [vmem:[%s1443 + $0xdc] sm:$0xf]
      %v1500 = vld [vmem:[%s1443 + $0xe0] sm:$0xf]
      %v1501 = vld [vmem:[%s1443 + $0xe4] sm:$0xf]
      %v1502 = vld [vmem:[%s1443 + $0xe8] sm:$0xf]
      %v1503 = vld [vmem:[%s1443 + $0xec] sm:$0xf]
      %v1504 = vld [vmem:[%s1443 + $0xf0] sm:$0xf]
      %v1505 = vld [vmem:[%s1443 + $0xf4] sm:$0xf]
      %v1506 = vld [vmem:[%s1443 + $0xf8] sm:$0xf]
      %v1507 = vld [vmem:[%s1443 + $0xfc] sm:$0xf]
      %s1508 = scalar_lea.vmem %s1, 128
      %v1509 = vld [vmem:[%s1508] sm:$0xf]
      %v1510 = vld [vmem:[%s1508 + $0x4] sm:$0xf]
      %v1511 = vld [vmem:[%s1508 + $0x8] sm:$0xf]
      %v1512 = vld [vmem:[%s1508 + $0xc] sm:$0xf]
      %v1513 = vld [vmem:[%s1508 + $0x10] sm:$0xf]
      %v1514 = vld [vmem:[%s1508 + $0x14] sm:$0xf]
      %v1515 = vld [vmem:[%s1508 + $0x18] sm:$0xf]
      %v1516 = vld [vmem:[%s1508 + $0x1c] sm:$0xf]
      %v1517 = vld [vmem:[%s1508 + $0x20] sm:$0xf]
      %v1518 = vld [vmem:[%s1508 + $0x24] sm:$0xf]
      %v1519 = vld [vmem:[%s1508 + $0x28] sm:$0xf]
      %v1520 = vld [vmem:[%s1508 + $0x2c] sm:$0xf]
      %v1521 = vld [vmem:[%s1508 + $0x30] sm:$0xf]
      %v1522 = vld [vmem:[%s1508 + $0x34] sm:$0xf]
      %v1523 = vld [vmem:[%s1508 + $0x38] sm:$0xf]
      %v1524 = vld [vmem:[%s1508 + $0x3c] sm:$0xf]
      %v1589 = vunpack.c.l.b16 %v1444
      %v1590 = vunpack.c.l.b16 %v1445
      %v1591 = vunpack.c.l.b16 %v1446
      %v1592 = vunpack.c.l.b16 %v1447
      %v1593 = vunpack.c.l.b16 %v1448
      %v1594 = vunpack.c.l.b16 %v1449
      %v1595 = vunpack.c.l.b16 %v1450
      %v1596 = vunpack.c.l.b16 %v1451
      %v1597 = vunpack.c.l.b16 %v1452
      %v1598 = vunpack.c.l.b16 %v1453
      %v1599 = vunpack.c.l.b16 %v1454
      %v1600 = vunpack.c.l.b16 %v1455
      %v1601 = vunpack.c.l.b16 %v1456
      %v1602 = vunpack.c.l.b16 %v1457
      %v1603 = vunpack.c.l.b16 %v1458
      %v1604 = vunpack.c.l.b16 %v1459
      %v1605 = vunpack.c.l.b16 %v1460
      %v1606 = vunpack.c.l.b16 %v1461
      %v1607 = vunpack.c.l.b16 %v1462
      %v1608 = vunpack.c.l.b16 %v1463
      %v1609 = vunpack.c.l.b16 %v1464
      %v1610 = vunpack.c.l.b16 %v1465
      %v1611 = vunpack.c.l.b16 %v1466
      %v1612 = vunpack.c.l.b16 %v1467
      %v1613 = vunpack.c.l.b16 %v1468
      %v1614 = vunpack.c.l.b16 %v1469
      %v1615 = vunpack.c.l.b16 %v1470
      %v1616 = vunpack.c.l.b16 %v1471
      %v1617 = vunpack.c.l.b16 %v1472
      %v1618 = vunpack.c.l.b16 %v1473
      %v1619 = vunpack.c.l.b16 %v1474
      %v1620 = vunpack.c.l.b16 %v1475
      %v1621 = vunpack.c.l.b16 %v1476
      %v1622 = vunpack.c.l.b16 %v1477
      %v1623 = vunpack.c.l.b16 %v1478
      %v1624 = vunpack.c.l.b16 %v1479
      %v1625 = vunpack.c.l.b16 %v1480
      %v1626 = vunpack.c.l.b16 %v1481
      %v1627 = vunpack.c.l.b16 %v1482
      %v1628 = vunpack.c.l.b16 %v1483
      %v1629 = vunpack.c.l.b16 %v1484
      %v1630 = vunpack.c.l.b16 %v1485
      %v1631 = vunpack.c.l.b16 %v1486
      %v1632 = vunpack.c.l.b16 %v1487
      %v1633 = vunpack.c.l.b16 %v1488
      %v1634 = vunpack.c.l.b16 %v1489
      %v1635 = vunpack.c.l.b16 %v1490
      %v1636 = vunpack.c.l.b16 %v1491
      %v1637 = vunpack.c.l.b16 %v1492
      %v1638 = vunpack.c.l.b16 %v1493
      %v1639 = vunpack.c.l.b16 %v1494
      %v1640 = vunpack.c.l.b16 %v1495
      %v1641 = vunpack.c.l.b16 %v1496
      %v1642 = vunpack.c.l.b16 %v1497
      %v1643 = vunpack.c.l.b16 %v1498
      %v1644 = vunpack.c.l.b16 %v1499
      %v1645 = vunpack.c.l.b16 %v1500
      %v1646 = vunpack.c.l.b16 %v1501
      %v1647 = vunpack.c.l.b16 %v1502
      %v1648 = vunpack.c.l.b16 %v1503
      %v1649 = vunpack.c.l.b16 %v1504
      %v1650 = vunpack.c.l.b16 %v1505
      %v1651 = vunpack.c.l.b16 %v1506
      %v1652 = vunpack.c.l.b16 %v1507
      %v1653 = vpack.c.b16 %v1590, %v1589
      %v1654 = vpack.c.b16 %v1592, %v1591
      %v1655 = vpack.c.b16 %v1594, %v1593
      %v1656 = vpack.c.b16 %v1596, %v1595
      %v1657 = vpack.c.b16 %v1598, %v1597
      %v1658 = vpack.c.b16 %v1600, %v1599
      %v1659 = vpack.c.b16 %v1602, %v1601
      %v1660 = vpack.c.b16 %v1604, %v1603
      %v1661 = vpack.c.b16 %v1606, %v1605
      %v1662 = vpack.c.b16 %v1608, %v1607
      %v1663 = vpack.c.b16 %v1610, %v1609
      %v1664 = vpack.c.b16 %v1612, %v1611
      %v1665 = vpack.c.b16 %v1614, %v1613
      %v1666 = vpack.c.b16 %v1616, %v1615
      %v1667 = vpack.c.b16 %v1618, %v1617
      %v1668 = vpack.c.b16 %v1620, %v1619
      %v1669 = vpack.c.b16 %v1622, %v1621
      %v1670 = vpack.c.b16 %v1624, %v1623
      %v1671 = vpack.c.b16 %v1626, %v1625
      %v1672 = vpack.c.b16 %v1628, %v1627
      %v1673 = vpack.c.b16 %v1630, %v1629
      %v1674 = vpack.c.b16 %v1632, %v1631
      %v1675 = vpack.c.b16 %v1634, %v1633
      %v1676 = vpack.c.b16 %v1636, %v1635
      %v1677 = vpack.c.b16 %v1638, %v1637
      %v1678 = vpack.c.b16 %v1640, %v1639
      %v1679 = vpack.c.b16 %v1642, %v1641
      %v1680 = vpack.c.b16 %v1644, %v1643
      %v1681 = vpack.c.b16 %v1646, %v1645
      %v1682 = vpack.c.b16 %v1648, %v1647
      %v1683 = vpack.c.b16 %v1650, %v1649
      %v1684 = vpack.c.b16 %v1652, %v1651
      %v1733 = vunpack.c.l.b16 %v1509
      %v1734 = vunpack.c.l.b16 %v1510
      %v1735 = vunpack.c.l.b16 %v1511
      %v1736 = vunpack.c.l.b16 %v1512
      %v1737 = vunpack.c.l.b16 %v1513
      %v1738 = vunpack.c.l.b16 %v1514
      %v1739 = vunpack.c.l.b16 %v1515
      %v1740 = vunpack.c.l.b16 %v1516
      %v1741 = vunpack.c.l.b16 %v1517
      %v1742 = vunpack.c.l.b16 %v1518
      %v1743 = vunpack.c.l.b16 %v1519
      %v1744 = vunpack.c.l.b16 %v1520
      %v1745 = vunpack.c.l.b16 %v1521
      %v1746 = vunpack.c.l.b16 %v1522
      %v1747 = vunpack.c.l.b16 %v1523
      %v1748 = vunpack.c.l.b16 %v1524
      %v1749 = vpack.c.b16 %v1734, %v1733
      %v1750 = vpack.c.b16 %v1736, %v1735
      %v1751 = vpack.c.b16 %v1738, %v1737
      %v1752 = vpack.c.b16 %v1740, %v1739
      %v1753 = vpack.c.b16 %v1742, %v1741
      %v1754 = vpack.c.b16 %v1744, %v1743
      %v1755 = vpack.c.b16 %v1746, %v1745
      %v1756 = vpack.c.b16 %v1748, %v1747
      %1765 = vmatpush.bf16.msra.mxu0 %v1756
      %1766 = vmatpush.bf16.msra.mxu0 %v1755
      %1767 = vmatpush.bf16.msra.mxu0 %v1754
      %1768 = vmatpush.bf16.msra.mxu0 %v1753
      %1769 = vmatpush.bf16.msra.mxu0 %v1752
      %1770 = vmatpush.bf16.msra.mxu0 %v1751
      %1771 = vmatpush.bf16.msra.mxu0 %v1750
      %1772 = vmatpush.bf16.msra.mxu0 %v1749
      %1773 = vmatmul.bf16.gmra.mxu0 %v1653
      %v1774 = vpop.f32.mrf.mxu0
      %v1775 = vadd.f32 0.0, %v1774
      %v1776 = vpop.f32.mrf.mxu0
      %v1777 = vadd.f32 0.0, %v1776
      %1778 = vmatmul.bf16.gmra.mxu0 %v1654
      %v1779 = vpop.f32.mrf.mxu0
      %v1780 = vadd.f32 0.0, %v1779
      %v1781 = vpop.f32.mrf.mxu0
      %v1782 = vadd.f32 0.0, %v1781
      %1783 = vmatmul.bf16.gmra.mxu0 %v1655
      %v1784 = vpop.f32.mrf.mxu0
      %v1785 = vadd.f32 0.0, %v1784
      %v1786 = vpop.f32.mrf.mxu0
      %v1787 = vadd.f32 0.0, %v1786
      %1788 = vmatmul.bf16.gmra.mxu0 %v1656
      %v1789 = vpop.f32.mrf.mxu0
      %v1790 = vadd.f32 0.0, %v1789
      %v1791 = vpop.f32.mrf.mxu0
      %v1792 = vadd.f32 0.0, %v1791
      %1793 = vmatmul.bf16.gmra.mxu0 %v1657
      %v1794 = vpop.f32.mrf.mxu0
      %v1795 = vadd.f32 0.0, %v1794
      %v1796 = vpop.f32.mrf.mxu0
      %v1797 = vadd.f32 0.0, %v1796
      %1798 = vmatmul.bf16.gmra.mxu0 %v1658
      %v1799 = vpop.f32.mrf.mxu0
      %v1800 = vadd.f32 0.0, %v1799
      %v1801 = vpop.f32.mrf.mxu0
      %v1802 = vadd.f32 0.0, %v1801
      %1803 = vmatmul.bf16.gmra.mxu0 %v1659
      %v1804 = vpop.f32.mrf.mxu0
      %v1805 = vadd.f32 0.0, %v1804
      %v1806 = vpop.f32.mrf.mxu0
      %v1807 = vadd.f32 0.0, %v1806
      %1808 = vmatmul.bf16.gmra.mxu0 %v1660
      %v1809 = vpop.f32.mrf.mxu0
      %v1810 = vadd.f32 0.0, %v1809
      %v1811 = vpop.f32.mrf.mxu0
      %v1812 = vadd.f32 0.0, %v1811
      %1813 = vmatmul.bf16.gmra.mxu0 %v1661
      %v1814 = vpop.f32.mrf.mxu0
      %v1815 = vadd.f32 0.0, %v1814
      %v1816 = vpop.f32.mrf.mxu0
      %v1817 = vadd.f32 0.0, %v1816
      %1818 = vmatmul.bf16.gmra.mxu0 %v1662
      %v1819 = vpop.f32.mrf.mxu0
      %v1820 = vadd.f32 0.0, %v1819
      %v1821 = vpop.f32.mrf.mxu0
      %v1822 = vadd.f32 0.0, %v1821
      %1823 = vmatmul.bf16.gmra.mxu0 %v1663
      %v1824 = vpop.f32.mrf.mxu0
      %v1825 = vadd.f32 0.0, %v1824
      %v1826 = vpop.f32.mrf.mxu0
      %v1827 = vadd.f32 0.0, %v1826
      %1828 = vmatmul.bf16.gmra.mxu0 %v1664
      %v1829 = vpop.f32.mrf.mxu0
      %v1830 = vadd.f32 0.0, %v1829
      %v1831 = vpop.f32.mrf.mxu0
      %v1832 = vadd.f32 0.0, %v1831
      %1833 = vmatmul.bf16.gmra.mxu0 %v1665
      %v1834 = vpop.f32.mrf.mxu0
      %v1835 = vadd.f32 0.0, %v1834
      %v1836 = vpop.f32.mrf.mxu0
      %v1837 = vadd.f32 0.0, %v1836
      %1838 = vmatmul.bf16.gmra.mxu0 %v1666
      %v1839 = vpop.f32.mrf.mxu0
      %v1840 = vadd.f32 0.0, %v1839
      %v1841 = vpop.f32.mrf.mxu0
      %v1842 = vadd.f32 0.0, %v1841
      %1843 = vmatmul.bf16.gmra.mxu0 %v1667
      %v1844 = vpop.f32.mrf.mxu0
      %v1845 = vadd.f32 0.0, %v1844
      %v1846 = vpop.f32.mrf.mxu0
      %v1847 = vadd.f32 0.0, %v1846
      %1848 = vmatmul.bf16.gmra.mxu0 %v1668
      %v1849 = vpop.f32.mrf.mxu0
      %v1850 = vadd.f32 0.0, %v1849
      %v1851 = vpop.f32.mrf.mxu0
      %v1852 = vadd.f32 0.0, %v1851
      %1853 = vmatmul.bf16.gmra.mxu0 %v1669
      %v1854 = vpop.f32.mrf.mxu0
      %v1855 = vadd.f32 0.0, %v1854
      %v1856 = vpop.f32.mrf.mxu0
      %v1857 = vadd.f32 0.0, %v1856
      %1858 = vmatmul.bf16.gmra.mxu0 %v1670
      %v1859 = vpop.f32.mrf.mxu0
      %v1860 = vadd.f32 0.0, %v1859
      %v1861 = vpop.f32.mrf.mxu0
      %v1862 = vadd.f32 0.0, %v1861
      %1863 = vmatmul.bf16.gmra.mxu0 %v1671
      %v1864 = vpop.f32.mrf.mxu0
      %v1865 = vadd.f32 0.0, %v1864
      %v1866 = vpop.f32.mrf.mxu0
      %v1867 = vadd.f32 0.0, %v1866
      %1868 = vmatmul.bf16.gmra.mxu0 %v1672
      %v1869 = vpop.f32.mrf.mxu0
      %v1870 = vadd.f32 0.0, %v1869
      %v1871 = vpop.f32.mrf.mxu0
      %v1872 = vadd.f32 0.0, %v1871
      %1873 = vmatmul.bf16.gmra.mxu0 %v1673
      %v1874 = vpop.f32.mrf.mxu0
      %v1875 = vadd.f32 0.0, %v1874
      %v1876 = vpop.f32.mrf.mxu0
      %v1877 = vadd.f32 0.0, %v1876
      %1878 = vmatmul.bf16.gmra.mxu0 %v1674
      %v1879 = vpop.f32.mrf.mxu0
      %v1880 = vadd.f32 0.0, %v1879
      %v1881 = vpop.f32.mrf.mxu0
      %v1882 = vadd.f32 0.0, %v1881
      %1883 = vmatmul.bf16.gmra.mxu0 %v1675
      %v1884 = vpop.f32.mrf.mxu0
      %v1885 = vadd.f32 0.0, %v1884
      %v1886 = vpop.f32.mrf.mxu0
      %v1887 = vadd.f32 0.0, %v1886
      %1888 = vmatmul.bf16.gmra.mxu0 %v1676
      %v1889 = vpop.f32.mrf.mxu0
      %v1890 = vadd.f32 0.0, %v1889
      %v1891 = vpop.f32.mrf.mxu0
      %v1892 = vadd.f32 0.0, %v1891
      %1893 = vmatmul.bf16.gmra.mxu0 %v1677
      %v1894 = vpop.f32.mrf.mxu0
      %v1895 = vadd.f32 0.0, %v1894
      %v1896 = vpop.f32.mrf.mxu0
      %v1897 = vadd.f32 0.0, %v1896
      %1898 = vmatmul.bf16.gmra.mxu0 %v1678
      %v1899 = vpop.f32.mrf.mxu0
      %v1900 = vadd.f32 0.0, %v1899
      %v1901 = vpop.f32.mrf.mxu0
      %v1902 = vadd.f32 0.0, %v1901
      %1903 = vmatmul.bf16.gmra.mxu0 %v1679
      %v1904 = vpop.f32.mrf.mxu0
      %v1905 = vadd.f32 0.0, %v1904
      %v1906 = vpop.f32.mrf.mxu0
      %v1907 = vadd.f32 0.0, %v1906
      %1908 = vmatmul.bf16.gmra.mxu0 %v1680
      %v1909 = vpop.f32.mrf.mxu0
      %v1910 = vadd.f32 0.0, %v1909
      %v1911 = vpop.f32.mrf.mxu0
      %v1912 = vadd.f32 0.0, %v1911
      %1913 = vmatmul.bf16.gmra.mxu0 %v1681
      %v1914 = vpop.f32.mrf.mxu0
      %v1915 = vadd.f32 0.0, %v1914
      %v1916 = vpop.f32.mrf.mxu0
      %v1917 = vadd.f32 0.0, %v1916
      %1918 = vmatmul.bf16.gmra.mxu0 %v1682
      %v1919 = vpop.f32.mrf.mxu0
      %v1920 = vadd.f32 0.0, %v1919
      %v1921 = vpop.f32.mrf.mxu0
      %v1922 = vadd.f32 0.0, %v1921
      %1923 = vmatmul.bf16.gmra.mxu0 %v1683
      %v1924 = vpop.f32.mrf.mxu0
      %v1925 = vadd.f32 0.0, %v1924
      %v1926 = vpop.f32.mrf.mxu0
      %v1927 = vadd.f32 0.0, %v1926
      %1928 = vmatmul.bf16.gmra.mxu0 %v1684
      %v1929 = vpop.f32.mrf.mxu0
      %v1930 = vadd.f32 0.0, %v1929
      %v1931 = vpop.f32.mrf.mxu0
      %v1932 = vadd.f32 0.0, %v1931
      %1933 = vdwg.mxu0
      %v1934 = vld [vmem:[#allocation2] sm:$0xff]
      %v1935 = vld [vmem:[#allocation2 + $0x8] sm:$0xff]
      %v1936 = vld [vmem:[#allocation2 + $0x10] sm:$0xff]
      %v1937 = vld [vmem:[#allocation2 + $0x18] sm:$0xff]
      %v1938 = vld [vmem:[#allocation2 + $0x20] sm:$0xff]
      %v1939 = vld [vmem:[#allocation2 + $0x28] sm:$0xff]
      %v1940 = vld [vmem:[#allocation2 + $0x30] sm:$0xff]
      %v1941 = vld [vmem:[#allocation2 + $0x38] sm:$0xff]
      %v1942 = vld [vmem:[#allocation2 + $0x40] sm:$0xff]
      %v1943 = vld [vmem:[#allocation2 + $0x48] sm:$0xff]
      %v1944 = vld [vmem:[#allocation2 + $0x50] sm:$0xff]
      %v1945 = vld [vmem:[#allocation2 + $0x58] sm:$0xff]
      %v1946 = vld [vmem:[#allocation2 + $0x60] sm:$0xff]
      %v1947 = vld [vmem:[#allocation2 + $0x68] sm:$0xff]
      %v1948 = vld [vmem:[#allocation2 + $0x70] sm:$0xff]
      %v1949 = vld [vmem:[#allocation2 + $0x78] sm:$0xff]
      %v1950 = vld [vmem:[#allocation2 + $0x80] sm:$0xff]
      %v1951 = vld [vmem:[#allocation2 + $0x88] sm:$0xff]
      %v1952 = vld [vmem:[#allocation2 + $0x90] sm:$0xff]
      %v1953 = vld [vmem:[#allocation2 + $0x98] sm:$0xff]
      %v1954 = vld [vmem:[#allocation2 + $0xa0] sm:$0xff]
      %v1955 = vld [vmem:[#allocation2 + $0xa8] sm:$0xff]
      %v1956 = vld [vmem:[#allocation2 + $0xb0] sm:$0xff]
      %v1957 = vld [vmem:[#allocation2 + $0xb8] sm:$0xff]
      %v1958 = vld [vmem:[#allocation2 + $0xc0] sm:$0xff]
      %v1959 = vld [vmem:[#allocation2 + $0xc8] sm:$0xff]
      %v1960 = vld [vmem:[#allocation2 + $0xd0] sm:$0xff]
      %v1961 = vld [vmem:[#allocation2 + $0xd8] sm:$0xff]
      %v1962 = vld [vmem:[#allocation2 + $0xe0] sm:$0xff]
      %v1963 = vld [vmem:[#allocation2 + $0xe8] sm:$0xff]
      %v1964 = vld [vmem:[#allocation2 + $0xf0] sm:$0xff]
      %v1965 = vld [vmem:[#allocation2 + $0xf8] sm:$0xff]
      %v1966 = vld [vmem:[#allocation2 + $0x100] sm:$0xff]
      %v1967 = vld [vmem:[#allocation2 + $0x108] sm:$0xff]
      %v1968 = vld [vmem:[#allocation2 + $0x110] sm:$0xff]
      %v1969 = vld [vmem:[#allocation2 + $0x118] sm:$0xff]
      %v1970 = vld [vmem:[#allocation2 + $0x120] sm:$0xff]
      %v1971 = vld [vmem:[#allocation2 + $0x128] sm:$0xff]
      %v1972 = vld [vmem:[#allocation2 + $0x130] sm:$0xff]
      %v1973 = vld [vmem:[#allocation2 + $0x138] sm:$0xff]
      %v1974 = vld [vmem:[#allocation2 + $0x140] sm:$0xff]
      %v1975 = vld [vmem:[#allocation2 + $0x148] sm:$0xff]
      %v1976 = vld [vmem:[#allocation2 + $0x150] sm:$0xff]
      %v1977 = vld [vmem:[#allocation2 + $0x158] sm:$0xff]
      %v1978 = vld [vmem:[#allocation2 + $0x160] sm:$0xff]
      %v1979 = vld [vmem:[#allocation2 + $0x168] sm:$0xff]
      %v1980 = vld [vmem:[#allocation2 + $0x170] sm:$0xff]
      %v1981 = vld [vmem:[#allocation2 + $0x178] sm:$0xff]
      %v1982 = vld [vmem:[#allocation2 + $0x180] sm:$0xff]
      %v1983 = vld [vmem:[#allocation2 + $0x188] sm:$0xff]
      %v1984 = vld [vmem:[#allocation2 + $0x190] sm:$0xff]
      %v1985 = vld [vmem:[#allocation2 + $0x198] sm:$0xff]
      %v1986 = vld [vmem:[#allocation2 + $0x1a0] sm:$0xff]
      %v1987 = vld [vmem:[#allocation2 + $0x1a8] sm:$0xff]
      %v1988 = vld [vmem:[#allocation2 + $0x1b0] sm:$0xff]
      %v1989 = vld [vmem:[#allocation2 + $0x1b8] sm:$0xff]
      %v1990 = vld [vmem:[#allocation2 + $0x1c0] sm:$0xff]
      %v1991 = vld [vmem:[#allocation2 + $0x1c8] sm:$0xff]
      %v1992 = vld [vmem:[#allocation2 + $0x1d0] sm:$0xff]
      %v1993 = vld [vmem:[#allocation2 + $0x1d8] sm:$0xff]
      %v1994 = vld [vmem:[#allocation2 + $0x1e0] sm:$0xff]
      %v1995 = vld [vmem:[#allocation2 + $0x1e8] sm:$0xff]
      %v1996 = vld [vmem:[#allocation2 + $0x1f0] sm:$0xff]
      %v1997 = vld [vmem:[#allocation2 + $0x1f8] sm:$0xff]
      %v1998 = vadd.f32 %v1934, %v1775
      %v1999 = vadd.f32 %v1935, %v1777
      %v2000 = vadd.f32 %v1936, %v1780
      %v2001 = vadd.f32 %v1937, %v1782
      %v2002 = vadd.f32 %v1938, %v1785
      %v2003 = vadd.f32 %v1939, %v1787
      %v2004 = vadd.f32 %v1940, %v1790
      %v2005 = vadd.f32 %v1941, %v1792
      %v2006 = vadd.f32 %v1942, %v1795
      %v2007 = vadd.f32 %v1943, %v1797
      %v2008 = vadd.f32 %v1944, %v1800
      %v2009 = vadd.f32 %v1945, %v1802
      %v2010 = vadd.f32 %v1946, %v1805
      %v2011 = vadd.f32 %v1947, %v1807
      %v2012 = vadd.f32 %v1948, %v1810
      %v2013 = vadd.f32 %v1949, %v1812
      %v2014 = vadd.f32 %v1950, %v1815
      %v2015 = vadd.f32 %v1951, %v1817
      %v2016 = vadd.f32 %v1952, %v1820
      %v2017 = vadd.f32 %v1953, %v1822
      %v2018 = vadd.f32 %v1954, %v1825
      %v2019 = vadd.f32 %v1955, %v1827
      %v2020 = vadd.f32 %v1956, %v1830
      %v2021 = vadd.f32 %v1957, %v1832
      %v2022 = vadd.f32 %v1958, %v1835
      %v2023 = vadd.f32 %v1959, %v1837
      %v2024 = vadd.f32 %v1960, %v1840
      %v2025 = vadd.f32 %v1961, %v1842
      %v2026 = vadd.f32 %v1962, %v1845
      %v2027 = vadd.f32 %v1963, %v1847
      %v2028 = vadd.f32 %v1964, %v1850
      %v2029 = vadd.f32 %v1965, %v1852
      %v2030 = vadd.f32 %v1966, %v1855
      %v2031 = vadd.f32 %v1967, %v1857
      %v2032 = vadd.f32 %v1968, %v1860
      %v2033 = vadd.f32 %v1969, %v1862
      %v2034 = vadd.f32 %v1970, %v1865
      %v2035 = vadd.f32 %v1971, %v1867
      %v2036 = vadd.f32 %v1972, %v1870
      %v2037 = vadd.f32 %v1973, %v1872
      %v2038 = vadd.f32 %v1974, %v1875
      %v2039 = vadd.f32 %v1975, %v1877
      %v2040 = vadd.f32 %v1976, %v1880
      %v2041 = vadd.f32 %v1977, %v1882
      %v2042 = vadd.f32 %v1978, %v1885
      %v2043 = vadd.f32 %v1979, %v1887
      %v2044 = vadd.f32 %v1980, %v1890
      %v2045 = vadd.f32 %v1981, %v1892
      %v2046 = vadd.f32 %v1982, %v1895
      %v2047 = vadd.f32 %v1983, %v1897
      %v2048 = vadd.f32 %v1984, %v1900
      %v2049 = vadd.f32 %v1985, %v1902
      %v2050 = vadd.f32 %v1986, %v1905
      %v2051 = vadd.f32 %v1987, %v1907
      %v2052 = vadd.f32 %v1988, %v1910
      %v2053 = vadd.f32 %v1989, %v1912
      %v2054 = vadd.f32 %v1990, %v1915
      %v2055 = vadd.f32 %v1991, %v1917
      %v2056 = vadd.f32 %v1992, %v1920
      %v2057 = vadd.f32 %v1993, %v1922
      %v2058 = vadd.f32 %v1994, %v1925
      %v2059 = vadd.f32 %v1995, %v1927
      %v2060 = vadd.f32 %v1996, %v1930
      %v2061 = vadd.f32 %v1997, %v1932
      %2062 = vst [vmem:[#allocation2] sm:$0xff] %v1998
      %2063 = vst [vmem:[#allocation2 + $0x8] sm:$0xff] %v1999
      %2064 = vst [vmem:[#allocation2 + $0x10] sm:$0xff] %v2000
      %2065 = vst [vmem:[#allocation2 + $0x18] sm:$0xff] %v2001
      %2066 = vst [vmem:[#allocation2 + $0x20] sm:$0xff] %v2002
      %2067 = vst [vmem:[#allocation2 + $0x28] sm:$0xff] %v2003
      %2068 = vst [vmem:[#allocation2 + $0x30] sm:$0xff] %v2004
      %2069 = vst [vmem:[#allocation2 + $0x38] sm:$0xff] %v2005
      %2070 = vst [vmem:[#allocation2 + $0x40] sm:$0xff] %v2006
      %2071 = vst [vmem:[#allocation2 + $0x48] sm:$0xff] %v2007
      %2072 = vst [vmem:[#allocation2 + $0x50] sm:$0xff] %v2008
      %2073 = vst [vmem:[#allocation2 + $0x58] sm:$0xff] %v2009
      %2074 = vst [vmem:[#allocation2 + $0x60] sm:$0xff] %v2010
      %2075 = vst [vmem:[#allocation2 + $0x68] sm:$0xff] %v2011
      %2076 = vst [vmem:[#allocation2 + $0x70] sm:$0xff] %v2012
      %2077 = vst [vmem:[#allocation2 + $0x78] sm:$0xff] %v2013
      %2078 = vst [vmem:[#allocation2 + $0x80] sm:$0xff] %v2014
      %2079 = vst [vmem:[#allocation2 + $0x88] sm:$0xff] %v2015
      %2080 = vst [vmem:[#allocation2 + $0x90] sm:$0xff] %v2016
      %2081 = vst [vmem:[#allocation2 + $0x98] sm:$0xff] %v2017
      %2082 = vst [vmem:[#allocation2 + $0xa0] sm:$0xff] %v2018
      %2083 = vst [vmem:[#allocation2 + $0xa8] sm:$0xff] %v2019
      %2084 = vst [vmem:[#allocation2 + $0xb0] sm:$0xff] %v2020
      %2085 = vst [vmem:[#allocation2 + $0xb8] sm:$0xff] %v2021
      %2086 = vst [vmem:[#allocation2 + $0xc0] sm:$0xff] %v2022
      %2087 = vst [vmem:[#allocation2 + $0xc8] sm:$0xff] %v2023
      %2088 = vst [vmem:[#allocation2 + $0xd0] sm:$0xff] %v2024
      %2089 = vst [vmem:[#allocation2 + $0xd8] sm:$0xff] %v2025
      %2090 = vst [vmem:[#allocation2 + $0xe0] sm:$0xff] %v2026
      %2091 = vst [vmem:[#allocation2 + $0xe8] sm:$0xff] %v2027
      %2092 = vst [vmem:[#allocation2 + $0xf0] sm:$0xff] %v2028
      %2093 = vst [vmem:[#allocation2 + $0xf8] sm:$0xff] %v2029
      %2094 = vst [vmem:[#allocation2 + $0x100] sm:$0xff] %v2030
      %2095 = vst [vmem:[#allocation2 + $0x108] sm:$0xff] %v2031
      %2096 = vst [vmem:[#allocation2 + $0x110] sm:$0xff] %v2032
      %2097 = vst [vmem:[#allocation2 + $0x118] sm:$0xff] %v2033
      %2098 = vst [vmem:[#allocation2 + $0x120] sm:$0xff] %v2034
      %2099 = vst [vmem:[#allocation2 + $0x128] sm:$0xff] %v2035
      %2100 = vst [vmem:[#allocation2 + $0x130] sm:$0xff] %v2036
      %2101 = vst [vmem:[#allocation2 + $0x138] sm:$0xff] %v2037
      %2102 = vst [vmem:[#allocation2 + $0x140] sm:$0xff] %v2038
      %2103 = vst [vmem:[#allocation2 + $0x148] sm:$0xff] %v2039
      %2104 = vst [vmem:[#allocation2 + $0x150] sm:$0xff] %v2040
      %2105 = vst [vmem:[#allocation2 + $0x158] sm:$0xff] %v2041
      %2106 = vst [vmem:[#allocation2 + $0x160] sm:$0xff] %v2042
      %2107 = vst [vmem:[#allocation2 + $0x168] sm:$0xff] %v2043
      %2108 = vst [vmem:[#allocation2 + $0x170] sm:$0xff] %v2044
      %2109 = vst [vmem:[#allocation2 + $0x178] sm:$0xff] %v2045
      %2110 = vst [vmem:[#allocation2 + $0x180] sm:$0xff] %v2046
      %2111 = vst [vmem:[#allocation2 + $0x188] sm:$0xff] %v2047
      %2112 = vst [vmem:[#allocation2 + $0x190] sm:$0xff] %v2048
      %2113 = vst [vmem:[#allocation2 + $0x198] sm:$0xff] %v2049
      %2114 = vst [vmem:[#allocation2 + $0x1a0] sm:$0xff] %v2050
      %2115 = vst [vmem:[#allocation2 + $0x1a8] sm:$0xff] %v2051
      %2116 = vst [vmem:[#allocation2 + $0x1b0] sm:$0xff] %v2052
      %2117 = vst [vmem:[#allocation2 + $0x1b8] sm:$0xff] %v2053
      %2118 = vst [vmem:[#allocation2 + $0x1c0] sm:$0xff] %v2054
      %2119 = vst [vmem:[#allocation2 + $0x1c8] sm:$0xff] %v2055
      %2120 = vst [vmem:[#allocation2 + $0x1d0] sm:$0xff] %v2056
      %2121 = vst [vmem:[#allocation2 + $0x1d8] sm:$0xff] %v2057
      %2122 = vst [vmem:[#allocation2 + $0x1e0] sm:$0xff] %v2058
      %2123 = vst [vmem:[#allocation2 + $0x1e8] sm:$0xff] %v2059
      %2124 = vst [vmem:[#allocation2 + $0x1f0] sm:$0xff] %v2060
      %2125 = vst [vmem:[#allocation2 + $0x1f8] sm:$0xff] %v2061
      %s2126 = sadd.s32 %s194, 384
      %s2127 = sshra.s32 %s2126, 3
      %s2128 = sand.u32 %s2126, 7
      %s2129 = smul.addr %s2127, 4
      %s2130 = scalar_lea.vmem %s183, %s2129
      %v2131 = vld [vmem:[%s2130] sm:$0xf]
      %v2132 = vld [vmem:[%s2130 + $0x4] sm:$0xf]
      %v2133 = vld [vmem:[%s2130 + $0x8] sm:$0xf]
      %v2134 = vld [vmem:[%s2130 + $0xc] sm:$0xf]
      %v2135 = vld [vmem:[%s2130 + $0x10] sm:$0xf]
      %v2136 = vld [vmem:[%s2130 + $0x14] sm:$0xf]
      %v2137 = vld [vmem:[%s2130 + $0x18] sm:$0xf]
      %v2138 = vld [vmem:[%s2130 + $0x1c] sm:$0xf]
      %v2139 = vld [vmem:[%s2130 + $0x20] sm:$0xf]
      %v2140 = vld [vmem:[%s2130 + $0x24] sm:$0xf]
      %v2141 = vld [vmem:[%s2130 + $0x28] sm:$0xf]
      %v2142 = vld [vmem:[%s2130 + $0x2c] sm:$0xf]
      %v2143 = vld [vmem:[%s2130 + $0x30] sm:$0xf]
      %v2144 = vld [vmem:[%s2130 + $0x34] sm:$0xf]
      %v2145 = vld [vmem:[%s2130 + $0x38] sm:$0xf]
      %v2146 = vld [vmem:[%s2130 + $0x3c] sm:$0xf]
      %v2147 = vld [vmem:[%s2130 + $0x40] sm:$0xf]
      %v2148 = vld [vmem:[%s2130 + $0x44] sm:$0xf]
      %v2149 = vld [vmem:[%s2130 + $0x48] sm:$0xf]
      %v2150 = vld [vmem:[%s2130 + $0x4c] sm:$0xf]
      %v2151 = vld [vmem:[%s2130 + $0x50] sm:$0xf]
      %v2152 = vld [vmem:[%s2130 + $0x54] sm:$0xf]
      %v2153 = vld [vmem:[%s2130 + $0x58] sm:$0xf]
      %v2154 = vld [vmem:[%s2130 + $0x5c] sm:$0xf]
      %v2155 = vld [vmem:[%s2130 + $0x60] sm:$0xf]
      %v2156 = vld [vmem:[%s2130 + $0x64] sm:$0xf]
      %v2157 = vld [vmem:[%s2130 + $0x68] sm:$0xf]
      %v2158 = vld [vmem:[%s2130 + $0x6c] sm:$0xf]
      %v2159 = vld [vmem:[%s2130 + $0x70] sm:$0xf]
      %v2160 = vld [vmem:[%s2130 + $0x74] sm:$0xf]
      %v2161 = vld [vmem:[%s2130 + $0x78] sm:$0xf]
      %v2162 = vld [vmem:[%s2130 + $0x7c] sm:$0xf]
      %v2163 = vld [vmem:[%s2130 + $0x80] sm:$0xf]
      %v2164 = vld [vmem:[%s2130 + $0x84] sm:$0xf]
      %v2165 = vld [vmem:[%s2130 + $0x88] sm:$0xf]
      %v2166 = vld [vmem:[%s2130 + $0x8c] sm:$0xf]
      %v2167 = vld [vmem:[%s2130 + $0x90] sm:$0xf]
      %v2168 = vld [vmem:[%s2130 + $0x94] sm:$0xf]
      %v2169 = vld [vmem:[%s2130 + $0x98] sm:$0xf]
      %v2170 = vld [vmem:[%s2130 + $0x9c] sm:$0xf]
      %v2171 = vld [vmem:[%s2130 + $0xa0] sm:$0xf]
      %v2172 = vld [vmem:[%s2130 + $0xa4] sm:$0xf]
      %v2173 = vld [vmem:[%s2130 + $0xa8] sm:$0xf]
      %v2174 = vld [vmem:[%s2130 + $0xac] sm:$0xf]
      %v2175 = vld [vmem:[%s2130 + $0xb0] sm:$0xf]
      %v2176 = vld [vmem:[%s2130 + $0xb4] sm:$0xf]
      %v2177 = vld [vmem:[%s2130 + $0xb8] sm:$0xf]
      %v2178 = vld [vmem:[%s2130 + $0xbc] sm:$0xf]
      %v2179 = vld [vmem:[%s2130 + $0xc0] sm:$0xf]
      %v2180 = vld [vmem:[%s2130 + $0xc4] sm:$0xf]
      %v2181 = vld [vmem:[%s2130 + $0xc8] sm:$0xf]
      %v2182 = vld [vmem:[%s2130 + $0xcc] sm:$0xf]
      %v2183 = vld [vmem:[%s2130 + $0xd0] sm:$0xf]
      %v2184 = vld [vmem:[%s2130 + $0xd4] sm:$0xf]
      %v2185 = vld [vmem:[%s2130 + $0xd8] sm:$0xf]
      %v2186 = vld [vmem:[%s2130 + $0xdc] sm:$0xf]
      %v2187 = vld [vmem:[%s2130 + $0xe0] sm:$0xf]
      %v2188 = vld [vmem:[%s2130 + $0xe4] sm:$0xf]
      %v2189 = vld [vmem:[%s2130 + $0xe8] sm:$0xf]
      %v2190 = vld [vmem:[%s2130 + $0xec] sm:$0xf]
      %v2191 = vld [vmem:[%s2130 + $0xf0] sm:$0xf]
      %v2192 = vld [vmem:[%s2130 + $0xf4] sm:$0xf]
      %v2193 = vld [vmem:[%s2130 + $0xf8] sm:$0xf]
      %v2194 = vld [vmem:[%s2130 + $0xfc] sm:$0xf]
      %s2195 = scalar_lea.vmem %s1, 192
      %v2196 = vld [vmem:[%s2195] sm:$0xf]
      %v2197 = vld [vmem:[%s2195 + $0x4] sm:$0xf]
      %v2198 = vld [vmem:[%s2195 + $0x8] sm:$0xf]
      %v2199 = vld [vmem:[%s2195 + $0xc] sm:$0xf]
      %v2200 = vld [vmem:[%s2195 + $0x10] sm:$0xf]
      %v2201 = vld [vmem:[%s2195 + $0x14] sm:$0xf]
      %v2202 = vld [vmem:[%s2195 + $0x18] sm:$0xf]
      %v2203 = vld [vmem:[%s2195 + $0x1c] sm:$0xf]
      %v2204 = vld [vmem:[%s2195 + $0x20] sm:$0xf]
      %v2205 = vld [vmem:[%s2195 + $0x24] sm:$0xf]
      %v2206 = vld [vmem:[%s2195 + $0x28] sm:$0xf]
      %v2207 = vld [vmem:[%s2195 + $0x2c] sm:$0xf]
      %v2208 = vld [vmem:[%s2195 + $0x30] sm:$0xf]
      %v2209 = vld [vmem:[%s2195 + $0x34] sm:$0xf]
      %v2210 = vld [vmem:[%s2195 + $0x38] sm:$0xf]
      %v2211 = vld [vmem:[%s2195 + $0x3c] sm:$0xf]
      %v2276 = vunpack.c.l.b16 %v2131
      %v2277 = vunpack.c.l.b16 %v2132
      %v2278 = vunpack.c.l.b16 %v2133
      %v2279 = vunpack.c.l.b16 %v2134
      %v2280 = vunpack.c.l.b16 %v2135
      %v2281 = vunpack.c.l.b16 %v2136
      %v2282 = vunpack.c.l.b16 %v2137
      %v2283 = vunpack.c.l.b16 %v2138
      %v2284 = vunpack.c.l.b16 %v2139
      %v2285 = vunpack.c.l.b16 %v2140
      %v2286 = vunpack.c.l.b16 %v2141
      %v2287 = vunpack.c.l.b16 %v2142
      %v2288 = vunpack.c.l.b16 %v2143
      %v2289 = vunpack.c.l.b16 %v2144
      %v2290 = vunpack.c.l.b16 %v2145
      %v2291 = vunpack.c.l.b16 %v2146
      %v2292 = vunpack.c.l.b16 %v2147
      %v2293 = vunpack.c.l.b16 %v2148
      %v2294 = vunpack.c.l.b16 %v2149
      %v2295 = vunpack.c.l.b16 %v2150
      %v2296 = vunpack.c.l.b16 %v2151
      %v2297 = vunpack.c.l.b16 %v2152
      %v2298 = vunpack.c.l.b16 %v2153
      %v2299 = vunpack.c.l.b16 %v2154
      %v2300 = vunpack.c.l.b16 %v2155
      %v2301 = vunpack.c.l.b16 %v2156
      %v2302 = vunpack.c.l.b16 %v2157
      %v2303 = vunpack.c.l.b16 %v2158
      %v2304 = vunpack.c.l.b16 %v2159
      %v2305 = vunpack.c.l.b16 %v2160
      %v2306 = vunpack.c.l.b16 %v2161
      %v2307 = vunpack.c.l.b16 %v2162
      %v2308 = vunpack.c.l.b16 %v2163
      %v2309 = vunpack.c.l.b16 %v2164
      %v2310 = vunpack.c.l.b16 %v2165
      %v2311 = vunpack.c.l.b16 %v2166
      %v2312 = vunpack.c.l.b16 %v2167
      %v2313 = vunpack.c.l.b16 %v2168
      %v2314 = vunpack.c.l.b16 %v2169
      %v2315 = vunpack.c.l.b16 %v2170
      %v2316 = vunpack.c.l.b16 %v2171
      %v2317 = vunpack.c.l.b16 %v2172
      %v2318 = vunpack.c.l.b16 %v2173
      %v2319 = vunpack.c.l.b16 %v2174
      %v2320 = vunpack.c.l.b16 %v2175
      %v2321 = vunpack.c.l.b16 %v2176
      %v2322 = vunpack.c.l.b16 %v2177
      %v2323 = vunpack.c.l.b16 %v2178
      %v2324 = vunpack.c.l.b16 %v2179
      %v2325 = vunpack.c.l.b16 %v2180
      %v2326 = vunpack.c.l.b16 %v2181
      %v2327 = vunpack.c.l.b16 %v2182
      %v2328 = vunpack.c.l.b16 %v2183
      %v2329 = vunpack.c.l.b16 %v2184
      %v2330 = vunpack.c.l.b16 %v2185
      %v2331 = vunpack.c.l.b16 %v2186
      %v2332 = vunpack.c.l.b16 %v2187
      %v2333 = vunpack.c.l.b16 %v2188
      %v2334 = vunpack.c.l.b16 %v2189
      %v2335 = vunpack.c.l.b16 %v2190
      %v2336 = vunpack.c.l.b16 %v2191
      %v2337 = vunpack.c.l.b16 %v2192
      %v2338 = vunpack.c.l.b16 %v2193
      %v2339 = vunpack.c.l.b16 %v2194
      %v2340 = vpack.c.b16 %v2277, %v2276
      %v2341 = vpack.c.b16 %v2279, %v2278
      %v2342 = vpack.c.b16 %v2281, %v2280
      %v2343 = vpack.c.b16 %v2283, %v2282
      %v2344 = vpack.c.b16 %v2285, %v2284
      %v2345 = vpack.c.b16 %v2287, %v2286
      %v2346 = vpack.c.b16 %v2289, %v2288
      %v2347 = vpack.c.b16 %v2291, %v2290
      %v2348 = vpack.c.b16 %v2293, %v2292
      %v2349 = vpack.c.b16 %v2295, %v2294
      %v2350 = vpack.c.b16 %v2297, %v2296
      %v2351 = vpack.c.b16 %v2299, %v2298
      %v2352 = vpack.c.b16 %v2301, %v2300
      %v2353 = vpack.c.b16 %v2303, %v2302
      %v2354 = vpack.c.b16 %v2305, %v2304
      %v2355 = vpack.c.b16 %v2307, %v2306
      %v2356 = vpack.c.b16 %v2309, %v2308
      %v2357 = vpack.c.b16 %v2311, %v2310
      %v2358 = vpack.c.b16 %v2313, %v2312
      %v2359 = vpack.c.b16 %v2315, %v2314
      %v2360 = vpack.c.b16 %v2317, %v2316
      %v2361 = vpack.c.b16 %v2319, %v2318
      %v2362 = vpack.c.b16 %v2321, %v2320
      %v2363 = vpack.c.b16 %v2323, %v2322
      %v2364 = vpack.c.b16 %v2325, %v2324
      %v2365 = vpack.c.b16 %v2327, %v2326
      %v2366 = vpack.c.b16 %v2329, %v2328
      %v2367 = vpack.c.b16 %v2331, %v2330
      %v2368 = vpack.c.b16 %v2333, %v2332
      %v2369 = vpack.c.b16 %v2335, %v2334
      %v2370 = vpack.c.b16 %v2337, %v2336
      %v2371 = vpack.c.b16 %v2339, %v2338
      %v2420 = vunpack.c.l.b16 %v2196
      %v2421 = vunpack.c.l.b16 %v2197
      %v2422 = vunpack.c.l.b16 %v2198
      %v2423 = vunpack.c.l.b16 %v2199
      %v2424 = vunpack.c.l.b16 %v2200
      %v2425 = vunpack.c.l.b16 %v2201
      %v2426 = vunpack.c.l.b16 %v2202
      %v2427 = vunpack.c.l.b16 %v2203
      %v2428 = vunpack.c.l.b16 %v2204
      %v2429 = vunpack.c.l.b16 %v2205
      %v2430 = vunpack.c.l.b16 %v2206
      %v2431 = vunpack.c.l.b16 %v2207
      %v2432 = vunpack.c.l.b16 %v2208
      %v2433 = vunpack.c.l.b16 %v2209
      %v2434 = vunpack.c.l.b16 %v2210
      %v2435 = vunpack.c.l.b16 %v2211
      %v2436 = vpack.c.b16 %v2421, %v2420
      %v2437 = vpack.c.b16 %v2423, %v2422
      %v2438 = vpack.c.b16 %v2425, %v2424
      %v2439 = vpack.c.b16 %v2427, %v2426
      %v2440 = vpack.c.b16 %v2429, %v2428
      %v2441 = vpack.c.b16 %v2431, %v2430
      %v2442 = vpack.c.b16 %v2433, %v2432
      %v2443 = vpack.c.b16 %v2435, %v2434
      %2452 = vmatpush.bf16.msra.mxu0 %v2443
      %2453 = vmatpush.bf16.msra.mxu0 %v2442
      %2454 = vmatpush.bf16.msra.mxu0 %v2441
      %2455 = vmatpush.bf16.msra.mxu0 %v2440
      %2456 = vmatpush.bf16.msra.mxu0 %v2439
      %2457 = vmatpush.bf16.msra.mxu0 %v2438
      %2458 = vmatpush.bf16.msra.mxu0 %v2437
      %2459 = vmatpush.bf16.msra.mxu0 %v2436
      %2460 = vmatmul.bf16.gmra.mxu0 %v2340
      %v2461 = vpop.f32.mrf.mxu0
      %v2462 = vadd.f32 0.0, %v2461
      %v2463 = vpop.f32.mrf.mxu0
      %v2464 = vadd.f32 0.0, %v2463
      %2465 = vmatmul.bf16.gmra.mxu0 %v2341
      %v2466 = vpop.f32.mrf.mxu0
      %v2467 = vadd.f32 0.0, %v2466
      %v2468 = vpop.f32.mrf.mxu0
      %v2469 = vadd.f32 0.0, %v2468
      %2470 = vmatmul.bf16.gmra.mxu0 %v2342
      %v2471 = vpop.f32.mrf.mxu0
      %v2472 = vadd.f32 0.0, %v2471
      %v2473 = vpop.f32.mrf.mxu0
      %v2474 = vadd.f32 0.0, %v2473
      %2475 = vmatmul.bf16.gmra.mxu0 %v2343
      %v2476 = vpop.f32.mrf.mxu0
      %v2477 = vadd.f32 0.0, %v2476
      %v2478 = vpop.f32.mrf.mxu0
      %v2479 = vadd.f32 0.0, %v2478
      %2480 = vmatmul.bf16.gmra.mxu0 %v2344
      %v2481 = vpop.f32.mrf.mxu0
      %v2482 = vadd.f32 0.0, %v2481
      %v2483 = vpop.f32.mrf.mxu0
      %v2484 = vadd.f32 0.0, %v2483
      %2485 = vmatmul.bf16.gmra.mxu0 %v2345
      %v2486 = vpop.f32.mrf.mxu0
      %v2487 = vadd.f32 0.0, %v2486
      %v2488 = vpop.f32.mrf.mxu0
      %v2489 = vadd.f32 0.0, %v2488
      %2490 = vmatmul.bf16.gmra.mxu0 %v2346
      %v2491 = vpop.f32.mrf.mxu0
      %v2492 = vadd.f32 0.0, %v2491
      %v2493 = vpop.f32.mrf.mxu0
      %v2494 = vadd.f32 0.0, %v2493
      %2495 = vmatmul.bf16.gmra.mxu0 %v2347
      %v2496 = vpop.f32.mrf.mxu0
      %v2497 = vadd.f32 0.0, %v2496
      %v2498 = vpop.f32.mrf.mxu0
      %v2499 = vadd.f32 0.0, %v2498
      %2500 = vmatmul.bf16.gmra.mxu0 %v2348
      %v2501 = vpop.f32.mrf.mxu0
      %v2502 = vadd.f32 0.0, %v2501
      %v2503 = vpop.f32.mrf.mxu0
      %v2504 = vadd.f32 0.0, %v2503
      %2505 = vmatmul.bf16.gmra.mxu0 %v2349
      %v2506 = vpop.f32.mrf.mxu0
      %v2507 = vadd.f32 0.0, %v2506
      %v2508 = vpop.f32.mrf.mxu0
      %v2509 = vadd.f32 0.0, %v2508
      %2510 = vmatmul.bf16.gmra.mxu0 %v2350
      %v2511 = vpop.f32.mrf.mxu0
      %v2512 = vadd.f32 0.0, %v2511
      %v2513 = vpop.f32.mrf.mxu0
      %v2514 = vadd.f32 0.0, %v2513
      %2515 = vmatmul.bf16.gmra.mxu0 %v2351
      %v2516 = vpop.f32.mrf.mxu0
      %v2517 = vadd.f32 0.0, %v2516
      %v2518 = vpop.f32.mrf.mxu0
      %v2519 = vadd.f32 0.0, %v2518
      %2520 = vmatmul.bf16.gmra.mxu0 %v2352
      %v2521 = vpop.f32.mrf.mxu0
      %v2522 = vadd.f32 0.0, %v2521
      %v2523 = vpop.f32.mrf.mxu0
      %v2524 = vadd.f32 0.0, %v2523
      %2525 = vmatmul.bf16.gmra.mxu0 %v2353
      %v2526 = vpop.f32.mrf.mxu0
      %v2527 = vadd.f32 0.0, %v2526
      %v2528 = vpop.f32.mrf.mxu0
      %v2529 = vadd.f32 0.0, %v2528
      %2530 = vmatmul.bf16.gmra.mxu0 %v2354
      %v2531 = vpop.f32.mrf.mxu0
      %v2532 = vadd.f32 0.0, %v2531
      %v2533 = vpop.f32.mrf.mxu0
      %v2534 = vadd.f32 0.0, %v2533
      %2535 = vmatmul.bf16.gmra.mxu0 %v2355
      %v2536 = vpop.f32.mrf.mxu0
      %v2537 = vadd.f32 0.0, %v2536
      %v2538 = vpop.f32.mrf.mxu0
      %v2539 = vadd.f32 0.0, %v2538
      %2540 = vmatmul.bf16.gmra.mxu0 %v2356
      %v2541 = vpop.f32.mrf.mxu0
      %v2542 = vadd.f32 0.0, %v2541
      %v2543 = vpop.f32.mrf.mxu0
      %v2544 = vadd.f32 0.0, %v2543
      %2545 = vmatmul.bf16.gmra.mxu0 %v2357
      %v2546 = vpop.f32.mrf.mxu0
      %v2547 = vadd.f32 0.0, %v2546
      %v2548 = vpop.f32.mrf.mxu0
      %v2549 = vadd.f32 0.0, %v2548
      %2550 = vmatmul.bf16.gmra.mxu0 %v2358
      %v2551 = vpop.f32.mrf.mxu0
      %v2552 = vadd.f32 0.0, %v2551
      %v2553 = vpop.f32.mrf.mxu0
      %v2554 = vadd.f32 0.0, %v2553
      %2555 = vmatmul.bf16.gmra.mxu0 %v2359
      %v2556 = vpop.f32.mrf.mxu0
      %v2557 = vadd.f32 0.0, %v2556
      %v2558 = vpop.f32.mrf.mxu0
      %v2559 = vadd.f32 0.0, %v2558
      %2560 = vmatmul.bf16.gmra.mxu0 %v2360
      %v2561 = vpop.f32.mrf.mxu0
      %v2562 = vadd.f32 0.0, %v2561
      %v2563 = vpop.f32.mrf.mxu0
      %v2564 = vadd.f32 0.0, %v2563
      %2565 = vmatmul.bf16.gmra.mxu0 %v2361
      %v2566 = vpop.f32.mrf.mxu0
      %v2567 = vadd.f32 0.0, %v2566
      %v2568 = vpop.f32.mrf.mxu0
      %v2569 = vadd.f32 0.0, %v2568
      %2570 = vmatmul.bf16.gmra.mxu0 %v2362
      %v2571 = vpop.f32.mrf.mxu0
      %v2572 = vadd.f32 0.0, %v2571
      %v2573 = vpop.f32.mrf.mxu0
      %v2574 = vadd.f32 0.0, %v2573
      %2575 = vmatmul.bf16.gmra.mxu0 %v2363
      %v2576 = vpop.f32.mrf.mxu0
      %v2577 = vadd.f32 0.0, %v2576
      %v2578 = vpop.f32.mrf.mxu0
      %v2579 = vadd.f32 0.0, %v2578
      %2580 = vmatmul.bf16.gmra.mxu0 %v2364
      %v2581 = vpop.f32.mrf.mxu0
      %v2582 = vadd.f32 0.0, %v2581
      %v2583 = vpop.f32.mrf.mxu0
      %v2584 = vadd.f32 0.0, %v2583
      %2585 = vmatmul.bf16.gmra.mxu0 %v2365
      %v2586 = vpop.f32.mrf.mxu0
      %v2587 = vadd.f32 0.0, %v2586
      %v2588 = vpop.f32.mrf.mxu0
      %v2589 = vadd.f32 0.0, %v2588
      %2590 = vmatmul.bf16.gmra.mxu0 %v2366
      %v2591 = vpop.f32.mrf.mxu0
      %v2592 = vadd.f32 0.0, %v2591
      %v2593 = vpop.f32.mrf.mxu0
      %v2594 = vadd.f32 0.0, %v2593
      %2595 = vmatmul.bf16.gmra.mxu0 %v2367
      %v2596 = vpop.f32.mrf.mxu0
      %v2597 = vadd.f32 0.0, %v2596
      %v2598 = vpop.f32.mrf.mxu0
      %v2599 = vadd.f32 0.0, %v2598
      %2600 = vmatmul.bf16.gmra.mxu0 %v2368
      %v2601 = vpop.f32.mrf.mxu0
      %v2602 = vadd.f32 0.0, %v2601
      %v2603 = vpop.f32.mrf.mxu0
      %v2604 = vadd.f32 0.0, %v2603
      %2605 = vmatmul.bf16.gmra.mxu0 %v2369
      %v2606 = vpop.f32.mrf.mxu0
      %v2607 = vadd.f32 0.0, %v2606
      %v2608 = vpop.f32.mrf.mxu0
      %v2609 = vadd.f32 0.0, %v2608
      %2610 = vmatmul.bf16.gmra.mxu0 %v2370
      %v2611 = vpop.f32.mrf.mxu0
      %v2612 = vadd.f32 0.0, %v2611
      %v2613 = vpop.f32.mrf.mxu0
      %v2614 = vadd.f32 0.0, %v2613
      %2615 = vmatmul.bf16.gmra.mxu0 %v2371
      %v2616 = vpop.f32.mrf.mxu0
      %v2617 = vadd.f32 0.0, %v2616
      %v2618 = vpop.f32.mrf.mxu0
      %v2619 = vadd.f32 0.0, %v2618
      %2620 = vdwg.mxu0
      %v2621 = vld [vmem:[#allocation2] sm:$0xff]
      %v2622 = vld [vmem:[#allocation2 + $0x8] sm:$0xff]
      %v2623 = vld [vmem:[#allocation2 + $0x10] sm:$0xff]
      %v2624 = vld [vmem:[#allocation2 + $0x18] sm:$0xff]
      %v2625 = vld [vmem:[#allocation2 + $0x20] sm:$0xff]
      %v2626 = vld [vmem:[#allocation2 + $0x28] sm:$0xff]
      %v2627 = vld [vmem:[#allocation2 + $0x30] sm:$0xff]
      %v2628 = vld [vmem:[#allocation2 + $0x38] sm:$0xff]
      %v2629 = vld [vmem:[#allocation2 + $0x40] sm:$0xff]
      %v2630 = vld [vmem:[#allocation2 + $0x48] sm:$0xff]
      %v2631 = vld [vmem:[#allocation2 + $0x50] sm:$0xff]
      %v2632 = vld [vmem:[#allocation2 + $0x58] sm:$0xff]
      %v2633 = vld [vmem:[#allocation2 + $0x60] sm:$0xff]
      %v2634 = vld [vmem:[#allocation2 + $0x68] sm:$0xff]
      %v2635 = vld [vmem:[#allocation2 + $0x70] sm:$0xff]
      %v2636 = vld [vmem:[#allocation2 + $0x78] sm:$0xff]
      %v2637 = vld [vmem:[#allocation2 + $0x80] sm:$0xff]
      %v2638 = vld [vmem:[#allocation2 + $0x88] sm:$0xff]
      %v2639 = vld [vmem:[#allocation2 + $0x90] sm:$0xff]
      %v2640 = vld [vmem:[#allocation2 + $0x98] sm:$0xff]
      %v2641 = vld [vmem:[#allocation2 + $0xa0] sm:$0xff]
      %v2642 = vld [vmem:[#allocation2 + $0xa8] sm:$0xff]
      %v2643 = vld [vmem:[#allocation2 + $0xb0] sm:$0xff]
      %v2644 = vld [vmem:[#allocation2 + $0xb8] sm:$0xff]
      %v2645 = vld [vmem:[#allocation2 + $0xc0] sm:$0xff]
      %v2646 = vld [vmem:[#allocation2 + $0xc8] sm:$0xff]
      %v2647 = vld [vmem:[#allocation2 + $0xd0] sm:$0xff]
      %v2648 = vld [vmem:[#allocation2 + $0xd8] sm:$0xff]
      %v2649 = vld [vmem:[#allocation2 + $0xe0] sm:$0xff]
      %v2650 = vld [vmem:[#allocation2 + $0xe8] sm:$0xff]
      %v2651 = vld [vmem:[#allocation2 + $0xf0] sm:$0xff]
      %v2652 = vld [vmem:[#allocation2 + $0xf8] sm:$0xff]
      %v2653 = vld [vmem:[#allocation2 + $0x100] sm:$0xff]
      %v2654 = vld [vmem:[#allocation2 + $0x108] sm:$0xff]
      %v2655 = vld [vmem:[#allocation2 + $0x110] sm:$0xff]
      %v2656 = vld [vmem:[#allocation2 + $0x118] sm:$0xff]
      %v2657 = vld [vmem:[#allocation2 + $0x120] sm:$0xff]
      %v2658 = vld [vmem:[#allocation2 + $0x128] sm:$0xff]
      %v2659 = vld [vmem:[#allocation2 + $0x130] sm:$0xff]
      %v2660 = vld [vmem:[#allocation2 + $0x138] sm:$0xff]
      %v2661 = vld [vmem:[#allocation2 + $0x140] sm:$0xff]
      %v2662 = vld [vmem:[#allocation2 + $0x148] sm:$0xff]
      %v2663 = vld [vmem:[#allocation2 + $0x150] sm:$0xff]
      %v2664 = vld [vmem:[#allocation2 + $0x158] sm:$0xff]
      %v2665 = vld [vmem:[#allocation2 + $0x160] sm:$0xff]
      %v2666 = vld [vmem:[#allocation2 + $0x168] sm:$0xff]
      %v2667 = vld [vmem:[#allocation2 + $0x170] sm:$0xff]
      %v2668 = vld [vmem:[#allocation2 + $0x178] sm:$0xff]
      %v2669 = vld [vmem:[#allocation2 + $0x180] sm:$0xff]
      %v2670 = vld [vmem:[#allocation2 + $0x188] sm:$0xff]
      %v2671 = vld [vmem:[#allocation2 + $0x190] sm:$0xff]
      %v2672 = vld [vmem:[#allocation2 + $0x198] sm:$0xff]
      %v2673 = vld [vmem:[#allocation2 + $0x1a0] sm:$0xff]
      %v2674 = vld [vmem:[#allocation2 + $0x1a8] sm:$0xff]
      %v2675 = vld [vmem:[#allocation2 + $0x1b0] sm:$0xff]
      %v2676 = vld [vmem:[#allocation2 + $0x1b8] sm:$0xff]
      %v2677 = vld [vmem:[#allocation2 + $0x1c0] sm:$0xff]
      %v2678 = vld [vmem:[#allocation2 + $0x1c8] sm:$0xff]
      %v2679 = vld [vmem:[#allocation2 + $0x1d0] sm:$0xff]
      %v2680 = vld [vmem:[#allocation2 + $0x1d8] sm:$0xff]
      %v2681 = vld [vmem:[#allocation2 + $0x1e0] sm:$0xff]
      %v2682 = vld [vmem:[#allocation2 + $0x1e8] sm:$0xff]
      %v2683 = vld [vmem:[#allocation2 + $0x1f0] sm:$0xff]
      %v2684 = vld [vmem:[#allocation2 + $0x1f8] sm:$0xff]
      %v2685 = vadd.f32 %v2621, %v2462
      %v2686 = vadd.f32 %v2622, %v2464
      %v2687 = vadd.f32 %v2623, %v2467
      %v2688 = vadd.f32 %v2624, %v2469
      %v2689 = vadd.f32 %v2625, %v2472
      %v2690 = vadd.f32 %v2626, %v2474
      %v2691 = vadd.f32 %v2627, %v2477
      %v2692 = vadd.f32 %v2628, %v2479
      %v2693 = vadd.f32 %v2629, %v2482
      %v2694 = vadd.f32 %v2630, %v2484
      %v2695 = vadd.f32 %v2631, %v2487
      %v2696 = vadd.f32 %v2632, %v2489
      %v2697 = vadd.f32 %v2633, %v2492
      %v2698 = vadd.f32 %v2634, %v2494
      %v2699 = vadd.f32 %v2635, %v2497
      %v2700 = vadd.f32 %v2636, %v2499
      %v2701 = vadd.f32 %v2637, %v2502
      %v2702 = vadd.f32 %v2638, %v2504
      %v2703 = vadd.f32 %v2639, %v2507
      %v2704 = vadd.f32 %v2640, %v2509
      %v2705 = vadd.f32 %v2641, %v2512
      %v2706 = vadd.f32 %v2642, %v2514
      %v2707 = vadd.f32 %v2643, %v2517
      %v2708 = vadd.f32 %v2644, %v2519
      %v2709 = vadd.f32 %v2645, %v2522
      %v2710 = vadd.f32 %v2646, %v2524
      %v2711 = vadd.f32 %v2647, %v2527
      %v2712 = vadd.f32 %v2648, %v2529
      %v2713 = vadd.f32 %v2649, %v2532
      %v2714 = vadd.f32 %v2650, %v2534
      %v2715 = vadd.f32 %v2651, %v2537
      %v2716 = vadd.f32 %v2652, %v2539
      %v2717 = vadd.f32 %v2653, %v2542
      %v2718 = vadd.f32 %v2654, %v2544
      %v2719 = vadd.f32 %v2655, %v2547
      %v2720 = vadd.f32 %v2656, %v2549
      %v2721 = vadd.f32 %v2657, %v2552
      %v2722 = vadd.f32 %v2658, %v2554
      %v2723 = vadd.f32 %v2659, %v2557
      %v2724 = vadd.f32 %v2660, %v2559
      %v2725 = vadd.f32 %v2661, %v2562
      %v2726 = vadd.f32 %v2662, %v2564
      %v2727 = vadd.f32 %v2663, %v2567
      %v2728 = vadd.f32 %v2664, %v2569
      %v2729 = vadd.f32 %v2665, %v2572
      %v2730 = vadd.f32 %v2666, %v2574
      %v2731 = vadd.f32 %v2667, %v2577
      %v2732 = vadd.f32 %v2668, %v2579
      %v2733 = vadd.f32 %v2669, %v2582
      %v2734 = vadd.f32 %v2670, %v2584
      %v2735 = vadd.f32 %v2671, %v2587
      %v2736 = vadd.f32 %v2672, %v2589
      %v2737 = vadd.f32 %v2673, %v2592
      %v2738 = vadd.f32 %v2674, %v2594
      %v2739 = vadd.f32 %v2675, %v2597
      %v2740 = vadd.f32 %v2676, %v2599
      %v2741 = vadd.f32 %v2677, %v2602
      %v2742 = vadd.f32 %v2678, %v2604
      %v2743 = vadd.f32 %v2679, %v2607
      %v2744 = vadd.f32 %v2680, %v2609
      %v2745 = vadd.f32 %v2681, %v2612
      %v2746 = vadd.f32 %v2682, %v2614
      %v2747 = vadd.f32 %v2683, %v2617
      %v2748 = vadd.f32 %v2684, %v2619
      %2749 = vst [vmem:[#allocation2] sm:$0xff] %v2685
      %2750 = vst [vmem:[#allocation2 + $0x8] sm:$0xff] %v2686
      %2751 = vst [vmem:[#allocation2 + $0x10] sm:$0xff] %v2687
      %2752 = vst [vmem:[#allocation2 + $0x18] sm:$0xff] %v2688
      %2753 = vst [vmem:[#allocation2 + $0x20] sm:$0xff] %v2689
      %2754 = vst [vmem:[#allocation2 + $0x28] sm:$0xff] %v2690
      %2755 = vst [vmem:[#allocation2 + $0x30] sm:$0xff] %v2691
      %2756 = vst [vmem:[#allocation2 + $0x38] sm:$0xff] %v2692
      %2757 = vst [vmem:[#allocation2 + $0x40] sm:$0xff] %v2693
      %2758 = vst [vmem:[#allocation2 + $0x48] sm:$0xff] %v2694
      %2759 = vst [vmem:[#allocation2 + $0x50] sm:$0xff] %v2695
      %2760 = vst [vmem:[#allocation2 + $0x58] sm:$0xff] %v2696
      %2761 = vst [vmem:[#allocation2 + $0x60] sm:$0xff] %v2697
      %2762 = vst [vmem:[#allocation2 + $0x68] sm:$0xff] %v2698
      %2763 = vst [vmem:[#allocation2 + $0x70] sm:$0xff] %v2699
      %2764 = vst [vmem:[#allocation2 + $0x78] sm:$0xff] %v2700
      %2765 = vst [vmem:[#allocation2 + $0x80] sm:$0xff] %v2701
      %2766 = vst [vmem:[#allocation2 + $0x88] sm:$0xff] %v2702
      %2767 = vst [vmem:[#allocation2 + $0x90] sm:$0xff] %v2703
      %2768 = vst [vmem:[#allocation2 + $0x98] sm:$0xff] %v2704
      %2769 = vst [vmem:[#allocation2 + $0xa0] sm:$0xff] %v2705
      %2770 = vst [vmem:[#allocation2 + $0xa8] sm:$0xff] %v2706
      %2771 = vst [vmem:[#allocation2 + $0xb0] sm:$0xff] %v2707
      %2772 = vst [vmem:[#allocation2 + $0xb8] sm:$0xff] %v2708
      %2773 = vst [vmem:[#allocation2 + $0xc0] sm:$0xff] %v2709
      %2774 = vst [vmem:[#allocation2 + $0xc8] sm:$0xff] %v2710
      %2775 = vst [vmem:[#allocation2 + $0xd0] sm:$0xff] %v2711
      %2776 = vst [vmem:[#allocation2 + $0xd8] sm:$0xff] %v2712
      %2777 = vst [vmem:[#allocation2 + $0xe0] sm:$0xff] %v2713
      %2778 = vst [vmem:[#allocation2 + $0xe8] sm:$0xff] %v2714
      %2779 = vst [vmem:[#allocation2 + $0xf0] sm:$0xff] %v2715
      %2780 = vst [vmem:[#allocation2 + $0xf8] sm:$0xff] %v2716
      %2781 = vst [vmem:[#allocation2 + $0x100] sm:$0xff] %v2717
      %2782 = vst [vmem:[#allocation2 + $0x108] sm:$0xff] %v2718
      %2783 = vst [vmem:[#allocation2 + $0x110] sm:$0xff] %v2719
      %2784 = vst [vmem:[#allocation2 + $0x118] sm:$0xff] %v2720
      %2785 = vst [vmem:[#allocation2 + $0x120] sm:$0xff] %v2721
      %2786 = vst [vmem:[#allocation2 + $0x128] sm:$0xff] %v2722
      %2787 = vst [vmem:[#allocation2 + $0x130] sm:$0xff] %v2723
      %2788 = vst [vmem:[#allocation2 + $0x138] sm:$0xff] %v2724
      %2789 = vst [vmem:[#allocation2 + $0x140] sm:$0xff] %v2725
      %2790 = vst [vmem:[#allocation2 + $0x148] sm:$0xff] %v2726
      %2791 = vst [vmem:[#allocation2 + $0x150] sm:$0xff] %v2727
      %2792 = vst [vmem:[#allocation2 + $0x158] sm:$0xff] %v2728
      %2793 = vst [vmem:[#allocation2 + $0x160] sm:$0xff] %v2729
      %2794 = vst [vmem:[#allocation2 + $0x168] sm:$0xff] %v2730
      %2795 = vst [vmem:[#allocation2 + $0x170] sm:$0xff] %v2731
      %2796 = vst [vmem:[#allocation2 + $0x178] sm:$0xff] %v2732
      %2797 = vst [vmem:[#allocation2 + $0x180] sm:$0xff] %v2733
      %2798 = vst [vmem:[#allocation2 + $0x188] sm:$0xff] %v2734
      %2799 = vst [vmem:[#allocation2 + $0x190] sm:$0xff] %v2735
      %2800 = vst [vmem:[#allocation2 + $0x198] sm:$0xff] %v2736
      %2801 = vst [vmem:[#allocation2 + $0x1a0] sm:$0xff] %v2737
      %2802 = vst [vmem:[#allocation2 + $0x1a8] sm:$0xff] %v2738
      %2803 = vst [vmem:[#allocation2 + $0x1b0] sm:$0xff] %v2739
      %2804 = vst [vmem:[#allocation2 + $0x1b8] sm:$0xff] %v2740
      %2805 = vst [vmem:[#allocation2 + $0x1c0] sm:$0xff] %v2741
      %2806 = vst [vmem:[#allocation2 + $0x1c8] sm:$0xff] %v2742
      %2807 = vst [vmem:[#allocation2 + $0x1d0] sm:$0xff] %v2743
      %2808 = vst [vmem:[#allocation2 + $0x1d8] sm:$0xff] %v2744
      %2809 = vst [vmem:[#allocation2 + $0x1e0] sm:$0xff] %v2745
      %2810 = vst [vmem:[#allocation2 + $0x1e8] sm:$0xff] %v2746
      %2811 = vst [vmem:[#allocation2 + $0x1f0] sm:$0xff] %v2747
      %2812 = vst [vmem:[#allocation2 + $0x1f8] sm:$0xff] %v2748
      %s2813 = sadd.s32 %s194, 512
      %s2814 = sshra.s32 %s2813, 3
      %s2815 = sand.u32 %s2813, 7
      %s2816 = smul.addr %s2814, 4
      %s2817 = scalar_lea.vmem %s183, %s2816
      %v2818 = vld [vmem:[%s2817] sm:$0xf]
      %v2819 = vld [vmem:[%s2817 + $0x4] sm:$0xf]
      %v2820 = vld [vmem:[%s2817 + $0x8] sm:$0xf]
      %v2821 = vld [vmem:[%s2817 + $0xc] sm:$0xf]
      %v2822 = vld [vmem:[%s2817 + $0x10] sm:$0xf]
      %v2823 = vld [vmem:[%s2817 + $0x14] sm:$0xf]
      %v2824 = vld [vmem:[%s2817 + $0x18] sm:$0xf]
      %v2825 = vld [vmem:[%s2817 + $0x1c] sm:$0xf]
      %v2826 = vld [vmem:[%s2817 + $0x20] sm:$0xf]
      %v2827 = vld [vmem:[%s2817 + $0x24] sm:$0xf]
      %v2828 = vld [vmem:[%s2817 + $0x28] sm:$0xf]
      %v2829 = vld [vmem:[%s2817 + $0x2c] sm:$0xf]
      %v2830 = vld [vmem:[%s2817 + $0x30] sm:$0xf]
      %v2831 = vld [vmem:[%s2817 + $0x34] sm:$0xf]
      %v2832 = vld [vmem:[%s2817 + $0x38] sm:$0xf]
      %v2833 = vld [vmem:[%s2817 + $0x3c] sm:$0xf]
      %v2834 = vld [vmem:[%s2817 + $0x40] sm:$0xf]
      %v2835 = vld [vmem:[%s2817 + $0x44] sm:$0xf]
      %v2836 = vld [vmem:[%s2817 + $0x48] sm:$0xf]
      %v2837 = vld [vmem:[%s2817 + $0x4c] sm:$0xf]
      %v2838 = vld [vmem:[%s2817 + $0x50] sm:$0xf]
      %v2839 = vld [vmem:[%s2817 + $0x54] sm:$0xf]
      %v2840 = vld [vmem:[%s2817 + $0x58] sm:$0xf]
      %v2841 = vld [vmem:[%s2817 + $0x5c] sm:$0xf]
      %v2842 = vld [vmem:[%s2817 + $0x60] sm:$0xf]
      %v2843 = vld [vmem:[%s2817 + $0x64] sm:$0xf]
      %v2844 = vld [vmem:[%s2817 + $0x68] sm:$0xf]
      %v2845 = vld [vmem:[%s2817 + $0x6c] sm:$0xf]
      %v2846 = vld [vmem:[%s2817 + $0x70] sm:$0xf]
      %v2847 = vld [vmem:[%s2817 + $0x74] sm:$0xf]
      %v2848 = vld [vmem:[%s2817 + $0x78] sm:$0xf]
      %v2849 = vld [vmem:[%s2817 + $0x7c] sm:$0xf]
      %v2850 = vld [vmem:[%s2817 + $0x80] sm:$0xf]
      %v2851 = vld [vmem:[%s2817 + $0x84] sm:$0xf]
      %v2852 = vld [vmem:[%s2817 + $0x88] sm:$0xf]
      %v2853 = vld [vmem:[%s2817 + $0x8c] sm:$0xf]
      %v2854 = vld [vmem:[%s2817 + $0x90] sm:$0xf]
      %v2855 = vld [vmem:[%s2817 + $0x94] sm:$0xf]
      %v2856 = vld [vmem:[%s2817 + $0x98] sm:$0xf]
      %v2857 = vld [vmem:[%s2817 + $0x9c] sm:$0xf]
      %v2858 = vld [vmem:[%s2817 + $0xa0] sm:$0xf]
      %v2859 = vld [vmem:[%s2817 + $0xa4] sm:$0xf]
      %v2860 = vld [vmem:[%s2817 + $0xa8] sm:$0xf]
      %v2861 = vld [vmem:[%s2817 + $0xac] sm:$0xf]
      %v2862 = vld [vmem:[%s2817 + $0xb0] sm:$0xf]
      %v2863 = vld [vmem:[%s2817 + $0xb4] sm:$0xf]
      %v2864 = vld [vmem:[%s2817 + $0xb8] sm:$0xf]
      %v2865 = vld [vmem:[%s2817 + $0xbc] sm:$0xf]
      %v2866 = vld [vmem:[%s2817 + $0xc0] sm:$0xf]
      %v2867 = vld [vmem:[%s2817 + $0xc4] sm:$0xf]
      %v2868 = vld [vmem:[%s2817 + $0xc8] sm:$0xf]
      %v2869 = vld [vmem:[%s2817 + $0xcc] sm:$0xf]
      %v2870 = vld [vmem:[%s2817 + $0xd0] sm:$0xf]
      %v2871 = vld [vmem:[%s2817 + $0xd4] sm:$0xf]
      %v2872 = vld [vmem:[%s2817 + $0xd8] sm:$0xf]
      %v2873 = vld [vmem:[%s2817 + $0xdc] sm:$0xf]
      %v2874 = vld [vmem:[%s2817 + $0xe0] sm:$0xf]
      %v2875 = vld [vmem:[%s2817 + $0xe4] sm:$0xf]
      %v2876 = vld [vmem:[%s2817 + $0xe8] sm:$0xf]
      %v2877 = vld [vmem:[%s2817 + $0xec] sm:$0xf]
      %v2878 = vld [vmem:[%s2817 + $0xf0] sm:$0xf]
      %v2879 = vld [vmem:[%s2817 + $0xf4] sm:$0xf]
      %v2880 = vld [vmem:[%s2817 + $0xf8] sm:$0xf]
      %v2881 = vld [vmem:[%s2817 + $0xfc] sm:$0xf]
      %s2882 = scalar_lea.vmem %s1, 256
      %v2883 = vld [vmem:[%s2882] sm:$0xf]
      %v2884 = vld [vmem:[%s2882 + $0x4] sm:$0xf]
      %v2885 = vld [vmem:[%s2882 + $0x8] sm:$0xf]
      %v2886 = vld [vmem:[%s2882 + $0xc] sm:$0xf]
      %v2887 = vld [vmem:[%s2882 + $0x10] sm:$0xf]
      %v2888 = vld [vmem:[%s2882 + $0x14] sm:$0xf]
      %v2889 = vld [vmem:[%s2882 + $0x18] sm:$0xf]
      %v2890 = vld [vmem:[%s2882 + $0x1c] sm:$0xf]
      %v2891 = vld [vmem:[%s2882 + $0x20] sm:$0xf]
      %v2892 = vld [vmem:[%s2882 + $0x24] sm:$0xf]
      %v2893 = vld [vmem:[%s2882 + $0x28] sm:$0xf]
      %v2894 = vld [vmem:[%s2882 + $0x2c] sm:$0xf]
      %v2895 = vld [vmem:[%s2882 + $0x30] sm:$0xf]
      %v2896 = vld [vmem:[%s2882 + $0x34] sm:$0xf]
      %v2897 = vld [vmem:[%s2882 + $0x38] sm:$0xf]
      %v2898 = vld [vmem:[%s2882 + $0x3c] sm:$0xf]
      %v2963 = vunpack.c.l.b16 %v2818
      %v2964 = vunpack.c.l.b16 %v2819
      %v2965 = vunpack.c.l.b16 %v2820
      %v2966 = vunpack.c.l.b16 %v2821
      %v2967 = vunpack.c.l.b16 %v2822
      %v2968 = vunpack.c.l.b16 %v2823
      %v2969 = vunpack.c.l.b16 %v2824
      %v2970 = vunpack.c.l.b16 %v2825
      %v2971 = vunpack.c.l.b16 %v2826
      %v2972 = vunpack.c.l.b16 %v2827
      %v2973 = vunpack.c.l.b16 %v2828
      %v2974 = vunpack.c.l.b16 %v2829
      %v2975 = vunpack.c.l.b16 %v2830
      %v2976 = vunpack.c.l.b16 %v2831
      %v2977 = vunpack.c.l.b16 %v2832
      %v2978 = vunpack.c.l.b16 %v2833
      %v2979 = vunpack.c.l.b16 %v2834
      %v2980 = vunpack.c.l.b16 %v2835
      %v2981 = vunpack.c.l.b16 %v2836
      %v2982 = vunpack.c.l.b16 %v2837
      %v2983 = vunpack.c.l.b16 %v2838
      %v2984 = vunpack.c.l.b16 %v2839
      %v2985 = vunpack.c.l.b16 %v2840
      %v2986 = vunpack.c.l.b16 %v2841
      %v2987 = vunpack.c.l.b16 %v2842
      %v2988 = vunpack.c.l.b16 %v2843
      %v2989 = vunpack.c.l.b16 %v2844
      %v2990 = vunpack.c.l.b16 %v2845
      %v2991 = vunpack.c.l.b16 %v2846
      %v2992 = vunpack.c.l.b16 %v2847
      %v2993 = vunpack.c.l.b16 %v2848
      %v2994 = vunpack.c.l.b16 %v2849
      %v2995 = vunpack.c.l.b16 %v2850
      %v2996 = vunpack.c.l.b16 %v2851
      %v2997 = vunpack.c.l.b16 %v2852
      %v2998 = vunpack.c.l.b16 %v2853
      %v2999 = vunpack.c.l.b16 %v2854
      %v3000 = vunpack.c.l.b16 %v2855
      %v3001 = vunpack.c.l.b16 %v2856
      %v3002 = vunpack.c.l.b16 %v2857
      %v3003 = vunpack.c.l.b16 %v2858
      %v3004 = vunpack.c.l.b16 %v2859
      %v3005 = vunpack.c.l.b16 %v2860
      %v3006 = vunpack.c.l.b16 %v2861
      %v3007 = vunpack.c.l.b16 %v2862
      %v3008 = vunpack.c.l.b16 %v2863
      %v3009 = vunpack.c.l.b16 %v2864
      %v3010 = vunpack.c.l.b16 %v2865
      %v3011 = vunpack.c.l.b16 %v2866
      %v3012 = vunpack.c.l.b16 %v2867
      %v3013 = vunpack.c.l.b16 %v2868
      %v3014 = vunpack.c.l.b16 %v2869
      %v3015 = vunpack.c.l.b16 %v2870
      %v3016 = vunpack.c.l.b16 %v2871
      %v3017 = vunpack.c.l.b16 %v2872
      %v3018 = vunpack.c.l.b16 %v2873
      %v3019 = vunpack.c.l.b16 %v2874
      %v3020 = vunpack.c.l.b16 %v2875
      %v3021 = vunpack.c.l.b16 %v2876
      %v3022 = vunpack.c.l.b16 %v2877
      %v3023 = vunpack.c.l.b16 %v2878
      %v3024 = vunpack.c.l.b16 %v2879
      %v3025 = vunpack.c.l.b16 %v2880
      %v3026 = vunpack.c.l.b16 %v2881
      %v3027 = vpack.c.b16 %v2964, %v2963
      %v3028 = vpack.c.b16 %v2966, %v2965
      %v3029 = vpack.c.b16 %v2968, %v2967
      %v3030 = vpack.c.b16 %v2970, %v2969
      %v3031 = vpack.c.b16 %v2972, %v2971
      %v3032 = vpack.c.b16 %v2974, %v2973
      %v3033 = vpack.c.b16 %v2976, %v2975
      %v3034 = vpack.c.b16 %v2978, %v2977
      %v3035 = vpack.c.b16 %v2980, %v2979
      %v3036 = vpack.c.b16 %v2982, %v2981
      %v3037 = vpack.c.b16 %v2984, %v2983
      %v3038 = vpack.c.b16 %v2986, %v2985
      %v3039 = vpack.c.b16 %v2988, %v2987
      %v3040 = vpack.c.b16 %v2990, %v2989
      %v3041 = vpack.c.b16 %v2992, %v2991
      %v3042 = vpack.c.b16 %v2994, %v2993
      %v3043 = vpack.c.b16 %v2996, %v2995
      %v3044 = vpack.c.b16 %v2998, %v2997
      %v3045 = vpack.c.b16 %v3000, %v2999
      %v3046 = vpack.c.b16 %v3002, %v3001
      %v3047 = vpack.c.b16 %v3004, %v3003
      %v3048 = vpack.c.b16 %v3006, %v3005
      %v3049 = vpack.c.b16 %v3008, %v3007
      %v3050 = vpack.c.b16 %v3010, %v3009
      %v3051 = vpack.c.b16 %v3012, %v3011
      %v3052 = vpack.c.b16 %v3014, %v3013
      %v3053 = vpack.c.b16 %v3016, %v3015
      %v3054 = vpack.c.b16 %v3018, %v3017
      %v3055 = vpack.c.b16 %v3020, %v3019
      %v3056 = vpack.c.b16 %v3022, %v3021
      %v3057 = vpack.c.b16 %v3024, %v3023
      %v3058 = vpack.c.b16 %v3026, %v3025
      %v3107 = vunpack.c.l.b16 %v2883
      %v3108 = vunpack.c.l.b16 %v2884
      %v3109 = vunpack.c.l.b16 %v2885
      %v3110 = vunpack.c.l.b16 %v2886
      %v3111 = vunpack.c.l.b16 %v2887
      %v3112 = vunpack.c.l.b16 %v2888
      %v3113 = vunpack.c.l.b16 %v2889
      %v3114 = vunpack.c.l.b16 %v2890
      %v3115 = vunpack.c.l.b16 %v2891
      %v3116 = vunpack.c.l.b16 %v2892
      %v3117 = vunpack.c.l.b16 %v2893
      %v3118 = vunpack.c.l.b16 %v2894
      %v3119 = vunpack.c.l.b16 %v2895
      %v3120 = vunpack.c.l.b16 %v2896
      %v3121 = vunpack.c.l.b16 %v2897
      %v3122 = vunpack.c.l.b16 %v2898
      %v3123 = vpack.c.b16 %v3108, %v3107
      %v3124 = vpack.c.b16 %v3110, %v3109
      %v3125 = vpack.c.b16 %v3112, %v3111
      %v3126 = vpack.c.b16 %v3114, %v3113
      %v3127 = vpack.c.b16 %v3116, %v3115
      %v3128 = vpack.c.b16 %v3118, %v3117
      %v3129 = vpack.c.b16 %v3120, %v3119
      %v3130 = vpack.c.b16 %v3122, %v3121
      %3139 = vmatpush.bf16.msra.mxu0 %v3130
      %3140 = vmatpush.bf16.msra.mxu0 %v3129
      %3141 = vmatpush.bf16.msra.mxu0 %v3128
      %3142 = vmatpush.bf16.msra.mxu0 %v3127
      %3143 = vmatpush.bf16.msra.mxu0 %v3126
      %3144 = vmatpush.bf16.msra.mxu0 %v3125
      %3145 = vmatpush.bf16.msra.mxu0 %v3124
      %3146 = vmatpush.bf16.msra.mxu0 %v3123
      %3147 = vmatmul.bf16.gmra.mxu0 %v3027
      %v3148 = vpop.f32.mrf.mxu0
      %v3149 = vadd.f32 0.0, %v3148
      %v3150 = vpop.f32.mrf.mxu0
      %v3151 = vadd.f32 0.0, %v3150
      %3152 = vmatmul.bf16.gmra.mxu0 %v3028
      %v3153 = vpop.f32.mrf.mxu0
      %v3154 = vadd.f32 0.0, %v3153
      %v3155 = vpop.f32.mrf.mxu0
      %v3156 = vadd.f32 0.0, %v3155
      %3157 = vmatmul.bf16.gmra.mxu0 %v3029
      %v3158 = vpop.f32.mrf.mxu0
      %v3159 = vadd.f32 0.0, %v3158
      %v3160 = vpop.f32.mrf.mxu0
      %v3161 = vadd.f32 0.0, %v3160
      %3162 = vmatmul.bf16.gmra.mxu0 %v3030
      %v3163 = vpop.f32.mrf.mxu0
      %v3164 = vadd.f32 0.0, %v3163
      %v3165 = vpop.f32.mrf.mxu0
      %v3166 = vadd.f32 0.0, %v3165
      %3167 = vmatmul.bf16.gmra.mxu0 %v3031
      %v3168 = vpop.f32.mrf.mxu0
      %v3169 = vadd.f32 0.0, %v3168
      %v3170 = vpop.f32.mrf.mxu0
      %v3171 = vadd.f32 0.0, %v3170
      %3172 = vmatmul.bf16.gmra.mxu0 %v3032
      %v3173 = vpop.f32.mrf.mxu0
      %v3174 = vadd.f32 0.0, %v3173
      %v3175 = vpop.f32.mrf.mxu0
      %v3176 = vadd.f32 0.0, %v3175
      %3177 = vmatmul.bf16.gmra.mxu0 %v3033
      %v3178 = vpop.f32.mrf.mxu0
      %v3179 = vadd.f32 0.0, %v3178
      %v3180 = vpop.f32.mrf.mxu0
      %v3181 = vadd.f32 0.0, %v3180
      %3182 = vmatmul.bf16.gmra.mxu0 %v3034
      %v3183 = vpop.f32.mrf.mxu0
      %v3184 = vadd.f32 0.0, %v3183
      %v3185 = vpop.f32.mrf.mxu0
      %v3186 = vadd.f32 0.0, %v3185
      %3187 = vmatmul.bf16.gmra.mxu0 %v3035
      %v3188 = vpop.f32.mrf.mxu0
      %v3189 = vadd.f32 0.0, %v3188
      %v3190 = vpop.f32.mrf.mxu0
      %v3191 = vadd.f32 0.0, %v3190
      %3192 = vmatmul.bf16.gmra.mxu0 %v3036
      %v3193 = vpop.f32.mrf.mxu0
      %v3194 = vadd.f32 0.0, %v3193
      %v3195 = vpop.f32.mrf.mxu0
      %v3196 = vadd.f32 0.0, %v3195
      %3197 = vmatmul.bf16.gmra.mxu0 %v3037
      %v3198 = vpop.f32.mrf.mxu0
      %v3199 = vadd.f32 0.0, %v3198
      %v3200 = vpop.f32.mrf.mxu0
      %v3201 = vadd.f32 0.0, %v3200
      %3202 = vmatmul.bf16.gmra.mxu0 %v3038
      %v3203 = vpop.f32.mrf.mxu0
      %v3204 = vadd.f32 0.0, %v3203
      %v3205 = vpop.f32.mrf.mxu0
      %v3206 = vadd.f32 0.0, %v3205
      %3207 = vmatmul.bf16.gmra.mxu0 %v3039
      %v3208 = vpop.f32.mrf.mxu0
      %v3209 = vadd.f32 0.0, %v3208
      %v3210 = vpop.f32.mrf.mxu0
      %v3211 = vadd.f32 0.0, %v3210
      %3212 = vmatmul.bf16.gmra.mxu0 %v3040
      %v3213 = vpop.f32.mrf.mxu0
      %v3214 = vadd.f32 0.0, %v3213
      %v3215 = vpop.f32.mrf.mxu0
      %v3216 = vadd.f32 0.0, %v3215
      %3217 = vmatmul.bf16.gmra.mxu0 %v3041
      %v3218 = vpop.f32.mrf.mxu0
      %v3219 = vadd.f32 0.0, %v3218
      %v3220 = vpop.f32.mrf.mxu0
      %v3221 = vadd.f32 0.0, %v3220
      %3222 = vmatmul.bf16.gmra.mxu0 %v3042
      %v3223 = vpop.f32.mrf.mxu0
      %v3224 = vadd.f32 0.0, %v3223
      %v3225 = vpop.f32.mrf.mxu0
      %v3226 = vadd.f32 0.0, %v3225
      %3227 = vmatmul.bf16.gmra.mxu0 %v3043
      %v3228 = vpop.f32.mrf.mxu0
      %v3229 = vadd.f32 0.0, %v3228
      %v3230 = vpop.f32.mrf.mxu0
      %v3231 = vadd.f32 0.0, %v3230
      %3232 = vmatmul.bf16.gmra.mxu0 %v3044
      %v3233 = vpop.f32.mrf.mxu0
      %v3234 = vadd.f32 0.0, %v3233
      %v3235 = vpop.f32.mrf.mxu0
      %v3236 = vadd.f32 0.0, %v3235
      %3237 = vmatmul.bf16.gmra.mxu0 %v3045
      %v3238 = vpop.f32.mrf.mxu0
      %v3239 = vadd.f32 0.0, %v3238
      %v3240 = vpop.f32.mrf.mxu0
      %v3241 = vadd.f32 0.0, %v3240
      %3242 = vmatmul.bf16.gmra.mxu0 %v3046
      %v3243 = vpop.f32.mrf.mxu0
      %v3244 = vadd.f32 0.0, %v3243
      %v3245 = vpop.f32.mrf.mxu0
      %v3246 = vadd.f32 0.0, %v3245
      %3247 = vmatmul.bf16.gmra.mxu0 %v3047
      %v3248 = vpop.f32.mrf.mxu0
      %v3249 = vadd.f32 0.0, %v3248
      %v3250 = vpop.f32.mrf.mxu0
      %v3251 = vadd.f32 0.0, %v3250
      %3252 = vmatmul.bf16.gmra.mxu0 %v3048
      %v3253 = vpop.f32.mrf.mxu0
      %v3254 = vadd.f32 0.0, %v3253
      %v3255 = vpop.f32.mrf.mxu0
      %v3256 = vadd.f32 0.0, %v3255
      %3257 = vmatmul.bf16.gmra.mxu0 %v3049
      %v3258 = vpop.f32.mrf.mxu0
      %v3259 = vadd.f32 0.0, %v3258
      %v3260 = vpop.f32.mrf.mxu0
      %v3261 = vadd.f32 0.0, %v3260
      %3262 = vmatmul.bf16.gmra.mxu0 %v3050
      %v3263 = vpop.f32.mrf.mxu0
      %v3264 = vadd.f32 0.0, %v3263
      %v3265 = vpop.f32.mrf.mxu0
      %v3266 = vadd.f32 0.0, %v3265
      %3267 = vmatmul.bf16.gmra.mxu0 %v3051
      %v3268 = vpop.f32.mrf.mxu0
      %v3269 = vadd.f32 0.0, %v3268
      %v3270 = vpop.f32.mrf.mxu0
      %v3271 = vadd.f32 0.0, %v3270
      %3272 = vmatmul.bf16.gmra.mxu0 %v3052
      %v3273 = vpop.f32.mrf.mxu0
      %v3274 = vadd.f32 0.0, %v3273
      %v3275 = vpop.f32.mrf.mxu0
      %v3276 = vadd.f32 0.0, %v3275
      %3277 = vmatmul.bf16.gmra.mxu0 %v3053
      %v3278 = vpop.f32.mrf.mxu0
      %v3279 = vadd.f32 0.0, %v3278
      %v3280 = vpop.f32.mrf.mxu0
      %v3281 = vadd.f32 0.0, %v3280
      %3282 = vmatmul.bf16.gmra.mxu0 %v3054
      %v3283 = vpop.f32.mrf.mxu0
      %v3284 = vadd.f32 0.0, %v3283
      %v3285 = vpop.f32.mrf.mxu0
      %v3286 = vadd.f32 0.0, %v3285
      %3287 = vmatmul.bf16.gmra.mxu0 %v3055
      %v3288 = vpop.f32.mrf.mxu0
      %v3289 = vadd.f32 0.0, %v3288
      %v3290 = vpop.f32.mrf.mxu0
      %v3291 = vadd.f32 0.0, %v3290
      %3292 = vmatmul.bf16.gmra.mxu0 %v3056
      %v3293 = vpop.f32.mrf.mxu0
      %v3294 = vadd.f32 0.0, %v3293
      %v3295 = vpop.f32.mrf.mxu0
      %v3296 = vadd.f32 0.0, %v3295
      %3297 = vmatmul.bf16.gmra.mxu0 %v3057
      %v3298 = vpop.f32.mrf.mxu0
      %v3299 = vadd.f32 0.0, %v3298
      %v3300 = vpop.f32.mrf.mxu0
      %v3301 = vadd.f32 0.0, %v3300
      %3302 = vmatmul.bf16.gmra.mxu0 %v3058
      %v3303 = vpop.f32.mrf.mxu0
      %v3304 = vadd.f32 0.0, %v3303
      %v3305 = vpop.f32.mrf.mxu0
      %v3306 = vadd.f32 0.0, %v3305
      %3307 = vdwg.mxu0
      %v3308 = vld [vmem:[#allocation2] sm:$0xff]
      %v3309 = vld [vmem:[#allocation2 + $0x8] sm:$0xff]
      %v3310 = vld [vmem:[#allocation2 + $0x10] sm:$0xff]
      %v3311 = vld [vmem:[#allocation2 + $0x18] sm:$0xff]
      %v3312 = vld [vmem:[#allocation2 + $0x20] sm:$0xff]
      %v3313 = vld [vmem:[#allocation2 + $0x28] sm:$0xff]
      %v3314 = vld [vmem:[#allocation2 + $0x30] sm:$0xff]
      %v3315 = vld [vmem:[#allocation2 + $0x38] sm:$0xff]
      %v3316 = vld [vmem:[#allocation2 + $0x40] sm:$0xff]
      %v3317 = vld [vmem:[#allocation2 + $0x48] sm:$0xff]
      %v3318 = vld [vmem:[#allocation2 + $0x50] sm:$0xff]
      %v3319 = vld [vmem:[#allocation2 + $0x58] sm:$0xff]
      %v3320 = vld [vmem:[#allocation2 + $0x60] sm:$0xff]
      %v3321 = vld [vmem:[#allocation2 + $0x68] sm:$0xff]
      %v3322 = vld [vmem:[#allocation2 + $0x70] sm:$0xff]
      %v3323 = vld [vmem:[#allocation2 + $0x78] sm:$0xff]
      %v3324 = vld [vmem:[#allocation2 + $0x80] sm:$0xff]
      %v3325 = vld [vmem:[#allocation2 + $0x88] sm:$0xff]
      %v3326 = vld [vmem:[#allocation2 + $0x90] sm:$0xff]
      %v3327 = vld [vmem:[#allocation2 + $0x98] sm:$0xff]
      %v3328 = vld [vmem:[#allocation2 + $0xa0] sm:$0xff]
      %v3329 = vld [vmem:[#allocation2 + $0xa8] sm:$0xff]
      %v3330 = vld [vmem:[#allocation2 + $0xb0] sm:$0xff]
      %v3331 = vld [vmem:[#allocation2 + $0xb8] sm:$0xff]
      %v3332 = vld [vmem:[#allocation2 + $0xc0] sm:$0xff]
      %v3333 = vld [vmem:[#allocation2 + $0xc8] sm:$0xff]
      %v3334 = vld [vmem:[#allocation2 + $0xd0] sm:$0xff]
      %v3335 = vld [vmem:[#allocation2 + $0xd8] sm:$0xff]
      %v3336 = vld [vmem:[#allocation2 + $0xe0] sm:$0xff]
      %v3337 = vld [vmem:[#allocation2 + $0xe8] sm:$0xff]
      %v3338 = vld [vmem:[#allocation2 + $0xf0] sm:$0xff]
      %v3339 = vld [vmem:[#allocation2 + $0xf8] sm:$0xff]
      %v3340 = vld [vmem:[#allocation2 + $0x100] sm:$0xff]
      %v3341 = vld [vmem:[#allocation2 + $0x108] sm:$0xff]
      %v3342 = vld [vmem:[#allocation2 + $0x110] sm:$0xff]
      %v3343 = vld [vmem:[#allocation2 + $0x118] sm:$0xff]
      %v3344 = vld [vmem:[#allocation2 + $0x120] sm:$0xff]
      %v3345 = vld [vmem:[#allocation2 + $0x128] sm:$0xff]
      %v3346 = vld [vmem:[#allocation2 + $0x130] sm:$0xff]
      %v3347 = vld [vmem:[#allocation2 + $0x138] sm:$0xff]
      %v3348 = vld [vmem:[#allocation2 + $0x140] sm:$0xff]
      %v3349 = vld [vmem:[#allocation2 + $0x148] sm:$0xff]
      %v3350 = vld [vmem:[#allocation2 + $0x150] sm:$0xff]
      %v3351 = vld [vmem:[#allocation2 + $0x158] sm:$0xff]
      %v3352 = vld [vmem:[#allocation2 + $0x160] sm:$0xff]
      %v3353 = vld [vmem:[#allocation2 + $0x168] sm:$0xff]
      %v3354 = vld [vmem:[#allocation2 + $0x170] sm:$0xff]
      %v3355 = vld [vmem:[#allocation2 + $0x178] sm:$0xff]
      %v3356 = vld [vmem:[#allocation2 + $0x180] sm:$0xff]
      %v3357 = vld [vmem:[#allocation2 + $0x188] sm:$0xff]
      %v3358 = vld [vmem:[#allocation2 + $0x190] sm:$0xff]
      %v3359 = vld [vmem:[#allocation2 + $0x198] sm:$0xff]
      %v3360 = vld [vmem:[#allocation2 + $0x1a0] sm:$0xff]
      %v3361 = vld [vmem:[#allocation2 + $0x1a8] sm:$0xff]
      %v3362 = vld [vmem:[#allocation2 + $0x1b0] sm:$0xff]
      %v3363 = vld [vmem:[#allocation2 + $0x1b8] sm:$0xff]
      %v3364 = vld [vmem:[#allocation2 + $0x1c0] sm:$0xff]
      %v3365 = vld [vmem:[#allocation2 + $0x1c8] sm:$0xff]
      %v3366 = vld [vmem:[#allocation2 + $0x1d0] sm:$0xff]
      %v3367 = vld [vmem:[#allocation2 + $0x1d8] sm:$0xff]
      %v3368 = vld [vmem:[#allocation2 + $0x1e0] sm:$0xff]
      %v3369 = vld [vmem:[#allocation2 + $0x1e8] sm:$0xff]
      %v3370 = vld [vmem:[#allocation2 + $0x1f0] sm:$0xff]
      %v3371 = vld [vmem:[#allocation2 + $0x1f8] sm:$0xff]
      %v3372 = vadd.f32 %v3308, %v3149
      %v3373 = vadd.f32 %v3309, %v3151
      %v3374 = vadd.f32 %v3310, %v3154
      %v3375 = vadd.f32 %v3311, %v3156
      %v3376 = vadd.f32 %v3312, %v3159
      %v3377 = vadd.f32 %v3313, %v3161
      %v3378 = vadd.f32 %v3314, %v3164
      %v3379 = vadd.f32 %v3315, %v3166
      %v3380 = vadd.f32 %v3316, %v3169
      %v3381 = vadd.f32 %v3317, %v3171
      %v3382 = vadd.f32 %v3318, %v3174
      %v3383 = vadd.f32 %v3319, %v3176
      %v3384 = vadd.f32 %v3320, %v3179
      %v3385 = vadd.f32 %v3321, %v3181
      %v3386 = vadd.f32 %v3322, %v3184
      %v3387 = vadd.f32 %v3323, %v3186
      %v3388 = vadd.f32 %v3324, %v3189
      %v3389 = vadd.f32 %v3325, %v3191
      %v3390 = vadd.f32 %v3326, %v3194
      %v3391 = vadd.f32 %v3327, %v3196
      %v3392 = vadd.f32 %v3328, %v3199
      %v3393 = vadd.f32 %v3329, %v3201
      %v3394 = vadd.f32 %v3330, %v3204
      %v3395 = vadd.f32 %v3331, %v3206
      %v3396 = vadd.f32 %v3332, %v3209
      %v3397 = vadd.f32 %v3333, %v3211
      %v3398 = vadd.f32 %v3334, %v3214
      %v3399 = vadd.f32 %v3335, %v3216
      %v3400 = vadd.f32 %v3336, %v3219
      %v3401 = vadd.f32 %v3337, %v3221
      %v3402 = vadd.f32 %v3338, %v3224
      %v3403 = vadd.f32 %v3339, %v3226
      %v3404 = vadd.f32 %v3340, %v3229
      %v3405 = vadd.f32 %v3341, %v3231
      %v3406 = vadd.f32 %v3342, %v3234
      %v3407 = vadd.f32 %v3343, %v3236
      %v3408 = vadd.f32 %v3344, %v3239
      %v3409 = vadd.f32 %v3345, %v3241
      %v3410 = vadd.f32 %v3346, %v3244
      %v3411 = vadd.f32 %v3347, %v3246
      %v3412 = vadd.f32 %v3348, %v3249
      %v3413 = vadd.f32 %v3349, %v3251
      %v3414 = vadd.f32 %v3350, %v3254
      %v3415 = vadd.f32 %v3351, %v3256
      %v3416 = vadd.f32 %v3352, %v3259
      %v3417 = vadd.f32 %v3353, %v3261
      %v3418 = vadd.f32 %v3354, %v3264
      %v3419 = vadd.f32 %v3355, %v3266
      %v3420 = vadd.f32 %v3356, %v3269
      %v3421 = vadd.f32 %v3357, %v3271
      %v3422 = vadd.f32 %v3358, %v3274
      %v3423 = vadd.f32 %v3359, %v3276
      %v3424 = vadd.f32 %v3360, %v3279
      %v3425 = vadd.f32 %v3361, %v3281
      %v3426 = vadd.f32 %v3362, %v3284
      %v3427 = vadd.f32 %v3363, %v3286
      %v3428 = vadd.f32 %v3364, %v3289
      %v3429 = vadd.f32 %v3365, %v3291
      %v3430 = vadd.f32 %v3366, %v3294
      %v3431 = vadd.f32 %v3367, %v3296
      %v3432 = vadd.f32 %v3368, %v3299
      %v3433 = vadd.f32 %v3369, %v3301
      %v3434 = vadd.f32 %v3370, %v3304
      %v3435 = vadd.f32 %v3371, %v3306
      %3436 = vst [vmem:[#allocation2] sm:$0xff] %v3372
      %3437 = vst [vmem:[#allocation2 + $0x8] sm:$0xff] %v3373
      %3438 = vst [vmem:[#allocation2 + $0x10] sm:$0xff] %v3374
      %3439 = vst [vmem:[#allocation2 + $0x18] sm:$0xff] %v3375
      %3440 = vst [vmem:[#allocation2 + $0x20] sm:$0xff] %v3376
      %3441 = vst [vmem:[#allocation2 + $0x28] sm:$0xff] %v3377
      %3442 = vst [vmem:[#allocation2 + $0x30] sm:$0xff] %v3378
      %3443 = vst [vmem:[#allocation2 + $0x38] sm:$0xff] %v3379
      %3444 = vst [vmem:[#allocation2 + $0x40] sm:$0xff] %v3380
      %3445 = vst [vmem:[#allocation2 + $0x48] sm:$0xff] %v3381
      %3446 = vst [vmem:[#allocation2 + $0x50] sm:$0xff] %v3382
      %3447 = vst [vmem:[#allocation2 + $0x58] sm:$0xff] %v3383
      %3448 = vst [vmem:[#allocation2 + $0x60] sm:$0xff] %v3384
      %3449 = vst [vmem:[#allocation2 + $0x68] sm:$0xff] %v3385
      %3450 = vst [vmem:[#allocation2 + $0x70] sm:$0xff] %v3386
      %3451 = vst [vmem:[#allocation2 + $0x78] sm:$0xff] %v3387
      %3452 = vst [vmem:[#allocation2 + $0x80] sm:$0xff] %v3388
      %3453 = vst [vmem:[#allocation2 + $0x88] sm:$0xff] %v3389
      %3454 = vst [vmem:[#allocation2 + $0x90] sm:$0xff] %v3390
      %3455 = vst [vmem:[#allocation2 + $0x98] sm:$0xff] %v3391
      %3456 = vst [vmem:[#allocation2 + $0xa0] sm:$0xff] %v3392
      %3457 = vst [vmem:[#allocation2 + $0xa8] sm:$0xff] %v3393
      %3458 = vst [vmem:[#allocation2 + $0xb0] sm:$0xff] %v3394
      %3459 = vst [vmem:[#allocation2 + $0xb8] sm:$0xff] %v3395
      %3460 = vst [vmem:[#allocation2 + $0xc0] sm:$0xff] %v3396
      %3461 = vst [vmem:[#allocation2 + $0xc8] sm:$0xff] %v3397
      %3462 = vst [vmem:[#allocation2 + $0xd0] sm:$0xff] %v3398
      %3463 = vst [vmem:[#allocation2 + $0xd8] sm:$0xff] %v3399
      %3464 = vst [vmem:[#allocation2 + $0xe0] sm:$0xff] %v3400
      %3465 = vst [vmem:[#allocation2 + $0xe8] sm:$0xff] %v3401
      %3466 = vst [vmem:[#allocation2 + $0xf0] sm:$0xff] %v3402
      %3467 = vst [vmem:[#allocation2 + $0xf8] sm:$0xff] %v3403
      %3468 = vst [vmem:[#allocation2 + $0x100] sm:$0xff] %v3404
      %3469 = vst [vmem:[#allocation2 + $0x108] sm:$0xff] %v3405
      %3470 = vst [vmem:[#allocation2 + $0x110] sm:$0xff] %v3406
      %3471 = vst [vmem:[#allocation2 + $0x118] sm:$0xff] %v3407
      %3472 = vst [vmem:[#allocation2 + $0x120] sm:$0xff] %v3408
      %3473 = vst [vmem:[#allocation2 + $0x128] sm:$0xff] %v3409
      %3474 = vst [vmem:[#allocation2 + $0x130] sm:$0xff] %v3410
      %3475 = vst [vmem:[#allocation2 + $0x138] sm:$0xff] %v3411
      %3476 = vst [vmem:[#allocation2 + $0x140] sm:$0xff] %v3412
      %3477 = vst [vmem:[#allocation2 + $0x148] sm:$0xff] %v3413
      %3478 = vst [vmem:[#allocation2 + $0x150] sm:$0xff] %v3414
      %3479 = vst [vmem:[#allocation2 + $0x158] sm:$0xff] %v3415
      %3480 = vst [vmem:[#allocation2 + $0x160] sm:$0xff] %v3416
      %3481 = vst [vmem:[#allocation2 + $0x168] sm:$0xff] %v3417
      %3482 = vst [vmem:[#allocation2 + $0x170] sm:$0xff] %v3418
      %3483 = vst [vmem:[#allocation2 + $0x178] sm:$0xff] %v3419
      %3484 = vst [vmem:[#allocation2 + $0x180] sm:$0xff] %v3420
      %3485 = vst [vmem:[#allocation2 + $0x188] sm:$0xff] %v3421
      %3486 = vst [vmem:[#allocation2 + $0x190] sm:$0xff] %v3422
      %3487 = vst [vmem:[#allocation2 + $0x198] sm:$0xff] %v3423
      %3488 = vst [vmem:[#allocation2 + $0x1a0] sm:$0xff] %v3424
      %3489 = vst [vmem:[#allocation2 + $0x1a8] sm:$0xff] %v3425
      %3490 = vst [vmem:[#allocation2 + $0x1b0] sm:$0xff] %v3426
      %3491 = vst [vmem:[#allocation2 + $0x1b8] sm:$0xff] %v3427
      %3492 = vst [vmem:[#allocation2 + $0x1c0] sm:$0xff] %v3428
      %3493 = vst [vmem:[#allocation2 + $0x1c8] sm:$0xff] %v3429
      %3494 = vst [vmem:[#allocation2 + $0x1d0] sm:$0xff] %v3430
      %3495 = vst [vmem:[#allocation2 + $0x1d8] sm:$0xff] %v3431
      %3496 = vst [vmem:[#allocation2 + $0x1e0] sm:$0xff] %v3432
      %3497 = vst [vmem:[#allocation2 + $0x1e8] sm:$0xff] %v3433
      %3498 = vst [vmem:[#allocation2 + $0x1f0] sm:$0xff] %v3434
      %3499 = vst [vmem:[#allocation2 + $0x1f8] sm:$0xff] %v3435
      %v3500 = vld [vmem:[#allocation2] sm:$0xff]
      %v3501 = vld [vmem:[#allocation2 + $0x8] sm:$0xff]
      %v3502 = vld [vmem:[#allocation2 + $0x10] sm:$0xff]
      %v3503 = vld [vmem:[#allocation2 + $0x18] sm:$0xff]
      %v3504 = vld [vmem:[#allocation2 + $0x20] sm:$0xff]
      %v3505 = vld [vmem:[#allocation2 + $0x28] sm:$0xff]
      %v3506 = vld [vmem:[#allocation2 + $0x30] sm:$0xff]
      %v3507 = vld [vmem:[#allocation2 + $0x38] sm:$0xff]
      %v3508 = vld [vmem:[#allocation2 + $0x40] sm:$0xff]
      %v3509 = vld [vmem:[#allocation2 + $0x48] sm:$0xff]
      %v3510 = vld [vmem:[#allocation2 + $0x50] sm:$0xff]
      %v3511 = vld [vmem:[#allocation2 + $0x58] sm:$0xff]
      %v3512 = vld [vmem:[#allocation2 + $0x60] sm:$0xff]
      %v3513 = vld [vmem:[#allocation2 + $0x68] sm:$0xff]
      %v3514 = vld [vmem:[#allocation2 + $0x70] sm:$0xff]
      %v3515 = vld [vmem:[#allocation2 + $0x78] sm:$0xff]
      %v3516 = vld [vmem:[#allocation2 + $0x80] sm:$0xff]
      %v3517 = vld [vmem:[#allocation2 + $0x88] sm:$0xff]
      %v3518 = vld [vmem:[#allocation2 + $0x90] sm:$0xff]
      %v3519 = vld [vmem:[#allocation2 + $0x98] sm:$0xff]
      %v3520 = vld [vmem:[#allocation2 + $0xa0] sm:$0xff]
      %v3521 = vld [vmem:[#allocation2 + $0xa8] sm:$0xff]
      %v3522 = vld [vmem:[#allocation2 + $0xb0] sm:$0xff]
      %v3523 = vld [vmem:[#allocation2 + $0xb8] sm:$0xff]
      %v3524 = vld [vmem:[#allocation2 + $0xc0] sm:$0xff]
      %v3525 = vld [vmem:[#allocation2 + $0xc8] sm:$0xff]
      %v3526 = vld [vmem:[#allocation2 + $0xd0] sm:$0xff]
      %v3527 = vld [vmem:[#allocation2 + $0xd8] sm:$0xff]
      %v3528 = vld [vmem:[#allocation2 + $0xe0] sm:$0xff]
      %v3529 = vld [vmem:[#allocation2 + $0xe8] sm:$0xff]
      %v3530 = vld [vmem:[#allocation2 + $0xf0] sm:$0xff]
      %v3531 = vld [vmem:[#allocation2 + $0xf8] sm:$0xff]
      %v3532 = vld [vmem:[#allocation2 + $0x100] sm:$0xff]
      %v3533 = vld [vmem:[#allocation2 + $0x108] sm:$0xff]
      %v3534 = vld [vmem:[#allocation2 + $0x110] sm:$0xff]
      %v3535 = vld [vmem:[#allocation2 + $0x118] sm:$0xff]
      %v3536 = vld [vmem:[#allocation2 + $0x120] sm:$0xff]
      %v3537 = vld [vmem:[#allocation2 + $0x128] sm:$0xff]
      %v3538 = vld [vmem:[#allocation2 + $0x130] sm:$0xff]
      %v3539 = vld [vmem:[#allocation2 + $0x138] sm:$0xff]
      %v3540 = vld [vmem:[#allocation2 + $0x140] sm:$0xff]
      %v3541 = vld [vmem:[#allocation2 + $0x148] sm:$0xff]
      %v3542 = vld [vmem:[#allocation2 + $0x150] sm:$0xff]
      %v3543 = vld [vmem:[#allocation2 + $0x158] sm:$0xff]
      %v3544 = vld [vmem:[#allocation2 + $0x160] sm:$0xff]
      %v3545 = vld [vmem:[#allocation2 + $0x168] sm:$0xff]
      %v3546 = vld [vmem:[#allocation2 + $0x170] sm:$0xff]
      %v3547 = vld [vmem:[#allocation2 + $0x178] sm:$0xff]
      %v3548 = vld [vmem:[#allocation2 + $0x180] sm:$0xff]
      %v3549 = vld [vmem:[#allocation2 + $0x188] sm:$0xff]
      %v3550 = vld [vmem:[#allocation2 + $0x190] sm:$0xff]
      %v3551 = vld [vmem:[#allocation2 + $0x198] sm:$0xff]
      %v3552 = vld [vmem:[#allocation2 + $0x1a0] sm:$0xff]
      %v3553 = vld [vmem:[#allocation2 + $0x1a8] sm:$0xff]
      %v3554 = vld [vmem:[#allocation2 + $0x1b0] sm:$0xff]
      %v3555 = vld [vmem:[#allocation2 + $0x1b8] sm:$0xff]
      %v3556 = vld [vmem:[#allocation2 + $0x1c0] sm:$0xff]
      %v3557 = vld [vmem:[#allocation2 + $0x1c8] sm:$0xff]
      %v3558 = vld [vmem:[#allocation2 + $0x1d0] sm:$0xff]
      %v3559 = vld [vmem:[#allocation2 + $0x1d8] sm:$0xff]
      %v3560 = vld [vmem:[#allocation2 + $0x1e0] sm:$0xff]
      %v3561 = vld [vmem:[#allocation2 + $0x1e8] sm:$0xff]
      %v3562 = vld [vmem:[#allocation2 + $0x1f0] sm:$0xff]
      %v3563 = vld [vmem:[#allocation2 + $0x1f8] sm:$0xff]
      %v3564 = vld [vmem:[%s2] sm:$0x1]
      %v3566 = vperm.slane %v3564, 0
      %v3568 = vadd.f32 %v3500, %v3566
      %v3569 = vadd.f32 %v3501, %v3566
      %v3570 = vadd.f32 %v3502, %v3566
      %v3571 = vadd.f32 %v3503, %v3566
      %v3572 = vadd.f32 %v3504, %v3566
      %v3573 = vadd.f32 %v3505, %v3566
      %v3574 = vadd.f32 %v3506, %v3566
      %v3575 = vadd.f32 %v3507, %v3566
      %v3576 = vadd.f32 %v3508, %v3566
      %v3577 = vadd.f32 %v3509, %v3566
      %v3578 = vadd.f32 %v3510, %v3566
      %v3579 = vadd.f32 %v3511, %v3566
      %v3580 = vadd.f32 %v3512, %v3566
      %v3581 = vadd.f32 %v3513, %v3566
      %v3582 = vadd.f32 %v3514, %v3566
      %v3583 = vadd.f32 %v3515, %v3566
      %v3584 = vadd.f32 %v3516, %v3566
      %v3585 = vadd.f32 %v3517, %v3566
      %v3586 = vadd.f32 %v3518, %v3566
      %v3587 = vadd.f32 %v3519, %v3566
      %v3588 = vadd.f32 %v3520, %v3566
      %v3589 = vadd.f32 %v3521, %v3566
      %v3590 = vadd.f32 %v3522, %v3566
      %v3591 = vadd.f32 %v3523, %v3566
      %v3592 = vadd.f32 %v3524, %v3566
      %v3593 = vadd.f32 %v3525, %v3566
      %v3594 = vadd.f32 %v3526, %v3566
      %v3595 = vadd.f32 %v3527, %v3566
      %v3596 = vadd.f32 %v3528, %v3566
      %v3597 = vadd.f32 %v3529, %v3566
      %v3598 = vadd.f32 %v3530, %v3566
      %v3599 = vadd.f32 %v3531, %v3566
      %v3600 = vadd.f32 %v3532, %v3566
      %v3601 = vadd.f32 %v3533, %v3566
      %v3602 = vadd.f32 %v3534, %v3566
      %v3603 = vadd.f32 %v3535, %v3566
      %v3604 = vadd.f32 %v3536, %v3566
      %v3605 = vadd.f32 %v3537, %v3566
      %v3606 = vadd.f32 %v3538, %v3566
      %v3607 = vadd.f32 %v3539, %v3566
      %v3608 = vadd.f32 %v3540, %v3566
      %v3609 = vadd.f32 %v3541, %v3566
      %v3610 = vadd.f32 %v3542, %v3566
      %v3611 = vadd.f32 %v3543, %v3566
      %v3612 = vadd.f32 %v3544, %v3566
      %v3613 = vadd.f32 %v3545, %v3566
      %v3614 = vadd.f32 %v3546, %v3566
      %v3615 = vadd.f32 %v3547, %v3566
      %v3616 = vadd.f32 %v3548, %v3566
      %v3617 = vadd.f32 %v3549, %v3566
      %v3618 = vadd.f32 %v3550, %v3566
      %v3619 = vadd.f32 %v3551, %v3566
      %v3620 = vadd.f32 %v3552, %v3566
      %v3621 = vadd.f32 %v3553, %v3566
      %v3622 = vadd.f32 %v3554, %v3566
      %v3623 = vadd.f32 %v3555, %v3566
      %v3624 = vadd.f32 %v3556, %v3566
      %v3625 = vadd.f32 %v3557, %v3566
      %v3626 = vadd.f32 %v3558, %v3566
      %v3627 = vadd.f32 %v3559, %v3566
      %v3628 = vadd.f32 %v3560, %v3566
      %v3629 = vadd.f32 %v3561, %v3566
      %v3630 = vadd.f32 %v3562, %v3566
      %v3631 = vadd.f32 %v3563, %v3566
      %v3632 = vmax.f32 %v3568, 0.0
      %v3633 = vmax.f32 %v3569, 0.0
      %v3634 = vmax.f32 %v3570, 0.0
      %v3635 = vmax.f32 %v3571, 0.0
      %v3636 = vmax.f32 %v3572, 0.0
      %v3637 = vmax.f32 %v3573, 0.0
      %v3638 = vmax.f32 %v3574, 0.0
      %v3639 = vmax.f32 %v3575, 0.0
      %v3640 = vmax.f32 %v3576, 0.0
      %v3641 = vmax.f32 %v3577, 0.0
      %v3642 = vmax.f32 %v3578, 0.0
      %v3643 = vmax.f32 %v3579, 0.0
      %v3644 = vmax.f32 %v3580, 0.0
      %v3645 = vmax.f32 %v3581, 0.0
      %v3646 = vmax.f32 %v3582, 0.0
      %v3647 = vmax.f32 %v3583, 0.0
      %v3648 = vmax.f32 %v3584, 0.0
      %v3649 = vmax.f32 %v3585, 0.0
      %v3650 = vmax.f32 %v3586, 0.0
      %v3651 = vmax.f32 %v3587, 0.0
      %v3652 = vmax.f32 %v3588, 0.0
      %v3653 = vmax.f32 %v3589, 0.0
      %v3654 = vmax.f32 %v3590, 0.0
      %v3655 = vmax.f32 %v3591, 0.0
      %v3656 = vmax.f32 %v3592, 0.0
      %v3657 = vmax.f32 %v3593, 0.0
      %v3658 = vmax.f32 %v3594, 0.0
      %v3659 = vmax.f32 %v3595, 0.0
      %v3660 = vmax.f32 %v3596, 0.0
      %v3661 = vmax.f32 %v3597, 0.0
      %v3662 = vmax.f32 %v3598, 0.0
      %v3663 = vmax.f32 %v3599, 0.0
      %v3664 = vmax.f32 %v3600, 0.0
      %v3665 = vmax.f32 %v3601, 0.0
      %v3666 = vmax.f32 %v3602, 0.0
      %v3667 = vmax.f32 %v3603, 0.0
      %v3668 = vmax.f32 %v3604, 0.0
      %v3669 = vmax.f32 %v3605, 0.0
      %v3670 = vmax.f32 %v3606, 0.0
      %v3671 = vmax.f32 %v3607, 0.0
      %v3672 = vmax.f32 %v3608, 0.0
      %v3673 = vmax.f32 %v3609, 0.0
      %v3674 = vmax.f32 %v3610, 0.0
      %v3675 = vmax.f32 %v3611, 0.0
      %v3676 = vmax.f32 %v3612, 0.0
      %v3677 = vmax.f32 %v3613, 0.0
      %v3678 = vmax.f32 %v3614, 0.0
      %v3679 = vmax.f32 %v3615, 0.0
      %v3680 = vmax.f32 %v3616, 0.0
      %v3681 = vmax.f32 %v3617, 0.0
      %v3682 = vmax.f32 %v3618, 0.0
      %v3683 = vmax.f32 %v3619, 0.0
      %v3684 = vmax.f32 %v3620, 0.0
      %v3685 = vmax.f32 %v3621, 0.0
      %v3686 = vmax.f32 %v3622, 0.0
      %v3687 = vmax.f32 %v3623, 0.0
      %v3688 = vmax.f32 %v3624, 0.0
      %v3689 = vmax.f32 %v3625, 0.0
      %v3690 = vmax.f32 %v3626, 0.0
      %v3691 = vmax.f32 %v3627, 0.0
      %v3692 = vmax.f32 %v3628, 0.0
      %v3693 = vmax.f32 %v3629, 0.0
      %v3694 = vmax.f32 %v3630, 0.0
      %v3695 = vmax.f32 %v3631, 0.0
      %v3696 = vpack.c.bf16 %v3632, %v3632
      %v3697 = vpack.c.bf16 %v3633, %v3633
      %v3698 = vpack.c.bf16 %v3634, %v3634
      %v3699 = vpack.c.bf16 %v3635, %v3635
      %v3700 = vpack.c.bf16 %v3636, %v3636
      %v3701 = vpack.c.bf16 %v3637, %v3637
      %v3702 = vpack.c.bf16 %v3638, %v3638
      %v3703 = vpack.c.bf16 %v3639, %v3639
      %v3704 = vpack.c.bf16 %v3640, %v3640
      %v3705 = vpack.c.bf16 %v3641, %v3641
      %v3706 = vpack.c.bf16 %v3642, %v3642
      %v3707 = vpack.c.bf16 %v3643, %v3643
      %v3708 = vpack.c.bf16 %v3644, %v3644
      %v3709 = vpack.c.bf16 %v3645, %v3645
      %v3710 = vpack.c.bf16 %v3646, %v3646
      %v3711 = vpack.c.bf16 %v3647, %v3647
      %v3712 = vpack.c.bf16 %v3648, %v3648
      %v3713 = vpack.c.bf16 %v3649, %v3649
      %v3714 = vpack.c.bf16 %v3650, %v3650
      %v3715 = vpack.c.bf16 %v3651, %v3651
      %v3716 = vpack.c.bf16 %v3652, %v3652
      %v3717 = vpack.c.bf16 %v3653, %v3653
      %v3718 = vpack.c.bf16 %v3654, %v3654
      %v3719 = vpack.c.bf16 %v3655, %v3655
      %v3720 = vpack.c.bf16 %v3656, %v3656
      %v3721 = vpack.c.bf16 %v3657, %v3657
      %v3722 = vpack.c.bf16 %v3658, %v3658
      %v3723 = vpack.c.bf16 %v3659, %v3659
      %v3724 = vpack.c.bf16 %v3660, %v3660
      %v3725 = vpack.c.bf16 %v3661, %v3661
      %v3726 = vpack.c.bf16 %v3662, %v3662
      %v3727 = vpack.c.bf16 %v3663, %v3663
      %v3728 = vpack.c.bf16 %v3664, %v3664
      %v3729 = vpack.c.bf16 %v3665, %v3665
      %v3730 = vpack.c.bf16 %v3666, %v3666
      %v3731 = vpack.c.bf16 %v3667, %v3667
      %v3732 = vpack.c.bf16 %v3668, %v3668
      %v3733 = vpack.c.bf16 %v3669, %v3669
      %v3734 = vpack.c.bf16 %v3670, %v3670
      %v3735 = vpack.c.bf16 %v3671, %v3671
      %v3736 = vpack.c.bf16 %v3672, %v3672
      %v3737 = vpack.c.bf16 %v3673, %v3673
      %v3738 = vpack.c.bf16 %v3674, %v3674
      %v3739 = vpack.c.bf16 %v3675, %v3675
      %v3740 = vpack.c.bf16 %v3676, %v3676
      %v3741 = vpack.c.bf16 %v3677, %v3677
      %v3742 = vpack.c.bf16 %v3678, %v3678
      %v3743 = vpack.c.bf16 %v3679, %v3679
      %v3744 = vpack.c.bf16 %v3680, %v3680
      %v3745 = vpack.c.bf16 %v3681, %v3681
      %v3746 = vpack.c.bf16 %v3682, %v3682
      %v3747 = vpack.c.bf16 %v3683, %v3683
      %v3748 = vpack.c.bf16 %v3684, %v3684
      %v3749 = vpack.c.bf16 %v3685, %v3685
      %v3750 = vpack.c.bf16 %v3686, %v3686
      %v3751 = vpack.c.bf16 %v3687, %v3687
      %v3752 = vpack.c.bf16 %v3688, %v3688
      %v3753 = vpack.c.bf16 %v3689, %v3689
      %v3754 = vpack.c.bf16 %v3690, %v3690
      %v3755 = vpack.c.bf16 %v3691, %v3691
      %v3756 = vpack.c.bf16 %v3692, %v3692
      %v3757 = vpack.c.bf16 %v3693, %v3693
      %v3758 = vpack.c.bf16 %v3694, %v3694
      %v3759 = vpack.c.bf16 %v3695, %v3695
      %3760 = vst [vmem:[%s192] sm:$0xf] %v3696
      %3761 = vst [vmem:[%s192 + $0x4] sm:$0xf] %v3697
      %3762 = vst [vmem:[%s192 + $0x8] sm:$0xf] %v3698
      %3763 = vst [vmem:[%s192 + $0xc] sm:$0xf] %v3699
      %3764 = vst [vmem:[%s192 + $0x10] sm:$0xf] %v3700
      %3765 = vst [vmem:[%s192 + $0x14] sm:$0xf] %v3701
      %3766 = vst [vmem:[%s192 + $0x18] sm:$0xf] %v3702
      %3767 = vst [vmem:[%s192 + $0x1c] sm:$0xf] %v3703
      %3768 = vst [vmem:[%s192 + $0x20] sm:$0xf] %v3704
      %3769 = vst [vmem:[%s192 + $0x24] sm:$0xf] %v3705
      %3770 = vst [vmem:[%s192 + $0x28] sm:$0xf] %v3706
      %3771 = vst [vmem:[%s192 + $0x2c] sm:$0xf] %v3707
      %3772 = vst [vmem:[%s192 + $0x30] sm:$0xf] %v3708
      %3773 = vst [vmem:[%s192 + $0x34] sm:$0xf] %v3709
      %3774 = vst [vmem:[%s192 + $0x38] sm:$0xf] %v3710
      %3775 = vst [vmem:[%s192 + $0x3c] sm:$0xf] %v3711
      %3776 = vst [vmem:[%s192 + $0x40] sm:$0xf] %v3712
      %3777 = vst [vmem:[%s192 + $0x44] sm:$0xf] %v3713
      %3778 = vst [vmem:[%s192 + $0x48] sm:$0xf] %v3714
      %3779 = vst [vmem:[%s192 + $0x4c] sm:$0xf] %v3715
      %3780 = vst [vmem:[%s192 + $0x50] sm:$0xf] %v3716
      %3781 = vst [vmem:[%s192 + $0x54] sm:$0xf] %v3717
      %3782 = vst [vmem:[%s192 + $0x58] sm:$0xf] %v3718
      %3783 = vst [vmem:[%s192 + $0x5c] sm:$0xf] %v3719
      %3784 = vst [vmem:[%s192 + $0x60] sm:$0xf] %v3720
      %3785 = vst [vmem:[%s192 + $0x64] sm:$0xf] %v3721
      %3786 = vst [vmem:[%s192 + $0x68] sm:$0xf] %v3722
      %3787 = vst [vmem:[%s192 + $0x6c] sm:$0xf] %v3723
      %3788 = vst [vmem:[%s192 + $0x70] sm:$0xf] %v3724
      %3789 = vst [vmem:[%s192 + $0x74] sm:$0xf] %v3725
      %3790 = vst [vmem:[%s192 + $0x78] sm:$0xf] %v3726
      %3791 = vst [vmem:[%s192 + $0x7c] sm:$0xf] %v3727
      %3792 = vst [vmem:[%s192 + $0x80] sm:$0xf] %v3728
      %3793 = vst [vmem:[%s192 + $0x84] sm:$0xf] %v3729
      %3794 = vst [vmem:[%s192 + $0x88] sm:$0xf] %v3730
      %3795 = vst [vmem:[%s192 + $0x8c] sm:$0xf] %v3731
      %3796 = vst [vmem:[%s192 + $0x90] sm:$0xf] %v3732
      %3797 = vst [vmem:[%s192 + $0x94] sm:$0xf] %v3733
      %3798 = vst [vmem:[%s192 + $0x98] sm:$0xf] %v3734
      %3799 = vst [vmem:[%s192 + $0x9c] sm:$0xf] %v3735
      %3800 = vst [vmem:[%s192 + $0xa0] sm:$0xf] %v3736
      %3801 = vst [vmem:[%s192 + $0xa4] sm:$0xf] %v3737
      %3802 = vst [vmem:[%s192 + $0xa8] sm:$0xf] %v3738
      %3803 = vst [vmem:[%s192 + $0xac] sm:$0xf] %v3739
      %3804 = vst [vmem:[%s192 + $0xb0] sm:$0xf] %v3740
      %3805 = vst [vmem:[%s192 + $0xb4] sm:$0xf] %v3741
      %3806 = vst [vmem:[%s192 + $0xb8] sm:$0xf] %v3742
      %3807 = vst [vmem:[%s192 + $0xbc] sm:$0xf] %v3743
      %3808 = vst [vmem:[%s192 + $0xc0] sm:$0xf] %v3744
      %3809 = vst [vmem:[%s192 + $0xc4] sm:$0xf] %v3745
      %3810 = vst [vmem:[%s192 + $0xc8] sm:$0xf] %v3746
      %3811 = vst [vmem:[%s192 + $0xcc] sm:$0xf] %v3747
      %3812 = vst [vmem:[%s192 + $0xd0] sm:$0xf] %v3748
      %3813 = vst [vmem:[%s192 + $0xd4] sm:$0xf] %v3749
      %3814 = vst [vmem:[%s192 + $0xd8] sm:$0xf] %v3750
      %3815 = vst [vmem:[%s192 + $0xdc] sm:$0xf] %v3751
      %3816 = vst [vmem:[%s192 + $0xe0] sm:$0xf] %v3752
      %3817 = vst [vmem:[%s192 + $0xe4] sm:$0xf] %v3753
      %3818 = vst [vmem:[%s192 + $0xe8] sm:$0xf] %v3754
      %3819 = vst [vmem:[%s192 + $0xec] sm:$0xf] %v3755
      %3820 = vst [vmem:[%s192 + $0xf0] sm:$0xf] %v3756
      %3821 = vst [vmem:[%s192 + $0xf4] sm:$0xf] %v3757
      %3822 = vst [vmem:[%s192 + $0xf8] sm:$0xf] %v3758
      %3823 = vst [vmem:[%s192 + $0xfc] sm:$0xf] %v3759
      %s3824 = smul.u32 64, %s19
      %p3825 = scmp.lt.s32.totalorder %s18, 1
      %s3826 = scalar_select %p3825, %s18, 1
      %p3827 = scmp.lt.s32.totalorder %s3824, 127
      %s3828 = scalar_select %p3827, %s3824, 127
      %s3829 = smul.addr %s3826, 128
      %s3830 = sadd.s32 %s3828, %s3829
      %s3831 = smul.addr %s3830, 4
      %s3832 = scalar_lea.vmem %s3, %s3831
      // Predicated region
      $region33: #{convolution3d_forward.4} parent=31 // pred_check
        %p3833 = pneg %p114
      $region34: #{convolution3d_forward.4} parent=31 // pred_check_branch
        %3835 = sbr.rel (%p3833) target = $region36
      $region35: #{convolution3d_forward.4} parent=31 // pred_region
        %s3836 = smul.u32 64, %s19
      $region36: #{convolution3d_forward.4} parent=31 // pred_fallthru
        _
    $region32: #{convolution3d_forward.4} parent=5 // pred_fallthru
      _
    %p3837 = scmp.le.s32.totalorder 2, %s9
    // Predicated region
    $region37: #{convolution3d_forward.4} parent=5 // pred_check
      %p3838 = pneg %p3837
    $region38: #{convolution3d_forward.4} parent=5 // pred_check_branch
      %3840 = sbr.rel (%p3838) target = $region40
    $region39: #{convolution3d_forward.4} parent=5 // pred_region
      %s3841 = ssub.s32 %s9, 2
      // Predicated region
      $region41: #{convolution3d_forward.4} parent=39 // pred_check
        %p3842 = pneg %p120
      $region42: #{convolution3d_forward.4} parent=39 // pred_check_branch
        %3844 = sbr.rel (%p3842) target = $region44
      $region43: #{convolution3d_forward.4} parent=39 // pred_region
        %s3845 = smul.u32 64, %s21
        %p3846 = scmp.lt.s32.totalorder %s20, 1
        %s3847 = scalar_select %p3846, %s20, 1
        %p3848 = scmp.lt.s32.totalorder %s3845, 127
        %s3849 = scalar_select %p3848, %s3845, 127
        %s3850 = smul.addr %s3847, 128
        %s3851 = sadd.s32 %s3849, %s3850
        %s3852 = smul.addr %s3851, 4
        %s3853 = scalar_lea.vmem %s3, %s3852
      $region44: #{convolution3d_forward.4} parent=39 // pred_fallthru
        _
    $region40: #{convolution3d_forward.4} parent=5 // pred_fallthru
      _
  $region6: #{convolution3d_forward.4} parent=0 // loop_footer
    %s13 = sadd.s32 1, %s9
  $region7: #{convolution3d_forward.4} parent=0 // loop_footer_branch
    %8 = sbr.rel target = $region3
  $region8: #{convolution3d_forward.4} parent=0 // loop_exit
    _

// kernel: convolution3d_forward.5
$region0: #{convolution3d_forward.5}
  #allocation0 [shape = 'u32[]', space=smem, size = 0x4, offset = 0x4, fixed_abs, tag = 'smem constant byte address 0x4 - core index']
  #allocation1 [shape = 'u32[72,128]{1,0:T(1,128)}', space=vmem, size = 0x9000, scoped, tag = 'internal scratch']
  #allocation2 [shape = 'f32[128,128]{1,0:T(8,128)}', space=vmem, size = 0x10000, scoped, tag = 'scratch operand']
  %s0 = inlined_call_operand.vmem [shape: bf16[2,192,384], index: 0, kind: input, shape index: {}]
  %s1 = inlined_call_operand.vmem [shape: bf16[3,384,128], index: 1, kind: input, shape index: {}]
  %s2 = inlined_call_operand.vmem [shape: f32[1,128], index: 2, kind: input, shape index: {}]
  %s3 = inlined_call_operand.vmem [shape: bf16[2,128,128], index: 3, kind: output, shape index: {}]
  %s4 = sld [smem:[#allocation0]]
  $region45: #{convolution3d_forward.5} parent=0
    _
  %s6 = ssub.s32 1, %s4
  %s7 = scalar_select 0, %s6, %s4
  loop: start=0, step=1, limit=4
  $region2: #{convolution3d_forward.5} parent=0 // loop_pre_header
    _
  $region3: #{convolution3d_forward.5} parent=0 // loop_header
    %s9 = sphi 0, %s13
    %p10 = scmp.ge.s32.totalorder %s9, 4
    %s16 = sphi 0, %s28
    %s17 = sphi 0, %s24
    %s18 = sphi 0, %s16
    %s19 = sphi 0, %s17
    %s20 = sphi 0, %s18
    %s21 = sphi 0, %s19
    %s31 = sphi 0, %s33
    %s34 = sphi 0, %s31
    %s35 = sphi 0, %s34
    %s51 = sphi 0, %s35
    %s55 = sphi 0, %s55
    %s57 = sphi 0, %s55
    %s58 = sphi 0, %s57
    %s72 = sphi 0, %s58
    %s76 = sphi 0, %s76
    %s78 = sphi 0, %s76
    %s79 = sphi 0, %s78
    %s93 = sphi 0, %s79
    %s101 = sphi 0, %s103
    %s104 = sphi 0, %s101
    %s105 = sphi 0, %s104
    %s121 = sphi 0, %s105
  $region4: #{convolution3d_forward.5} parent=0 // loop_header_branch
    %12 = sbr.rel (%p10) target = $region8
  $region5: #{convolution3d_forward.5} parent=0 // loop_body
    %s14 = ssub.s32 %s9, 1
    %s15 = ssub.s32 %s9, 2
    %s22 = sadd.s32 1, %s17
    %p23 = scmp.ge.s32.totalorder %s22, 1
    %s24 = scalar_select %p23, 0, %s22
    %s25 = sadd.s32 1, %s16
    %s26 = scalar_select %p23, %s25, %s16
    %p27 = scmp.ge.s32.totalorder %s26, 2
    %s28 = scalar_select %p27, 0, %s26
    %s29 = ssub.s32 %s16, %s28
    %p30 = scmp.eq.s32.totalorder %s29, 0
    %s32 = sadd.s32 %s31, 1
    %s33 = scalar_select %p30, %s31, %s32
    %p36 = pneg %p30
    %p37 = scmp.eq.s32.totalorder %s9, 1
    %p38 = por %p36, %p37
    %p39 = scmp.ne.s32.totalorder %s31, %s34
    %p40 = scmp.eq.s32.totalorder %s9, 0
    %p41 = por %p39, %p40
    %p42 = scmp.ne.s32.totalorder %s31, %s34
    %p43 = scmp.eq.s32.totalorder %s14, 1
    %p44 = por %p42, %p43
    %p45 = scmp.ne.s32.totalorder %s34, %s35
    %p46 = scmp.eq.s32.totalorder %s14, 0
    %p47 = por %p45, %p46
    %p48 = scmp.ne.s32.totalorder %s34, %s35
    %p49 = scmp.eq.s32.totalorder %s15, 1
    %p50 = por %p48, %p49
    %p52 = scmp.ne.s32.totalorder %s35, %s51
    %p53 = scmp.eq.s32.totalorder %s15, 0
    %p54 = por %p52, %p53
    %s56 = sadd.s32 %s55, 1
    %p59 = scmp.eq.s32.totalorder %s9, 1
    %p60 = scmp.ne.s32.totalorder %s55, %s57
    %p61 = scmp.eq.s32.totalorder %s9, 0
    %p62 = por %p60, %p61
    %p63 = scmp.ne.s32.totalorder %s55, %s57
    %p64 = scmp.eq.s32.totalorder %s14, 1
    %p65 = por %p63, %p64
    %p66 = scmp.ne.s32.totalorder %s57, %s58
    %p67 = scmp.eq.s32.totalorder %s14, 0
    %p68 = por %p66, %p67
    %p69 = scmp.ne.s32.totalorder %s57, %s58
    %p70 = scmp.eq.s32.totalorder %s15, 1
    %p71 = por %p69, %p70
    %p73 = scmp.ne.s32.totalorder %s58, %s72
    %p74 = scmp.eq.s32.totalorder %s15, 0
    %p75 = por %p73, %p74
    %s77 = sadd.s32 %s76, 1
    %p80 = scmp.eq.s32.totalorder %s9, 1
    %p81 = scmp.ne.s32.totalorder %s76, %s78
    %p82 = scmp.eq.s32.totalorder %s9, 0
    %p83 = por %p81, %p82
    %p84 = scmp.ne.s32.totalorder %s76, %s78
    %p85 = scmp.eq.s32.totalorder %s14, 1
    %p86 = por %p84, %p85
    %p87 = scmp.ne.s32.totalorder %s78, %s79
    %p88 = scmp.eq.s32.totalorder %s14, 0
    %p89 = por %p87, %p88
    %p90 = scmp.ne.s32.totalorder %s78, %s79
    %p91 = scmp.eq.s32.totalorder %s15, 1
    %p92 = por %p90, %p91
    %p94 = scmp.ne.s32.totalorder %s79, %s93
    %p95 = scmp.eq.s32.totalorder %s15, 0
    %p96 = por %p94, %p95
    %s97 = ssub.s32 %s16, %s28
    %s98 = ssub.s32 %s17, %s24
    %s99 = sor.u32 %s97, %s98
    %p100 = scmp.eq.s32.totalorder %s99, 0
    %s102 = sadd.s32 %s101, 1
    %s103 = scalar_select %p100, %s101, %s102
    %p106 = pneg %p100
    %p107 = scmp.eq.s32.totalorder %s9, 1
    %p108 = por %p106, %p107
    %p109 = scmp.ne.s32.totalorder %s101, %s104
    %p110 = scmp.eq.s32.totalorder %s9, 0
    %p111 = por %p109, %p110
    %p112 = scmp.ne.s32.totalorder %s101, %s104
    %p113 = scmp.eq.s32.totalorder %s14, 1
    %p114 = por %p112, %p113
    %p115 = scmp.ne.s32.totalorder %s104, %s105
    %p116 = scmp.eq.s32.totalorder %s14, 0
    %p117 = por %p115, %p116
    %p118 = scmp.ne.s32.totalorder %s104, %s105
    %p119 = scmp.eq.s32.totalorder %s15, 1
    %p120 = por %p118, %p119
    %p122 = scmp.ne.s32.totalorder %s105, %s121
    %p123 = scmp.eq.s32.totalorder %s15, 0
    %p124 = por %p122, %p123
    %p125 = scmp.le.s32.totalorder 1, %s9
    %p126 = scmp.lt.s32.totalorder %s9, 3
    %p127 = pnand %p125, %p126
    %p128 = pneg %p127
    // Predicated region
    $region9: #{convolution3d_forward.5} parent=5 // pred_check
      _
    $region10: #{convolution3d_forward.5} parent=5 // pred_check_branch
      %130 = sbr.rel (%p127) target = $region12
    $region11: #{convolution3d_forward.5} parent=5 // pred_region
      %s131 = ssub.s32 %s9, 1
      // Predicated region
      $region13: #{convolution3d_forward.5} parent=11 // pred_check
        %p132 = pneg %p68
      $region14: #{convolution3d_forward.5} parent=11 // pred_check_branch
        %134 = sbr.rel (%p132) target = $region16
      $region15: #{convolution3d_forward.5} parent=11 // pred_region
        _
      $region16: #{convolution3d_forward.5} parent=11 // pred_fallthru
        _
      // Predicated region
      $region17: #{convolution3d_forward.5} parent=11 // pred_check
        %p135 = pneg %p89
      $region18: #{convolution3d_forward.5} parent=11 // pred_check_branch
        %137 = sbr.rel (%p135) target = $region20
      $region19: #{convolution3d_forward.5} parent=11 // pred_region
        _
      $region20: #{convolution3d_forward.5} parent=11 // pred_fallthru
        _
    $region12: #{convolution3d_forward.5} parent=5 // pred_fallthru
      _
    %p138 = scmp.lt.s32.totalorder %s9, 2
    // Predicated region
    $region21: #{convolution3d_forward.5} parent=5 // pred_check
      %p139 = pneg %p138
    $region22: #{convolution3d_forward.5} parent=5 // pred_check_branch
      %141 = sbr.rel (%p139) target = $region24
    $region23: #{convolution3d_forward.5} parent=5 // pred_region
      // Predicated region
      $region25: #{convolution3d_forward.5} parent=23 // pred_check
        %p142 = pneg %p41
      $region26: #{convolution3d_forward.5} parent=23 // pred_check_branch
        %144 = sbr.rel (%p142) target = $region28
      $region27: #{convolution3d_forward.5} parent=23 // pred_region
        %p145 = scmp.lt.s32.totalorder %s16, 1
        %s146 = scalar_select %p145, %s16, 1
        %s147 = smul.addr %s146, 72
        %s148 = smul.addr %s147, 4
        %s149 = scalar_lea.vmem %s0, %s148
      $region28: #{convolution3d_forward.5} parent=23 // pred_fallthru
        _
    $region24: #{convolution3d_forward.5} parent=5 // pred_fallthru
      _
    %p150 = scmp.le.s32.totalorder 1, %s9
    %p151 = scmp.lt.s32.totalorder %s9, 3
    %p152 = pnand %p150, %p151
    %p153 = pneg %p152
    // Predicated region
    $region29: #{convolution3d_forward.5} parent=5 // pred_check
      _
    $region30: #{convolution3d_forward.5} parent=5 // pred_check_branch
      %155 = sbr.rel (%p152) target = $region32
    $region31: #{convolution3d_forward.5} parent=5 // pred_region
      %s156 = ssub.s32 %s9, 1
      %p157 = scmp.lt.s32.totalorder %s18, 1
      %s158 = scalar_select %p157, %s18, 1
      %s159 = smul.addr %s158, 72
      %s160 = smul.addr %s159, 4
      %s161 = scalar_lea.vmem %s0, %s160
      %p162 = pneg %p47
      %p163 = pneg %p44
      %p164 = pneg %p68
      %p165 = pneg %p65
      %p166 = pneg %p89
      %p167 = pneg %p86
      %p168 = pneg %p117
      %p169 = pneg %p114
      %s170 = smul.u32 16, %s19
      %p171 = scmp.lt.s32.totalorder %s18, 1
      %s172 = scalar_select %p171, %s18, 1
      %p173 = scmp.lt.s32.totalorder %s170, 15
      %s174 = scalar_select %p173, %s170, 15
      %s175 = smul.addr %s172, 16
      %s176 = sadd.s32 %s174, %s175
      %s177 = smul.addr %s176, 4
      %s178 = scalar_lea.vmem %s3, %s177
      %p179 = scmp.lt.s32.totalorder %s18, 1
      %s180 = scalar_select %p179, %s18, 1
      %s181 = smul.addr %s180, 72
      %s182 = smul.addr %s181, 4
      %s183 = scalar_lea.vmem %s0, %s182
      %s184 = smul.u32 16, %s19
      %p185 = scmp.lt.s32.totalorder %s18, 1
      %s186 = scalar_select %p185, %s18, 1
      %p187 = scmp.lt.s32.totalorder %s184, 15
      %s188 = scalar_select %p187, %s184, 15
      %s189 = smul.addr %s186, 16
      %s190 = sadd.s32 %s188, %s189
      %s191 = smul.addr %s190, 4
      %s192 = scalar_lea.vmem %s3, %s191
      %s193 = smul.u32 16, %s19
      %s194 = smul.u32 %s19, 128
      %s195 = sshra.s32 %s194, 3
      %s196 = sand.u32 %s194, 7
      %s197 = smul.u32 %s195, 3
      %s198 = smul.addr %s197, 4
      %s199 = scalar_lea.vmem %s183, %s198
      %v200 = vld [vmem:[%s199] sm:$0xff]
      %v201 = vld [vmem:[%s199 + $0x8] sm:$0xf]
      %v202 = vld [vmem:[%s199 + $0xc] sm:$0xff]
      %v203 = vld [vmem:[%s199 + $0x14] sm:$0xf]
      %v204 = vld [vmem:[%s199 + $0x18] sm:$0xff]
      %v205 = vld [vmem:[%s199 + $0x20] sm:$0xf]
      %v206 = vld [vmem:[%s199 + $0x24] sm:$0xff]
      %v207 = vld [vmem:[%s199 + $0x2c] sm:$0xf]
      %v208 = vld [vmem:[%s199 + $0x30] sm:$0xff]
      %v209 = vld [vmem:[%s199 + $0x38] sm:$0xf]
      %v210 = vld [vmem:[%s199 + $0x3c] sm:$0xff]
      %v211 = vld [vmem:[%s199 + $0x44] sm:$0xf]
      %v212 = vld [vmem:[%s199 + $0x48] sm:$0xff]
      %v213 = vld [vmem:[%s199 + $0x50] sm:$0xf]
      %v214 = vld [vmem:[%s199 + $0x54] sm:$0xff]
      %v215 = vld [vmem:[%s199 + $0x5c] sm:$0xf]
      %v216 = vld [vmem:[%s199 + $0x60] sm:$0xff]
      %v217 = vld [vmem:[%s199 + $0x68] sm:$0xf]
      %v218 = vld [vmem:[%s199 + $0x6c] sm:$0xff]
      %v219 = vld [vmem:[%s199 + $0x74] sm:$0xf]
      %v220 = vld [vmem:[%s199 + $0x78] sm:$0xff]
      %v221 = vld [vmem:[%s199 + $0x80] sm:$0xf]
      %v222 = vld [vmem:[%s199 + $0x84] sm:$0xff]
      %v223 = vld [vmem:[%s199 + $0x8c] sm:$0xf]
      %v224 = vld [vmem:[%s199 + $0x90] sm:$0xff]
      %v225 = vld [vmem:[%s199 + $0x98] sm:$0xf]
      %v226 = vld [vmem:[%s199 + $0x9c] sm:$0xff]
      %v227 = vld [vmem:[%s199 + $0xa4] sm:$0xf]
      %v228 = vld [vmem:[%s199 + $0xa8] sm:$0xff]
      %v229 = vld [vmem:[%s199 + $0xb0] sm:$0xf]
      %v230 = vld [vmem:[%s199 + $0xb4] sm:$0xff]
      %v231 = vld [vmem:[%s199 + $0xbc] sm:$0xf]
      %v232 = vld [vmem:[%s1] sm:$0xf]
      %v233 = vld [vmem:[%s1 + $0x4] sm:$0xf]
      %v234 = vld [vmem:[%s1 + $0x8] sm:$0xf]
      %v235 = vld [vmem:[%s1 + $0xc] sm:$0xf]
      %v236 = vld [vmem:[%s1 + $0x10] sm:$0xf]
      %v237 = vld [vmem:[%s1 + $0x14] sm:$0xf]
      %v238 = vld [vmem:[%s1 + $0x18] sm:$0xf]
      %v239 = vld [vmem:[%s1 + $0x1c] sm:$0xf]
      %v240 = vld [vmem:[%s1 + $0x20] sm:$0xf]
      %v241 = vld [vmem:[%s1 + $0x24] sm:$0xf]
      %v242 = vld [vmem:[%s1 + $0x28] sm:$0xf]
      %v243 = vld [vmem:[%s1 + $0x2c] sm:$0xf]
      %v244 = vld [vmem:[%s1 + $0x30] sm:$0xf]
      %v245 = vld [vmem:[%s1 + $0x34] sm:$0xf]
      %v246 = vld [vmem:[%s1 + $0x38] sm:$0xf]
      %v247 = vld [vmem:[%s1 + $0x3c] sm:$0xf]
      %v248 = vld [vmem:[%s1 + $0x40] sm:$0xf]
      %v249 = vld [vmem:[%s1 + $0x44] sm:$0xf]
      %v250 = vld [vmem:[%s1 + $0x48] sm:$0xf]
      %v251 = vld [vmem:[%s1 + $0x4c] sm:$0xf]
      %v252 = vld [vmem:[%s1 + $0x50] sm:$0xf]
      %v253 = vld [vmem:[%s1 + $0x54] sm:$0xf]
      %v254 = vld [vmem:[%s1 + $0x58] sm:$0xf]
      %v255 = vld [vmem:[%s1 + $0x5c] sm:$0xf]
      %v256 = vld [vmem:[%s1 + $0x60] sm:$0xf]
      %v257 = vld [vmem:[%s1 + $0x64] sm:$0xf]
      %v258 = vld [vmem:[%s1 + $0x68] sm:$0xf]
      %v259 = vld [vmem:[%s1 + $0x6c] sm:$0xf]
      %v260 = vld [vmem:[%s1 + $0x70] sm:$0xf]
      %v261 = vld [vmem:[%s1 + $0x74] sm:$0xf]
      %v262 = vld [vmem:[%s1 + $0x78] sm:$0xf]
      %v263 = vld [vmem:[%s1 + $0x7c] sm:$0xf]
      %v264 = vld [vmem:[%s1 + $0x80] sm:$0xf]
      %v265 = vld [vmem:[%s1 + $0x84] sm:$0xf]
      %v266 = vld [vmem:[%s1 + $0x88] sm:$0xf]
      %v267 = vld [vmem:[%s1 + $0x8c] sm:$0xf]
      %v268 = vld [vmem:[%s1 + $0x90] sm:$0xf]
      %v269 = vld [vmem:[%s1 + $0x94] sm:$0xf]
      %v270 = vld [vmem:[%s1 + $0x98] sm:$0xf]
      %v271 = vld [vmem:[%s1 + $0x9c] sm:$0xf]
      %v272 = vld [vmem:[%s1 + $0xa0] sm:$0xf]
      %v273 = vld [vmem:[%s1 + $0xa4] sm:$0xf]
      %v274 = vld [vmem:[%s1 + $0xa8] sm:$0xf]
      %v275 = vld [vmem:[%s1 + $0xac] sm:$0xf]
      %v276 = vld [vmem:[%s1 + $0xb0] sm:$0xf]
      %v277 = vld [vmem:[%s1 + $0xb4] sm:$0xf]
      %v278 = vld [vmem:[%s1 + $0xb8] sm:$0xf]
      %v279 = vld [vmem:[%s1 + $0xbc] sm:$0xf]
      %v312 = vunpack.c.l.b16 %v200
      %v313 = vunpack.c.h.b16 %v200
      %v314 = vunpack.c.l.b16 %v201
      %v315 = vunpack.c.l.b16 %v202
      %v316 = vunpack.c.h.b16 %v202
      %v317 = vunpack.c.l.b16 %v203
      %v318 = vunpack.c.l.b16 %v204
      %v319 = vunpack.c.h.b16 %v204
      %v320 = vunpack.c.l.b16 %v205
      %v321 = vunpack.c.l.b16 %v206
      %v322 = vunpack.c.h.b16 %v206
      %v323 = vunpack.c.l.b16 %v207
      %v324 = vunpack.c.l.b16 %v208
      %v325 = vunpack.c.h.b16 %v208
      %v326 = vunpack.c.l.b16 %v209
      %v327 = vunpack.c.l.b16 %v210
      %v328 = vunpack.c.h.b16 %v210
      %v329 = vunpack.c.l.b16 %v211
      %v330 = vunpack.c.l.b16 %v212
      %v331 = vunpack.c.h.b16 %v212
      %v332 = vunpack.c.l.b16 %v213
      %v333 = vunpack.c.l.b16 %v214
      %v334 = vunpack.c.h.b16 %v214
      %v335 = vunpack.c.l.b16 %v215
      %v336 = vunpack.c.l.b16 %v216
      %v337 = vunpack.c.h.b16 %v216
      %v338 = vunpack.c.l.b16 %v217
      %v339 = vunpack.c.l.b16 %v218
      %v340 = vunpack.c.h.b16 %v218
      %v341 = vunpack.c.l.b16 %v219
      %v342 = vunpack.c.l.b16 %v220
      %v343 = vunpack.c.h.b16 %v220
      %v344 = vunpack.c.l.b16 %v221
      %v345 = vunpack.c.l.b16 %v222
      %v346 = vunpack.c.h.b16 %v222
      %v347 = vunpack.c.l.b16 %v223
      %v348 = vunpack.c.l.b16 %v224
      %v349 = vunpack.c.h.b16 %v224
      %v350 = vunpack.c.l.b16 %v225
      %v351 = vunpack.c.l.b16 %v226
      %v352 = vunpack.c.h.b16 %v226
      %v353 = vunpack.c.l.b16 %v227
      %v354 = vunpack.c.l.b16 %v228
      %v355 = vunpack.c.h.b16 %v228
      %v356 = vunpack.c.l.b16 %v229
      %v357 = vunpack.c.l.b16 %v230
      %v358 = vunpack.c.h.b16 %v230
      %v359 = vunpack.c.l.b16 %v231
      %v360 = vpack.c.b16 %v315, %v312
      %v361 = vpack.c.b16 %v316, %v313
      %v362 = vpack.c.b16 %v317, %v314
      %v363 = vpack.c.b16 %v321, %v318
      %v364 = vpack.c.b16 %v322, %v319
      %v365 = vpack.c.b16 %v323, %v320
      %v366 = vpack.c.b16 %v327, %v324
      %v367 = vpack.c.b16 %v328, %v325
      %v368 = vpack.c.b16 %v329, %v326
      %v369 = vpack.c.b16 %v333, %v330
      %v370 = vpack.c.b16 %v334, %v331
      %v371 = vpack.c.b16 %v335, %v332
      %v372 = vpack.c.b16 %v339, %v336
      %v373 = vpack.c.b16 %v340, %v337
      %v374 = vpack.c.b16 %v341, %v338
      %v375 = vpack.c.b16 %v345, %v342
      %v376 = vpack.c.b16 %v346, %v343
      %v377 = vpack.c.b16 %v347, %v344
      %v378 = vpack.c.b16 %v351, %v348
      %v379 = vpack.c.b16 %v352, %v349
      %v380 = vpack.c.b16 %v353, %v350
      %v381 = vpack.c.b16 %v357, %v354
      %v382 = vpack.c.b16 %v358, %v355
      %v383 = vpack.c.b16 %v359, %v356
      %v456 = vunpack.c.l.b16 %v232
      %v457 = vunpack.c.l.b16 %v233
      %v458 = vunpack.c.l.b16 %v234
      %v459 = vunpack.c.l.b16 %v235
      %v460 = vunpack.c.l.b16 %v236
      %v461 = vunpack.c.l.b16 %v237
      %v462 = vunpack.c.l.b16 %v238
      %v463 = vunpack.c.l.b16 %v239
      %v464 = vunpack.c.l.b16 %v240
      %v465 = vunpack.c.l.b16 %v241
      %v466 = vunpack.c.l.b16 %v242
      %v467 = vunpack.c.l.b16 %v243
      %v468 = vunpack.c.l.b16 %v244
      %v469 = vunpack.c.l.b16 %v245
      %v470 = vunpack.c.l.b16 %v246
      %v471 = vunpack.c.l.b16 %v247
      %v472 = vunpack.c.l.b16 %v248
      %v473 = vunpack.c.l.b16 %v249
      %v474 = vunpack.c.l.b16 %v250
      %v475 = vunpack.c.l.b16 %v251
      %v476 = vunpack.c.l.b16 %v252
      %v477 = vunpack.c.l.b16 %v253
      %v478 = vunpack.c.l.b16 %v254
      %v479 = vunpack.c.l.b16 %v255
      %v480 = vunpack.c.l.b16 %v256
      %v481 = vunpack.c.l.b16 %v257
      %v482 = vunpack.c.l.b16 %v258
      %v483 = vunpack.c.l.b16 %v259
      %v484 = vunpack.c.l.b16 %v260
      %v485 = vunpack.c.l.b16 %v261
      %v486 = vunpack.c.l.b16 %v262
      %v487 = vunpack.c.l.b16 %v263
      %v488 = vunpack.c.l.b16 %v264
      %v489 = vunpack.c.l.b16 %v265
      %v490 = vunpack.c.l.b16 %v266
      %v491 = vunpack.c.l.b16 %v267
      %v492 = vunpack.c.l.b16 %v268
      %v493 = vunpack.c.l.b16 %v269
      %v494 = vunpack.c.l.b16 %v270
      %v495 = vunpack.c.l.b16 %v271
      %v496 = vunpack.c.l.b16 %v272
      %v497 = vunpack.c.l.b16 %v273
      %v498 = vunpack.c.l.b16 %v274
      %v499 = vunpack.c.l.b16 %v275
      %v500 = vunpack.c.l.b16 %v276
      %v501 = vunpack.c.l.b16 %v277
      %v502 = vunpack.c.l.b16 %v278
      %v503 = vunpack.c.l.b16 %v279
      %v504 = vpack.c.b16 %v457, %v456
      %v505 = vpack.c.b16 %v459, %v458
      %v506 = vpack.c.b16 %v461, %v460
      %v507 = vpack.c.b16 %v463, %v462
      %v508 = vpack.c.b16 %v465, %v464
      %v509 = vpack.c.b16 %v467, %v466
      %v510 = vpack.c.b16 %v469, %v468
      %v511 = vpack.c.b16 %v471, %v470
      %v512 = vpack.c.b16 %v473, %v472
      %v513 = vpack.c.b16 %v475, %v474
      %v514 = vpack.c.b16 %v477, %v476
      %v515 = vpack.c.b16 %v479, %v478
      %v516 = vpack.c.b16 %v481, %v480
      %v517 = vpack.c.b16 %v483, %v482
      %v518 = vpack.c.b16 %v485, %v484
      %v519 = vpack.c.b16 %v487, %v486
      %v520 = vpack.c.b16 %v489, %v488
      %v521 = vpack.c.b16 %v491, %v490
      %v522 = vpack.c.b16 %v493, %v492
      %v523 = vpack.c.b16 %v495, %v494
      %v524 = vpack.c.b16 %v497, %v496
      %v525 = vpack.c.b16 %v499, %v498
      %v526 = vpack.c.b16 %v501, %v500
      %v527 = vpack.c.b16 %v503, %v502
      %552 = vmatpush.bf16.msra.mxu0 %v511
      %553 = vmatpush.bf16.msra.mxu0 %v510
      %554 = vmatpush.bf16.msra.mxu0 %v509
      %555 = vmatpush.bf16.msra.mxu0 %v508
      %556 = vmatpush.bf16.msra.mxu0 %v507
      %557 = vmatpush.bf16.msra.mxu0 %v506
      %558 = vmatpush.bf16.msra.mxu0 %v505
      %559 = vmatpush.bf16.msra.mxu0 %v504
      %560 = vmatmul.bf16.gmra.mxu0 %v360
      %v561 = vpop.f32.mrf.mxu0
      %v562 = vadd.f32 0.0, %v561
      %v563 = vpop.f32.mrf.mxu0
      %v564 = vadd.f32 0.0, %v563
      %565 = vmatmul.bf16.gmra.mxu0 %v363
      %v566 = vpop.f32.mrf.mxu0
      %v567 = vadd.f32 0.0, %v566
      %v568 = vpop.f32.mrf.mxu0
      %v569 = vadd.f32 0.0, %v568
      %570 = vmatmul.bf16.gmra.mxu0 %v366
      %v571 = vpop.f32.mrf.mxu0
      %v572 = vadd.f32 0.0, %v571
      %v573 = vpop.f32.mrf.mxu0
      %v574 = vadd.f32 0.0, %v573
      %575 = vmatmul.bf16.gmra.mxu0 %v369
      %v576 = vpop.f32.mrf.mxu0
      %v577 = vadd.f32 0.0, %v576
      %v578 = vpop.f32.mrf.mxu0
      %v579 = vadd.f32 0.0, %v578
      %580 = vmatmul.bf16.gmra.mxu0 %v372
      %v581 = vpop.f32.mrf.mxu0
      %v582 = vadd.f32 0.0, %v581
      %v583 = vpop.f32.mrf.mxu0
      %v584 = vadd.f32 0.0, %v583
      %585 = vmatmul.bf16.gmra.mxu0 %v375
      %v586 = vpop.f32.mrf.mxu0
      %v587 = vadd.f32 0.0, %v586
      %v588 = vpop.f32.mrf.mxu0
      %v589 = vadd.f32 0.0, %v588
      %590 = vmatmul.bf16.gmra.mxu0 %v378
      %v591 = vpop.f32.mrf.mxu0
      %v592 = vadd.f32 0.0, %v591
      %v593 = vpop.f32.mrf.mxu0
      %v594 = vadd.f32 0.0, %v593
      %595 = vmatmul.bf16.gmra.mxu0 %v381
      %v596 = vpop.f32.mrf.mxu0
      %v597 = vadd.f32 0.0, %v596
      %v598 = vpop.f32.mrf.mxu0
      %v599 = vadd.f32 0.0, %v598
      %600 = vdwg.mxu0
      %601 = vmatpush.bf16.msra.mxu0 %v519
      %602 = vmatpush.bf16.msra.mxu0 %v518
      %603 = vmatpush.bf16.msra.mxu0 %v517
      %604 = vmatpush.bf16.msra.mxu0 %v516
      %605 = vmatpush.bf16.msra.mxu0 %v515
      %606 = vmatpush.bf16.msra.mxu0 %v514
      %607 = vmatpush.bf16.msra.mxu0 %v513
      %608 = vmatpush.bf16.msra.mxu0 %v512
      %609 = vmatmul.bf16.gmra.mxu0 %v361
      %v610 = vpop.f32.mrf.mxu0
      %v611 = vadd.f32 %v562, %v610
      %v612 = vpop.f32.mrf.mxu0
      %v613 = vadd.f32 %v564, %v612
      %614 = vmatmul.bf16.gmra.mxu0 %v364
      %v615 = vpop.f32.mrf.mxu0
      %v616 = vadd.f32 %v567, %v615
      %v617 = vpop.f32.mrf.mxu0
      %v618 = vadd.f32 %v569, %v617
      %619 = vmatmul.bf16.gmra.mxu0 %v367
      %v620 = vpop.f32.mrf.mxu0
      %v621 = vadd.f32 %v572, %v620
      %v622 = vpop.f32.mrf.mxu0
      %v623 = vadd.f32 %v574, %v622
      %624 = vmatmul.bf16.gmra.mxu0 %v370
      %v625 = vpop.f32.mrf.mxu0
      %v626 = vadd.f32 %v577, %v625
      %v627 = vpop.f32.mrf.mxu0
      %v628 = vadd.f32 %v579, %v627
      %629 = vmatmul.bf16.gmra.mxu0 %v373
      %v630 = vpop.f32.mrf.mxu0
      %v631 = vadd.f32 %v582, %v630
      %v632 = vpop.f32.mrf.mxu0
      %v633 = vadd.f32 %v584, %v632
      %634 = vmatmul.bf16.gmra.mxu0 %v376
      %v635 = vpop.f32.mrf.mxu0
      %v636 = vadd.f32 %v587, %v635
      %v637 = vpop.f32.mrf.mxu0
      %v638 = vadd.f32 %v589, %v637
      %639 = vmatmul.bf16.gmra.mxu0 %v379
      %v640 = vpop.f32.mrf.mxu0
      %v641 = vadd.f32 %v592, %v640
      %v642 = vpop.f32.mrf.mxu0
      %v643 = vadd.f32 %v594, %v642
      %644 = vmatmul.bf16.gmra.mxu0 %v382
      %v645 = vpop.f32.mrf.mxu0
      %v646 = vadd.f32 %v597, %v645
      %v647 = vpop.f32.mrf.mxu0
      %v648 = vadd.f32 %v599, %v647
      %649 = vdwg.mxu0
      %650 = vmatpush.bf16.msra.mxu0 %v527
      %651 = vmatpush.bf16.msra.mxu0 %v526
      %652 = vmatpush.bf16.msra.mxu0 %v525
      %653 = vmatpush.bf16.msra.mxu0 %v524
      %654 = vmatpush.bf16.msra.mxu0 %v523
      %655 = vmatpush.bf16.msra.mxu0 %v522
      %656 = vmatpush.bf16.msra.mxu0 %v521
      %657 = vmatpush.bf16.msra.mxu0 %v520
      %658 = vmatmul.bf16.gmra.mxu0 %v362
      %v659 = vpop.f32.mrf.mxu0
      %v660 = vadd.f32 %v611, %v659
      %v661 = vpop.f32.mrf.mxu0
      %v662 = vadd.f32 %v613, %v661
      %663 = vmatmul.bf16.gmra.mxu0 %v365
      %v664 = vpop.f32.mrf.mxu0
      %v665 = vadd.f32 %v616, %v664
      %v666 = vpop.f32.mrf.mxu0
      %v667 = vadd.f32 %v618, %v666
      %668 = vmatmul.bf16.gmra.mxu0 %v368
      %v669 = vpop.f32.mrf.mxu0
      %v670 = vadd.f32 %v621, %v669
      %v671 = vpop.f32.mrf.mxu0
      %v672 = vadd.f32 %v623, %v671
      %673 = vmatmul.bf16.gmra.mxu0 %v371
      %v674 = vpop.f32.mrf.mxu0
      %v675 = vadd.f32 %v626, %v674
      %v676 = vpop.f32.mrf.mxu0
      %v677 = vadd.f32 %v628, %v676
      %678 = vmatmul.bf16.gmra.mxu0 %v374
      %v679 = vpop.f32.mrf.mxu0
      %v680 = vadd.f32 %v631, %v679
      %v681 = vpop.f32.mrf.mxu0
      %v682 = vadd.f32 %v633, %v681
      %683 = vmatmul.bf16.gmra.mxu0 %v377
      %v684 = vpop.f32.mrf.mxu0
      %v685 = vadd.f32 %v636, %v684
      %v686 = vpop.f32.mrf.mxu0
      %v687 = vadd.f32 %v638, %v686
      %688 = vmatmul.bf16.gmra.mxu0 %v380
      %v689 = vpop.f32.mrf.mxu0
      %v690 = vadd.f32 %v641, %v689
      %v691 = vpop.f32.mrf.mxu0
      %v692 = vadd.f32 %v643, %v691
      %693 = vmatmul.bf16.gmra.mxu0 %v383
      %v694 = vpop.f32.mrf.mxu0
      %v695 = vadd.f32 %v646, %v694
      %v696 = vpop.f32.mrf.mxu0
      %v697 = vadd.f32 %v648, %v696
      %698 = vdwg.mxu0
      %699 = vst [vmem:[#allocation2] sm:$0xff] %v660
      %700 = vst [vmem:[#allocation2 + $0x8] sm:$0xff] %v662
      %701 = vst [vmem:[#allocation2 + $0x10] sm:$0xff] %v665
      %702 = vst [vmem:[#allocation2 + $0x18] sm:$0xff] %v667
      %703 = vst [vmem:[#allocation2 + $0x20] sm:$0xff] %v670
      %704 = vst [vmem:[#allocation2 + $0x28] sm:$0xff] %v672
      %705 = vst [vmem:[#allocation2 + $0x30] sm:$0xff] %v675
      %706 = vst [vmem:[#allocation2 + $0x38] sm:$0xff] %v677
      %707 = vst [vmem:[#allocation2 + $0x40] sm:$0xff] %v680
      %708 = vst [vmem:[#allocation2 + $0x48] sm:$0xff] %v682
      %709 = vst [vmem:[#allocation2 + $0x50] sm:$0xff] %v685
      %710 = vst [vmem:[#allocation2 + $0x58] sm:$0xff] %v687
      %711 = vst [vmem:[#allocation2 + $0x60] sm:$0xff] %v690
      %712 = vst [vmem:[#allocation2 + $0x68] sm:$0xff] %v692
      %713 = vst [vmem:[#allocation2 + $0x70] sm:$0xff] %v695
      %714 = vst [vmem:[#allocation2 + $0x78] sm:$0xff] %v697
      %s715 = sadd.s32 %s194, 32
      %s716 = sshra.s32 %s715, 3
      %s717 = sand.u32 %s715, 7
      %s718 = smul.u32 %s716, 3
      %s719 = smul.addr %s718, 4
      %s720 = scalar_lea.vmem %s183, %s719
      %v721 = vld [vmem:[%s720] sm:$0xff]
      %v722 = vld [vmem:[%s720 + $0x8] sm:$0xf]
      %v723 = vld [vmem:[%s720 + $0xc] sm:$0xff]
      %v724 = vld [vmem:[%s720 + $0x14] sm:$0xf]
      %v725 = vld [vmem:[%s720 + $0x18] sm:$0xff]
      %v726 = vld [vmem:[%s720 + $0x20] sm:$0xf]
      %v727 = vld [vmem:[%s720 + $0x24] sm:$0xff]
      %v728 = vld [vmem:[%s720 + $0x2c] sm:$0xf]
      %v729 = vld [vmem:[%s720 + $0x30] sm:$0xff]
      %v730 = vld [vmem:[%s720 + $0x38] sm:$0xf]
      %v731 = vld [vmem:[%s720 + $0x3c] sm:$0xff]
      %v732 = vld [vmem:[%s720 + $0x44] sm:$0xf]
      %v733 = vld [vmem:[%s720 + $0x48] sm:$0xff]
      %v734 = vld [vmem:[%s720 + $0x50] sm:$0xf]
      %v735 = vld [vmem:[%s720 + $0x54] sm:$0xff]
      %v736 = vld [vmem:[%s720 + $0x5c] sm:$0xf]
      %v737 = vld [vmem:[%s720 + $0x60] sm:$0xff]
      %v738 = vld [vmem:[%s720 + $0x68] sm:$0xf]
      %v739 = vld [vmem:[%s720 + $0x6c] sm:$0xff]
      %v740 = vld [vmem:[%s720 + $0x74] sm:$0xf]
      %v741 = vld [vmem:[%s720 + $0x78] sm:$0xff]
      %v742 = vld [vmem:[%s720 + $0x80] sm:$0xf]
      %v743 = vld [vmem:[%s720 + $0x84] sm:$0xff]
      %v744 = vld [vmem:[%s720 + $0x8c] sm:$0xf]
      %v745 = vld [vmem:[%s720 + $0x90] sm:$0xff]
      %v746 = vld [vmem:[%s720 + $0x98] sm:$0xf]
      %v747 = vld [vmem:[%s720 + $0x9c] sm:$0xff]
      %v748 = vld [vmem:[%s720 + $0xa4] sm:$0xf]
      %v749 = vld [vmem:[%s720 + $0xa8] sm:$0xff]
      %v750 = vld [vmem:[%s720 + $0xb0] sm:$0xf]
      %v751 = vld [vmem:[%s720 + $0xb4] sm:$0xff]
      %v752 = vld [vmem:[%s720 + $0xbc] sm:$0xf]
      %s753 = scalar_lea.vmem %s1, 192
      %v754 = vld [vmem:[%s753] sm:$0xf]
      %v755 = vld [vmem:[%s753 + $0x4] sm:$0xf]
      %v756 = vld [vmem:[%s753 + $0x8] sm:$0xf]
      %v757 = vld [vmem:[%s753 + $0xc] sm:$0xf]
      %v758 = vld [vmem:[%s753 + $0x10] sm:$0xf]
      %v759 = vld [vmem:[%s753 + $0x14] sm:$0xf]
      %v760 = vld [vmem:[%s753 + $0x18] sm:$0xf]
      %v761 = vld [vmem:[%s753 + $0x1c] sm:$0xf]
      %v762 = vld [vmem:[%s753 + $0x20] sm:$0xf]
      %v763 = vld [vmem:[%s753 + $0x24] sm:$0xf]
      %v764 = vld [vmem:[%s753 + $0x28] sm:$0xf]
      %v765 = vld [vmem:[%s753 + $0x2c] sm:$0xf]
      %v766 = vld [vmem:[%s753 + $0x30] sm:$0xf]
      %v767 = vld [vmem:[%s753 + $0x34] sm:$0xf]
      %v768 = vld [vmem:[%s753 + $0x38] sm:$0xf]
      %v769 = vld [vmem:[%s753 + $0x3c] sm:$0xf]
      %v770 = vld [vmem:[%s753 + $0x40] sm:$0xf]
      %v771 = vld [vmem:[%s753 + $0x44] sm:$0xf]
      %v772 = vld [vmem:[%s753 + $0x48] sm:$0xf]
      %v773 = vld [vmem:[%s753 + $0x4c] sm:$0xf]
      %v774 = vld [vmem:[%s753 + $0x50] sm:$0xf]
      %v775 = vld [vmem:[%s753 + $0x54] sm:$0xf]
      %v776 = vld [vmem:[%s753 + $0x58] sm:$0xf]
      %v777 = vld [vmem:[%s753 + $0x5c] sm:$0xf]
      %v778 = vld [vmem:[%s753 + $0x60] sm:$0xf]
      %v779 = vld [vmem:[%s753 + $0x64] sm:$0xf]
      %v780 = vld [vmem:[%s753 + $0x68] sm:$0xf]
      %v781 = vld [vmem:[%s753 + $0x6c] sm:$0xf]
      %v782 = vld [vmem:[%s753 + $0x70] sm:$0xf]
      %v783 = vld [vmem:[%s753 + $0x74] sm:$0xf]
      %v784 = vld [vmem:[%s753 + $0x78] sm:$0xf]
      %v785 = vld [vmem:[%s753 + $0x7c] sm:$0xf]
      %v786 = vld [vmem:[%s753 + $0x80] sm:$0xf]
      %v787 = vld [vmem:[%s753 + $0x84] sm:$0xf]
      %v788 = vld [vmem:[%s753 + $0x88] sm:$0xf]
      %v789 = vld [vmem:[%s753 + $0x8c] sm:$0xf]
      %v790 = vld [vmem:[%s753 + $0x90] sm:$0xf]
      %v791 = vld [vmem:[%s753 + $0x94] sm:$0xf]
      %v792 = vld [vmem:[%s753 + $0x98] sm:$0xf]
      %v793 = vld [vmem:[%s753 + $0x9c] sm:$0xf]
      %v794 = vld [vmem:[%s753 + $0xa0] sm:$0xf]
      %v795 = vld [vmem:[%s753 + $0xa4] sm:$0xf]
      %v796 = vld [vmem:[%s753 + $0xa8] sm:$0xf]
      %v797 = vld [vmem:[%s753 + $0xac] sm:$0xf]
      %v798 = vld [vmem:[%s753 + $0xb0] sm:$0xf]
      %v799 = vld [vmem:[%s753 + $0xb4] sm:$0xf]
      %v800 = vld [vmem:[%s753 + $0xb8] sm:$0xf]
      %v801 = vld [vmem:[%s753 + $0xbc] sm:$0xf]
      %v834 = vunpack.c.l.b16 %v721
      %v835 = vunpack.c.h.b16 %v721
      %v836 = vunpack.c.l.b16 %v722
      %v837 = vunpack.c.l.b16 %v723
      %v838 = vunpack.c.h.b16 %v723
      %v839 = vunpack.c.l.b16 %v724
      %v840 = vunpack.c.l.b16 %v725
      %v841 = vunpack.c.h.b16 %v725
      %v842 = vunpack.c.l.b16 %v726
      %v843 = vunpack.c.l.b16 %v727
      %v844 = vunpack.c.h.b16 %v727
      %v845 = vunpack.c.l.b16 %v728
      %v846 = vunpack.c.l.b16 %v729
      %v847 = vunpack.c.h.b16 %v729
      %v848 = vunpack.c.l.b16 %v730
      %v849 = vunpack.c.l.b16 %v731
      %v850 = vunpack.c.h.b16 %v731
      %v851 = vunpack.c.l.b16 %v732
      %v852 = vunpack.c.l.b16 %v733
      %v853 = vunpack.c.h.b16 %v733
      %v854 = vunpack.c.l.b16 %v734
      %v855 = vunpack.c.l.b16 %v735
      %v856 = vunpack.c.h.b16 %v735
      %v857 = vunpack.c.l.b16 %v736
      %v858 = vunpack.c.l.b16 %v737
      %v859 = vunpack.c.h.b16 %v737
      %v860 = vunpack.c.l.b16 %v738
      %v861 = vunpack.c.l.b16 %v739
      %v862 = vunpack.c.h.b16 %v739
      %v863 = vunpack.c.l.b16 %v740
      %v864 = vunpack.c.l.b16 %v741
      %v865 = vunpack.c.h.b16 %v741
      %v866 = vunpack.c.l.b16 %v742
      %v867 = vunpack.c.l.b16 %v743
      %v868 = vunpack.c.h.b16 %v743
      %v869 = vunpack.c.l.b16 %v744
      %v870 = vunpack.c.l.b16 %v745
      %v871 = vunpack.c.h.b16 %v745
      %v872 = vunpack.c.l.b16 %v746
      %v873 = vunpack.c.l.b16 %v747
      %v874 = vunpack.c.h.b16 %v747
      %v875 = vunpack.c.l.b16 %v748
      %v876 = vunpack.c.l.b16 %v749
      %v877 = vunpack.c.h.b16 %v749
      %v878 = vunpack.c.l.b16 %v750
      %v879 = vunpack.c.l.b16 %v751
      %v880 = vunpack.c.h.b16 %v751
      %v881 = vunpack.c.l.b16 %v752
      %v882 = vpack.c.b16 %v837, %v834
      %v883 = vpack.c.b16 %v838, %v835
      %v884 = vpack.c.b16 %v839, %v836
      %v885 = vpack.c.b16 %v843, %v840
      %v886 = vpack.c.b16 %v844, %v841
      %v887 = vpack.c.b16 %v845, %v842
      %v888 = vpack.c.b16 %v849, %v846
      %v889 = vpack.c.b16 %v850, %v847
      %v890 = vpack.c.b16 %v851, %v848
      %v891 = vpack.c.b16 %v855, %v852
      %v892 = vpack.c.b16 %v856, %v853
      %v893 = vpack.c.b16 %v857, %v854
      %v894 = vpack.c.b16 %v861, %v858
      %v895 = vpack.c.b16 %v862, %v859
      %v896 = vpack.c.b16 %v863, %v860
      %v897 = vpack.c.b16 %v867, %v864
      %v898 = vpack.c.b16 %v868, %v865
      %v899 = vpack.c.b16 %v869, %v866
      %v900 = vpack.c.b16 %v873, %v870
      %v901 = vpack.c.b16 %v874, %v871
      %v902 = vpack.c.b16 %v875, %v872
      %v903 = vpack.c.b16 %v879, %v876
      %v904 = vpack.c.b16 %v880, %v877
      %v905 = vpack.c.b16 %v881, %v878
      %v978 = vunpack.c.l.b16 %v754
      %v979 = vunpack.c.l.b16 %v755
      %v980 = vunpack.c.l.b16 %v756
      %v981 = vunpack.c.l.b16 %v757
      %v982 = vunpack.c.l.b16 %v758
      %v983 = vunpack.c.l.b16 %v759
      %v984 = vunpack.c.l.b16 %v760
      %v985 = vunpack.c.l.b16 %v761
      %v986 = vunpack.c.l.b16 %v762
      %v987 = vunpack.c.l.b16 %v763
      %v988 = vunpack.c.l.b16 %v764
      %v989 = vunpack.c.l.b16 %v765
      %v990 = vunpack.c.l.b16 %v766
      %v991 = vunpack.c.l.b16 %v767
      %v992 = vunpack.c.l.b16 %v768
      %v993 = vunpack.c.l.b16 %v769
      %v994 = vunpack.c.l.b16 %v770
      %v995 = vunpack.c.l.b16 %v771
      %v996 = vunpack.c.l.b16 %v772
      %v997 = vunpack.c.l.b16 %v773
      %v998 = vunpack.c.l.b16 %v774
      %v999 = vunpack.c.l.b16 %v775
      %v1000 = vunpack.c.l.b16 %v776
      %v1001 = vunpack.c.l.b16 %v777
      %v1002 = vunpack.c.l.b16 %v778
      %v1003 = vunpack.c.l.b16 %v779
      %v1004 = vunpack.c.l.b16 %v780
      %v1005 = vunpack.c.l.b16 %v781
      %v1006 = vunpack.c.l.b16 %v782
      %v1007 = vunpack.c.l.b16 %v783
      %v1008 = vunpack.c.l.b16 %v784
      %v1009 = vunpack.c.l.b16 %v785
      %v1010 = vunpack.c.l.b16 %v786
      %v1011 = vunpack.c.l.b16 %v787
      %v1012 = vunpack.c.l.b16 %v788
      %v1013 = vunpack.c.l.b16 %v789
      %v1014 = vunpack.c.l.b16 %v790
      %v1015 = vunpack.c.l.b16 %v791
      %v1016 = vunpack.c.l.b16 %v792
      %v1017 = vunpack.c.l.b16 %v793
      %v1018 = vunpack.c.l.b16 %v794
      %v1019 = vunpack.c.l.b16 %v795
      %v1020 = vunpack.c.l.b16 %v796
      %v1021 = vunpack.c.l.b16 %v797
      %v1022 = vunpack.c.l.b16 %v798
      %v1023 = vunpack.c.l.b16 %v799
      %v1024 = vunpack.c.l.b16 %v800
      %v1025 = vunpack.c.l.b16 %v801
      %v1026 = vpack.c.b16 %v979, %v978
      %v1027 = vpack.c.b16 %v981, %v980
      %v1028 = vpack.c.b16 %v983, %v982
      %v1029 = vpack.c.b16 %v985, %v984
      %v1030 = vpack.c.b16 %v987, %v986
      %v1031 = vpack.c.b16 %v989, %v988
      %v1032 = vpack.c.b16 %v991, %v990
      %v1033 = vpack.c.b16 %v993, %v992
      %v1034 = vpack.c.b16 %v995, %v994
      %v1035 = vpack.c.b16 %v997, %v996
      %v1036 = vpack.c.b16 %v999, %v998
      %v1037 = vpack.c.b16 %v1001, %v1000
      %v1038 = vpack.c.b16 %v1003, %v1002
      %v1039 = vpack.c.b16 %v1005, %v1004
      %v1040 = vpack.c.b16 %v1007, %v1006
      %v1041 = vpack.c.b16 %v1009, %v1008
      %v1042 = vpack.c.b16 %v1011, %v1010
      %v1043 = vpack.c.b16 %v1013, %v1012
      %v1044 = vpack.c.b16 %v1015, %v1014
      %v1045 = vpack.c.b16 %v1017, %v1016
      %v1046 = vpack.c.b16 %v1019, %v1018
      %v1047 = vpack.c.b16 %v1021, %v1020
      %v1048 = vpack.c.b16 %v1023, %v1022
      %v1049 = vpack.c.b16 %v1025, %v1024
      %1074 = vmatpush.bf16.msra.mxu0 %v1033
      %1075 = vmatpush.bf16.msra.mxu0 %v1032
      %1076 = vmatpush.bf16.msra.mxu0 %v1031
      %1077 = vmatpush.bf16.msra.mxu0 %v1030
      %1078 = vmatpush.bf16.msra.mxu0 %v1029
      %1079 = vmatpush.bf16.msra.mxu0 %v1028
      %1080 = vmatpush.bf16.msra.mxu0 %v1027
      %1081 = vmatpush.bf16.msra.mxu0 %v1026
      %1082 = vmatmul.bf16.gmra.mxu0 %v882
      %v1083 = vpop.f32.mrf.mxu0
      %v1084 = vadd.f32 0.0, %v1083
      %v1085 = vpop.f32.mrf.mxu0
      %v1086 = vadd.f32 0.0, %v1085
      %1087 = vmatmul.bf16.gmra.mxu0 %v885
      %v1088 = vpop.f32.mrf.mxu0
      %v1089 = vadd.f32 0.0, %v1088
      %v1090 = vpop.f32.mrf.mxu0
      %v1091 = vadd.f32 0.0, %v1090
      %1092 = vmatmul.bf16.gmra.mxu0 %v888
      %v1093 = vpop.f32.mrf.mxu0
      %v1094 = vadd.f32 0.0, %v1093
      %v1095 = vpop.f32.mrf.mxu0
      %v1096 = vadd.f32 0.0, %v1095
      %1097 = vmatmul.bf16.gmra.mxu0 %v891
      %v1098 = vpop.f32.mrf.mxu0
      %v1099 = vadd.f32 0.0, %v1098
      %v1100 = vpop.f32.mrf.mxu0
      %v1101 = vadd.f32 0.0, %v1100
      %1102 = vmatmul.bf16.gmra.mxu0 %v894
      %v1103 = vpop.f32.mrf.mxu0
      %v1104 = vadd.f32 0.0, %v1103
      %v1105 = vpop.f32.mrf.mxu0
      %v1106 = vadd.f32 0.0, %v1105
      %1107 = vmatmul.bf16.gmra.mxu0 %v897
      %v1108 = vpop.f32.mrf.mxu0
      %v1109 = vadd.f32 0.0, %v1108
      %v1110 = vpop.f32.mrf.mxu0
      %v1111 = vadd.f32 0.0, %v1110
      %1112 = vmatmul.bf16.gmra.mxu0 %v900
      %v1113 = vpop.f32.mrf.mxu0
      %v1114 = vadd.f32 0.0, %v1113
      %v1115 = vpop.f32.mrf.mxu0
      %v1116 = vadd.f32 0.0, %v1115
      %1117 = vmatmul.bf16.gmra.mxu0 %v903
      %v1118 = vpop.f32.mrf.mxu0
      %v1119 = vadd.f32 0.0, %v1118
      %v1120 = vpop.f32.mrf.mxu0
      %v1121 = vadd.f32 0.0, %v1120
      %1122 = vdwg.mxu0
      %1123 = vmatpush.bf16.msra.mxu0 %v1041
      %1124 = vmatpush.bf16.msra.mxu0 %v1040
      %1125 = vmatpush.bf16.msra.mxu0 %v1039
      %1126 = vmatpush.bf16.msra.mxu0 %v1038
      %1127 = vmatpush.bf16.msra.mxu0 %v1037
      %1128 = vmatpush.bf16.msra.mxu0 %v1036
      %1129 = vmatpush.bf16.msra.mxu0 %v1035
      %1130 = vmatpush.bf16.msra.mxu0 %v1034
      %1131 = vmatmul.bf16.gmra.mxu0 %v883
      %v1132 = vpop.f32.mrf.mxu0
      %v1133 = vadd.f32 %v1084, %v1132
      %v1134 = vpop.f32.mrf.mxu0
      %v1135 = vadd.f32 %v1086, %v1134
      %1136 = vmatmul.bf16.gmra.mxu0 %v886
      %v1137 = vpop.f32.mrf.mxu0
      %v1138 = vadd.f32 %v1089, %v1137
      %v1139 = vpop.f32.mrf.mxu0
      %v1140 = vadd.f32 %v1091, %v1139
      %1141 = vmatmul.bf16.gmra.mxu0 %v889
      %v1142 = vpop.f32.mrf.mxu0
      %v1143 = vadd.f32 %v1094, %v1142
      %v1144 = vpop.f32.mrf.mxu0
      %v1145 = vadd.f32 %v1096, %v1144
      %1146 = vmatmul.bf16.gmra.mxu0 %v892
      %v1147 = vpop.f32.mrf.mxu0
      %v1148 = vadd.f32 %v1099, %v1147
      %v1149 = vpop.f32.mrf.mxu0
      %v1150 = vadd.f32 %v1101, %v1149
      %1151 = vmatmul.bf16.gmra.mxu0 %v895
      %v1152 = vpop.f32.mrf.mxu0
      %v1153 = vadd.f32 %v1104, %v1152
      %v1154 = vpop.f32.mrf.mxu0
      %v1155 = vadd.f32 %v1106, %v1154
      %1156 = vmatmul.bf16.gmra.mxu0 %v898
      %v1157 = vpop.f32.mrf.mxu0
      %v1158 = vadd.f32 %v1109, %v1157
      %v1159 = vpop.f32.mrf.mxu0
      %v1160 = vadd.f32 %v1111, %v1159
      %1161 = vmatmul.bf16.gmra.mxu0 %v901
      %v1162 = vpop.f32.mrf.mxu0
      %v1163 = vadd.f32 %v1114, %v1162
      %v1164 = vpop.f32.mrf.mxu0
      %v1165 = vadd.f32 %v1116, %v1164
      %1166 = vmatmul.bf16.gmra.mxu0 %v904
      %v1167 = vpop.f32.mrf.mxu0
      %v1168 = vadd.f32 %v1119, %v1167
      %v1169 = vpop.f32.mrf.mxu0
      %v1170 = vadd.f32 %v1121, %v1169
      %1171 = vdwg.mxu0
      %1172 = vmatpush.bf16.msra.mxu0 %v1049
      %1173 = vmatpush.bf16.msra.mxu0 %v1048
      %1174 = vmatpush.bf16.msra.mxu0 %v1047
      %1175 = vmatpush.bf16.msra.mxu0 %v1046
      %1176 = vmatpush.bf16.msra.mxu0 %v1045
      %1177 = vmatpush.bf16.msra.mxu0 %v1044
      %1178 = vmatpush.bf16.msra.mxu0 %v1043
      %1179 = vmatpush.bf16.msra.mxu0 %v1042
      %1180 = vmatmul.bf16.gmra.mxu0 %v884
      %v1181 = vpop.f32.mrf.mxu0
      %v1182 = vadd.f32 %v1133, %v1181
      %v1183 = vpop.f32.mrf.mxu0
      %v1184 = vadd.f32 %v1135, %v1183
      %1185 = vmatmul.bf16.gmra.mxu0 %v887
      %v1186 = vpop.f32.mrf.mxu0
      %v1187 = vadd.f32 %v1138, %v1186
      %v1188 = vpop.f32.mrf.mxu0
      %v1189 = vadd.f32 %v1140, %v1188
      %1190 = vmatmul.bf16.gmra.mxu0 %v890
      %v1191 = vpop.f32.mrf.mxu0
      %v1192 = vadd.f32 %v1143, %v1191
      %v1193 = vpop.f32.mrf.mxu0
      %v1194 = vadd.f32 %v1145, %v1193
      %1195 = vmatmul.bf16.gmra.mxu0 %v893
      %v1196 = vpop.f32.mrf.mxu0
      %v1197 = vadd.f32 %v1148, %v1196
      %v1198 = vpop.f32.mrf.mxu0
      %v1199 = vadd.f32 %v1150, %v1198
      %1200 = vmatmul.bf16.gmra.mxu0 %v896
      %v1201 = vpop.f32.mrf.mxu0
      %v1202 = vadd.f32 %v1153, %v1201
      %v1203 = vpop.f32.mrf.mxu0
      %v1204 = vadd.f32 %v1155, %v1203
      %1205 = vmatmul.bf16.gmra.mxu0 %v899
      %v1206 = vpop.f32.mrf.mxu0
      %v1207 = vadd.f32 %v1158, %v1206
      %v1208 = vpop.f32.mrf.mxu0
      %v1209 = vadd.f32 %v1160, %v1208
      %1210 = vmatmul.bf16.gmra.mxu0 %v902
      %v1211 = vpop.f32.mrf.mxu0
      %v1212 = vadd.f32 %v1163, %v1211
      %v1213 = vpop.f32.mrf.mxu0
      %v1214 = vadd.f32 %v1165, %v1213
      %1215 = vmatmul.bf16.gmra.mxu0 %v905
      %v1216 = vpop.f32.mrf.mxu0
      %v1217 = vadd.f32 %v1168, %v1216
      %v1218 = vpop.f32.mrf.mxu0
      %v1219 = vadd.f32 %v1170, %v1218
      %1220 = vdwg.mxu0
      %v1221 = vld [vmem:[#allocation2] sm:$0xff]
      %v1222 = vld [vmem:[#allocation2 + $0x8] sm:$0xff]
      %v1223 = vld [vmem:[#allocation2 + $0x10] sm:$0xff]
      %v1224 = vld [vmem:[#allocation2 + $0x18] sm:$0xff]
      %v1225 = vld [vmem:[#allocation2 + $0x20] sm:$0xff]
      %v1226 = vld [vmem:[#allocation2 + $0x28] sm:$0xff]
      %v1227 = vld [vmem:[#allocation2 + $0x30] sm:$0xff]
      %v1228 = vld [vmem:[#allocation2 + $0x38] sm:$0xff]
      %v1229 = vld [vmem:[#allocation2 + $0x40] sm:$0xff]
      %v1230 = vld [vmem:[#allocation2 + $0x48] sm:$0xff]
      %v1231 = vld [vmem:[#allocation2 + $0x50] sm:$0xff]
      %v1232 = vld [vmem:[#allocation2 + $0x58] sm:$0xff]
      %v1233 = vld [vmem:[#allocation2 + $0x60] sm:$0xff]
      %v1234 = vld [vmem:[#allocation2 + $0x68] sm:$0xff]
      %v1235 = vld [vmem:[#allocation2 + $0x70] sm:$0xff]
      %v1236 = vld [vmem:[#allocation2 + $0x78] sm:$0xff]
      %v1237 = vadd.f32 %v1221, %v1182
      %v1238 = vadd.f32 %v1222, %v1184
      %v1239 = vadd.f32 %v1223, %v1187
      %v1240 = vadd.f32 %v1224, %v1189
      %v1241 = vadd.f32 %v1225, %v1192
      %v1242 = vadd.f32 %v1226, %v1194
      %v1243 = vadd.f32 %v1227, %v1197
      %v1244 = vadd.f32 %v1228, %v1199
      %v1245 = vadd.f32 %v1229, %v1202
      %v1246 = vadd.f32 %v1230, %v1204
      %v1247 = vadd.f32 %v1231, %v1207
      %v1248 = vadd.f32 %v1232, %v1209
      %v1249 = vadd.f32 %v1233, %v1212
      %v1250 = vadd.f32 %v1234, %v1214
      %v1251 = vadd.f32 %v1235, %v1217
      %v1252 = vadd.f32 %v1236, %v1219
      %1253 = vst [vmem:[#allocation2] sm:$0xff] %v1237
      %1254 = vst [vmem:[#allocation2 + $0x8] sm:$0xff] %v1238
      %1255 = vst [vmem:[#allocation2 + $0x10] sm:$0xff] %v1239
      %1256 = vst [vmem:[#allocation2 + $0x18] sm:$0xff] %v1240
      %1257 = vst [vmem:[#allocation2 + $0x20] sm:$0xff] %v1241
      %1258 = vst [vmem:[#allocation2 + $0x28] sm:$0xff] %v1242
      %1259 = vst [vmem:[#allocation2 + $0x30] sm:$0xff] %v1243
      %1260 = vst [vmem:[#allocation2 + $0x38] sm:$0xff] %v1244
      %1261 = vst [vmem:[#allocation2 + $0x40] sm:$0xff] %v1245
      %1262 = vst [vmem:[#allocation2 + $0x48] sm:$0xff] %v1246
      %1263 = vst [vmem:[#allocation2 + $0x50] sm:$0xff] %v1247
      %1264 = vst [vmem:[#allocation2 + $0x58] sm:$0xff] %v1248
      %1265 = vst [vmem:[#allocation2 + $0x60] sm:$0xff] %v1249
      %1266 = vst [vmem:[#allocation2 + $0x68] sm:$0xff] %v1250
      %1267 = vst [vmem:[#allocation2 + $0x70] sm:$0xff] %v1251
      %1268 = vst [vmem:[#allocation2 + $0x78] sm:$0xff] %v1252
      %s1269 = sadd.s32 %s194, 64
      %s1270 = sshra.s32 %s1269, 3
      %s1271 = sand.u32 %s1269, 7
      %s1272 = smul.u32 %s1270, 3
      %s1273 = smul.addr %s1272, 4
      %s1274 = scalar_lea.vmem %s183, %s1273
      %v1275 = vld [vmem:[%s1274] sm:$0xff]
      %v1276 = vld [vmem:[%s1274 + $0x8] sm:$0xf]
      %v1277 = vld [vmem:[%s1274 + $0xc] sm:$0xff]
      %v1278 = vld [vmem:[%s1274 + $0x14] sm:$0xf]
      %v1279 = vld [vmem:[%s1274 + $0x18] sm:$0xff]
      %v1280 = vld [vmem:[%s1274 + $0x20] sm:$0xf]
      %v1281 = vld [vmem:[%s1274 + $0x24] sm:$0xff]
      %v1282 = vld [vmem:[%s1274 + $0x2c] sm:$0xf]
      %v1283 = vld [vmem:[%s1274 + $0x30] sm:$0xff]
      %v1284 = vld [vmem:[%s1274 + $0x38] sm:$0xf]
      %v1285 = vld [vmem:[%s1274 + $0x3c] sm:$0xff]
      %v1286 = vld [vmem:[%s1274 + $0x44] sm:$0xf]
      %v1287 = vld [vmem:[%s1274 + $0x48] sm:$0xff]
      %v1288 = vld [vmem:[%s1274 + $0x50] sm:$0xf]
      %v1289 = vld [vmem:[%s1274 + $0x54] sm:$0xff]
      %v1290 = vld [vmem:[%s1274 + $0x5c] sm:$0xf]
      %v1291 = vld [vmem:[%s1274 + $0x60] sm:$0xff]
      %v1292 = vld [vmem:[%s1274 + $0x68] sm:$0xf]
      %v1293 = vld [vmem:[%s1274 + $0x6c] sm:$0xff]
      %v1294 = vld [vmem:[%s1274 + $0x74] sm:$0xf]
      %v1295 = vld [vmem:[%s1274 + $0x78] sm:$0xff]
      %v1296 = vld [vmem:[%s1274 + $0x80] sm:$0xf]
      %v1297 = vld [vmem:[%s1274 + $0x84] sm:$0xff]
      %v1298 = vld [vmem:[%s1274 + $0x8c] sm:$0xf]
      %v1299 = vld [vmem:[%s1274 + $0x90] sm:$0xff]
      %v1300 = vld [vmem:[%s1274 + $0x98] sm:$0xf]
      %v1301 = vld [vmem:[%s1274 + $0x9c] sm:$0xff]
      %v1302 = vld [vmem:[%s1274 + $0xa4] sm:$0xf]
      %v1303 = vld [vmem:[%s1274 + $0xa8] sm:$0xff]
      %v1304 = vld [vmem:[%s1274 + $0xb0] sm:$0xf]
      %v1305 = vld [vmem:[%s1274 + $0xb4] sm:$0xff]
      %v1306 = vld [vmem:[%s1274 + $0xbc] sm:$0xf]
      %s1307 = scalar_lea.vmem %s1, 384
      %v1308 = vld [vmem:[%s1307] sm:$0xf]
      %v1309 = vld [vmem:[%s1307 + $0x4] sm:$0xf]
      %v1310 = vld [vmem:[%s1307 + $0x8] sm:$0xf]
      %v1311 = vld [vmem:[%s1307 + $0xc] sm:$0xf]
      %v1312 = vld [vmem:[%s1307 + $0x10] sm:$0xf]
      %v1313 = vld [vmem:[%s1307 + $0x14] sm:$0xf]
      %v1314 = vld [vmem:[%s1307 + $0x18] sm:$0xf]
      %v1315 = vld [vmem:[%s1307 + $0x1c] sm:$0xf]
      %v1316 = vld [vmem:[%s1307 + $0x20] sm:$0xf]
      %v1317 = vld [vmem:[%s1307 + $0x24] sm:$0xf]
      %v1318 = vld [vmem:[%s1307 + $0x28] sm:$0xf]
      %v1319 = vld [vmem:[%s1307 + $0x2c] sm:$0xf]
      %v1320 = vld [vmem:[%s1307 + $0x30] sm:$0xf]
      %v1321 = vld [vmem:[%s1307 + $0x34] sm:$0xf]
      %v1322 = vld [vmem:[%s1307 + $0x38] sm:$0xf]
      %v1323 = vld [vmem:[%s1307 + $0x3c] sm:$0xf]
      %v1324 = vld [vmem:[%s1307 + $0x40] sm:$0xf]
      %v1325 = vld [vmem:[%s1307 + $0x44] sm:$0xf]
      %v1326 = vld [vmem:[%s1307 + $0x48] sm:$0xf]
      %v1327 = vld [vmem:[%s1307 + $0x4c] sm:$0xf]
      %v1328 = vld [vmem:[%s1307 + $0x50] sm:$0xf]
      %v1329 = vld [vmem:[%s1307 + $0x54] sm:$0xf]
      %v1330 = vld [vmem:[%s1307 + $0x58] sm:$0xf]
      %v1331 = vld [vmem:[%s1307 + $0x5c] sm:$0xf]
      %v1332 = vld [vmem:[%s1307 + $0x60] sm:$0xf]
      %v1333 = vld [vmem:[%s1307 + $0x64] sm:$0xf]
      %v1334 = vld [vmem:[%s1307 + $0x68] sm:$0xf]
      %v1335 = vld [vmem:[%s1307 + $0x6c] sm:$0xf]
      %v1336 = vld [vmem:[%s1307 + $0x70] sm:$0xf]
      %v1337 = vld [vmem:[%s1307 + $0x74] sm:$0xf]
      %v1338 = vld [vmem:[%s1307 + $0x78] sm:$0xf]
      %v1339 = vld [vmem:[%s1307 + $0x7c] sm:$0xf]
      %v1340 = vld [vmem:[%s1307 + $0x80] sm:$0xf]
      %v1341 = vld [vmem:[%s1307 + $0x84] sm:$0xf]
      %v1342 = vld [vmem:[%s1307 + $0x88] sm:$0xf]
      %v1343 = vld [vmem:[%s1307 + $0x8c] sm:$0xf]
      %v1344 = vld [vmem:[%s1307 + $0x90] sm:$0xf]
      %v1345 = vld [vmem:[%s1307 + $0x94] sm:$0xf]
      %v1346 = vld [vmem:[%s1307 + $0x98] sm:$0xf]
      %v1347 = vld [vmem:[%s1307 + $0x9c] sm:$0xf]
      %v1348 = vld [vmem:[%s1307 + $0xa0] sm:$0xf]
      %v1349 = vld [vmem:[%s1307 + $0xa4] sm:$0xf]
      %v1350 = vld [vmem:[%s1307 + $0xa8] sm:$0xf]
      %v1351 = vld [vmem:[%s1307 + $0xac] sm:$0xf]
      %v1352 = vld [vmem:[%s1307 + $0xb0] sm:$0xf]
      %v1353 = vld [vmem:[%s1307 + $0xb4] sm:$0xf]
      %v1354 = vld [vmem:[%s1307 + $0xb8] sm:$0xf]
      %v1355 = vld [vmem:[%s1307 + $0xbc] sm:$0xf]
      %v1388 = vunpack.c.l.b16 %v1275
      %v1389 = vunpack.c.h.b16 %v1275
      %v1390 = vunpack.c.l.b16 %v1276
      %v1391 = vunpack.c.l.b16 %v1277
      %v1392 = vunpack.c.h.b16 %v1277
      %v1393 = vunpack.c.l.b16 %v1278
      %v1394 = vunpack.c.l.b16 %v1279
      %v1395 = vunpack.c.h.b16 %v1279
      %v1396 = vunpack.c.l.b16 %v1280
      %v1397 = vunpack.c.l.b16 %v1281
      %v1398 = vunpack.c.h.b16 %v1281
      %v1399 = vunpack.c.l.b16 %v1282
      %v1400 = vunpack.c.l.b16 %v1283
      %v1401 = vunpack.c.h.b16 %v1283
      %v1402 = vunpack.c.l.b16 %v1284
      %v1403 = vunpack.c.l.b16 %v1285
      %v1404 = vunpack.c.h.b16 %v1285
      %v1405 = vunpack.c.l.b16 %v1286
      %v1406 = vunpack.c.l.b16 %v1287
      %v1407 = vunpack.c.h.b16 %v1287
      %v1408 = vunpack.c.l.b16 %v1288
      %v1409 = vunpack.c.l.b16 %v1289
      %v1410 = vunpack.c.h.b16 %v1289
      %v1411 = vunpack.c.l.b16 %v1290
      %v1412 = vunpack.c.l.b16 %v1291
      %v1413 = vunpack.c.h.b16 %v1291
      %v1414 = vunpack.c.l.b16 %v1292
      %v1415 = vunpack.c.l.b16 %v1293
      %v1416 = vunpack.c.h.b16 %v1293
      %v1417 = vunpack.c.l.b16 %v1294
      %v1418 = vunpack.c.l.b16 %v1295
      %v1419 = vunpack.c.h.b16 %v1295
      %v1420 = vunpack.c.l.b16 %v1296
      %v1421 = vunpack.c.l.b16 %v1297
      %v1422 = vunpack.c.h.b16 %v1297
      %v1423 = vunpack.c.l.b16 %v1298
      %v1424 = vunpack.c.l.b16 %v1299
      %v1425 = vunpack.c.h.b16 %v1299
      %v1426 = vunpack.c.l.b16 %v1300
      %v1427 = vunpack.c.l.b16 %v1301
      %v1428 = vunpack.c.h.b16 %v1301
      %v1429 = vunpack.c.l.b16 %v1302
      %v1430 = vunpack.c.l.b16 %v1303
      %v1431 = vunpack.c.h.b16 %v1303
      %v1432 = vunpack.c.l.b16 %v1304
      %v1433 = vunpack.c.l.b16 %v1305
      %v1434 = vunpack.c.h.b16 %v1305
      %v1435 = vunpack.c.l.b16 %v1306
      %v1436 = vpack.c.b16 %v1391, %v1388
      %v1437 = vpack.c.b16 %v1392, %v1389
      %v1438 = vpack.c.b16 %v1393, %v1390
      %v1439 = vpack.c.b16 %v1397, %v1394
      %v1440 = vpack.c.b16 %v1398, %v1395
      %v1441 = vpack.c.b16 %v1399, %v1396
      %v1442 = vpack.c.b16 %v1403, %v1400
      %v1443 = vpack.c.b16 %v1404, %v1401
      %v1444 = vpack.c.b16 %v1405, %v1402
      %v1445 = vpack.c.b16 %v1409, %v1406
      %v1446 = vpack.c.b16 %v1410, %v1407
      %v1447 = vpack.c.b16 %v1411, %v1408
      %v1448 = vpack.c.b16 %v1415, %v1412
      %v1449 = vpack.c.b16 %v1416, %v1413
      %v1450 = vpack.c.b16 %v1417, %v1414
      %v1451 = vpack.c.b16 %v1421, %v1418
      %v1452 = vpack.c.b16 %v1422, %v1419
      %v1453 = vpack.c.b16 %v1423, %v1420
      %v1454 = vpack.c.b16 %v1427, %v1424
      %v1455 = vpack.c.b16 %v1428, %v1425
      %v1456 = vpack.c.b16 %v1429, %v1426
      %v1457 = vpack.c.b16 %v1433, %v1430
      %v1458 = vpack.c.b16 %v1434, %v1431
      %v1459 = vpack.c.b16 %v1435, %v1432
      %v1532 = vunpack.c.l.b16 %v1308
      %v1533 = vunpack.c.l.b16 %v1309
      %v1534 = vunpack.c.l.b16 %v1310
      %v1535 = vunpack.c.l.b16 %v1311
      %v1536 = vunpack.c.l.b16 %v1312
      %v1537 = vunpack.c.l.b16 %v1313
      %v1538 = vunpack.c.l.b16 %v1314
      %v1539 = vunpack.c.l.b16 %v1315
      %v1540 = vunpack.c.l.b16 %v1316
      %v1541 = vunpack.c.l.b16 %v1317
      %v1542 = vunpack.c.l.b16 %v1318
      %v1543 = vunpack.c.l.b16 %v1319
      %v1544 = vunpack.c.l.b16 %v1320
      %v1545 = vunpack.c.l.b16 %v1321
      %v1546 = vunpack.c.l.b16 %v1322
      %v1547 = vunpack.c.l.b16 %v1323
      %v1548 = vunpack.c.l.b16 %v1324
      %v1549 = vunpack.c.l.b16 %v1325
      %v1550 = vunpack.c.l.b16 %v1326
      %v1551 = vunpack.c.l.b16 %v1327
      %v1552 = vunpack.c.l.b16 %v1328
      %v1553 = vunpack.c.l.b16 %v1329
      %v1554 = vunpack.c.l.b16 %v1330
      %v1555 = vunpack.c.l.b16 %v1331
      %v1556 = vunpack.c.l.b16 %v1332
      %v1557 = vunpack.c.l.b16 %v1333
      %v1558 = vunpack.c.l.b16 %v1334
      %v1559 = vunpack.c.l.b16 %v1335
      %v1560 = vunpack.c.l.b16 %v1336
      %v1561 = vunpack.c.l.b16 %v1337
      %v1562 = vunpack.c.l.b16 %v1338
      %v1563 = vunpack.c.l.b16 %v1339
      %v1564 = vunpack.c.l.b16 %v1340
      %v1565 = vunpack.c.l.b16 %v1341
      %v1566 = vunpack.c.l.b16 %v1342
      %v1567 = vunpack.c.l.b16 %v1343
      %v1568 = vunpack.c.l.b16 %v1344
      %v1569 = vunpack.c.l.b16 %v1345
      %v1570 = vunpack.c.l.b16 %v1346
      %v1571 = vunpack.c.l.b16 %v1347
      %v1572 = vunpack.c.l.b16 %v1348
      %v1573 = vunpack.c.l.b16 %v1349
      %v1574 = vunpack.c.l.b16 %v1350
      %v1575 = vunpack.c.l.b16 %v1351
      %v1576 = vunpack.c.l.b16 %v1352
      %v1577 = vunpack.c.l.b16 %v1353
      %v1578 = vunpack.c.l.b16 %v1354
      %v1579 = vunpack.c.l.b16 %v1355
      %v1580 = vpack.c.b16 %v1533, %v1532
      %v1581 = vpack.c.b16 %v1535, %v1534
      %v1582 = vpack.c.b16 %v1537, %v1536
      %v1583 = vpack.c.b16 %v1539, %v1538
      %v1584 = vpack.c.b16 %v1541, %v1540
      %v1585 = vpack.c.b16 %v1543, %v1542
      %v1586 = vpack.c.b16 %v1545, %v1544
      %v1587 = vpack.c.b16 %v1547, %v1546
      %v1588 = vpack.c.b16 %v1549, %v1548
      %v1589 = vpack.c.b16 %v1551, %v1550
      %v1590 = vpack.c.b16 %v1553, %v1552
      %v1591 = vpack.c.b16 %v1555, %v1554
      %v1592 = vpack.c.b16 %v1557, %v1556
      %v1593 = vpack.c.b16 %v1559, %v1558
      %v1594 = vpack.c.b16 %v1561, %v1560
      %v1595 = vpack.c.b16 %v1563, %v1562
      %v1596 = vpack.c.b16 %v1565, %v1564
      %v1597 = vpack.c.b16 %v1567, %v1566
      %v1598 = vpack.c.b16 %v1569, %v1568
      %v1599 = vpack.c.b16 %v1571, %v1570
      %v1600 = vpack.c.b16 %v1573, %v1572
      %v1601 = vpack.c.b16 %v1575, %v1574
      %v1602 = vpack.c.b16 %v1577, %v1576
      %v1603 = vpack.c.b16 %v1579, %v1578
      %1628 = vmatpush.bf16.msra.mxu0 %v1587
      %1629 = vmatpush.bf16.msra.mxu0 %v1586
      %1630 = vmatpush.bf16.msra.mxu0 %v1585
      %1631 = vmatpush.bf16.msra.mxu0 %v1584
      %1632 = vmatpush.bf16.msra.mxu0 %v1583
      %1633 = vmatpush.bf16.msra.mxu0 %v1582
      %1634 = vmatpush.bf16.msra.mxu0 %v1581
      %1635 = vmatpush.bf16.msra.mxu0 %v1580
      %1636 = vmatmul.bf16.gmra.mxu0 %v1436
      %v1637 = vpop.f32.mrf.mxu0
      %v1638 = vadd.f32 0.0, %v1637
      %v1639 = vpop.f32.mrf.mxu0
      %v1640 = vadd.f32 0.0, %v1639
      %1641 = vmatmul.bf16.gmra.mxu0 %v1439
      %v1642 = vpop.f32.mrf.mxu0
      %v1643 = vadd.f32 0.0, %v1642
      %v1644 = vpop.f32.mrf.mxu0
      %v1645 = vadd.f32 0.0, %v1644
      %1646 = vmatmul.bf16.gmra.mxu0 %v1442
      %v1647 = vpop.f32.mrf.mxu0
      %v1648 = vadd.f32 0.0, %v1647
      %v1649 = vpop.f32.mrf.mxu0
      %v1650 = vadd.f32 0.0, %v1649
      %1651 = vmatmul.bf16.gmra.mxu0 %v1445
      %v1652 = vpop.f32.mrf.mxu0
      %v1653 = vadd.f32 0.0, %v1652
      %v1654 = vpop.f32.mrf.mxu0
      %v1655 = vadd.f32 0.0, %v1654
      %1656 = vmatmul.bf16.gmra.mxu0 %v1448
      %v1657 = vpop.f32.mrf.mxu0
      %v1658 = vadd.f32 0.0, %v1657
      %v1659 = vpop.f32.mrf.mxu0
      %v1660 = vadd.f32 0.0, %v1659
      %1661 = vmatmul.bf16.gmra.mxu0 %v1451
      %v1662 = vpop.f32.mrf.mxu0
      %v1663 = vadd.f32 0.0, %v1662
      %v1664 = vpop.f32.mrf.mxu0
      %v1665 = vadd.f32 0.0, %v1664
      %1666 = vmatmul.bf16.gmra.mxu0 %v1454
      %v1667 = vpop.f32.mrf.mxu0
      %v1668 = vadd.f32 0.0, %v1667
      %v1669 = vpop.f32.mrf.mxu0
      %v1670 = vadd.f32 0.0, %v1669
      %1671 = vmatmul.bf16.gmra.mxu0 %v1457
      %v1672 = vpop.f32.mrf.mxu0
      %v1673 = vadd.f32 0.0, %v1672
      %v1674 = vpop.f32.mrf.mxu0
      %v1675 = vadd.f32 0.0, %v1674
      %1676 = vdwg.mxu0
      %1677 = vmatpush.bf16.msra.mxu0 %v1595
      %1678 = vmatpush.bf16.msra.mxu0 %v1594
      %1679 = vmatpush.bf16.msra.mxu0 %v1593
      %1680 = vmatpush.bf16.msra.mxu0 %v1592
      %1681 = vmatpush.bf16.msra.mxu0 %v1591
      %1682 = vmatpush.bf16.msra.mxu0 %v1590
      %1683 = vmatpush.bf16.msra.mxu0 %v1589
      %1684 = vmatpush.bf16.msra.mxu0 %v1588
      %1685 = vmatmul.bf16.gmra.mxu0 %v1437
      %v1686 = vpop.f32.mrf.mxu0
      %v1687 = vadd.f32 %v1638, %v1686
      %v1688 = vpop.f32.mrf.mxu0
      %v1689 = vadd.f32 %v1640, %v1688
      %1690 = vmatmul.bf16.gmra.mxu0 %v1440
      %v1691 = vpop.f32.mrf.mxu0
      %v1692 = vadd.f32 %v1643, %v1691
      %v1693 = vpop.f32.mrf.mxu0
      %v1694 = vadd.f32 %v1645, %v1693
      %1695 = vmatmul.bf16.gmra.mxu0 %v1443
      %v1696 = vpop.f32.mrf.mxu0
      %v1697 = vadd.f32 %v1648, %v1696
      %v1698 = vpop.f32.mrf.mxu0
      %v1699 = vadd.f32 %v1650, %v1698
      %1700 = vmatmul.bf16.gmra.mxu0 %v1446
      %v1701 = vpop.f32.mrf.mxu0
      %v1702 = vadd.f32 %v1653, %v1701
      %v1703 = vpop.f32.mrf.mxu0
      %v1704 = vadd.f32 %v1655, %v1703
      %1705 = vmatmul.bf16.gmra.mxu0 %v1449
      %v1706 = vpop.f32.mrf.mxu0
      %v1707 = vadd.f32 %v1658, %v1706
      %v1708 = vpop.f32.mrf.mxu0
      %v1709 = vadd.f32 %v1660, %v1708
      %1710 = vmatmul.bf16.gmra.mxu0 %v1452
      %v1711 = vpop.f32.mrf.mxu0
      %v1712 = vadd.f32 %v1663, %v1711
      %v1713 = vpop.f32.mrf.mxu0
      %v1714 = vadd.f32 %v1665, %v1713
      %1715 = vmatmul.bf16.gmra.mxu0 %v1455
      %v1716 = vpop.f32.mrf.mxu0
      %v1717 = vadd.f32 %v1668, %v1716
      %v1718 = vpop.f32.mrf.mxu0
      %v1719 = vadd.f32 %v1670, %v1718
      %1720 = vmatmul.bf16.gmra.mxu0 %v1458
      %v1721 = vpop.f32.mrf.mxu0
      %v1722 = vadd.f32 %v1673, %v1721
      %v1723 = vpop.f32.mrf.mxu0
      %v1724 = vadd.f32 %v1675, %v1723
      %1725 = vdwg.mxu0
      %1726 = vmatpush.bf16.msra.mxu0 %v1603
      %1727 = vmatpush.bf16.msra.mxu0 %v1602
      %1728 = vmatpush.bf16.msra.mxu0 %v1601
      %1729 = vmatpush.bf16.msra.mxu0 %v1600
      %1730 = vmatpush.bf16.msra.mxu0 %v1599
      %1731 = vmatpush.bf16.msra.mxu0 %v1598
      %1732 = vmatpush.bf16.msra.mxu0 %v1597
      %1733 = vmatpush.bf16.msra.mxu0 %v1596
      %1734 = vmatmul.bf16.gmra.mxu0 %v1438
      %v1735 = vpop.f32.mrf.mxu0
      %v1736 = vadd.f32 %v1687, %v1735
      %v1737 = vpop.f32.mrf.mxu0
      %v1738 = vadd.f32 %v1689, %v1737
      %1739 = vmatmul.bf16.gmra.mxu0 %v1441
      %v1740 = vpop.f32.mrf.mxu0
      %v1741 = vadd.f32 %v1692, %v1740
      %v1742 = vpop.f32.mrf.mxu0
      %v1743 = vadd.f32 %v1694, %v1742
      %1744 = vmatmul.bf16.gmra.mxu0 %v1444
      %v1745 = vpop.f32.mrf.mxu0
      %v1746 = vadd.f32 %v1697, %v1745
      %v1747 = vpop.f32.mrf.mxu0
      %v1748 = vadd.f32 %v1699, %v1747
      %1749 = vmatmul.bf16.gmra.mxu0 %v1447
      %v1750 = vpop.f32.mrf.mxu0
      %v1751 = vadd.f32 %v1702, %v1750
      %v1752 = vpop.f32.mrf.mxu0
      %v1753 = vadd.f32 %v1704, %v1752
      %1754 = vmatmul.bf16.gmra.mxu0 %v1450
      %v1755 = vpop.f32.mrf.mxu0
      %v1756 = vadd.f32 %v1707, %v1755
      %v1757 = vpop.f32.mrf.mxu0
      %v1758 = vadd.f32 %v1709, %v1757
      %1759 = vmatmul.bf16.gmra.mxu0 %v1453
      %v1760 = vpop.f32.mrf.mxu0
      %v1761 = vadd.f32 %v1712, %v1760
      %v1762 = vpop.f32.mrf.mxu0
      %v1763 = vadd.f32 %v1714, %v1762
      %1764 = vmatmul.bf16.gmra.mxu0 %v1456
      %v1765 = vpop.f32.mrf.mxu0
      %v1766 = vadd.f32 %v1717, %v1765
      %v1767 = vpop.f32.mrf.mxu0
      %v1768 = vadd.f32 %v1719, %v1767
      %1769 = vmatmul.bf16.gmra.mxu0 %v1459
      %v1770 = vpop.f32.mrf.mxu0
      %v1771 = vadd.f32 %v1722, %v1770
      %v1772 = vpop.f32.mrf.mxu0
      %v1773 = vadd.f32 %v1724, %v1772
      %1774 = vdwg.mxu0
      %v1775 = vld [vmem:[#allocation2] sm:$0xff]
      %v1776 = vld [vmem:[#allocation2 + $0x8] sm:$0xff]
      %v1777 = vld [vmem:[#allocation2 + $0x10] sm:$0xff]
      %v1778 = vld [vmem:[#allocation2 + $0x18] sm:$0xff]
      %v1779 = vld [vmem:[#allocation2 + $0x20] sm:$0xff]
      %v1780 = vld [vmem:[#allocation2 + $0x28] sm:$0xff]
      %v1781 = vld [vmem:[#allocation2 + $0x30] sm:$0xff]
      %v1782 = vld [vmem:[#allocation2 + $0x38] sm:$0xff]
      %v1783 = vld [vmem:[#allocation2 + $0x40] sm:$0xff]
      %v1784 = vld [vmem:[#allocation2 + $0x48] sm:$0xff]
      %v1785 = vld [vmem:[#allocation2 + $0x50] sm:$0xff]
      %v1786 = vld [vmem:[#allocation2 + $0x58] sm:$0xff]
      %v1787 = vld [vmem:[#allocation2 + $0x60] sm:$0xff]
      %v1788 = vld [vmem:[#allocation2 + $0x68] sm:$0xff]
      %v1789 = vld [vmem:[#allocation2 + $0x70] sm:$0xff]
      %v1790 = vld [vmem:[#allocation2 + $0x78] sm:$0xff]
      %v1791 = vadd.f32 %v1775, %v1736
      %v1792 = vadd.f32 %v1776, %v1738
      %v1793 = vadd.f32 %v1777, %v1741
      %v1794 = vadd.f32 %v1778, %v1743
      %v1795 = vadd.f32 %v1779, %v1746
      %v1796 = vadd.f32 %v1780, %v1748
      %v1797 = vadd.f32 %v1781, %v1751
      %v1798 = vadd.f32 %v1782, %v1753
      %v1799 = vadd.f32 %v1783, %v1756
      %v1800 = vadd.f32 %v1784, %v1758
      %v1801 = vadd.f32 %v1785, %v1761
      %v1802 = vadd.f32 %v1786, %v1763
      %v1803 = vadd.f32 %v1787, %v1766
      %v1804 = vadd.f32 %v1788, %v1768
      %v1805 = vadd.f32 %v1789, %v1771
      %v1806 = vadd.f32 %v1790, %v1773
      %1807 = vst [vmem:[#allocation2] sm:$0xff] %v1791
      %1808 = vst [vmem:[#allocation2 + $0x8] sm:$0xff] %v1792
      %1809 = vst [vmem:[#allocation2 + $0x10] sm:$0xff] %v1793
      %1810 = vst [vmem:[#allocation2 + $0x18] sm:$0xff] %v1794
      %1811 = vst [vmem:[#allocation2 + $0x20] sm:$0xff] %v1795
      %1812 = vst [vmem:[#allocation2 + $0x28] sm:$0xff] %v1796
      %1813 = vst [vmem:[#allocation2 + $0x30] sm:$0xff] %v1797
      %1814 = vst [vmem:[#allocation2 + $0x38] sm:$0xff] %v1798
      %1815 = vst [vmem:[#allocation2 + $0x40] sm:$0xff] %v1799
      %1816 = vst [vmem:[#allocation2 + $0x48] sm:$0xff] %v1800
      %1817 = vst [vmem:[#allocation2 + $0x50] sm:$0xff] %v1801
      %1818 = vst [vmem:[#allocation2 + $0x58] sm:$0xff] %v1802
      %1819 = vst [vmem:[#allocation2 + $0x60] sm:$0xff] %v1803
      %1820 = vst [vmem:[#allocation2 + $0x68] sm:$0xff] %v1804
      %1821 = vst [vmem:[#allocation2 + $0x70] sm:$0xff] %v1805
      %1822 = vst [vmem:[#allocation2 + $0x78] sm:$0xff] %v1806
      %v1823 = vld [vmem:[#allocation2] sm:$0xff]
      %v1824 = vld [vmem:[#allocation2 + $0x8] sm:$0xff]
      %v1825 = vld [vmem:[#allocation2 + $0x10] sm:$0xff]
      %v1826 = vld [vmem:[#allocation2 + $0x18] sm:$0xff]
      %v1827 = vld [vmem:[#allocation2 + $0x20] sm:$0xff]
      %v1828 = vld [vmem:[#allocation2 + $0x28] sm:$0xff]
      %v1829 = vld [vmem:[#allocation2 + $0x30] sm:$0xff]
      %v1830 = vld [vmem:[#allocation2 + $0x38] sm:$0xff]
      %v1831 = vld [vmem:[#allocation2 + $0x40] sm:$0xff]
      %v1832 = vld [vmem:[#allocation2 + $0x48] sm:$0xff]
      %v1833 = vld [vmem:[#allocation2 + $0x50] sm:$0xff]
      %v1834 = vld [vmem:[#allocation2 + $0x58] sm:$0xff]
      %v1835 = vld [vmem:[#allocation2 + $0x60] sm:$0xff]
      %v1836 = vld [vmem:[#allocation2 + $0x68] sm:$0xff]
      %v1837 = vld [vmem:[#allocation2 + $0x70] sm:$0xff]
      %v1838 = vld [vmem:[#allocation2 + $0x78] sm:$0xff]
      %v1839 = vld [vmem:[%s2] sm:$0x1]
      %v1841 = vperm.slane %v1839, 0
      %v1843 = vadd.f32 %v1823, %v1841
      %v1844 = vadd.f32 %v1824, %v1841
      %v1845 = vadd.f32 %v1825, %v1841
      %v1846 = vadd.f32 %v1826, %v1841
      %v1847 = vadd.f32 %v1827, %v1841
      %v1848 = vadd.f32 %v1828, %v1841
      %v1849 = vadd.f32 %v1829, %v1841
      %v1850 = vadd.f32 %v1830, %v1841
      %v1851 = vadd.f32 %v1831, %v1841
      %v1852 = vadd.f32 %v1832, %v1841
      %v1853 = vadd.f32 %v1833, %v1841
      %v1854 = vadd.f32 %v1834, %v1841
      %v1855 = vadd.f32 %v1835, %v1841
      %v1856 = vadd.f32 %v1836, %v1841
      %v1857 = vadd.f32 %v1837, %v1841
      %v1858 = vadd.f32 %v1838, %v1841
      %v1859 = vmax.f32 %v1843, 0.0
      %v1860 = vmax.f32 %v1844, 0.0
      %v1861 = vmax.f32 %v1845, 0.0
      %v1862 = vmax.f32 %v1846, 0.0
      %v1863 = vmax.f32 %v1847, 0.0
      %v1864 = vmax.f32 %v1848, 0.0
      %v1865 = vmax.f32 %v1849, 0.0
      %v1866 = vmax.f32 %v1850, 0.0
      %v1867 = vmax.f32 %v1851, 0.0
      %v1868 = vmax.f32 %v1852, 0.0
      %v1869 = vmax.f32 %v1853, 0.0
      %v1870 = vmax.f32 %v1854, 0.0
      %v1871 = vmax.f32 %v1855, 0.0
      %v1872 = vmax.f32 %v1856, 0.0
      %v1873 = vmax.f32 %v1857, 0.0
      %v1874 = vmax.f32 %v1858, 0.0
      %v1875 = vpack.c.bf16 %v1859, %v1859
      %v1876 = vpack.c.bf16 %v1860, %v1860
      %v1877 = vpack.c.bf16 %v1861, %v1861
      %v1878 = vpack.c.bf16 %v1862, %v1862
      %v1879 = vpack.c.bf16 %v1863, %v1863
      %v1880 = vpack.c.bf16 %v1864, %v1864
      %v1881 = vpack.c.bf16 %v1865, %v1865
      %v1882 = vpack.c.bf16 %v1866, %v1866
      %v1883 = vpack.c.bf16 %v1867, %v1867
      %v1884 = vpack.c.bf16 %v1868, %v1868
      %v1885 = vpack.c.bf16 %v1869, %v1869
      %v1886 = vpack.c.bf16 %v1870, %v1870
      %v1887 = vpack.c.bf16 %v1871, %v1871
      %v1888 = vpack.c.bf16 %v1872, %v1872
      %v1889 = vpack.c.bf16 %v1873, %v1873
      %v1890 = vpack.c.bf16 %v1874, %v1874
      %1891 = vst [vmem:[%s192] sm:$0xf] %v1875
      %1892 = vst [vmem:[%s192 + $0x4] sm:$0xf] %v1876
      %1893 = vst [vmem:[%s192 + $0x8] sm:$0xf] %v1877
      %1894 = vst [vmem:[%s192 + $0xc] sm:$0xf] %v1878
      %1895 = vst [vmem:[%s192 + $0x10] sm:$0xf] %v1879
      %1896 = vst [vmem:[%s192 + $0x14] sm:$0xf] %v1880
      %1897 = vst [vmem:[%s192 + $0x18] sm:$0xf] %v1881
      %1898 = vst [vmem:[%s192 + $0x1c] sm:$0xf] %v1882
      %1899 = vst [vmem:[%s192 + $0x20] sm:$0xf] %v1883
      %1900 = vst [vmem:[%s192 + $0x24] sm:$0xf] %v1884
      %1901 = vst [vmem:[%s192 + $0x28] sm:$0xf] %v1885
      %1902 = vst [vmem:[%s192 + $0x2c] sm:$0xf] %v1886
      %1903 = vst [vmem:[%s192 + $0x30] sm:$0xf] %v1887
      %1904 = vst [vmem:[%s192 + $0x34] sm:$0xf] %v1888
      %1905 = vst [vmem:[%s192 + $0x38] sm:$0xf] %v1889
      %1906 = vst [vmem:[%s192 + $0x3c] sm:$0xf] %v1890
      %s1907 = smul.u32 16, %s19
      %p1908 = scmp.lt.s32.totalorder %s18, 1
      %s1909 = scalar_select %p1908, %s18, 1
      %p1910 = scmp.lt.s32.totalorder %s1907, 15
      %s1911 = scalar_select %p1910, %s1907, 15
      %s1912 = smul.addr %s1909, 16
      %s1913 = sadd.s32 %s1911, %s1912
      %s1914 = smul.addr %s1913, 4
      %s1915 = scalar_lea.vmem %s3, %s1914
      // Predicated region
      $region33: #{convolution3d_forward.5} parent=31 // pred_check
        %p1916 = pneg %p114
      $region34: #{convolution3d_forward.5} parent=31 // pred_check_branch
        %1918 = sbr.rel (%p1916) target = $region36
      $region35: #{convolution3d_forward.5} parent=31 // pred_region
        %s1919 = smul.u32 16, %s19
      $region36: #{convolution3d_forward.5} parent=31 // pred_fallthru
        _
    $region32: #{convolution3d_forward.5} parent=5 // pred_fallthru
      _
    %p1920 = scmp.le.s32.totalorder 2, %s9
    // Predicated region
    $region37: #{convolution3d_forward.5} parent=5 // pred_check
      %p1921 = pneg %p1920
    $region38: #{convolution3d_forward.5} parent=5 // pred_check_branch
      %1923 = sbr.rel (%p1921) target = $region40
    $region39: #{convolution3d_forward.5} parent=5 // pred_region
      %s1924 = ssub.s32 %s9, 2
      // Predicated region
      $region41: #{convolution3d_forward.5} parent=39 // pred_check
        %p1925 = pneg %p120
      $region42: #{convolution3d_forward.5} parent=39 // pred_check_branch
        %1927 = sbr.rel (%p1925) target = $region44
      $region43: #{convolution3d_forward.5} parent=39 // pred_region
        %s1928 = smul.u32 16, %s21
        %p1929 = scmp.lt.s32.totalorder %s20, 1
        %s1930 = scalar_select %p1929, %s20, 1
        %p1931 = scmp.lt.s32.totalorder %s1928, 15
        %s1932 = scalar_select %p1931, %s1928, 15
        %s1933 = smul.addr %s1930, 16
        %s1934 = sadd.s32 %s1932, %s1933
        %s1935 = smul.addr %s1934, 4
        %s1936 = scalar_lea.vmem %s3, %s1935
      $region44: #{convolution3d_forward.5} parent=39 // pred_fallthru
        _
    $region40: #{convolution3d_forward.5} parent=5 // pred_fallthru
      _
  $region6: #{convolution3d_forward.5} parent=0 // loop_footer
    %s13 = sadd.s32 1, %s9
  $region7: #{convolution3d_forward.5} parent=0 // loop_footer_branch
    %8 = sbr.rel target = $region3
  $region8: #{convolution3d_forward.5} parent=0 // loop_exit
    _

// kernel: convolution3d_forward.6
$region0: #{convolution3d_forward.6}
  #allocation0 [shape = 'u32[]', space=smem, size = 0x4, offset = 0x4, fixed_abs, tag = 'smem constant byte address 0x4 - core index']
  #allocation1 [shape = 'u32[72,128]{1,0:T(1,128)}', space=vmem, size = 0x9000, scoped, tag = 'internal scratch']
  #allocation2 [shape = 'f32[32,128]{1,0:T(8,128)}', space=vmem, size = 0x4000, scoped, tag = 'scratch operand']
  %s0 = inlined_call_operand.vmem [shape: bf16[2,64,640], index: 0, kind: input, shape index: {}]
  %s1 = inlined_call_operand.vmem [shape: bf16[3,640,128], index: 1, kind: input, shape index: {}]
  %s2 = inlined_call_operand.vmem [shape: f32[1,128], index: 2, kind: input, shape index: {}]
  %s3 = inlined_call_operand.vmem [shape: bf16[2,32,128], index: 3, kind: output, shape index: {}]
  %s4 = sld [smem:[#allocation0]]
  $region45: #{convolution3d_forward.6} parent=0
    _
  %s6 = ssub.s32 1, %s4
  %s7 = scalar_select 0, %s6, %s4
  loop: start=0, step=1, limit=4
  $region2: #{convolution3d_forward.6} parent=0 // loop_pre_header
    _
  $region3: #{convolution3d_forward.6} parent=0 // loop_header
    %s9 = sphi 0, %s13
    %p10 = scmp.ge.s32.totalorder %s9, 4
    %s16 = sphi 0, %s28
    %s17 = sphi 0, %s24
    %s18 = sphi 0, %s16
    %s19 = sphi 0, %s17
    %s20 = sphi 0, %s18
    %s21 = sphi 0, %s19
    %s31 = sphi 0, %s33
    %s34 = sphi 0, %s31
    %s35 = sphi 0, %s34
    %s51 = sphi 0, %s35
    %s55 = sphi 0, %s55
    %s57 = sphi 0, %s55
    %s58 = sphi 0, %s57
    %s72 = sphi 0, %s58
    %s76 = sphi 0, %s76
    %s78 = sphi 0, %s76
    %s79 = sphi 0, %s78
    %s93 = sphi 0, %s79
    %s101 = sphi 0, %s103
    %s104 = sphi 0, %s101
    %s105 = sphi 0, %s104
    %s121 = sphi 0, %s105
  $region4: #{convolution3d_forward.6} parent=0 // loop_header_branch
    %12 = sbr.rel (%p10) target = $region8
  $region5: #{convolution3d_forward.6} parent=0 // loop_body
    %s14 = ssub.s32 %s9, 1
    %s15 = ssub.s32 %s9, 2
    %s22 = sadd.s32 1, %s17
    %p23 = scmp.ge.s32.totalorder %s22, 1
    %s24 = scalar_select %p23, 0, %s22
    %s25 = sadd.s32 1, %s16
    %s26 = scalar_select %p23, %s25, %s16
    %p27 = scmp.ge.s32.totalorder %s26, 2
    %s28 = scalar_select %p27, 0, %s26
    %s29 = ssub.s32 %s16, %s28
    %p30 = scmp.eq.s32.totalorder %s29, 0
    %s32 = sadd.s32 %s31, 1
    %s33 = scalar_select %p30, %s31, %s32
    %p36 = pneg %p30
    %p37 = scmp.eq.s32.totalorder %s9, 1
    %p38 = por %p36, %p37
    %p39 = scmp.ne.s32.totalorder %s31, %s34
    %p40 = scmp.eq.s32.totalorder %s9, 0
    %p41 = por %p39, %p40
    %p42 = scmp.ne.s32.totalorder %s31, %s34
    %p43 = scmp.eq.s32.totalorder %s14, 1
    %p44 = por %p42, %p43
    %p45 = scmp.ne.s32.totalorder %s34, %s35
    %p46 = scmp.eq.s32.totalorder %s14, 0
    %p47 = por %p45, %p46
    %p48 = scmp.ne.s32.totalorder %s34, %s35
    %p49 = scmp.eq.s32.totalorder %s15, 1
    %p50 = por %p48, %p49
    %p52 = scmp.ne.s32.totalorder %s35, %s51
    %p53 = scmp.eq.s32.totalorder %s15, 0
    %p54 = por %p52, %p53
    %s56 = sadd.s32 %s55, 1
    %p59 = scmp.eq.s32.totalorder %s9, 1
    %p60 = scmp.ne.s32.totalorder %s55, %s57
    %p61 = scmp.eq.s32.totalorder %s9, 0
    %p62 = por %p60, %p61
    %p63 = scmp.ne.s32.totalorder %s55, %s57
    %p64 = scmp.eq.s32.totalorder %s14, 1
    %p65 = por %p63, %p64
    %p66 = scmp.ne.s32.totalorder %s57, %s58
    %p67 = scmp.eq.s32.totalorder %s14, 0
    %p68 = por %p66, %p67
    %p69 = scmp.ne.s32.totalorder %s57, %s58
    %p70 = scmp.eq.s32.totalorder %s15, 1
    %p71 = por %p69, %p70
    %p73 = scmp.ne.s32.totalorder %s58, %s72
    %p74 = scmp.eq.s32.totalorder %s15, 0
    %p75 = por %p73, %p74
    %s77 = sadd.s32 %s76, 1
    %p80 = scmp.eq.s32.totalorder %s9, 1
    %p81 = scmp.ne.s32.totalorder %s76, %s78
    %p82 = scmp.eq.s32.totalorder %s9, 0
    %p83 = por %p81, %p82
    %p84 = scmp.ne.s32.totalorder %s76, %s78
    %p85 = scmp.eq.s32.totalorder %s14, 1
    %p86 = por %p84, %p85
    %p87 = scmp.ne.s32.totalorder %s78, %s79
    %p88 = scmp.eq.s32.totalorder %s14, 0
    %p89 = por %p87, %p88
    %p90 = scmp.ne.s32.totalorder %s78, %s79
    %p91 = scmp.eq.s32.totalorder %s15, 1
    %p92 = por %p90, %p91
    %p94 = scmp.ne.s32.totalorder %s79, %s93
    %p95 = scmp.eq.s32.totalorder %s15, 0
    %p96 = por %p94, %p95
    %s97 = ssub.s32 %s16, %s28
    %s98 = ssub.s32 %s17, %s24
    %s99 = sor.u32 %s97, %s98
    %p100 = scmp.eq.s32.totalorder %s99, 0
    %s102 = sadd.s32 %s101, 1
    %s103 = scalar_select %p100, %s101, %s102
    %p106 = pneg %p100
    %p107 = scmp.eq.s32.totalorder %s9, 1
    %p108 = por %p106, %p107
    %p109 = scmp.ne.s32.totalorder %s101, %s104
    %p110 = scmp.eq.s32.totalorder %s9, 0
    %p111 = por %p109, %p110
    %p112 = scmp.ne.s32.totalorder %s101, %s104
    %p113 = scmp.eq.s32.totalorder %s14, 1
    %p114 = por %p112, %p113
    %p115 = scmp.ne.s32.totalorder %s104, %s105
    %p116 = scmp.eq.s32.totalorder %s14, 0
    %p117 = por %p115, %p116
    %p118 = scmp.ne.s32.totalorder %s104, %s105
    %p119 = scmp.eq.s32.totalorder %s15, 1
    %p120 = por %p118, %p119
    %p122 = scmp.ne.s32.totalorder %s105, %s121
    %p123 = scmp.eq.s32.totalorder %s15, 0
    %p124 = por %p122, %p123
    %p125 = scmp.le.s32.totalorder 1, %s9
    %p126 = scmp.lt.s32.totalorder %s9, 3
    %p127 = pnand %p125, %p126
    %p128 = pneg %p127
    // Predicated region
    $region9: #{convolution3d_forward.6} parent=5 // pred_check
      _
    $region10: #{convolution3d_forward.6} parent=5 // pred_check_branch
      %130 = sbr.rel (%p127) target = $region12
    $region11: #{convolution3d_forward.6} parent=5 // pred_region
      %s131 = ssub.s32 %s9, 1
      // Predicated region
      $region13: #{convolution3d_forward.6} parent=11 // pred_check
        %p132 = pneg %p68
      $region14: #{convolution3d_forward.6} parent=11 // pred_check_branch
        %134 = sbr.rel (%p132) target = $region16
      $region15: #{convolution3d_forward.6} parent=11 // pred_region
        _
      $region16: #{convolution3d_forward.6} parent=11 // pred_fallthru
        _
      // Predicated region
      $region17: #{convolution3d_forward.6} parent=11 // pred_check
        %p135 = pneg %p89
      $region18: #{convolution3d_forward.6} parent=11 // pred_check_branch
        %137 = sbr.rel (%p135) target = $region20
      $region19: #{convolution3d_forward.6} parent=11 // pred_region
        _
      $region20: #{convolution3d_forward.6} parent=11 // pred_fallthru
        _
    $region12: #{convolution3d_forward.6} parent=5 // pred_fallthru
      _
    %p138 = scmp.lt.s32.totalorder %s9, 2
    // Predicated region
    $region21: #{convolution3d_forward.6} parent=5 // pred_check
      %p139 = pneg %p138
    $region22: #{convolution3d_forward.6} parent=5 // pred_check_branch
      %141 = sbr.rel (%p139) target = $region24
    $region23: #{convolution3d_forward.6} parent=5 // pred_region
      // Predicated region
      $region25: #{convolution3d_forward.6} parent=23 // pred_check
        %p142 = pneg %p41
      $region26: #{convolution3d_forward.6} parent=23 // pred_check_branch
        %144 = sbr.rel (%p142) target = $region28
      $region27: #{convolution3d_forward.6} parent=23 // pred_region
        %p145 = scmp.lt.s32.totalorder %s16, 1
        %s146 = scalar_select %p145, %s16, 1
        %s147 = smul.addr %s146, 40
        %s148 = smul.addr %s147, 4
        %s149 = scalar_lea.vmem %s0, %s148
      $region28: #{convolution3d_forward.6} parent=23 // pred_fallthru
        _
    $region24: #{convolution3d_forward.6} parent=5 // pred_fallthru
      _
    %p150 = scmp.le.s32.totalorder 1, %s9
    %p151 = scmp.lt.s32.totalorder %s9, 3
    %p152 = pnand %p150, %p151
    %p153 = pneg %p152
    // Predicated region
    $region29: #{convolution3d_forward.6} parent=5 // pred_check
      _
    $region30: #{convolution3d_forward.6} parent=5 // pred_check_branch
      %155 = sbr.rel (%p152) target = $region32
    $region31: #{convolution3d_forward.6} parent=5 // pred_region
      %s156 = ssub.s32 %s9, 1
      %p157 = scmp.lt.s32.totalorder %s18, 1
      %s158 = scalar_select %p157, %s18, 1
      %s159 = smul.addr %s158, 40
      %s160 = smul.addr %s159, 4
      %s161 = scalar_lea.vmem %s0, %s160
      %p162 = pneg %p47
      %p163 = pneg %p44
      %p164 = pneg %p68
      %p165 = pneg %p65
      %p166 = pneg %p89
      %p167 = pneg %p86
      %p168 = pneg %p117
      %p169 = pneg %p114
      %s170 = smul.u32 4, %s19
      %p171 = scmp.lt.s32.totalorder %s18, 1
      %s172 = scalar_select %p171, %s18, 1
      %p173 = scmp.lt.s32.totalorder %s170, 3
      %s174 = scalar_select %p173, %s170, 3
      %s175 = smul.addr %s172, 4
      %s176 = sadd.s32 %s174, %s175
      %s177 = smul.addr %s176, 4
      %s178 = scalar_lea.vmem %s3, %s177
      %p179 = scmp.lt.s32.totalorder %s18, 1
      %s180 = scalar_select %p179, %s18, 1
      %s181 = smul.addr %s180, 40
      %s182 = smul.addr %s181, 4
      %s183 = scalar_lea.vmem %s0, %s182
      %s184 = smul.u32 4, %s19
      %p185 = scmp.lt.s32.totalorder %s18, 1
      %s186 = scalar_select %p185, %s18, 1
      %p187 = scmp.lt.s32.totalorder %s184, 3
      %s188 = scalar_select %p187, %s184, 3
      %s189 = smul.addr %s186, 4
      %s190 = sadd.s32 %s188, %s189
      %s191 = smul.addr %s190, 4
      %s192 = scalar_lea.vmem %s3, %s191
      %s193 = smul.u32 4, %s19
      %s194 = smul.u32 %s19, 32
      %s195 = sshra.s32 %s194, 3
      %s196 = sand.u32 %s194, 7
      %s197 = smul.u32 %s195, 5
      %s198 = smul.addr %s197, 4
      %s199 = scalar_lea.vmem %s183, %s198
      %v200 = vld [vmem:[%s199] sm:$0xff]
      %v201 = vld [vmem:[%s199 + $0x8] sm:$0xff]
      %v202 = vld [vmem:[%s199 + $0x10] sm:$0xf]
      %v203 = vld [vmem:[%s199 + $0x14] sm:$0xff]
      %v204 = vld [vmem:[%s199 + $0x1c] sm:$0xff]
      %v205 = vld [vmem:[%s199 + $0x24] sm:$0xf]
      %v206 = vld [vmem:[%s199 + $0x28] sm:$0xff]
      %v207 = vld [vmem:[%s199 + $0x30] sm:$0xff]
      %v208 = vld [vmem:[%s199 + $0x38] sm:$0xf]
      %v209 = vld [vmem:[%s199 + $0x3c] sm:$0xff]
      %v210 = vld [vmem:[%s199 + $0x44] sm:$0xff]
      %v211 = vld [vmem:[%s199 + $0x4c] sm:$0xf]
      %v212 = vld [vmem:[%s1] sm:$0xf]
      %v213 = vld [vmem:[%s1 + $0x4] sm:$0xf]
      %v214 = vld [vmem:[%s1 + $0x8] sm:$0xf]
      %v215 = vld [vmem:[%s1 + $0xc] sm:$0xf]
      %v216 = vld [vmem:[%s1 + $0x10] sm:$0xf]
      %v217 = vld [vmem:[%s1 + $0x14] sm:$0xf]
      %v218 = vld [vmem:[%s1 + $0x18] sm:$0xf]
      %v219 = vld [vmem:[%s1 + $0x1c] sm:$0xf]
      %v220 = vld [vmem:[%s1 + $0x20] sm:$0xf]
      %v221 = vld [vmem:[%s1 + $0x24] sm:$0xf]
      %v222 = vld [vmem:[%s1 + $0x28] sm:$0xf]
      %v223 = vld [vmem:[%s1 + $0x2c] sm:$0xf]
      %v224 = vld [vmem:[%s1 + $0x30] sm:$0xf]
      %v225 = vld [vmem:[%s1 + $0x34] sm:$0xf]
      %v226 = vld [vmem:[%s1 + $0x38] sm:$0xf]
      %v227 = vld [vmem:[%s1 + $0x3c] sm:$0xf]
      %v228 = vld [vmem:[%s1 + $0x40] sm:$0xf]
      %v229 = vld [vmem:[%s1 + $0x44] sm:$0xf]
      %v230 = vld [vmem:[%s1 + $0x48] sm:$0xf]
      %v231 = vld [vmem:[%s1 + $0x4c] sm:$0xf]
      %v232 = vld [vmem:[%s1 + $0x50] sm:$0xf]
      %v233 = vld [vmem:[%s1 + $0x54] sm:$0xf]
      %v234 = vld [vmem:[%s1 + $0x58] sm:$0xf]
      %v235 = vld [vmem:[%s1 + $0x5c] sm:$0xf]
      %v236 = vld [vmem:[%s1 + $0x60] sm:$0xf]
      %v237 = vld [vmem:[%s1 + $0x64] sm:$0xf]
      %v238 = vld [vmem:[%s1 + $0x68] sm:$0xf]
      %v239 = vld [vmem:[%s1 + $0x6c] sm:$0xf]
      %v240 = vld [vmem:[%s1 + $0x70] sm:$0xf]
      %v241 = vld [vmem:[%s1 + $0x74] sm:$0xf]
      %v242 = vld [vmem:[%s1 + $0x78] sm:$0xf]
      %v243 = vld [vmem:[%s1 + $0x7c] sm:$0xf]
      %v244 = vld [vmem:[%s1 + $0x80] sm:$0xf]
      %v245 = vld [vmem:[%s1 + $0x84] sm:$0xf]
      %v246 = vld [vmem:[%s1 + $0x88] sm:$0xf]
      %v247 = vld [vmem:[%s1 + $0x8c] sm:$0xf]
      %v248 = vld [vmem:[%s1 + $0x90] sm:$0xf]
      %v249 = vld [vmem:[%s1 + $0x94] sm:$0xf]
      %v250 = vld [vmem:[%s1 + $0x98] sm:$0xf]
      %v251 = vld [vmem:[%s1 + $0x9c] sm:$0xf]
      %v252 = vld [vmem:[%s1 + $0xa0] sm:$0xf]
      %v253 = vld [vmem:[%s1 + $0xa4] sm:$0xf]
      %v254 = vld [vmem:[%s1 + $0xa8] sm:$0xf]
      %v255 = vld [vmem:[%s1 + $0xac] sm:$0xf]
      %v256 = vld [vmem:[%s1 + $0xb0] sm:$0xf]
      %v257 = vld [vmem:[%s1 + $0xb4] sm:$0xf]
      %v258 = vld [vmem:[%s1 + $0xb8] sm:$0xf]
      %v259 = vld [vmem:[%s1 + $0xbc] sm:$0xf]
      %v260 = vld [vmem:[%s1 + $0xc0] sm:$0xf]
      %v261 = vld [vmem:[%s1 + $0xc4] sm:$0xf]
      %v262 = vld [vmem:[%s1 + $0xc8] sm:$0xf]
      %v263 = vld [vmem:[%s1 + $0xcc] sm:$0xf]
      %v264 = vld [vmem:[%s1 + $0xd0] sm:$0xf]
      %v265 = vld [vmem:[%s1 + $0xd4] sm:$0xf]
      %v266 = vld [vmem:[%s1 + $0xd8] sm:$0xf]
      %v267 = vld [vmem:[%s1 + $0xdc] sm:$0xf]
      %v268 = vld [vmem:[%s1 + $0xe0] sm:$0xf]
      %v269 = vld [vmem:[%s1 + $0xe4] sm:$0xf]
      %v270 = vld [vmem:[%s1 + $0xe8] sm:$0xf]
      %v271 = vld [vmem:[%s1 + $0xec] sm:$0xf]
      %v272 = vld [vmem:[%s1 + $0xf0] sm:$0xf]
      %v273 = vld [vmem:[%s1 + $0xf4] sm:$0xf]
      %v274 = vld [vmem:[%s1 + $0xf8] sm:$0xf]
      %v275 = vld [vmem:[%s1 + $0xfc] sm:$0xf]
      %v276 = vld [vmem:[%s1 + $0x100] sm:$0xf]
      %v277 = vld [vmem:[%s1 + $0x104] sm:$0xf]
      %v278 = vld [vmem:[%s1 + $0x108] sm:$0xf]
      %v279 = vld [vmem:[%s1 + $0x10c] sm:$0xf]
      %v280 = vld [vmem:[%s1 + $0x110] sm:$0xf]
      %v281 = vld [vmem:[%s1 + $0x114] sm:$0xf]
      %v282 = vld [vmem:[%s1 + $0x118] sm:$0xf]
      %v283 = vld [vmem:[%s1 + $0x11c] sm:$0xf]
      %v284 = vld [vmem:[%s1 + $0x120] sm:$0xf]
      %v285 = vld [vmem:[%s1 + $0x124] sm:$0xf]
      %v286 = vld [vmem:[%s1 + $0x128] sm:$0xf]
      %v287 = vld [vmem:[%s1 + $0x12c] sm:$0xf]
      %v288 = vld [vmem:[%s1 + $0x130] sm:$0xf]
      %v289 = vld [vmem:[%s1 + $0x134] sm:$0xf]
      %v290 = vld [vmem:[%s1 + $0x138] sm:$0xf]
      %v291 = vld [vmem:[%s1 + $0x13c] sm:$0xf]
      %v304 = vunpack.c.l.b16 %v200
      %v305 = vunpack.c.h.b16 %v200
      %v306 = vunpack.c.l.b16 %v201
      %v307 = vunpack.c.h.b16 %v201
      %v308 = vunpack.c.l.b16 %v202
      %v309 = vunpack.c.l.b16 %v203
      %v310 = vunpack.c.h.b16 %v203
      %v311 = vunpack.c.l.b16 %v204
      %v312 = vunpack.c.h.b16 %v204
      %v313 = vunpack.c.l.b16 %v205
      %v314 = vunpack.c.l.b16 %v206
      %v315 = vunpack.c.h.b16 %v206
      %v316 = vunpack.c.l.b16 %v207
      %v317 = vunpack.c.h.b16 %v207
      %v318 = vunpack.c.l.b16 %v208
      %v319 = vunpack.c.l.b16 %v209
      %v320 = vunpack.c.h.b16 %v209
      %v321 = vunpack.c.l.b16 %v210
      %v322 = vunpack.c.h.b16 %v210
      %v323 = vunpack.c.l.b16 %v211
      %v324 = vpack.c.b16 %v309, %v304
      %v325 = vpack.c.b16 %v310, %v305
      %v326 = vpack.c.b16 %v311, %v306
      %v327 = vpack.c.b16 %v312, %v307
      %v328 = vpack.c.b16 %v313, %v308
      %v329 = vpack.c.b16 %v319, %v314
      %v330 = vpack.c.b16 %v320, %v315
      %v331 = vpack.c.b16 %v321, %v316
      %v332 = vpack.c.b16 %v322, %v317
      %v333 = vpack.c.b16 %v323, %v318
      %v424 = vunpack.c.l.b16 %v212
      %v425 = vunpack.c.l.b16 %v213
      %v426 = vunpack.c.l.b16 %v214
      %v427 = vunpack.c.l.b16 %v215
      %v428 = vunpack.c.l.b16 %v216
      %v429 = vunpack.c.l.b16 %v217
      %v430 = vunpack.c.l.b16 %v218
      %v431 = vunpack.c.l.b16 %v219
      %v432 = vunpack.c.l.b16 %v220
      %v433 = vunpack.c.l.b16 %v221
      %v434 = vunpack.c.l.b16 %v222
      %v435 = vunpack.c.l.b16 %v223
      %v436 = vunpack.c.l.b16 %v224
      %v437 = vunpack.c.l.b16 %v225
      %v438 = vunpack.c.l.b16 %v226
      %v439 = vunpack.c.l.b16 %v227
      %v440 = vunpack.c.l.b16 %v228
      %v441 = vunpack.c.l.b16 %v229
      %v442 = vunpack.c.l.b16 %v230
      %v443 = vunpack.c.l.b16 %v231
      %v444 = vunpack.c.l.b16 %v232
      %v445 = vunpack.c.l.b16 %v233
      %v446 = vunpack.c.l.b16 %v234
      %v447 = vunpack.c.l.b16 %v235
      %v448 = vunpack.c.l.b16 %v236
      %v449 = vunpack.c.l.b16 %v237
      %v450 = vunpack.c.l.b16 %v238
      %v451 = vunpack.c.l.b16 %v239
      %v452 = vunpack.c.l.b16 %v240
      %v453 = vunpack.c.l.b16 %v241
      %v454 = vunpack.c.l.b16 %v242
      %v455 = vunpack.c.l.b16 %v243
      %v456 = vunpack.c.l.b16 %v244
      %v457 = vunpack.c.l.b16 %v245
      %v458 = vunpack.c.l.b16 %v246
      %v459 = vunpack.c.l.b16 %v247
      %v460 = vunpack.c.l.b16 %v248
      %v461 = vunpack.c.l.b16 %v249
      %v462 = vunpack.c.l.b16 %v250
      %v463 = vunpack.c.l.b16 %v251
      %v464 = vunpack.c.l.b16 %v252
      %v465 = vunpack.c.l.b16 %v253
      %v466 = vunpack.c.l.b16 %v254
      %v467 = vunpack.c.l.b16 %v255
      %v468 = vunpack.c.l.b16 %v256
      %v469 = vunpack.c.l.b16 %v257
      %v470 = vunpack.c.l.b16 %v258
      %v471 = vunpack.c.l.b16 %v259
      %v472 = vunpack.c.l.b16 %v260
      %v473 = vunpack.c.l.b16 %v261
      %v474 = vunpack.c.l.b16 %v262
      %v475 = vunpack.c.l.b16 %v263
      %v476 = vunpack.c.l.b16 %v264
      %v477 = vunpack.c.l.b16 %v265
      %v478 = vunpack.c.l.b16 %v266
      %v479 = vunpack.c.l.b16 %v267
      %v480 = vunpack.c.l.b16 %v268
      %v481 = vunpack.c.l.b16 %v269
      %v482 = vunpack.c.l.b16 %v270
      %v483 = vunpack.c.l.b16 %v271
      %v484 = vunpack.c.l.b16 %v272
      %v485 = vunpack.c.l.b16 %v273
      %v486 = vunpack.c.l.b16 %v274
      %v487 = vunpack.c.l.b16 %v275
      %v488 = vunpack.c.l.b16 %v276
      %v489 = vunpack.c.l.b16 %v277
      %v490 = vunpack.c.l.b16 %v278
      %v491 = vunpack.c.l.b16 %v279
      %v492 = vunpack.c.l.b16 %v280
      %v493 = vunpack.c.l.b16 %v281
      %v494 = vunpack.c.l.b16 %v282
      %v495 = vunpack.c.l.b16 %v283
      %v496 = vunpack.c.l.b16 %v284
      %v497 = vunpack.c.l.b16 %v285
      %v498 = vunpack.c.l.b16 %v286
      %v499 = vunpack.c.l.b16 %v287
      %v500 = vunpack.c.l.b16 %v288
      %v501 = vunpack.c.l.b16 %v289
      %v502 = vunpack.c.l.b16 %v290
      %v503 = vunpack.c.l.b16 %v291
      %v504 = vpack.c.b16 %v425, %v424
      %v505 = vpack.c.b16 %v427, %v426
      %v506 = vpack.c.b16 %v429, %v428
      %v507 = vpack.c.b16 %v431, %v430
      %v508 = vpack.c.b16 %v433, %v432
      %v509 = vpack.c.b16 %v435, %v434
      %v510 = vpack.c.b16 %v437, %v436
      %v511 = vpack.c.b16 %v439, %v438
      %v512 = vpack.c.b16 %v441, %v440
      %v513 = vpack.c.b16 %v443, %v442
      %v514 = vpack.c.b16 %v445, %v444
      %v515 = vpack.c.b16 %v447, %v446
      %v516 = vpack.c.b16 %v449, %v448
      %v517 = vpack.c.b16 %v451, %v450
      %v518 = vpack.c.b16 %v453, %v452
      %v519 = vpack.c.b16 %v455, %v454
      %v520 = vpack.c.b16 %v457, %v456
      %v521 = vpack.c.b16 %v459, %v458
      %v522 = vpack.c.b16 %v461, %v460
      %v523 = vpack.c.b16 %v463, %v462
      %v524 = vpack.c.b16 %v465, %v464
      %v525 = vpack.c.b16 %v467, %v466
      %v526 = vpack.c.b16 %v469, %v468
      %v527 = vpack.c.b16 %v471, %v470
      %v528 = vpack.c.b16 %v473, %v472
      %v529 = vpack.c.b16 %v475, %v474
      %v530 = vpack.c.b16 %v477, %v476
      %v531 = vpack.c.b16 %v479, %v478
      %v532 = vpack.c.b16 %v481, %v480
      %v533 = vpack.c.b16 %v483, %v482
      %v534 = vpack.c.b16 %v485, %v484
      %v535 = vpack.c.b16 %v487, %v486
      %v536 = vpack.c.b16 %v489, %v488
      %v537 = vpack.c.b16 %v491, %v490
      %v538 = vpack.c.b16 %v493, %v492
      %v539 = vpack.c.b16 %v495, %v494
      %v540 = vpack.c.b16 %v497, %v496
      %v541 = vpack.c.b16 %v499, %v498
      %v542 = vpack.c.b16 %v501, %v500
      %v543 = vpack.c.b16 %v503, %v502
      %584 = vmatpush.bf16.msra.mxu0 %v511
      %585 = vmatpush.bf16.msra.mxu0 %v510
      %586 = vmatpush.bf16.msra.mxu0 %v509
      %587 = vmatpush.bf16.msra.mxu0 %v508
      %588 = vmatpush.bf16.msra.mxu0 %v507
      %589 = vmatpush.bf16.msra.mxu0 %v506
      %590 = vmatpush.bf16.msra.mxu0 %v505
      %591 = vmatpush.bf16.msra.mxu0 %v504
      %592 = vmatmul.bf16.gmra.mxu0 %v324
      %v593 = vpop.f32.mrf.mxu0
      %v594 = vadd.f32 0.0, %v593
      %v595 = vpop.f32.mrf.mxu0
      %v596 = vadd.f32 0.0, %v595
      %597 = vmatmul.bf16.gmra.mxu0 %v329
      %v598 = vpop.f32.mrf.mxu0
      %v599 = vadd.f32 0.0, %v598
      %v600 = vpop.f32.mrf.mxu0
      %v601 = vadd.f32 0.0, %v600
      %602 = vdwg.mxu0
      %603 = vmatpush.bf16.msra.mxu0 %v519
      %604 = vmatpush.bf16.msra.mxu0 %v518
      %605 = vmatpush.bf16.msra.mxu0 %v517
      %606 = vmatpush.bf16.msra.mxu0 %v516
      %607 = vmatpush.bf16.msra.mxu0 %v515
      %608 = vmatpush.bf16.msra.mxu0 %v514
      %609 = vmatpush.bf16.msra.mxu0 %v513
      %610 = vmatpush.bf16.msra.mxu0 %v512
      %611 = vmatmul.bf16.gmra.mxu0 %v325
      %v612 = vpop.f32.mrf.mxu0
      %v613 = vadd.f32 %v594, %v612
      %v614 = vpop.f32.mrf.mxu0
      %v615 = vadd.f32 %v596, %v614
      %616 = vmatmul.bf16.gmra.mxu0 %v330
      %v617 = vpop.f32.mrf.mxu0
      %v618 = vadd.f32 %v599, %v617
      %v619 = vpop.f32.mrf.mxu0
      %v620 = vadd.f32 %v601, %v619
      %621 = vdwg.mxu0
      %622 = vmatpush.bf16.msra.mxu0 %v527
      %623 = vmatpush.bf16.msra.mxu0 %v526
      %624 = vmatpush.bf16.msra.mxu0 %v525
      %625 = vmatpush.bf16.msra.mxu0 %v524
      %626 = vmatpush.bf16.msra.mxu0 %v523
      %627 = vmatpush.bf16.msra.mxu0 %v522
      %628 = vmatpush.bf16.msra.mxu0 %v521
      %629 = vmatpush.bf16.msra.mxu0 %v520
      %630 = vmatmul.bf16.gmra.mxu0 %v326
      %v631 = vpop.f32.mrf.mxu0
      %v632 = vadd.f32 %v613, %v631
      %v633 = vpop.f32.mrf.mxu0
      %v634 = vadd.f32 %v615, %v633
      %635 = vmatmul.bf16.gmra.mxu0 %v331
      %v636 = vpop.f32.mrf.mxu0
      %v637 = vadd.f32 %v618, %v636
      %v638 = vpop.f32.mrf.mxu0
      %v639 = vadd.f32 %v620, %v638
      %640 = vdwg.mxu0
      %641 = vmatpush.bf16.msra.mxu0 %v535
      %642 = vmatpush.bf16.msra.mxu0 %v534
      %643 = vmatpush.bf16.msra.mxu0 %v533
      %644 = vmatpush.bf16.msra.mxu0 %v532
      %645 = vmatpush.bf16.msra.mxu0 %v531
      %646 = vmatpush.bf16.msra.mxu0 %v530
      %647 = vmatpush.bf16.msra.mxu0 %v529
      %648 = vmatpush.bf16.msra.mxu0 %v528
      %649 = vmatmul.bf16.gmra.mxu0 %v327
      %v650 = vpop.f32.mrf.mxu0
      %v651 = vadd.f32 %v632, %v650
      %v652 = vpop.f32.mrf.mxu0
      %v653 = vadd.f32 %v634, %v652
      %654 = vmatmul.bf16.gmra.mxu0 %v332
      %v655 = vpop.f32.mrf.mxu0
      %v656 = vadd.f32 %v637, %v655
      %v657 = vpop.f32.mrf.mxu0
      %v658 = vadd.f32 %v639, %v657
      %659 = vdwg.mxu0
      %660 = vmatpush.bf16.msra.mxu0 %v543
      %661 = vmatpush.bf16.msra.mxu0 %v542
      %662 = vmatpush.bf16.msra.mxu0 %v541
      %663 = vmatpush.bf16.msra.mxu0 %v540
      %664 = vmatpush.bf16.msra.mxu0 %v539
      %665 = vmatpush.bf16.msra.mxu0 %v538
      %666 = vmatpush.bf16.msra.mxu0 %v537
      %667 = vmatpush.bf16.msra.mxu0 %v536
      %668 = vmatmul.bf16.gmra.mxu0 %v328
      %v669 = vpop.f32.mrf.mxu0
      %v670 = vadd.f32 %v651, %v669
      %v671 = vpop.f32.mrf.mxu0
      %v672 = vadd.f32 %v653, %v671
      %673 = vmatmul.bf16.gmra.mxu0 %v333
      %v674 = vpop.f32.mrf.mxu0
      %v675 = vadd.f32 %v656, %v674
      %v676 = vpop.f32.mrf.mxu0
      %v677 = vadd.f32 %v658, %v676
      %678 = vdwg.mxu0
      %679 = vst [vmem:[#allocation2] sm:$0xff] %v670
      %680 = vst [vmem:[#allocation2 + $0x8] sm:$0xff] %v672
      %681 = vst [vmem:[#allocation2 + $0x10] sm:$0xff] %v675
      %682 = vst [vmem:[#allocation2 + $0x18] sm:$0xff] %v677
      %s683 = sadd.s32 %s194, 16
      %s684 = sshra.s32 %s683, 3
      %s685 = sand.u32 %s683, 7
      %s686 = smul.u32 %s684, 5
      %s687 = smul.addr %s686, 4
      %s688 = scalar_lea.vmem %s183, %s687
      %v689 = vld [vmem:[%s688] sm:$0xff]
      %v690 = vld [vmem:[%s688 + $0x8] sm:$0xff]
      %v691 = vld [vmem:[%s688 + $0x10] sm:$0xf]
      %v692 = vld [vmem:[%s688 + $0x14] sm:$0xff]
      %v693 = vld [vmem:[%s688 + $0x1c] sm:$0xff]
      %v694 = vld [vmem:[%s688 + $0x24] sm:$0xf]
      %v695 = vld [vmem:[%s688 + $0x28] sm:$0xff]
      %v696 = vld [vmem:[%s688 + $0x30] sm:$0xff]
      %v697 = vld [vmem:[%s688 + $0x38] sm:$0xf]
      %v698 = vld [vmem:[%s688 + $0x3c] sm:$0xff]
      %v699 = vld [vmem:[%s688 + $0x44] sm:$0xff]
      %v700 = vld [vmem:[%s688 + $0x4c] sm:$0xf]
      %s701 = scalar_lea.vmem %s1, 320
      %v702 = vld [vmem:[%s701] sm:$0xf]
      %v703 = vld [vmem:[%s701 + $0x4] sm:$0xf]
      %v704 = vld [vmem:[%s701 + $0x8] sm:$0xf]
      %v705 = vld [vmem:[%s701 + $0xc] sm:$0xf]
      %v706 = vld [vmem:[%s701 + $0x10] sm:$0xf]
      %v707 = vld [vmem:[%s701 + $0x14] sm:$0xf]
      %v708 = vld [vmem:[%s701 + $0x18] sm:$0xf]
      %v709 = vld [vmem:[%s701 + $0x1c] sm:$0xf]
      %v710 = vld [vmem:[%s701 + $0x20] sm:$0xf]
      %v711 = vld [vmem:[%s701 + $0x24] sm:$0xf]
      %v712 = vld [vmem:[%s701 + $0x28] sm:$0xf]
      %v713 = vld [vmem:[%s701 + $0x2c] sm:$0xf]
      %v714 = vld [vmem:[%s701 + $0x30] sm:$0xf]
      %v715 = vld [vmem:[%s701 + $0x34] sm:$0xf]
      %v716 = vld [vmem:[%s701 + $0x38] sm:$0xf]
      %v717 = vld [vmem:[%s701 + $0x3c] sm:$0xf]
      %v718 = vld [vmem:[%s701 + $0x40] sm:$0xf]
      %v719 = vld [vmem:[%s701 + $0x44] sm:$0xf]
      %v720 = vld [vmem:[%s701 + $0x48] sm:$0xf]
      %v721 = vld [vmem:[%s701 + $0x4c] sm:$0xf]
      %v722 = vld [vmem:[%s701 + $0x50] sm:$0xf]
      %v723 = vld [vmem:[%s701 + $0x54] sm:$0xf]
      %v724 = vld [vmem:[%s701 + $0x58] sm:$0xf]
      %v725 = vld [vmem:[%s701 + $0x5c] sm:$0xf]
      %v726 = vld [vmem:[%s701 + $0x60] sm:$0xf]
      %v727 = vld [vmem:[%s701 + $0x64] sm:$0xf]
      %v728 = vld [vmem:[%s701 + $0x68] sm:$0xf]
      %v729 = vld [vmem:[%s701 + $0x6c] sm:$0xf]
      %v730 = vld [vmem:[%s701 + $0x70] sm:$0xf]
      %v731 = vld [vmem:[%s701 + $0x74] sm:$0xf]
      %v732 = vld [vmem:[%s701 + $0x78] sm:$0xf]
      %v733 = vld [vmem:[%s701 + $0x7c] sm:$0xf]
      %v734 = vld [vmem:[%s701 + $0x80] sm:$0xf]
      %v735 = vld [vmem:[%s701 + $0x84] sm:$0xf]
      %v736 = vld [vmem:[%s701 + $0x88] sm:$0xf]
      %v737 = vld [vmem:[%s701 + $0x8c] sm:$0xf]
      %v738 = vld [vmem:[%s701 + $0x90] sm:$0xf]
      %v739 = vld [vmem:[%s701 + $0x94] sm:$0xf]
      %v740 = vld [vmem:[%s701 + $0x98] sm:$0xf]
      %v741 = vld [vmem:[%s701 + $0x9c] sm:$0xf]
      %v742 = vld [vmem:[%s701 + $0xa0] sm:$0xf]
      %v743 = vld [vmem:[%s701 + $0xa4] sm:$0xf]
      %v744 = vld [vmem:[%s701 + $0xa8] sm:$0xf]
      %v745 = vld [vmem:[%s701 + $0xac] sm:$0xf]
      %v746 = vld [vmem:[%s701 + $0xb0] sm:$0xf]
      %v747 = vld [vmem:[%s701 + $0xb4] sm:$0xf]
      %v748 = vld [vmem:[%s701 + $0xb8] sm:$0xf]
      %v749 = vld [vmem:[%s701 + $0xbc] sm:$0xf]
      %v750 = vld [vmem:[%s701 + $0xc0] sm:$0xf]
      %v751 = vld [vmem:[%s701 + $0xc4] sm:$0xf]
      %v752 = vld [vmem:[%s701 + $0xc8] sm:$0xf]
      %v753 = vld [vmem:[%s701 + $0xcc] sm:$0xf]
      %v754 = vld [vmem:[%s701 + $0xd0] sm:$0xf]
      %v755 = vld [vmem:[%s701 + $0xd4] sm:$0xf]
      %v756 = vld [vmem:[%s701 + $0xd8] sm:$0xf]
      %v757 = vld [vmem:[%s701 + $0xdc] sm:$0xf]
      %v758 = vld [vmem:[%s701 + $0xe0] sm:$0xf]
      %v759 = vld [vmem:[%s701 + $0xe4] sm:$0xf]
      %v760 = vld [vmem:[%s701 + $0xe8] sm:$0xf]
      %v761 = vld [vmem:[%s701 + $0xec] sm:$0xf]
      %v762 = vld [vmem:[%s701 + $0xf0] sm:$0xf]
      %v763 = vld [vmem:[%s701 + $0xf4] sm:$0xf]
      %v764 = vld [vmem:[%s701 + $0xf8] sm:$0xf]
      %v765 = vld [vmem:[%s701 + $0xfc] sm:$0xf]
      %v766 = vld [vmem:[%s701 + $0x100] sm:$0xf]
      %v767 = vld [vmem:[%s701 + $0x104] sm:$0xf]
      %v768 = vld [vmem:[%s701 + $0x108] sm:$0xf]
      %v769 = vld [vmem:[%s701 + $0x10c] sm:$0xf]
      %v770 = vld [vmem:[%s701 + $0x110] sm:$0xf]
      %v771 = vld [vmem:[%s701 + $0x114] sm:$0xf]
      %v772 = vld [vmem:[%s701 + $0x118] sm:$0xf]
      %v773 = vld [vmem:[%s701 + $0x11c] sm:$0xf]
      %v774 = vld [vmem:[%s701 + $0x120] sm:$0xf]
      %v775 = vld [vmem:[%s701 + $0x124] sm:$0xf]
      %v776 = vld [vmem:[%s701 + $0x128] sm:$0xf]
      %v777 = vld [vmem:[%s701 + $0x12c] sm:$0xf]
      %v778 = vld [vmem:[%s701 + $0x130] sm:$0xf]
      %v779 = vld [vmem:[%s701 + $0x134] sm:$0xf]
      %v780 = vld [vmem:[%s701 + $0x138] sm:$0xf]
      %v781 = vld [vmem:[%s701 + $0x13c] sm:$0xf]
      %v794 = vunpack.c.l.b16 %v689
      %v795 = vunpack.c.h.b16 %v689
      %v796 = vunpack.c.l.b16 %v690
      %v797 = vunpack.c.h.b16 %v690
      %v798 = vunpack.c.l.b16 %v691
      %v799 = vunpack.c.l.b16 %v692
      %v800 = vunpack.c.h.b16 %v692
      %v801 = vunpack.c.l.b16 %v693
      %v802 = vunpack.c.h.b16 %v693
      %v803 = vunpack.c.l.b16 %v694
      %v804 = vunpack.c.l.b16 %v695
      %v805 = vunpack.c.h.b16 %v695
      %v806 = vunpack.c.l.b16 %v696
      %v807 = vunpack.c.h.b16 %v696
      %v808 = vunpack.c.l.b16 %v697
      %v809 = vunpack.c.l.b16 %v698
      %v810 = vunpack.c.h.b16 %v698
      %v811 = vunpack.c.l.b16 %v699
      %v812 = vunpack.c.h.b16 %v699
      %v813 = vunpack.c.l.b16 %v700
      %v814 = vpack.c.b16 %v799, %v794
      %v815 = vpack.c.b16 %v800, %v795
      %v816 = vpack.c.b16 %v801, %v796
      %v817 = vpack.c.b16 %v802, %v797
      %v818 = vpack.c.b16 %v803, %v798
      %v819 = vpack.c.b16 %v809, %v804
      %v820 = vpack.c.b16 %v810, %v805
      %v821 = vpack.c.b16 %v811, %v806
      %v822 = vpack.c.b16 %v812, %v807
      %v823 = vpack.c.b16 %v813, %v808
      %v914 = vunpack.c.l.b16 %v702
      %v915 = vunpack.c.l.b16 %v703
      %v916 = vunpack.c.l.b16 %v704
      %v917 = vunpack.c.l.b16 %v705
      %v918 = vunpack.c.l.b16 %v706
      %v919 = vunpack.c.l.b16 %v707
      %v920 = vunpack.c.l.b16 %v708
      %v921 = vunpack.c.l.b16 %v709
      %v922 = vunpack.c.l.b16 %v710
      %v923 = vunpack.c.l.b16 %v711
      %v924 = vunpack.c.l.b16 %v712
      %v925 = vunpack.c.l.b16 %v713
      %v926 = vunpack.c.l.b16 %v714
      %v927 = vunpack.c.l.b16 %v715
      %v928 = vunpack.c.l.b16 %v716
      %v929 = vunpack.c.l.b16 %v717
      %v930 = vunpack.c.l.b16 %v718
      %v931 = vunpack.c.l.b16 %v719
      %v932 = vunpack.c.l.b16 %v720
      %v933 = vunpack.c.l.b16 %v721
      %v934 = vunpack.c.l.b16 %v722
      %v935 = vunpack.c.l.b16 %v723
      %v936 = vunpack.c.l.b16 %v724
      %v937 = vunpack.c.l.b16 %v725
      %v938 = vunpack.c.l.b16 %v726
      %v939 = vunpack.c.l.b16 %v727
      %v940 = vunpack.c.l.b16 %v728
      %v941 = vunpack.c.l.b16 %v729
      %v942 = vunpack.c.l.b16 %v730
      %v943 = vunpack.c.l.b16 %v731
      %v944 = vunpack.c.l.b16 %v732
      %v945 = vunpack.c.l.b16 %v733
      %v946 = vunpack.c.l.b16 %v734
      %v947 = vunpack.c.l.b16 %v735
      %v948 = vunpack.c.l.b16 %v736
      %v949 = vunpack.c.l.b16 %v737
      %v950 = vunpack.c.l.b16 %v738
      %v951 = vunpack.c.l.b16 %v739
      %v952 = vunpack.c.l.b16 %v740
      %v953 = vunpack.c.l.b16 %v741
      %v954 = vunpack.c.l.b16 %v742
      %v955 = vunpack.c.l.b16 %v743
      %v956 = vunpack.c.l.b16 %v744
      %v957 = vunpack.c.l.b16 %v745
      %v958 = vunpack.c.l.b16 %v746
      %v959 = vunpack.c.l.b16 %v747
      %v960 = vunpack.c.l.b16 %v748
      %v961 = vunpack.c.l.b16 %v749
      %v962 = vunpack.c.l.b16 %v750
      %v963 = vunpack.c.l.b16 %v751
      %v964 = vunpack.c.l.b16 %v752
      %v965 = vunpack.c.l.b16 %v753
      %v966 = vunpack.c.l.b16 %v754
      %v967 = vunpack.c.l.b16 %v755
      %v968 = vunpack.c.l.b16 %v756
      %v969 = vunpack.c.l.b16 %v757
      %v970 = vunpack.c.l.b16 %v758
      %v971 = vunpack.c.l.b16 %v759
      %v972 = vunpack.c.l.b16 %v760
      %v973 = vunpack.c.l.b16 %v761
      %v974 = vunpack.c.l.b16 %v762
      %v975 = vunpack.c.l.b16 %v763
      %v976 = vunpack.c.l.b16 %v764
      %v977 = vunpack.c.l.b16 %v765
      %v978 = vunpack.c.l.b16 %v766
      %v979 = vunpack.c.l.b16 %v767
      %v980 = vunpack.c.l.b16 %v768
      %v981 = vunpack.c.l.b16 %v769
      %v982 = vunpack.c.l.b16 %v770
      %v983 = vunpack.c.l.b16 %v771
      %v984 = vunpack.c.l.b16 %v772
      %v985 = vunpack.c.l.b16 %v773
      %v986 = vunpack.c.l.b16 %v774
      %v987 = vunpack.c.l.b16 %v775
      %v988 = vunpack.c.l.b16 %v776
      %v989 = vunpack.c.l.b16 %v777
      %v990 = vunpack.c.l.b16 %v778
      %v991 = vunpack.c.l.b16 %v779
      %v992 = vunpack.c.l.b16 %v780
      %v993 = vunpack.c.l.b16 %v781
      %v994 = vpack.c.b16 %v915, %v914
      %v995 = vpack.c.b16 %v917, %v916
      %v996 = vpack.c.b16 %v919, %v918
      %v997 = vpack.c.b16 %v921, %v920
      %v998 = vpack.c.b16 %v923, %v922
      %v999 = vpack.c.b16 %v925, %v924
      %v1000 = vpack.c.b16 %v927, %v926
      %v1001 = vpack.c.b16 %v929, %v928
      %v1002 = vpack.c.b16 %v931, %v930
      %v1003 = vpack.c.b16 %v933, %v932
      %v1004 = vpack.c.b16 %v935, %v934
      %v1005 = vpack.c.b16 %v937, %v936
      %v1006 = vpack.c.b16 %v939, %v938
      %v1007 = vpack.c.b16 %v941, %v940
      %v1008 = vpack.c.b16 %v943, %v942
      %v1009 = vpack.c.b16 %v945, %v944
      %v1010 = vpack.c.b16 %v947, %v946
      %v1011 = vpack.c.b16 %v949, %v948
      %v1012 = vpack.c.b16 %v951, %v950
      %v1013 = vpack.c.b16 %v953, %v952
      %v1014 = vpack.c.b16 %v955, %v954
      %v1015 = vpack.c.b16 %v957, %v956
      %v1016 = vpack.c.b16 %v959, %v958
      %v1017 = vpack.c.b16 %v961, %v960
      %v1018 = vpack.c.b16 %v963, %v962
      %v1019 = vpack.c.b16 %v965, %v964
      %v1020 = vpack.c.b16 %v967, %v966
      %v1021 = vpack.c.b16 %v969, %v968
      %v1022 = vpack.c.b16 %v971, %v970
      %v1023 = vpack.c.b16 %v973, %v972
      %v1024 = vpack.c.b16 %v975, %v974
      %v1025 = vpack.c.b16 %v977, %v976
      %v1026 = vpack.c.b16 %v979, %v978
      %v1027 = vpack.c.b16 %v981, %v980
      %v1028 = vpack.c.b16 %v983, %v982
      %v1029 = vpack.c.b16 %v985, %v984
      %v1030 = vpack.c.b16 %v987, %v986
      %v1031 = vpack.c.b16 %v989, %v988
      %v1032 = vpack.c.b16 %v991, %v990
      %v1033 = vpack.c.b16 %v993, %v992
      %1074 = vmatpush.bf16.msra.mxu0 %v1001
      %1075 = vmatpush.bf16.msra.mxu0 %v1000
      %1076 = vmatpush.bf16.msra.mxu0 %v999
      %1077 = vmatpush.bf16.msra.mxu0 %v998
      %1078 = vmatpush.bf16.msra.mxu0 %v997
      %1079 = vmatpush.bf16.msra.mxu0 %v996
      %1080 = vmatpush.bf16.msra.mxu0 %v995
      %1081 = vmatpush.bf16.msra.mxu0 %v994
      %1082 = vmatmul.bf16.gmra.mxu0 %v814
      %v1083 = vpop.f32.mrf.mxu0
      %v1084 = vadd.f32 0.0, %v1083
      %v1085 = vpop.f32.mrf.mxu0
      %v1086 = vadd.f32 0.0, %v1085
      %1087 = vmatmul.bf16.gmra.mxu0 %v819
      %v1088 = vpop.f32.mrf.mxu0
      %v1089 = vadd.f32 0.0, %v1088
      %v1090 = vpop.f32.mrf.mxu0
      %v1091 = vadd.f32 0.0, %v1090
      %1092 = vdwg.mxu0
      %1093 = vmatpush.bf16.msra.mxu0 %v1009
      %1094 = vmatpush.bf16.msra.mxu0 %v1008
      %1095 = vmatpush.bf16.msra.mxu0 %v1007
      %1096 = vmatpush.bf16.msra.mxu0 %v1006
      %1097 = vmatpush.bf16.msra.mxu0 %v1005
      %1098 = vmatpush.bf16.msra.mxu0 %v1004
      %1099 = vmatpush.bf16.msra.mxu0 %v1003
      %1100 = vmatpush.bf16.msra.mxu0 %v1002
      %1101 = vmatmul.bf16.gmra.mxu0 %v815
      %v1102 = vpop.f32.mrf.mxu0
      %v1103 = vadd.f32 %v1084, %v1102
      %v1104 = vpop.f32.mrf.mxu0
      %v1105 = vadd.f32 %v1086, %v1104
      %1106 = vmatmul.bf16.gmra.mxu0 %v820
      %v1107 = vpop.f32.mrf.mxu0
      %v1108 = vadd.f32 %v1089, %v1107
      %v1109 = vpop.f32.mrf.mxu0
      %v1110 = vadd.f32 %v1091, %v1109
      %1111 = vdwg.mxu0
      %1112 = vmatpush.bf16.msra.mxu0 %v1017
      %1113 = vmatpush.bf16.msra.mxu0 %v1016
      %1114 = vmatpush.bf16.msra.mxu0 %v1015
      %1115 = vmatpush.bf16.msra.mxu0 %v1014
      %1116 = vmatpush.bf16.msra.mxu0 %v1013
      %1117 = vmatpush.bf16.msra.mxu0 %v1012
      %1118 = vmatpush.bf16.msra.mxu0 %v1011
      %1119 = vmatpush.bf16.msra.mxu0 %v1010
      %1120 = vmatmul.bf16.gmra.mxu0 %v816
      %v1121 = vpop.f32.mrf.mxu0
      %v1122 = vadd.f32 %v1103, %v1121
      %v1123 = vpop.f32.mrf.mxu0
      %v1124 = vadd.f32 %v1105, %v1123
      %1125 = vmatmul.bf16.gmra.mxu0 %v821
      %v1126 = vpop.f32.mrf.mxu0
      %v1127 = vadd.f32 %v1108, %v1126
      %v1128 = vpop.f32.mrf.mxu0
      %v1129 = vadd.f32 %v1110, %v1128
      %1130 = vdwg.mxu0
      %1131 = vmatpush.bf16.msra.mxu0 %v1025
      %1132 = vmatpush.bf16.msra.mxu0 %v1024
      %1133 = vmatpush.bf16.msra.mxu0 %v1023
      %1134 = vmatpush.bf16.msra.mxu0 %v1022
      %1135 = vmatpush.bf16.msra.mxu0 %v1021
      %1136 = vmatpush.bf16.msra.mxu0 %v1020
      %1137 = vmatpush.bf16.msra.mxu0 %v1019
      %1138 = vmatpush.bf16.msra.mxu0 %v1018
      %1139 = vmatmul.bf16.gmra.mxu0 %v817
      %v1140 = vpop.f32.mrf.mxu0
      %v1141 = vadd.f32 %v1122, %v1140
      %v1142 = vpop.f32.mrf.mxu0
      %v1143 = vadd.f32 %v1124, %v1142
      %1144 = vmatmul.bf16.gmra.mxu0 %v822
      %v1145 = vpop.f32.mrf.mxu0
      %v1146 = vadd.f32 %v1127, %v1145
      %v1147 = vpop.f32.mrf.mxu0
      %v1148 = vadd.f32 %v1129, %v1147
      %1149 = vdwg.mxu0
      %1150 = vmatpush.bf16.msra.mxu0 %v1033
      %1151 = vmatpush.bf16.msra.mxu0 %v1032
      %1152 = vmatpush.bf16.msra.mxu0 %v1031
      %1153 = vmatpush.bf16.msra.mxu0 %v1030
      %1154 = vmatpush.bf16.msra.mxu0 %v1029
      %1155 = vmatpush.bf16.msra.mxu0 %v1028
      %1156 = vmatpush.bf16.msra.mxu0 %v1027
      %1157 = vmatpush.bf16.msra.mxu0 %v1026
      %1158 = vmatmul.bf16.gmra.mxu0 %v818
      %v1159 = vpop.f32.mrf.mxu0
      %v1160 = vadd.f32 %v1141, %v1159
      %v1161 = vpop.f32.mrf.mxu0
      %v1162 = vadd.f32 %v1143, %v1161
      %1163 = vmatmul.bf16.gmra.mxu0 %v823
      %v1164 = vpop.f32.mrf.mxu0
      %v1165 = vadd.f32 %v1146, %v1164
      %v1166 = vpop.f32.mrf.mxu0
      %v1167 = vadd.f32 %v1148, %v1166
      %1168 = vdwg.mxu0
      %v1169 = vld [vmem:[#allocation2] sm:$0xff]
      %v1170 = vld [vmem:[#allocation2 + $0x8] sm:$0xff]
      %v1171 = vld [vmem:[#allocation2 + $0x10] sm:$0xff]
      %v1172 = vld [vmem:[#allocation2 + $0x18] sm:$0xff]
      %v1173 = vadd.f32 %v1169, %v1160
      %v1174 = vadd.f32 %v1170, %v1162
      %v1175 = vadd.f32 %v1171, %v1165
      %v1176 = vadd.f32 %v1172, %v1167
      %1177 = vst [vmem:[#allocation2] sm:$0xff] %v1173
      %1178 = vst [vmem:[#allocation2 + $0x8] sm:$0xff] %v1174
      %1179 = vst [vmem:[#allocation2 + $0x10] sm:$0xff] %v1175
      %1180 = vst [vmem:[#allocation2 + $0x18] sm:$0xff] %v1176
      %s1181 = sadd.s32 %s194, 32
      %s1182 = sshra.s32 %s1181, 3
      %s1183 = sand.u32 %s1181, 7
      %s1184 = smul.u32 %s1182, 5
      %s1185 = smul.addr %s1184, 4
      %s1186 = scalar_lea.vmem %s183, %s1185
      %v1187 = vld [vmem:[%s1186] sm:$0xff]
      %v1188 = vld [vmem:[%s1186 + $0x8] sm:$0xff]
      %v1189 = vld [vmem:[%s1186 + $0x10] sm:$0xf]
      %v1190 = vld [vmem:[%s1186 + $0x14] sm:$0xff]
      %v1191 = vld [vmem:[%s1186 + $0x1c] sm:$0xff]
      %v1192 = vld [vmem:[%s1186 + $0x24] sm:$0xf]
      %v1193 = vld [vmem:[%s1186 + $0x28] sm:$0xff]
      %v1194 = vld [vmem:[%s1186 + $0x30] sm:$0xff]
      %v1195 = vld [vmem:[%s1186 + $0x38] sm:$0xf]
      %v1196 = vld [vmem:[%s1186 + $0x3c] sm:$0xff]
      %v1197 = vld [vmem:[%s1186 + $0x44] sm:$0xff]
      %v1198 = vld [vmem:[%s1186 + $0x4c] sm:$0xf]
      %s1199 = scalar_lea.vmem %s1, 640
      %v1200 = vld [vmem:[%s1199] sm:$0xf]
      %v1201 = vld [vmem:[%s1199 + $0x4] sm:$0xf]
      %v1202 = vld [vmem:[%s1199 + $0x8] sm:$0xf]
      %v1203 = vld [vmem:[%s1199 + $0xc] sm:$0xf]
      %v1204 = vld [vmem:[%s1199 + $0x10] sm:$0xf]
      %v1205 = vld [vmem:[%s1199 + $0x14] sm:$0xf]
      %v1206 = vld [vmem:[%s1199 + $0x18] sm:$0xf]
      %v1207 = vld [vmem:[%s1199 + $0x1c] sm:$0xf]
      %v1208 = vld [vmem:[%s1199 + $0x20] sm:$0xf]
      %v1209 = vld [vmem:[%s1199 + $0x24] sm:$0xf]
      %v1210 = vld [vmem:[%s1199 + $0x28] sm:$0xf]
      %v1211 = vld [vmem:[%s1199 + $0x2c] sm:$0xf]
      %v1212 = vld [vmem:[%s1199 + $0x30] sm:$0xf]
      %v1213 = vld [vmem:[%s1199 + $0x34] sm:$0xf]
      %v1214 = vld [vmem:[%s1199 + $0x38] sm:$0xf]
      %v1215 = vld [vmem:[%s1199 + $0x3c] sm:$0xf]
      %v1216 = vld [vmem:[%s1199 + $0x40] sm:$0xf]
      %v1217 = vld [vmem:[%s1199 + $0x44] sm:$0xf]
      %v1218 = vld [vmem:[%s1199 + $0x48] sm:$0xf]
      %v1219 = vld [vmem:[%s1199 + $0x4c] sm:$0xf]
      %v1220 = vld [vmem:[%s1199 + $0x50] sm:$0xf]
      %v1221 = vld [vmem:[%s1199 + $0x54] sm:$0xf]
      %v1222 = vld [vmem:[%s1199 + $0x58] sm:$0xf]
      %v1223 = vld [vmem:[%s1199 + $0x5c] sm:$0xf]
      %v1224 = vld [vmem:[%s1199 + $0x60] sm:$0xf]
      %v1225 = vld [vmem:[%s1199 + $0x64] sm:$0xf]
      %v1226 = vld [vmem:[%s1199 + $0x68] sm:$0xf]
      %v1227 = vld [vmem:[%s1199 + $0x6c] sm:$0xf]
      %v1228 = vld [vmem:[%s1199 + $0x70] sm:$0xf]
      %v1229 = vld [vmem:[%s1199 + $0x74] sm:$0xf]
      %v1230 = vld [vmem:[%s1199 + $0x78] sm:$0xf]
      %v1231 = vld [vmem:[%s1199 + $0x7c] sm:$0xf]
      %v1232 = vld [vmem:[%s1199 + $0x80] sm:$0xf]
      %v1233 = vld [vmem:[%s1199 + $0x84] sm:$0xf]
      %v1234 = vld [vmem:[%s1199 + $0x88] sm:$0xf]
      %v1235 = vld [vmem:[%s1199 + $0x8c] sm:$0xf]
      %v1236 = vld [vmem:[%s1199 + $0x90] sm:$0xf]
      %v1237 = vld [vmem:[%s1199 + $0x94] sm:$0xf]
      %v1238 = vld [vmem:[%s1199 + $0x98] sm:$0xf]
      %v1239 = vld [vmem:[%s1199 + $0x9c] sm:$0xf]
      %v1240 = vld [vmem:[%s1199 + $0xa0] sm:$0xf]
      %v1241 = vld [vmem:[%s1199 + $0xa4] sm:$0xf]
      %v1242 = vld [vmem:[%s1199 + $0xa8] sm:$0xf]
      %v1243 = vld [vmem:[%s1199 + $0xac] sm:$0xf]
      %v1244 = vld [vmem:[%s1199 + $0xb0] sm:$0xf]
      %v1245 = vld [vmem:[%s1199 + $0xb4] sm:$0xf]
      %v1246 = vld [vmem:[%s1199 + $0xb8] sm:$0xf]
      %v1247 = vld [vmem:[%s1199 + $0xbc] sm:$0xf]
      %v1248 = vld [vmem:[%s1199 + $0xc0] sm:$0xf]
      %v1249 = vld [vmem:[%s1199 + $0xc4] sm:$0xf]
      %v1250 = vld [vmem:[%s1199 + $0xc8] sm:$0xf]
      %v1251 = vld [vmem:[%s1199 + $0xcc] sm:$0xf]
      %v1252 = vld [vmem:[%s1199 + $0xd0] sm:$0xf]
      %v1253 = vld [vmem:[%s1199 + $0xd4] sm:$0xf]
      %v1254 = vld [vmem:[%s1199 + $0xd8] sm:$0xf]
      %v1255 = vld [vmem:[%s1199 + $0xdc] sm:$0xf]
      %v1256 = vld [vmem:[%s1199 + $0xe0] sm:$0xf]
      %v1257 = vld [vmem:[%s1199 + $0xe4] sm:$0xf]
      %v1258 = vld [vmem:[%s1199 + $0xe8] sm:$0xf]
      %v1259 = vld [vmem:[%s1199 + $0xec] sm:$0xf]
      %v1260 = vld [vmem:[%s1199 + $0xf0] sm:$0xf]
      %v1261 = vld [vmem:[%s1199 + $0xf4] sm:$0xf]
      %v1262 = vld [vmem:[%s1199 + $0xf8] sm:$0xf]
      %v1263 = vld [vmem:[%s1199 + $0xfc] sm:$0xf]
      %v1264 = vld [vmem:[%s1199 + $0x100] sm:$0xf]
      %v1265 = vld [vmem:[%s1199 + $0x104] sm:$0xf]
      %v1266 = vld [vmem:[%s1199 + $0x108] sm:$0xf]
      %v1267 = vld [vmem:[%s1199 + $0x10c] sm:$0xf]
      %v1268 = vld [vmem:[%s1199 + $0x110] sm:$0xf]
      %v1269 = vld [vmem:[%s1199 + $0x114] sm:$0xf]
      %v1270 = vld [vmem:[%s1199 + $0x118] sm:$0xf]
      %v1271 = vld [vmem:[%s1199 + $0x11c] sm:$0xf]
      %v1272 = vld [vmem:[%s1199 + $0x120] sm:$0xf]
      %v1273 = vld [vmem:[%s1199 + $0x124] sm:$0xf]
      %v1274 = vld [vmem:[%s1199 + $0x128] sm:$0xf]
      %v1275 = vld [vmem:[%s1199 + $0x12c] sm:$0xf]
      %v1276 = vld [vmem:[%s1199 + $0x130] sm:$0xf]
      %v1277 = vld [vmem:[%s1199 + $0x134] sm:$0xf]
      %v1278 = vld [vmem:[%s1199 + $0x138] sm:$0xf]
      %v1279 = vld [vmem:[%s1199 + $0x13c] sm:$0xf]
      %v1292 = vunpack.c.l.b16 %v1187
      %v1293 = vunpack.c.h.b16 %v1187
      %v1294 = vunpack.c.l.b16 %v1188
      %v1295 = vunpack.c.h.b16 %v1188
      %v1296 = vunpack.c.l.b16 %v1189
      %v1297 = vunpack.c.l.b16 %v1190
      %v1298 = vunpack.c.h.b16 %v1190
      %v1299 = vunpack.c.l.b16 %v1191
      %v1300 = vunpack.c.h.b16 %v1191
      %v1301 = vunpack.c.l.b16 %v1192
      %v1302 = vunpack.c.l.b16 %v1193
      %v1303 = vunpack.c.h.b16 %v1193
      %v1304 = vunpack.c.l.b16 %v1194
      %v1305 = vunpack.c.h.b16 %v1194
      %v1306 = vunpack.c.l.b16 %v1195
      %v1307 = vunpack.c.l.b16 %v1196
      %v1308 = vunpack.c.h.b16 %v1196
      %v1309 = vunpack.c.l.b16 %v1197
      %v1310 = vunpack.c.h.b16 %v1197
      %v1311 = vunpack.c.l.b16 %v1198
      %v1312 = vpack.c.b16 %v1297, %v1292
      %v1313 = vpack.c.b16 %v1298, %v1293
      %v1314 = vpack.c.b16 %v1299, %v1294
      %v1315 = vpack.c.b16 %v1300, %v1295
      %v1316 = vpack.c.b16 %v1301, %v1296
      %v1317 = vpack.c.b16 %v1307, %v1302
      %v1318 = vpack.c.b16 %v1308, %v1303
      %v1319 = vpack.c.b16 %v1309, %v1304
      %v1320 = vpack.c.b16 %v1310, %v1305
      %v1321 = vpack.c.b16 %v1311, %v1306
      %v1412 = vunpack.c.l.b16 %v1200
      %v1413 = vunpack.c.l.b16 %v1201
      %v1414 = vunpack.c.l.b16 %v1202
      %v1415 = vunpack.c.l.b16 %v1203
      %v1416 = vunpack.c.l.b16 %v1204
      %v1417 = vunpack.c.l.b16 %v1205
      %v1418 = vunpack.c.l.b16 %v1206
      %v1419 = vunpack.c.l.b16 %v1207
      %v1420 = vunpack.c.l.b16 %v1208
      %v1421 = vunpack.c.l.b16 %v1209
      %v1422 = vunpack.c.l.b16 %v1210
      %v1423 = vunpack.c.l.b16 %v1211
      %v1424 = vunpack.c.l.b16 %v1212
      %v1425 = vunpack.c.l.b16 %v1213
      %v1426 = vunpack.c.l.b16 %v1214
      %v1427 = vunpack.c.l.b16 %v1215
      %v1428 = vunpack.c.l.b16 %v1216
      %v1429 = vunpack.c.l.b16 %v1217
      %v1430 = vunpack.c.l.b16 %v1218
      %v1431 = vunpack.c.l.b16 %v1219
      %v1432 = vunpack.c.l.b16 %v1220
      %v1433 = vunpack.c.l.b16 %v1221
      %v1434 = vunpack.c.l.b16 %v1222
      %v1435 = vunpack.c.l.b16 %v1223
      %v1436 = vunpack.c.l.b16 %v1224
      %v1437 = vunpack.c.l.b16 %v1225
      %v1438 = vunpack.c.l.b16 %v1226
      %v1439 = vunpack.c.l.b16 %v1227
      %v1440 = vunpack.c.l.b16 %v1228
      %v1441 = vunpack.c.l.b16 %v1229
      %v1442 = vunpack.c.l.b16 %v1230
      %v1443 = vunpack.c.l.b16 %v1231
      %v1444 = vunpack.c.l.b16 %v1232
      %v1445 = vunpack.c.l.b16 %v1233
      %v1446 = vunpack.c.l.b16 %v1234
      %v1447 = vunpack.c.l.b16 %v1235
      %v1448 = vunpack.c.l.b16 %v1236
      %v1449 = vunpack.c.l.b16 %v1237
      %v1450 = vunpack.c.l.b16 %v1238
      %v1451 = vunpack.c.l.b16 %v1239
      %v1452 = vunpack.c.l.b16 %v1240
      %v1453 = vunpack.c.l.b16 %v1241
      %v1454 = vunpack.c.l.b16 %v1242
      %v1455 = vunpack.c.l.b16 %v1243
      %v1456 = vunpack.c.l.b16 %v1244
      %v1457 = vunpack.c.l.b16 %v1245
      %v1458 = vunpack.c.l.b16 %v1246
      %v1459 = vunpack.c.l.b16 %v1247
      %v1460 = vunpack.c.l.b16 %v1248
      %v1461 = vunpack.c.l.b16 %v1249
      %v1462 = vunpack.c.l.b16 %v1250
      %v1463 = vunpack.c.l.b16 %v1251
      %v1464 = vunpack.c.l.b16 %v1252
      %v1465 = vunpack.c.l.b16 %v1253
      %v1466 = vunpack.c.l.b16 %v1254
      %v1467 = vunpack.c.l.b16 %v1255
      %v1468 = vunpack.c.l.b16 %v1256
      %v1469 = vunpack.c.l.b16 %v1257
      %v1470 = vunpack.c.l.b16 %v1258
      %v1471 = vunpack.c.l.b16 %v1259
      %v1472 = vunpack.c.l.b16 %v1260
      %v1473 = vunpack.c.l.b16 %v1261
      %v1474 = vunpack.c.l.b16 %v1262
      %v1475 = vunpack.c.l.b16 %v1263
      %v1476 = vunpack.c.l.b16 %v1264
      %v1477 = vunpack.c.l.b16 %v1265
      %v1478 = vunpack.c.l.b16 %v1266
      %v1479 = vunpack.c.l.b16 %v1267
      %v1480 = vunpack.c.l.b16 %v1268
      %v1481 = vunpack.c.l.b16 %v1269
      %v1482 = vunpack.c.l.b16 %v1270
      %v1483 = vunpack.c.l.b16 %v1271
      %v1484 = vunpack.c.l.b16 %v1272
      %v1485 = vunpack.c.l.b16 %v1273
      %v1486 = vunpack.c.l.b16 %v1274
      %v1487 = vunpack.c.l.b16 %v1275
      %v1488 = vunpack.c.l.b16 %v1276
      %v1489 = vunpack.c.l.b16 %v1277
      %v1490 = vunpack.c.l.b16 %v1278
      %v1491 = vunpack.c.l.b16 %v1279
      %v1492 = vpack.c.b16 %v1413, %v1412
      %v1493 = vpack.c.b16 %v1415, %v1414
      %v1494 = vpack.c.b16 %v1417, %v1416
      %v1495 = vpack.c.b16 %v1419, %v1418
      %v1496 = vpack.c.b16 %v1421, %v1420
      %v1497 = vpack.c.b16 %v1423, %v1422
      %v1498 = vpack.c.b16 %v1425, %v1424
      %v1499 = vpack.c.b16 %v1427, %v1426
      %v1500 = vpack.c.b16 %v1429, %v1428
      %v1501 = vpack.c.b16 %v1431, %v1430
      %v1502 = vpack.c.b16 %v1433, %v1432
      %v1503 = vpack.c.b16 %v1435, %v1434
      %v1504 = vpack.c.b16 %v1437, %v1436
      %v1505 = vpack.c.b16 %v1439, %v1438
      %v1506 = vpack.c.b16 %v1441, %v1440
      %v1507 = vpack.c.b16 %v1443, %v1442
      %v1508 = vpack.c.b16 %v1445, %v1444
      %v1509 = vpack.c.b16 %v1447, %v1446
      %v1510 = vpack.c.b16 %v1449, %v1448
      %v1511 = vpack.c.b16 %v1451, %v1450
      %v1512 = vpack.c.b16 %v1453, %v1452
      %v1513 = vpack.c.b16 %v1455, %v1454
      %v1514 = vpack.c.b16 %v1457, %v1456
      %v1515 = vpack.c.b16 %v1459, %v1458
      %v1516 = vpack.c.b16 %v1461, %v1460
      %v1517 = vpack.c.b16 %v1463, %v1462
      %v1518 = vpack.c.b16 %v1465, %v1464
      %v1519 = vpack.c.b16 %v1467, %v1466
      %v1520 = vpack.c.b16 %v1469, %v1468
      %v1521 = vpack.c.b16 %v1471, %v1470
      %v1522 = vpack.c.b16 %v1473, %v1472
      %v1523 = vpack.c.b16 %v1475, %v1474
      %v1524 = vpack.c.b16 %v1477, %v1476
      %v1525 = vpack.c.b16 %v1479, %v1478
      %v1526 = vpack.c.b16 %v1481, %v1480
      %v1527 = vpack.c.b16 %v1483, %v1482
      %v1528 = vpack.c.b16 %v1485, %v1484
      %v1529 = vpack.c.b16 %v1487, %v1486
      %v1530 = vpack.c.b16 %v1489, %v1488
      %v1531 = vpack.c.b16 %v1491, %v1490
      %1572 = vmatpush.bf16.msra.mxu0 %v1499
      %1573 = vmatpush.bf16.msra.mxu0 %v1498
      %1574 = vmatpush.bf16.msra.mxu0 %v1497
      %1575 = vmatpush.bf16.msra.mxu0 %v1496
      %1576 = vmatpush.bf16.msra.mxu0 %v1495
      %1577 = vmatpush.bf16.msra.mxu0 %v1494
      %1578 = vmatpush.bf16.msra.mxu0 %v1493
      %1579 = vmatpush.bf16.msra.mxu0 %v1492
      %1580 = vmatmul.bf16.gmra.mxu0 %v1312
      %v1581 = vpop.f32.mrf.mxu0
      %v1582 = vadd.f32 0.0, %v1581
      %v1583 = vpop.f32.mrf.mxu0
      %v1584 = vadd.f32 0.0, %v1583
      %1585 = vmatmul.bf16.gmra.mxu0 %v1317
      %v1586 = vpop.f32.mrf.mxu0
      %v1587 = vadd.f32 0.0, %v1586
      %v1588 = vpop.f32.mrf.mxu0
      %v1589 = vadd.f32 0.0, %v1588
      %1590 = vdwg.mxu0
      %1591 = vmatpush.bf16.msra.mxu0 %v1507
      %1592 = vmatpush.bf16.msra.mxu0 %v1506
      %1593 = vmatpush.bf16.msra.mxu0 %v1505
      %1594 = vmatpush.bf16.msra.mxu0 %v1504
      %1595 = vmatpush.bf16.msra.mxu0 %v1503
      %1596 = vmatpush.bf16.msra.mxu0 %v1502
      %1597 = vmatpush.bf16.msra.mxu0 %v1501
      %1598 = vmatpush.bf16.msra.mxu0 %v1500
      %1599 = vmatmul.bf16.gmra.mxu0 %v1313
      %v1600 = vpop.f32.mrf.mxu0
      %v1601 = vadd.f32 %v1582, %v1600
      %v1602 = vpop.f32.mrf.mxu0
      %v1603 = vadd.f32 %v1584, %v1602
      %1604 = vmatmul.bf16.gmra.mxu0 %v1318
      %v1605 = vpop.f32.mrf.mxu0
      %v1606 = vadd.f32 %v1587, %v1605
      %v1607 = vpop.f32.mrf.mxu0
      %v1608 = vadd.f32 %v1589, %v1607
      %1609 = vdwg.mxu0
      %1610 = vmatpush.bf16.msra.mxu0 %v1515
      %1611 = vmatpush.bf16.msra.mxu0 %v1514
      %1612 = vmatpush.bf16.msra.mxu0 %v1513
      %1613 = vmatpush.bf16.msra.mxu0 %v1512
      %1614 = vmatpush.bf16.msra.mxu0 %v1511
      %1615 = vmatpush.bf16.msra.mxu0 %v1510
      %1616 = vmatpush.bf16.msra.mxu0 %v1509
      %1617 = vmatpush.bf16.msra.mxu0 %v1508
      %1618 = vmatmul.bf16.gmra.mxu0 %v1314
      %v1619 = vpop.f32.mrf.mxu0
      %v1620 = vadd.f32 %v1601, %v1619
      %v1621 = vpop.f32.mrf.mxu0
      %v1622 = vadd.f32 %v1603, %v1621
      %1623 = vmatmul.bf16.gmra.mxu0 %v1319
      %v1624 = vpop.f32.mrf.mxu0
      %v1625 = vadd.f32 %v1606, %v1624
      %v1626 = vpop.f32.mrf.mxu0
      %v1627 = vadd.f32 %v1608, %v1626
      %1628 = vdwg.mxu0
      %1629 = vmatpush.bf16.msra.mxu0 %v1523
      %1630 = vmatpush.bf16.msra.mxu0 %v1522
      %1631 = vmatpush.bf16.msra.mxu0 %v1521
      %1632 = vmatpush.bf16.msra.mxu0 %v1520
      %1633 = vmatpush.bf16.msra.mxu0 %v1519
      %1634 = vmatpush.bf16.msra.mxu0 %v1518
      %1635 = vmatpush.bf16.msra.mxu0 %v1517
      %1636 = vmatpush.bf16.msra.mxu0 %v1516
      %1637 = vmatmul.bf16.gmra.mxu0 %v1315
      %v1638 = vpop.f32.mrf.mxu0
      %v1639 = vadd.f32 %v1620, %v1638
      %v1640 = vpop.f32.mrf.mxu0
      %v1641 = vadd.f32 %v1622, %v1640
      %1642 = vmatmul.bf16.gmra.mxu0 %v1320
      %v1643 = vpop.f32.mrf.mxu0
      %v1644 = vadd.f32 %v1625, %v1643
      %v1645 = vpop.f32.mrf.mxu0
      %v1646 = vadd.f32 %v1627, %v1645
      %1647 = vdwg.mxu0
      %1648 = vmatpush.bf16.msra.mxu0 %v1531
      %1649 = vmatpush.bf16.msra.mxu0 %v1530
      %1650 = vmatpush.bf16.msra.mxu0 %v1529
      %1651 = vmatpush.bf16.msra.mxu0 %v1528
      %1652 = vmatpush.bf16.msra.mxu0 %v1527
      %1653 = vmatpush.bf16.msra.mxu0 %v1526
      %1654 = vmatpush.bf16.msra.mxu0 %v1525
      %1655 = vmatpush.bf16.msra.mxu0 %v1524
      %1656 = vmatmul.bf16.gmra.mxu0 %v1316
      %v1657 = vpop.f32.mrf.mxu0
      %v1658 = vadd.f32 %v1639, %v1657
      %v1659 = vpop.f32.mrf.mxu0
      %v1660 = vadd.f32 %v1641, %v1659
      %1661 = vmatmul.bf16.gmra.mxu0 %v1321
      %v1662 = vpop.f32.mrf.mxu0
      %v1663 = vadd.f32 %v1644, %v1662
      %v1664 = vpop.f32.mrf.mxu0
      %v1665 = vadd.f32 %v1646, %v1664
      %1666 = vdwg.mxu0
      %v1667 = vld [vmem:[#allocation2] sm:$0xff]
      %v1668 = vld [vmem:[#allocation2 + $0x8] sm:$0xff]
      %v1669 = vld [vmem:[#allocation2 + $0x10] sm:$0xff]
      %v1670 = vld [vmem:[#allocation2 + $0x18] sm:$0xff]
      %v1671 = vadd.f32 %v1667, %v1658
      %v1672 = vadd.f32 %v1668, %v1660
      %v1673 = vadd.f32 %v1669, %v1663
      %v1674 = vadd.f32 %v1670, %v1665
      %1675 = vst [vmem:[#allocation2] sm:$0xff] %v1671
      %1676 = vst [vmem:[#allocation2 + $0x8] sm:$0xff] %v1672
      %1677 = vst [vmem:[#allocation2 + $0x10] sm:$0xff] %v1673
      %1678 = vst [vmem:[#allocation2 + $0x18] sm:$0xff] %v1674
      %v1679 = vld [vmem:[#allocation2] sm:$0xff]
      %v1680 = vld [vmem:[#allocation2 + $0x8] sm:$0xff]
      %v1681 = vld [vmem:[#allocation2 + $0x10] sm:$0xff]
      %v1682 = vld [vmem:[#allocation2 + $0x18] sm:$0xff]
      %v1683 = vld [vmem:[%s2] sm:$0x1]
      %v1685 = vperm.slane %v1683, 0
      %v1687 = vadd.f32 %v1679, %v1685
      %v1688 = vadd.f32 %v1680, %v1685
      %v1689 = vadd.f32 %v1681, %v1685
      %v1690 = vadd.f32 %v1682, %v1685
      %v1691 = vmax.f32 %v1687, 0.0
      %v1692 = vmax.f32 %v1688, 0.0
      %v1693 = vmax.f32 %v1689, 0.0
      %v1694 = vmax.f32 %v1690, 0.0
      %v1695 = vpack.c.bf16 %v1691, %v1691
      %v1696 = vpack.c.bf16 %v1692, %v1692
      %v1697 = vpack.c.bf16 %v1693, %v1693
      %v1698 = vpack.c.bf16 %v1694, %v1694
      %1699 = vst [vmem:[%s192] sm:$0xf] %v1695
      %1700 = vst [vmem:[%s192 + $0x4] sm:$0xf] %v1696
      %1701 = vst [vmem:[%s192 + $0x8] sm:$0xf] %v1697
      %1702 = vst [vmem:[%s192 + $0xc] sm:$0xf] %v1698
      %s1703 = smul.u32 4, %s19
      %p1704 = scmp.lt.s32.totalorder %s18, 1
      %s1705 = scalar_select %p1704, %s18, 1
      %p1706 = scmp.lt.s32.totalorder %s1703, 3
      %s1707 = scalar_select %p1706, %s1703, 3
      %s1708 = smul.addr %s1705, 4
      %s1709 = sadd.s32 %s1707, %s1708
      %s1710 = smul.addr %s1709, 4
      %s1711 = scalar_lea.vmem %s3, %s1710
      // Predicated region
      $region33: #{convolution3d_forward.6} parent=31 // pred_check
        %p1712 = pneg %p114
      $region34: #{convolution3d_forward.6} parent=31 // pred_check_branch
        %1714 = sbr.rel (%p1712) target = $region36
      $region35: #{convolution3d_forward.6} parent=31 // pred_region
        %s1715 = smul.u32 4, %s19
      $region36: #{convolution3d_forward.6} parent=31 // pred_fallthru
        _
    $region32: #{convolution3d_forward.6} parent=5 // pred_fallthru
      _
    %p1716 = scmp.le.s32.totalorder 2, %s9
    // Predicated region
    $region37: #{convolution3d_forward.6} parent=5 // pred_check
      %p1717 = pneg %p1716
    $region38: #{convolution3d_forward.6} parent=5 // pred_check_branch
      %1719 = sbr.rel (%p1717) target = $region40
    $region39: #{convolution3d_forward.6} parent=5 // pred_region
      %s1720 = ssub.s32 %s9, 2
      // Predicated region
      $region41: #{convolution3d_forward.6} parent=39 // pred_check
        %p1721 = pneg %p120
      $region42: #{convolution3d_forward.6} parent=39 // pred_check_branch
        %1723 = sbr.rel (%p1721) target = $region44
      $region43: #{convolution3d_forward.6} parent=39 // pred_region
        %s1724 = smul.u32 4, %s21
        %p1725 = scmp.lt.s32.totalorder %s20, 1
        %s1726 = scalar_select %p1725, %s20, 1
        %p1727 = scmp.lt.s32.totalorder %s1724, 3
        %s1728 = scalar_select %p1727, %s1724, 3
        %s1729 = smul.addr %s1726, 4
        %s1730 = sadd.s32 %s1728, %s1729
        %s1731 = smul.addr %s1730, 4
        %s1732 = scalar_lea.vmem %s3, %s1731
      $region44: #{convolution3d_forward.6} parent=39 // pred_fallthru
        _
    $region40: #{convolution3d_forward.6} parent=5 // pred_fallthru
      _
  $region6: #{convolution3d_forward.6} parent=0 // loop_footer
    %s13 = sadd.s32 1, %s9
  $region7: #{convolution3d_forward.6} parent=0 // loop_footer_branch
    %8 = sbr.rel target = $region3
  $region8: #{convolution3d_forward.6} parent=0 // loop_exit
    _

// kernel: convolution3d_forward.7
$region0: #{convolution3d_forward.7}
  #allocation0 [shape = 'u32[]', space=smem, size = 0x4, offset = 0x4, fixed_abs, tag = 'smem constant byte address 0x4 - core index']
  #allocation1 [shape = 'u32[72,128]{1,0:T(1,128)}', space=vmem, size = 0x9000, scoped, tag = 'internal scratch']
  #allocation2 [shape = 'bf16[2,1024]{1,0:T(2,128)(2,1)}', space=vmem, size = 0x1000, scoped, tag = 'scratch operand']
  %s0 = inlined_call_operand.vmem [shape: bf16[2,256], index: 0, kind: input, shape index: {}]
  %s1 = inlined_call_operand.vmem [shape: bf16[256,1024], index: 1, kind: input, shape index: {}]
  %s2 = inlined_call_operand.vmem [shape: f32[1,1024], index: 2, kind: input, shape index: {}]
  %s3 = inlined_call_operand.vmem [shape: bf16[1024,2048], index: 3, kind: input, shape index: {}]
  %s4 = inlined_call_operand.vmem [shape: f32[1,2048], index: 4, kind: input, shape index: {}]
  %s5 = inlined_call_operand.vmem [shape: bf16[2048,128], index: 5, kind: input, shape index: {}]
  %s6 = inlined_call_operand.vmem [shape: f32[1,128], index: 6, kind: input, shape index: {}]
  %s7 = inlined_call_operand.hbm [shape: f32[2,128], index: 7, kind: output, shape index: {}]
  %s8 = sld [smem:[#allocation0]]
  $region92: #{convolution3d_forward.7} parent=0
    _
  %s10 = ssub.s32 1, %s8
  %s11 = scalar_select 0, %s10, %s8
  $region1: #{convolution3d_forward.7} parent=0
    #allocation3 [shape = 'u8[2097152]{0}', space=vmem, size = 0x200000, scoped, tag = 'input window, operand 3']
    #allocation4 [shape = 'u8[1024]{0}', space=vmem, size = 0x400, scoped, tag = 'output window, operand 0, single buffered']
    #allocation5 [shape = 's32[2]{0}', space=sflag, size = 0x8, scoped, tag = 'scoped memory for convolution3d_forward.7']
    %12 = vsyncpa [#allocation5], 0
    loop: start=0, step=1, limit=6
    $region2: #{convolution3d_forward.7} parent=1 // loop_pre_header
      _
    $region3: #{convolution3d_forward.7} parent=1 // loop_header
      %s14 = sphi 0, %s18
      %p15 = scmp.ge.s32.totalorder %s14, 6
      %s22 = sphi 0, %s22
      %s24 = sphi 0, %s22
      %s25 = sphi 0, %s24
      %s39 = sphi 0, %s25
      %s43 = sphi 0, %s43
      %s45 = sphi 0, %s43
      %s46 = sphi 0, %s45
      %s60 = sphi 0, %s46
      %s64 = sphi 0, %s64
      %s66 = sphi 0, %s64
      %s67 = sphi 0, %s66
      %s81 = sphi 0, %s67
      %s87 = sphi 0, %s89
      %s90 = sphi 0, %s87
      %s91 = sphi 0, %s90
      %s107 = sphi 0, %s91
      %s113 = sphi 0, %s115
      %s116 = sphi 0, %s113
      %s117 = sphi 0, %s116
      %s133 = sphi 0, %s117
      %s139 = sphi 0, %s141
      %s142 = sphi 0, %s139
      %s143 = sphi 0, %s142
      %s159 = sphi 0, %s143
      %s163 = sphi 0, %s163
      %s165 = sphi 0, %s163
      %s166 = sphi 0, %s165
      %s180 = sphi 0, %s166
      %s184 = sphi 0, %s184
      %s186 = sphi 0, %s184
      %s187 = sphi 0, %s186
      %s201 = sphi 0, %s187
    $region4: #{convolution3d_forward.7} parent=1 // loop_header_branch
      %17 = sbr.rel (%p15) target = $region8
    $region5: #{convolution3d_forward.7} parent=1 // loop_body
      %s19 = ssub.s32 %s14, 1
      %s20 = ssub.s32 %s14, 2
      %s21 = sadd.s32 %s14, 1
      %s23 = sadd.s32 %s22, 1
      %p26 = scmp.eq.s32.totalorder %s14, 3
      %p27 = scmp.ne.s32.totalorder %s22, %s24
      %p28 = scmp.eq.s32.totalorder %s14, 0
      %p29 = por %p27, %p28
      %p30 = scmp.ne.s32.totalorder %s22, %s24
      %p31 = scmp.eq.s32.totalorder %s19, 3
      %p32 = por %p30, %p31
      %p33 = scmp.ne.s32.totalorder %s24, %s25
      %p34 = scmp.eq.s32.totalorder %s19, 0
      %p35 = por %p33, %p34
      %p36 = scmp.ne.s32.totalorder %s24, %s25
      %p37 = scmp.eq.s32.totalorder %s20, 3
      %p38 = por %p36, %p37
      %p40 = scmp.ne.s32.totalorder %s25, %s39
      %p41 = scmp.eq.s32.totalorder %s20, 0
      %p42 = por %p40, %p41
      %s44 = sadd.s32 %s43, 1
      %p47 = scmp.eq.s32.totalorder %s14, 3
      %p48 = scmp.ne.s32.totalorder %s43, %s45
      %p49 = scmp.eq.s32.totalorder %s14, 0
      %p50 = por %p48, %p49
      %p51 = scmp.ne.s32.totalorder %s43, %s45
      %p52 = scmp.eq.s32.totalorder %s19, 3
      %p53 = por %p51, %p52
      %p54 = scmp.ne.s32.totalorder %s45, %s46
      %p55 = scmp.eq.s32.totalorder %s19, 0
      %p56 = por %p54, %p55
      %p57 = scmp.ne.s32.totalorder %s45, %s46
      %p58 = scmp.eq.s32.totalorder %s20, 3
      %p59 = por %p57, %p58
      %p61 = scmp.ne.s32.totalorder %s46, %s60
      %p62 = scmp.eq.s32.totalorder %s20, 0
      %p63 = por %p61, %p62
      %s65 = sadd.s32 %s64, 1
      %p68 = scmp.eq.s32.totalorder %s14, 3
      %p69 = scmp.ne.s32.totalorder %s64, %s66
      %p70 = scmp.eq.s32.totalorder %s14, 0
      %p71 = por %p69, %p70
      %p72 = scmp.ne.s32.totalorder %s64, %s66
      %p73 = scmp.eq.s32.totalorder %s19, 3
      %p74 = por %p72, %p73
      %p75 = scmp.ne.s32.totalorder %s66, %s67
      %p76 = scmp.eq.s32.totalorder %s19, 0
      %p77 = por %p75, %p76
      %p78 = scmp.ne.s32.totalorder %s66, %s67
      %p79 = scmp.eq.s32.totalorder %s20, 3
      %p80 = por %p78, %p79
      %p82 = scmp.ne.s32.totalorder %s67, %s81
      %p83 = scmp.eq.s32.totalorder %s20, 0
      %p84 = por %p82, %p83
      %s85 = ssub.s32 %s14, %s21
      %p86 = scmp.eq.s32.totalorder %s85, 0
      %s88 = sadd.s32 %s87, 1
      %s89 = scalar_select %p86, %s87, %s88
      %p92 = pneg %p86
      %p93 = scmp.eq.s32.totalorder %s14, 3
      %p94 = por %p92, %p93
      %p95 = scmp.ne.s32.totalorder %s87, %s90
      %p96 = scmp.eq.s32.totalorder %s14, 0
      %p97 = por %p95, %p96
      %p98 = scmp.ne.s32.totalorder %s87, %s90
      %p99 = scmp.eq.s32.totalorder %s19, 3
      %p100 = por %p98, %p99
      %p101 = scmp.ne.s32.totalorder %s90, %s91
      %p102 = scmp.eq.s32.totalorder %s19, 0
      %p103 = por %p101, %p102
      %p104 = scmp.ne.s32.totalorder %s90, %s91
      %p105 = scmp.eq.s32.totalorder %s20, 3
      %p106 = por %p104, %p105
      %p108 = scmp.ne.s32.totalorder %s91, %s107
      %p109 = scmp.eq.s32.totalorder %s20, 0
      %p110 = por %p108, %p109
      %s111 = ssub.s32 %s14, %s21
      %p112 = scmp.eq.s32.totalorder %s111, 0
      %s114 = sadd.s32 %s113, 1
      %s115 = scalar_select %p112, %s113, %s114
      %p118 = pneg %p112
      %p119 = scmp.eq.s32.totalorder %s14, 3
      %p120 = por %p118, %p119
      %p121 = scmp.ne.s32.totalorder %s113, %s116
      %p122 = scmp.eq.s32.totalorder %s14, 0
      %p123 = por %p121, %p122
      %p124 = scmp.ne.s32.totalorder %s113, %s116
      %p125 = scmp.eq.s32.totalorder %s19, 3
      %p126 = por %p124, %p125
      %p127 = scmp.ne.s32.totalorder %s116, %s117
      %p128 = scmp.eq.s32.totalorder %s19, 0
      %p129 = por %p127, %p128
      %p130 = scmp.ne.s32.totalorder %s116, %s117
      %p131 = scmp.eq.s32.totalorder %s20, 3
      %p132 = por %p130, %p131
      %p134 = scmp.ne.s32.totalorder %s117, %s133
      %p135 = scmp.eq.s32.totalorder %s20, 0
      %p136 = por %p134, %p135
      %s137 = ssub.s32 %s14, %s21
      %p138 = scmp.eq.s32.totalorder %s137, 0
      %s140 = sadd.s32 %s139, 1
      %s141 = scalar_select %p138, %s139, %s140
      %p144 = pneg %p138
      %p145 = scmp.eq.s32.totalorder %s14, 3
      %p146 = por %p144, %p145
      %p147 = scmp.ne.s32.totalorder %s139, %s142
      %p148 = scmp.eq.s32.totalorder %s14, 0
      %p149 = por %p147, %p148
      %p150 = scmp.ne.s32.totalorder %s139, %s142
      %p151 = scmp.eq.s32.totalorder %s19, 3
      %p152 = por %p150, %p151
      %p153 = scmp.ne.s32.totalorder %s142, %s143
      %p154 = scmp.eq.s32.totalorder %s19, 0
      %p155 = por %p153, %p154
      %p156 = scmp.ne.s32.totalorder %s142, %s143
      %p157 = scmp.eq.s32.totalorder %s20, 3
      %p158 = por %p156, %p157
      %p160 = scmp.ne.s32.totalorder %s143, %s159
      %p161 = scmp.eq.s32.totalorder %s20, 0
      %p162 = por %p160, %p161
      %s164 = sadd.s32 %s163, 1
      %p167 = scmp.eq.s32.totalorder %s14, 3
      %p168 = scmp.ne.s32.totalorder %s163, %s165
      %p169 = scmp.eq.s32.totalorder %s14, 0
      %p170 = por %p168, %p169
      %p171 = scmp.ne.s32.totalorder %s163, %s165
      %p172 = scmp.eq.s32.totalorder %s19, 3
      %p173 = por %p171, %p172
      %p174 = scmp.ne.s32.totalorder %s165, %s166
      %p175 = scmp.eq.s32.totalorder %s19, 0
      %p176 = por %p174, %p175
      %p177 = scmp.ne.s32.totalorder %s165, %s166
      %p178 = scmp.eq.s32.totalorder %s20, 3
      %p179 = por %p177, %p178
      %p181 = scmp.ne.s32.totalorder %s166, %s180
      %p182 = scmp.eq.s32.totalorder %s20, 0
      %p183 = por %p181, %p182
      %s185 = sadd.s32 %s184, 1
      %p188 = scmp.eq.s32.totalorder %s14, 3
      %p189 = scmp.ne.s32.totalorder %s184, %s186
      %p190 = scmp.eq.s32.totalorder %s14, 0
      %p191 = por %p189, %p190
      %p192 = scmp.ne.s32.totalorder %s184, %s186
      %p193 = scmp.eq.s32.totalorder %s19, 3
      %p194 = por %p192, %p193
      %p195 = scmp.ne.s32.totalorder %s186, %s187
      %p196 = scmp.eq.s32.totalorder %s19, 0
      %p197 = por %p195, %p196
      %p198 = scmp.ne.s32.totalorder %s186, %s187
      %p199 = scmp.eq.s32.totalorder %s20, 3
      %p200 = por %p198, %p199
      %p202 = scmp.ne.s32.totalorder %s187, %s201
      %p203 = scmp.eq.s32.totalorder %s20, 0
      %p204 = por %p202, %p203
      %p205 = scmp.le.s32.totalorder 1, %s14
      %p206 = scmp.lt.s32.totalorder %s14, 5
      %p207 = pnand %p205, %p206
      %p208 = pneg %p207
      // Predicated region
      $region9: #{convolution3d_forward.7} parent=5 // pred_check
        _
      $region10: #{convolution3d_forward.7} parent=5 // pred_check_branch
        %210 = sbr.rel (%p207) target = $region12
      $region11: #{convolution3d_forward.7} parent=5 // pred_region
        %s211 = ssub.s32 %s14, 1
        // Predicated region
        $region13: #{convolution3d_forward.7} parent=11 // pred_check
          %p212 = pneg %p35
        $region14: #{convolution3d_forward.7} parent=11 // pred_check_branch
          %214 = sbr.rel (%p212) target = $region16
        $region15: #{convolution3d_forward.7} parent=11 // pred_region
          _
        $region16: #{convolution3d_forward.7} parent=11 // pred_fallthru
          _
        // Predicated region
        $region17: #{convolution3d_forward.7} parent=11 // pred_check
          %p215 = pneg %p56
        $region18: #{convolution3d_forward.7} parent=11 // pred_check_branch
          %217 = sbr.rel (%p215) target = $region20
        $region19: #{convolution3d_forward.7} parent=11 // pred_region
          _
        $region20: #{convolution3d_forward.7} parent=11 // pred_fallthru
          _
        // Predicated region
        $region21: #{convolution3d_forward.7} parent=11 // pred_check
          %p218 = pneg %p77
        $region22: #{convolution3d_forward.7} parent=11 // pred_check_branch
          %220 = sbr.rel (%p218) target = $region24
        $region23: #{convolution3d_forward.7} parent=11 // pred_region
          _
        $region24: #{convolution3d_forward.7} parent=11 // pred_fallthru
          _
        // Predicated region
        $region25: #{convolution3d_forward.7} parent=11 // pred_check
          %p221 = pneg %p176
        $region26: #{convolution3d_forward.7} parent=11 // pred_check_branch
          %223 = sbr.rel (%p221) target = $region28
        $region27: #{convolution3d_forward.7} parent=11 // pred_region
          _
        $region28: #{convolution3d_forward.7} parent=11 // pred_fallthru
          _
      $region12: #{convolution3d_forward.7} parent=5 // pred_fallthru
        _
      %p224 = scmp.lt.s32.totalorder %s14, 4
      // Predicated region
      $region29: #{convolution3d_forward.7} parent=5 // pred_check
        %p225 = pneg %p224
      $region30: #{convolution3d_forward.7} parent=5 // pred_check_branch
        %227 = sbr.rel (%p225) target = $region32
      $region31: #{convolution3d_forward.7} parent=5 // pred_region
        // Predicated region
        $region33: #{convolution3d_forward.7} parent=31 // pred_check
          %p228 = pneg %p97
        $region34: #{convolution3d_forward.7} parent=31 // pred_check_branch
          %230 = sbr.rel (%p228) target = $region36
        $region35: #{convolution3d_forward.7} parent=31 // pred_region
          %s231 = sand.u32 %s87, 1
          %s232 = sand.u32 %s87, 1
          %s233 = smul.addr %s232, 2048
          %s234 = scalar_lea.vmem [#allocation3], %s233
          %s235 = smul.u32 4, %s14
          %s236 = smul.addr %s235, 4
          %s237 = scalar_lea.vmem %s3, %s236
          // Predicated region
          $region37: #{convolution3d_forward.7} parent=35 // pred_check
            _
          $region38: #{convolution3d_forward.7} parent=35 // pred_check_branch
            %239 = sbr.rel (0) target = $region40
          $region39: #{convolution3d_forward.7} parent=35 // pred_region
            // Predicated region
            $region41: #{convolution3d_forward.7} parent=39 // pred_check
              _
            $region42: #{convolution3d_forward.7} parent=39 // pred_check_branch
              %241 = sbr.rel (0) target = $region44
            $region43: #{convolution3d_forward.7} parent=39 // pred_region
              loop: start=0, step=1, limit=1
              $region45: #{convolution3d_forward.7} parent=43 // loop_pre_header
                _
              $region46: #{convolution3d_forward.7} parent=43 // loop_header
                %s243 = sphi 0, %s247
                %p244 = scmp.ge.s32.totalorder %s243, 1
                %s248 = sphi %s237, %s237
                %s249 = sphi %s234, %s234
              $region47: #{convolution3d_forward.7} parent=43 // loop_header_branch
                %246 = sbr.rel (%p244) target = $region51
              $region48: #{convolution3d_forward.7} parent=43 // loop_body
                %v250 = vld [vmem:[%s248] sm:$0xff]
                %251 = vst [vmem:[%s249] sm:$0xff] %v250
                %v252 = vld [vmem:[%s248 + $0x8] sm:$0xff]
                %253 = vst [vmem:[%s249 + $0x8] sm:$0xff] %v252
                %v254 = vld [vmem:[%s248 + $0x40] sm:$0xff]
                %255 = vst [vmem:[%s249 + $0x10] sm:$0xff] %v254
                %v256 = vld [vmem:[%s248 + $0x48] sm:$0xff]
                %257 = vst [vmem:[%s249 + $0x18] sm:$0xff] %v256
                %v258 = vld [vmem:[%s248 + $0x80] sm:$0xff]
                %259 = vst [vmem:[%s249 + $0x20] sm:$0xff] %v258
                %v260 = vld [vmem:[%s248 + $0x88] sm:$0xff]
                %261 = vst [vmem:[%s249 + $0x28] sm:$0xff] %v260
                %v262 = vld [vmem:[%s248 + $0xc0] sm:$0xff]
                %263 = vst [vmem:[%s249 + $0x30] sm:$0xff] %v262
                %v264 = vld [vmem:[%s248 + $0xc8] sm:$0xff]
                %265 = vst [vmem:[%s249 + $0x38] sm:$0xff] %v264
                %v266 = vld [vmem:[%s248 + $0x100] sm:$0xff]
                %267 = vst [vmem:[%s249 + $0x40] sm:$0xff] %v266
                %v268 = vld [vmem:[%s248 + $0x108] sm:$0xff]
                %269 = vst [vmem:[%s249 + $0x48] sm:$0xff] %v268
                %v270 = vld [vmem:[%s248 + $0x140] sm:$0xff]
                %271 = vst [vmem:[%s249 + $0x50] sm:$0xff] %v270
                %v272 = vld [vmem:[%s248 + $0x148] sm:$0xff]
                %273 = vst [vmem:[%s249 + $0x58] sm:$0xff] %v272
                %v274 = vld [vmem:[%s248 + $0x180] sm:$0xff]
                %275 = vst [vmem:[%s249 + $0x60] sm:$0xff] %v274
                %v276 = vld [vmem:[%s248 + $0x188] sm:$0xff]
                %277 = vst [vmem:[%s249 + $0x68] sm:$0xff] %v276
                %v278 = vld [vmem:[%s248 + $0x1c0] sm:$0xff]
                %279 = vst [vmem:[%s249 + $0x70] sm:$0xff] %v278
                %v280 = vld [vmem:[%s248 + $0x1c8] sm:$0xff]
                %281 = vst [vmem:[%s249 + $0x78] sm:$0xff] %v280
                %v282 = vld [vmem:[%s248 + $0x200] sm:$0xff]
                %283 = vst [vmem:[%s249 + $0x80] sm:$0xff] %v282
                %v284 = vld [vmem:[%s248 + $0x208] sm:$0xff]
                %285 = vst [vmem:[%s249 + $0x88] sm:$0xff] %v284
                %v286 = vld [vmem:[%s248 + $0x240] sm:$0xff]
                %287 = vst [vmem:[%s249 + $0x90] sm:$0xff] %v286
                %v288 = vld [vmem:[%s248 + $0x248] sm:$0xff]
                %289 = vst [vmem:[%s249 + $0x98] sm:$0xff] %v288
                %v290 = vld [vmem:[%s248 + $0x280] sm:$0xff]
                %291 = vst [vmem:[%s249 + $0xa0] sm:$0xff] %v290
                %v292 = vld [vmem:[%s248 + $0x288] sm:$0xff]
                %293 = vst [vmem:[%s249 + $0xa8] sm:$0xff] %v292
                %v294 = vld [vmem:[%s248 + $0x2c0] sm:$0xff]
                %295 = vst [vmem:[%s249 + $0xb0] sm:$0xff] %v294
                %v296 = vld [vmem:[%s248 + $0x2c8] sm:$0xff]
                %297 = vst [vmem:[%s249 + $0xb8] sm:$0xff] %v296
                %v298 = vld [vmem:[%s248 + $0x300] sm:$0xff]
                %299 = vst [vmem:[%s249 + $0xc0] sm:$0xff] %v298
                %v300 = vld [vmem:[%s248 + $0x308] sm:$0xff]
                %301 = vst [vmem:[%s249 + $0xc8] sm:$0xff] %v300
                %v302 = vld [vmem:[%s248 + $0x340] sm:$0xff]
                %303 = vst [vmem:[%s249 + $0xd0] sm:$0xff] %v302
                %v304 = vld [vmem:[%s248 + $0x348] sm:$0xff]
                %305 = vst [vmem:[%s249 + $0xd8] sm:$0xff] %v304
                %v306 = vld [vmem:[%s248 + $0x380] sm:$0xff]
                %307 = vst [vmem:[%s249 + $0xe0] sm:$0xff] %v306
                %v308 = vld [vmem:[%s248 + $0x388] sm:$0xff]
                %309 = vst [vmem:[%s249 + $0xe8] sm:$0xff] %v308
                %v310 = vld [vmem:[%s248 + $0x3c0] sm:$0xff]
                %311 = vst [vmem:[%s249 + $0xf0] sm:$0xff] %v310
                %v312 = vld [vmem:[%s248 + $0x3c8] sm:$0xff]
                %313 = vst [vmem:[%s249 + $0xf8] sm:$0xff] %v312
                %v314 = vld [vmem:[%s248 + $0x400] sm:$0xff]
                %315 = vst [vmem:[%s249 + $0x100] sm:$0xff] %v314
                %v316 = vld [vmem:[%s248 + $0x408] sm:$0xff]
                %317 = vst [vmem:[%s249 + $0x108] sm:$0xff] %v316
                %v318 = vld [vmem:[%s248 + $0x440] sm:$0xff]
                %319 = vst [vmem:[%s249 + $0x110] sm:$0xff] %v318
                %v320 = vld [vmem:[%s248 + $0x448] sm:$0xff]
                %321 = vst [vmem:[%s249 + $0x118] sm:$0xff] %v320
                %v322 = vld [vmem:[%s248 + $0x480] sm:$0xff]
                %323 = vst [vmem:[%s249 + $0x120] sm:$0xff] %v322
                %v324 = vld [vmem:[%s248 + $0x488] sm:$0xff]
                %325 = vst [vmem:[%s249 + $0x128] sm:$0xff] %v324
                %v326 = vld [vmem:[%s248 + $0x4c0] sm:$0xff]
                %327 = vst [vmem:[%s249 + $0x130] sm:$0xff] %v326
                %v328 = vld [vmem:[%s248 + $0x4c8] sm:$0xff]
                %329 = vst [vmem:[%s249 + $0x138] sm:$0xff] %v328
                %v330 = vld [vmem:[%s248 + $0x500] sm:$0xff]
                %331 = vst [vmem:[%s249 + $0x140] sm:$0xff] %v330
                %v332 = vld [vmem:[%s248 + $0x508] sm:$0xff]
                %333 = vst [vmem:[%s249 + $0x148] sm:$0xff] %v332
                %v334 = vld [vmem:[%s248 + $0x540] sm:$0xff]
                %335 = vst [vmem:[%s249 + $0x150] sm:$0xff] %v334
                %v336 = vld [vmem:[%s248 + $0x548] sm:$0xff]
                %337 = vst [vmem:[%s249 + $0x158] sm:$0xff] %v336
                %v338 = vld [vmem:[%s248 + $0x580] sm:$0xff]
                %339 = vst [vmem:[%s249 + $0x160] sm:$0xff] %v338
                %v340 = vld [vmem:[%s248 + $0x588] sm:$0xff]
                %341 = vst [vmem:[%s249 + $0x168] sm:$0xff] %v340
                %v342 = vld [vmem:[%s248 + $0x5c0] sm:$0xff]
                %343 = vst [vmem:[%s249 + $0x170] sm:$0xff] %v342
                %v344 = vld [vmem:[%s248 + $0x5c8] sm:$0xff]
                %345 = vst [vmem:[%s249 + $0x178] sm:$0xff] %v344
                %v346 = vld [vmem:[%s248 + $0x600] sm:$0xff]
                %347 = vst [vmem:[%s249 + $0x180] sm:$0xff] %v346
                %v348 = vld [vmem:[%s248 + $0x608] sm:$0xff]
                %349 = vst [vmem:[%s249 + $0x188] sm:$0xff] %v348
                %v350 = vld [vmem:[%s248 + $0x640] sm:$0xff]
                %351 = vst [vmem:[%s249 + $0x190] sm:$0xff] %v350
                %v352 = vld [vmem:[%s248 + $0x648] sm:$0xff]
                %353 = vst [vmem:[%s249 + $0x198] sm:$0xff] %v352
                %v354 = vld [vmem:[%s248 + $0x680] sm:$0xff]
                %355 = vst [vmem:[%s249 + $0x1a0] sm:$0xff] %v354
                %v356 = vld [vmem:[%s248 + $0x688] sm:$0xff]
                %357 = vst [vmem:[%s249 + $0x1a8] sm:$0xff] %v356
                %v358 = vld [vmem:[%s248 + $0x6c0] sm:$0xff]
                %359 = vst [vmem:[%s249 + $0x1b0] sm:$0xff] %v358
                %v360 = vld [vmem:[%s248 + $0x6c8] sm:$0xff]
                %361 = vst [vmem:[%s249 + $0x1b8] sm:$0xff] %v360
                %v362 = vld [vmem:[%s248 + $0x700] sm:$0xff]
                %363 = vst [vmem:[%s249 + $0x1c0] sm:$0xff] %v362
                %v364 = vld [vmem:[%s248 + $0x708] sm:$0xff]
                %365 = vst [vmem:[%s249 + $0x1c8] sm:$0xff] %v364
                %v366 = vld [vmem:[%s248 + $0x740] sm:$0xff]
                %367 = vst [vmem:[%s249 + $0x1d0] sm:$0xff] %v366
                %v368 = vld [vmem:[%s248 + $0x748] sm:$0xff]
                %369 = vst [vmem:[%s249 + $0x1d8] sm:$0xff] %v368
                %v370 = vld [vmem:[%s248 + $0x780] sm:$0xff]
                %371 = vst [vmem:[%s249 + $0x1e0] sm:$0xff] %v370
                %v372 = vld [vmem:[%s248 + $0x788] sm:$0xff]
                %373 = vst [vmem:[%s249 + $0x1e8] sm:$0xff] %v372
                %v374 = vld [vmem:[%s248 + $0x7c0] sm:$0xff]
                %375 = vst [vmem:[%s249 + $0x1f0] sm:$0xff] %v374
                %v376 = vld [vmem:[%s248 + $0x7c8] sm:$0xff]
                %377 = vst [vmem:[%s249 + $0x1f8] sm:$0xff] %v376
                %v378 = vld [vmem:[%s248 + $0x800] sm:$0xff]
                %379 = vst [vmem:[%s249 + $0x200] sm:$0xff] %v378
                %v380 = vld [vmem:[%s248 + $0x808] sm:$0xff]
                %381 = vst [vmem:[%s249 + $0x208] sm:$0xff] %v380
                %v382 = vld [vmem:[%s248 + $0x840] sm:$0xff]
                %383 = vst [vmem:[%s249 + $0x210] sm:$0xff] %v382
                %v384 = vld [vmem:[%s248 + $0x848] sm:$0xff]
                %385 = vst [vmem:[%s249 + $0x218] sm:$0xff] %v384
                %v386 = vld [vmem:[%s248 + $0x880] sm:$0xff]
                %387 = vst [vmem:[%s249 + $0x220] sm:$0xff] %v386
                %v388 = vld [vmem:[%s248 + $0x888] sm:$0xff]
                %389 = vst [vmem:[%s249 + $0x228] sm:$0xff] %v388
                %v390 = vld [vmem:[%s248 + $0x8c0] sm:$0xff]
                %391 = vst [vmem:[%s249 + $0x230] sm:$0xff] %v390
                %v392 = vld [vmem:[%s248 + $0x8c8] sm:$0xff]
                %393 = vst [vmem:[%s249 + $0x238] sm:$0xff] %v392
                %v394 = vld [vmem:[%s248 + $0x900] sm:$0xff]
                %395 = vst [vmem:[%s249 + $0x240] sm:$0xff] %v394
                %v396 = vld [vmem:[%s248 + $0x908] sm:$0xff]
                %397 = vst [vmem:[%s249 + $0x248] sm:$0xff] %v396
                %v398 = vld [vmem:[%s248 + $0x940] sm:$0xff]
                %399 = vst [vmem:[%s249 + $0x250] sm:$0xff] %v398
                %v400 = vld [vmem:[%s248 + $0x948] sm:$0xff]
                %401 = vst [vmem:[%s249 + $0x258] sm:$0xff] %v400
                %v402 = vld [vmem:[%s248 + $0x980] sm:$0xff]
                %403 = vst [vmem:[%s249 + $0x260] sm:$0xff] %v402
                %v404 = vld [vmem:[%s248 + $0x988] sm:$0xff]
                %405 = vst [vmem:[%s249 + $0x268] sm:$0xff] %v404
                %v406 = vld [vmem:[%s248 + $0x9c0] sm:$0xff]
                %407 = vst [vmem:[%s249 + $0x270] sm:$0xff] %v406
                %v408 = vld [vmem:[%s248 + $0x9c8] sm:$0xff]
                %409 = vst [vmem:[%s249 + $0x278] sm:$0xff] %v408
                %v410 = vld [vmem:[%s248 + $0xa00] sm:$0xff]
                %411 = vst [vmem:[%s249 + $0x280] sm:$0xff] %v410
                %v412 = vld [vmem:[%s248 + $0xa08] sm:$0xff]
                %413 = vst [vmem:[%s249 + $0x288] sm:$0xff] %v412
                %v414 = vld [vmem:[%s248 + $0xa40] sm:$0xff]
                %415 = vst [vmem:[%s249 + $0x290] sm:$0xff] %v414
                %v416 = vld [vmem:[%s248 + $0xa48] sm:$0xff]
                %417 = vst [vmem:[%s249 + $0x298] sm:$0xff] %v416
                %v418 = vld [vmem:[%s248 + $0xa80] sm:$0xff]
                %419 = vst [vmem:[%s249 + $0x2a0] sm:$0xff] %v418
                %v420 = vld [vmem:[%s248 + $0xa88] sm:$0xff]
                %421 = vst [vmem:[%s249 + $0x2a8] sm:$0xff] %v420
                %v422 = vld [vmem:[%s248 + $0xac0] sm:$0xff]
                %423 = vst [vmem:[%s249 + $0x2b0] sm:$0xff] %v422
                %v424 = vld [vmem:[%s248 + $0xac8] sm:$0xff]
                %425 = vst [vmem:[%s249 + $0x2b8] sm:$0xff] %v424
                %v426 = vld [vmem:[%s248 + $0xb00] sm:$0xff]
                %427 = vst [vmem:[%s249 + $0x2c0] sm:$0xff] %v426
                %v428 = vld [vmem:[%s248 + $0xb08] sm:$0xff]
                %429 = vst [vmem:[%s249 + $0x2c8] sm:$0xff] %v428
                %v430 = vld [vmem:[%s248 + $0xb40] sm:$0xff]
                %431 = vst [vmem:[%s249 + $0x2d0] sm:$0xff] %v430
                %v432 = vld [vmem:[%s248 + $0xb48] sm:$0xff]
                %433 = vst [vmem:[%s249 + $0x2d8] sm:$0xff] %v432
                %v434 = vld [vmem:[%s248 + $0xb80] sm:$0xff]
                %435 = vst [vmem:[%s249 + $0x2e0] sm:$0xff] %v434
                %v436 = vld [vmem:[%s248 + $0xb88] sm:$0xff]
                %437 = vst [vmem:[%s249 + $0x2e8] sm:$0xff] %v436
                %v438 = vld [vmem:[%s248 + $0xbc0] sm:$0xff]
                %439 = vst [vmem:[%s249 + $0x2f0] sm:$0xff] %v438
                %v440 = vld [vmem:[%s248 + $0xbc8] sm:$0xff]
                %441 = vst [vmem:[%s249 + $0x2f8] sm:$0xff] %v440
                %v442 = vld [vmem:[%s248 + $0xc00] sm:$0xff]
                %443 = vst [vmem:[%s249 + $0x300] sm:$0xff] %v442
                %v444 = vld [vmem:[%s248 + $0xc08] sm:$0xff]
                %445 = vst [vmem:[%s249 + $0x308] sm:$0xff] %v444
                %v446 = vld [vmem:[%s248 + $0xc40] sm:$0xff]
                %447 = vst [vmem:[%s249 + $0x310] sm:$0xff] %v446
                %v448 = vld [vmem:[%s248 + $0xc48] sm:$0xff]
                %449 = vst [vmem:[%s249 + $0x318] sm:$0xff] %v448
                %v450 = vld [vmem:[%s248 + $0xc80] sm:$0xff]
                %451 = vst [vmem:[%s249 + $0x320] sm:$0xff] %v450
                %v452 = vld [vmem:[%s248 + $0xc88] sm:$0xff]
                %453 = vst [vmem:[%s249 + $0x328] sm:$0xff] %v452
                %v454 = vld [vmem:[%s248 + $0xcc0] sm:$0xff]
                %455 = vst [vmem:[%s249 + $0x330] sm:$0xff] %v454
                %v456 = vld [vmem:[%s248 + $0xcc8] sm:$0xff]
                %457 = vst [vmem:[%s249 + $0x338] sm:$0xff] %v456
                %v458 = vld [vmem:[%s248 + $0xd00] sm:$0xff]
                %459 = vst [vmem:[%s249 + $0x340] sm:$0xff] %v458
                %v460 = vld [vmem:[%s248 + $0xd08] sm:$0xff]
                %461 = vst [vmem:[%s249 + $0x348] sm:$0xff] %v460
                %v462 = vld [vmem:[%s248 + $0xd40] sm:$0xff]
                %463 = vst [vmem:[%s249 + $0x350] sm:$0xff] %v462
                %v464 = vld [vmem:[%s248 + $0xd48] sm:$0xff]
                %465 = vst [vmem:[%s249 + $0x358] sm:$0xff] %v464
                %v466 = vld [vmem:[%s248 + $0xd80] sm:$0xff]
                %467 = vst [vmem:[%s249 + $0x360] sm:$0xff] %v466
                %v468 = vld [vmem:[%s248 + $0xd88] sm:$0xff]
                %469 = vst [vmem:[%s249 + $0x368] sm:$0xff] %v468
                %v470 = vld [vmem:[%s248 + $0xdc0] sm:$0xff]
                %471 = vst [vmem:[%s249 + $0x370] sm:$0xff] %v470
                %v472 = vld [vmem:[%s248 + $0xdc8] sm:$0xff]
                %473 = vst [vmem:[%s249 + $0x378] sm:$0xff] %v472
                %v474 = vld [vmem:[%s248 + $0xe00] sm:$0xff]
                %475 = vst [vmem:[%s249 + $0x380] sm:$0xff] %v474
                %v476 = vld [vmem:[%s248 + $0xe08] sm:$0xff]
                %477 = vst [vmem:[%s249 + $0x388] sm:$0xff] %v476
                %v478 = vld [vmem:[%s248 + $0xe40] sm:$0xff]
                %479 = vst [vmem:[%s249 + $0x390] sm:$0xff] %v478
                %v480 = vld [vmem:[%s248 + $0xe48] sm:$0xff]
                %481 = vst [vmem:[%s249 + $0x398] sm:$0xff] %v480
                %v482 = vld [vmem:[%s248 + $0xe80] sm:$0xff]
                %483 = vst [vmem:[%s249 + $0x3a0] sm:$0xff] %v482
                %v484 = vld [vmem:[%s248 + $0xe88] sm:$0xff]
                %485 = vst [vmem:[%s249 + $0x3a8] sm:$0xff] %v484
                %v486 = vld [vmem:[%s248 + $0xec0] sm:$0xff]
                %487 = vst [vmem:[%s249 + $0x3b0] sm:$0xff] %v486
                %v488 = vld [vmem:[%s248 + $0xec8] sm:$0xff]
                %489 = vst [vmem:[%s249 + $0x3b8] sm:$0xff] %v488
                %v490 = vld [vmem:[%s248 + $0xf00] sm:$0xff]
                %491 = vst [vmem:[%s249 + $0x3c0] sm:$0xff] %v490
                %v492 = vld [vmem:[%s248 + $0xf08] sm:$0xff]
                %493 = vst [vmem:[%s249 + $0x3c8] sm:$0xff] %v492
                %v494 = vld [vmem:[%s248 + $0xf40] sm:$0xff]
                %495 = vst [vmem:[%s249 + $0x3d0] sm:$0xff] %v494
                %v496 = vld [vmem:[%s248 + $0xf48] sm:$0xff]
                %497 = vst [vmem:[%s249 + $0x3d8] sm:$0xff] %v496
                %v498 = vld [vmem:[%s248 + $0xf80] sm:$0xff]
                %499 = vst [vmem:[%s249 + $0x3e0] sm:$0xff] %v498
                %v500 = vld [vmem:[%s248 + $0xf88] sm:$0xff]
                %501 = vst [vmem:[%s249 + $0x3e8] sm:$0xff] %v500
                %v502 = vld [vmem:[%s248 + $0xfc0] sm:$0xff]
                %503 = vst [vmem:[%s249 + $0x3f0] sm:$0xff] %v502
                %v504 = vld [vmem:[%s248 + $0xfc8] sm:$0xff]
                %505 = vst [vmem:[%s249 + $0x3f8] sm:$0xff] %v504
                %v506 = vld [vmem:[%s248 + $0x1000] sm:$0xff]
                %507 = vst [vmem:[%s249 + $0x400] sm:$0xff] %v506
                %v508 = vld [vmem:[%s248 + $0x1008] sm:$0xff]
                %509 = vst [vmem:[%s249 + $0x408] sm:$0xff] %v508
                %v510 = vld [vmem:[%s248 + $0x1040] sm:$0xff]
                %511 = vst [vmem:[%s249 + $0x410] sm:$0xff] %v510
                %v512 = vld [vmem:[%s248 + $0x1048] sm:$0xff]
                %513 = vst [vmem:[%s249 + $0x418] sm:$0xff] %v512
                %v514 = vld [vmem:[%s248 + $0x1080] sm:$0xff]
                %515 = vst [vmem:[%s249 + $0x420] sm:$0xff] %v514
                %v516 = vld [vmem:[%s248 + $0x1088] sm:$0xff]
                %517 = vst [vmem:[%s249 + $0x428] sm:$0xff] %v516
                %v518 = vld [vmem:[%s248 + $0x10c0] sm:$0xff]
                %519 = vst [vmem:[%s249 + $0x430] sm:$0xff] %v518
                %v520 = vld [vmem:[%s248 + $0x10c8] sm:$0xff]
                %521 = vst [vmem:[%s249 + $0x438] sm:$0xff] %v520
                %v522 = vld [vmem:[%s248 + $0x1100] sm:$0xff]
                %523 = vst [vmem:[%s249 + $0x440] sm:$0xff] %v522
                %v524 = vld [vmem:[%s248 + $0x1108] sm:$0xff]
                %525 = vst [vmem:[%s249 + $0x448] sm:$0xff] %v524
                %v526 = vld [vmem:[%s248 + $0x1140] sm:$0xff]
                %527 = vst [vmem:[%s249 + $0x450] sm:$0xff] %v526
                %v528 = vld [vmem:[%s248 + $0x1148] sm:$0xff]
                %529 = vst [vmem:[%s249 + $0x458] sm:$0xff] %v528
                %v530 = vld [vmem:[%s248 + $0x1180] sm:$0xff]
                %531 = vst [vmem:[%s249 + $0x460] sm:$0xff] %v530
                %v532 = vld [vmem:[%s248 + $0x1188] sm:$0xff]
                %533 = vst [vmem:[%s249 + $0x468] sm:$0xff] %v532
                %v534 = vld [vmem:[%s248 + $0x11c0] sm:$0xff]
                %535 = vst [vmem:[%s249 + $0x470] sm:$0xff] %v534
                %v536 = vld [vmem:[%s248 + $0x11c8] sm:$0xff]
                %537 = vst [vmem:[%s249 + $0x478] sm:$0xff] %v536
                %v538 = vld [vmem:[%s248 + $0x1200] sm:$0xff]
                %539 = vst [vmem:[%s249 + $0x480] sm:$0xff] %v538
                %v540 = vld [vmem:[%s248 + $0x1208] sm:$0xff]
                %541 = vst [vmem:[%s249 + $0x488] sm:$0xff] %v540
                %v542 = vld [vmem:[%s248 + $0x1240] sm:$0xff]
                %543 = vst [vmem:[%s249 + $0x490] sm:$0xff] %v542
                %v544 = vld [vmem:[%s248 + $0x1248] sm:$0xff]
                %545 = vst [vmem:[%s249 + $0x498] sm:$0xff] %v544
                %v546 = vld [vmem:[%s248 + $0x1280] sm:$0xff]
                %547 = vst [vmem:[%s249 + $0x4a0] sm:$0xff] %v546
                %v548 = vld [vmem:[%s248 + $0x1288] sm:$0xff]
                %549 = vst [vmem:[%s249 + $0x4a8] sm:$0xff] %v548
                %v550 = vld [vmem:[%s248 + $0x12c0] sm:$0xff]
                %551 = vst [vmem:[%s249 + $0x4b0] sm:$0xff] %v550
                %v552 = vld [vmem:[%s248 + $0x12c8] sm:$0xff]
                %553 = vst [vmem:[%s249 + $0x4b8] sm:$0xff] %v552
                %v554 = vld [vmem:[%s248 + $0x1300] sm:$0xff]
                %555 = vst [vmem:[%s249 + $0x4c0] sm:$0xff] %v554
                %v556 = vld [vmem:[%s248 + $0x1308] sm:$0xff]
                %557 = vst [vmem:[%s249 + $0x4c8] sm:$0xff] %v556
                %v558 = vld [vmem:[%s248 + $0x1340] sm:$0xff]
                %559 = vst [vmem:[%s249 + $0x4d0] sm:$0xff] %v558
                %v560 = vld [vmem:[%s248 + $0x1348] sm:$0xff]
                %561 = vst [vmem:[%s249 + $0x4d8] sm:$0xff] %v560
                %v562 = vld [vmem:[%s248 + $0x1380] sm:$0xff]
                %563 = vst [vmem:[%s249 + $0x4e0] sm:$0xff] %v562
                %v564 = vld [vmem:[%s248 + $0x1388] sm:$0xff]
                %565 = vst [vmem:[%s249 + $0x4e8] sm:$0xff] %v564
                %v566 = vld [vmem:[%s248 + $0x13c0] sm:$0xff]
                %567 = vst [vmem:[%s249 + $0x4f0] sm:$0xff] %v566
                %v568 = vld [vmem:[%s248 + $0x13c8] sm:$0xff]
                %569 = vst [vmem:[%s249 + $0x4f8] sm:$0xff] %v568
                %v570 = vld [vmem:[%s248 + $0x1400] sm:$0xff]
                %571 = vst [vmem:[%s249 + $0x500] sm:$0xff] %v570
                %v572 = vld [vmem:[%s248 + $0x1408] sm:$0xff]
                %573 = vst [vmem:[%s249 + $0x508] sm:$0xff] %v572
                %v574 = vld [vmem:[%s248 + $0x1440] sm:$0xff]
                %575 = vst [vmem:[%s249 + $0x510] sm:$0xff] %v574
                %v576 = vld [vmem:[%s248 + $0x1448] sm:$0xff]
                %577 = vst [vmem:[%s249 + $0x518] sm:$0xff] %v576
                %v578 = vld [vmem:[%s248 + $0x1480] sm:$0xff]
                %579 = vst [vmem:[%s249 + $0x520] sm:$0xff] %v578
                %v580 = vld [vmem:[%s248 + $0x1488] sm:$0xff]
                %581 = vst [vmem:[%s249 + $0x528] sm:$0xff] %v580
                %v582 = vld [vmem:[%s248 + $0x14c0] sm:$0xff]
                %583 = vst [vmem:[%s249 + $0x530] sm:$0xff] %v582
                %v584 = vld [vmem:[%s248 + $0x14c8] sm:$0xff]
                %585 = vst [vmem:[%s249 + $0x538] sm:$0xff] %v584
                %v586 = vld [vmem:[%s248 + $0x1500] sm:$0xff]
                %587 = vst [vmem:[%s249 + $0x540] sm:$0xff] %v586
                %v588 = vld [vmem:[%s248 + $0x1508] sm:$0xff]
                %589 = vst [vmem:[%s249 + $0x548] sm:$0xff] %v588
                %v590 = vld [vmem:[%s248 + $0x1540] sm:$0xff]
                %591 = vst [vmem:[%s249 + $0x550] sm:$0xff] %v590
                %v592 = vld [vmem:[%s248 + $0x1548] sm:$0xff]
                %593 = vst [vmem:[%s249 + $0x558] sm:$0xff] %v592
                %v594 = vld [vmem:[%s248 + $0x1580] sm:$0xff]
                %595 = vst [vmem:[%s249 + $0x560] sm:$0xff] %v594
                %v596 = vld [vmem:[%s248 + $0x1588] sm:$0xff]
                %597 = vst [vmem:[%s249 + $0x568] sm:$0xff] %v596
                %v598 = vld [vmem:[%s248 + $0x15c0] sm:$0xff]
                %599 = vst [vmem:[%s249 + $0x570] sm:$0xff] %v598
                %v600 = vld [vmem:[%s248 + $0x15c8] sm:$0xff]
                %601 = vst [vmem:[%s249 + $0x578] sm:$0xff] %v600
                %v602 = vld [vmem:[%s248 + $0x1600] sm:$0xff]
                %603 = vst [vmem:[%s249 + $0x580] sm:$0xff] %v602
                %v604 = vld [vmem:[%s248 + $0x1608] sm:$0xff]
                %605 = vst [vmem:[%s249 + $0x588] sm:$0xff] %v604
                %v606 = vld [vmem:[%s248 + $0x1640] sm:$0xff]
                %607 = vst [vmem:[%s249 + $0x590] sm:$0xff] %v606
                %v608 = vld [vmem:[%s248 + $0x1648] sm:$0xff]
                %609 = vst [vmem:[%s249 + $0x598] sm:$0xff] %v608
                %v610 = vld [vmem:[%s248 + $0x1680] sm:$0xff]
                %611 = vst [vmem:[%s249 + $0x5a0] sm:$0xff] %v610
                %v612 = vld [vmem:[%s248 + $0x1688] sm:$0xff]
                %613 = vst [vmem:[%s249 + $0x5a8] sm:$0xff] %v612
                %v614 = vld [vmem:[%s248 + $0x16c0] sm:$0xff]
                %615 = vst [vmem:[%s249 + $0x5b0] sm:$0xff] %v614
                %v616 = vld [vmem:[%s248 + $0x16c8] sm:$0xff]
                %617 = vst [vmem:[%s249 + $0x5b8] sm:$0xff] %v616
                %v618 = vld [vmem:[%s248 + $0x1700] sm:$0xff]
                %619 = vst [vmem:[%s249 + $0x5c0] sm:$0xff] %v618
                %v620 = vld [vmem:[%s248 + $0x1708] sm:$0xff]
                %621 = vst [vmem:[%s249 + $0x5c8] sm:$0xff] %v620
                %v622 = vld [vmem:[%s248 + $0x1740] sm:$0xff]
                %623 = vst [vmem:[%s249 + $0x5d0] sm:$0xff] %v622
                %v624 = vld [vmem:[%s248 + $0x1748] sm:$0xff]
                %625 = vst [vmem:[%s249 + $0x5d8] sm:$0xff] %v624
                %v626 = vld [vmem:[%s248 + $0x1780] sm:$0xff]
                %627 = vst [vmem:[%s249 + $0x5e0] sm:$0xff] %v626
                %v628 = vld [vmem:[%s248 + $0x1788] sm:$0xff]
                %629 = vst [vmem:[%s249 + $0x5e8] sm:$0xff] %v628
                %v630 = vld [vmem:[%s248 + $0x17c0] sm:$0xff]
                %631 = vst [vmem:[%s249 + $0x5f0] sm:$0xff] %v630
                %v632 = vld [vmem:[%s248 + $0x17c8] sm:$0xff]
                %633 = vst [vmem:[%s249 + $0x5f8] sm:$0xff] %v632
                %v634 = vld [vmem:[%s248 + $0x1800] sm:$0xff]
                %635 = vst [vmem:[%s249 + $0x600] sm:$0xff] %v634
                %v636 = vld [vmem:[%s248 + $0x1808] sm:$0xff]
                %637 = vst [vmem:[%s249 + $0x608] sm:$0xff] %v636
                %v638 = vld [vmem:[%s248 + $0x1840] sm:$0xff]
                %639 = vst [vmem:[%s249 + $0x610] sm:$0xff] %v638
                %v640 = vld [vmem:[%s248 + $0x1848] sm:$0xff]
                %641 = vst [vmem:[%s249 + $0x618] sm:$0xff] %v640
                %v642 = vld [vmem:[%s248 + $0x1880] sm:$0xff]
                %643 = vst [vmem:[%s249 + $0x620] sm:$0xff] %v642
                %v644 = vld [vmem:[%s248 + $0x1888] sm:$0xff]
                %645 = vst [vmem:[%s249 + $0x628] sm:$0xff] %v644
                %v646 = vld [vmem:[%s248 + $0x18c0] sm:$0xff]
                %647 = vst [vmem:[%s249 + $0x630] sm:$0xff] %v646
                %v648 = vld [vmem:[%s248 + $0x18c8] sm:$0xff]
                %649 = vst [vmem:[%s249 + $0x638] sm:$0xff] %v648
                %v650 = vld [vmem:[%s248 + $0x1900] sm:$0xff]
                %651 = vst [vmem:[%s249 + $0x640] sm:$0xff] %v650
                %v652 = vld [vmem:[%s248 + $0x1908] sm:$0xff]
                %653 = vst [vmem:[%s249 + $0x648] sm:$0xff] %v652
                %v654 = vld [vmem:[%s248 + $0x1940] sm:$0xff]
                %655 = vst [vmem:[%s249 + $0x650] sm:$0xff] %v654
                %v656 = vld [vmem:[%s248 + $0x1948] sm:$0xff]
                %657 = vst [vmem:[%s249 + $0x658] sm:$0xff] %v656
                %v658 = vld [vmem:[%s248 + $0x1980] sm:$0xff]
                %659 = vst [vmem:[%s249 + $0x660] sm:$0xff] %v658
                %v660 = vld [vmem:[%s248 + $0x1988] sm:$0xff]
                %661 = vst [vmem:[%s249 + $0x668] sm:$0xff] %v660
                %v662 = vld [vmem:[%s248 + $0x19c0] sm:$0xff]
                %663 = vst [vmem:[%s249 + $0x670] sm:$0xff] %v662
                %v664 = vld [vmem:[%s248 + $0x19c8] sm:$0xff]
                %665 = vst [vmem:[%s249 + $0x678] sm:$0xff] %v664
                %v666 = vld [vmem:[%s248 + $0x1a00] sm:$0xff]
                %667 = vst [vmem:[%s249 + $0x680] sm:$0xff] %v666
                %v668 = vld [vmem:[%s248 + $0x1a08] sm:$0xff]
                %669 = vst [vmem:[%s249 + $0x688] sm:$0xff] %v668
                %v670 = vld [vmem:[%s248 + $0x1a40] sm:$0xff]
                %671 = vst [vmem:[%s249 + $0x690] sm:$0xff] %v670
                %v672 = vld [vmem:[%s248 + $0x1a48] sm:$0xff]
                %673 = vst [vmem:[%s249 + $0x698] sm:$0xff] %v672
                %v674 = vld [vmem:[%s248 + $0x1a80] sm:$0xff]
                %675 = vst [vmem:[%s249 + $0x6a0] sm:$0xff] %v674
                %v676 = vld [vmem:[%s248 + $0x1a88] sm:$0xff]
                %677 = vst [vmem:[%s249 + $0x6a8] sm:$0xff] %v676
                %v678 = vld [vmem:[%s248 + $0x1ac0] sm:$0xff]
                %679 = vst [vmem:[%s249 + $0x6b0] sm:$0xff] %v678
                %v680 = vld [vmem:[%s248 + $0x1ac8] sm:$0xff]
                %681 = vst [vmem:[%s249 + $0x6b8] sm:$0xff] %v680
                %v682 = vld [vmem:[%s248 + $0x1b00] sm:$0xff]
                %683 = vst [vmem:[%s249 + $0x6c0] sm:$0xff] %v682
                %v684 = vld [vmem:[%s248 + $0x1b08] sm:$0xff]
                %685 = vst [vmem:[%s249 + $0x6c8] sm:$0xff] %v684
                %v686 = vld [vmem:[%s248 + $0x1b40] sm:$0xff]
                %687 = vst [vmem:[%s249 + $0x6d0] sm:$0xff] %v686
                %v688 = vld [vmem:[%s248 + $0x1b48] sm:$0xff]
                %689 = vst [vmem:[%s249 + $0x6d8] sm:$0xff] %v688
                %v690 = vld [vmem:[%s248 + $0x1b80] sm:$0xff]
                %691 = vst [vmem:[%s249 + $0x6e0] sm:$0xff] %v690
                %v692 = vld [vmem:[%s248 + $0x1b88] sm:$0xff]
                %693 = vst [vmem:[%s249 + $0x6e8] sm:$0xff] %v692
                %v694 = vld [vmem:[%s248 + $0x1bc0] sm:$0xff]
                %695 = vst [vmem:[%s249 + $0x6f0] sm:$0xff] %v694
                %v696 = vld [vmem:[%s248 + $0x1bc8] sm:$0xff]
                %697 = vst [vmem:[%s249 + $0x6f8] sm:$0xff] %v696
                %v698 = vld [vmem:[%s248 + $0x1c00] sm:$0xff]
                %699 = vst [vmem:[%s249 + $0x700] sm:$0xff] %v698
                %v700 = vld [vmem:[%s248 + $0x1c08] sm:$0xff]
                %701 = vst [vmem:[%s249 + $0x708] sm:$0xff] %v700
                %v702 = vld [vmem:[%s248 + $0x1c40] sm:$0xff]
                %703 = vst [vmem:[%s249 + $0x710] sm:$0xff] %v702
                %v704 = vld [vmem:[%s248 + $0x1c48] sm:$0xff]
                %705 = vst [vmem:[%s249 + $0x718] sm:$0xff] %v704
                %v706 = vld [vmem:[%s248 + $0x1c80] sm:$0xff]
                %707 = vst [vmem:[%s249 + $0x720] sm:$0xff] %v706
                %v708 = vld [vmem:[%s248 + $0x1c88] sm:$0xff]
                %709 = vst [vmem:[%s249 + $0x728] sm:$0xff] %v708
                %v710 = vld [vmem:[%s248 + $0x1cc0] sm:$0xff]
                %711 = vst [vmem:[%s249 + $0x730] sm:$0xff] %v710
                %v712 = vld [vmem:[%s248 + $0x1cc8] sm:$0xff]
                %713 = vst [vmem:[%s249 + $0x738] sm:$0xff] %v712
                %v714 = vld [vmem:[%s248 + $0x1d00] sm:$0xff]
                %715 = vst [vmem:[%s249 + $0x740] sm:$0xff] %v714
                %v716 = vld [vmem:[%s248 + $0x1d08] sm:$0xff]
                %717 = vst [vmem:[%s249 + $0x748] sm:$0xff] %v716
                %v718 = vld [vmem:[%s248 + $0x1d40] sm:$0xff]
                %719 = vst [vmem:[%s249 + $0x750] sm:$0xff] %v718
                %v720 = vld [vmem:[%s248 + $0x1d48] sm:$0xff]
                %721 = vst [vmem:[%s249 + $0x758] sm:$0xff] %v720
                %v722 = vld [vmem:[%s248 + $0x1d80] sm:$0xff]
                %723 = vst [vmem:[%s249 + $0x760] sm:$0xff] %v722
                %v724 = vld [vmem:[%s248 + $0x1d88] sm:$0xff]
                %725 = vst [vmem:[%s249 + $0x768] sm:$0xff] %v724
                %v726 = vld [vmem:[%s248 + $0x1dc0] sm:$0xff]
                %727 = vst [vmem:[%s249 + $0x770] sm:$0xff] %v726
                %v728 = vld [vmem:[%s248 + $0x1dc8] sm:$0xff]
                %729 = vst [vmem:[%s249 + $0x778] sm:$0xff] %v728
                %v730 = vld [vmem:[%s248 + $0x1e00] sm:$0xff]
                %731 = vst [vmem:[%s249 + $0x780] sm:$0xff] %v730
                %v732 = vld [vmem:[%s248 + $0x1e08] sm:$0xff]
                %733 = vst [vmem:[%s249 + $0x788] sm:$0xff] %v732
                %v734 = vld [vmem:[%s248 + $0x1e40] sm:$0xff]
                %735 = vst [vmem:[%s249 + $0x790] sm:$0xff] %v734
                %v736 = vld [vmem:[%s248 + $0x1e48] sm:$0xff]
                %737 = vst [vmem:[%s249 + $0x798] sm:$0xff] %v736
                %v738 = vld [vmem:[%s248 + $0x1e80] sm:$0xff]
                %739 = vst [vmem:[%s249 + $0x7a0] sm:$0xff] %v738
                %v740 = vld [vmem:[%s248 + $0x1e88] sm:$0xff]
                %741 = vst [vmem:[%s249 + $0x7a8] sm:$0xff] %v740
                %v742 = vld [vmem:[%s248 + $0x1ec0] sm:$0xff]
                %743 = vst [vmem:[%s249 + $0x7b0] sm:$0xff] %v742
                %v744 = vld [vmem:[%s248 + $0x1ec8] sm:$0xff]
                %745 = vst [vmem:[%s249 + $0x7b8] sm:$0xff] %v744
                %v746 = vld [vmem:[%s248 + $0x1f00] sm:$0xff]
                %747 = vst [vmem:[%s249 + $0x7c0] sm:$0xff] %v746
                %v748 = vld [vmem:[%s248 + $0x1f08] sm:$0xff]
                %749 = vst [vmem:[%s249 + $0x7c8] sm:$0xff] %v748
                %v750 = vld [vmem:[%s248 + $0x1f40] sm:$0xff]
                %751 = vst [vmem:[%s249 + $0x7d0] sm:$0xff] %v750
                %v752 = vld [vmem:[%s248 + $0x1f48] sm:$0xff]
                %753 = vst [vmem:[%s249 + $0x7d8] sm:$0xff] %v752
                %v754 = vld [vmem:[%s248 + $0x1f80] sm:$0xff]
                %755 = vst [vmem:[%s249 + $0x7e0] sm:$0xff] %v754
                %v756 = vld [vmem:[%s248 + $0x1f88] sm:$0xff]
                %757 = vst [vmem:[%s249 + $0x7e8] sm:$0xff] %v756
                %v758 = vld [vmem:[%s248 + $0x1fc0] sm:$0xff]
                %759 = vst [vmem:[%s249 + $0x7f0] sm:$0xff] %v758
                %v760 = vld [vmem:[%s248 + $0x1fc8] sm:$0xff]
                %761 = vst [vmem:[%s249 + $0x7f8] sm:$0xff] %v760
              $region49: #{convolution3d_forward.7} parent=43 // loop_footer
                %s247 = sadd.s32 1, %s243
              $region50: #{convolution3d_forward.7} parent=43 // loop_footer_branch
                %242 = sbr.rel target = $region46
              $region51: #{convolution3d_forward.7} parent=43 // loop_exit
                _
            $region44: #{convolution3d_forward.7} parent=39 // pred_fallthru
              _
            // Predicated region
            $region52: #{convolution3d_forward.7} parent=39 // pred_check
              _
            $region53: #{convolution3d_forward.7} parent=39 // pred_check_branch
              %763 = sbr.rel target = $region55
            $region54: #{convolution3d_forward.7} parent=39 // pred_region
              _
            $region55: #{convolution3d_forward.7} parent=39 // pred_fallthru
              _
          $region40: #{convolution3d_forward.7} parent=35 // pred_fallthru
            _
          %764 = vnop
        $region36: #{convolution3d_forward.7} parent=31 // pred_fallthru
          _
        // Predicated region
        $region56: #{convolution3d_forward.7} parent=31 // pred_check
          %p765 = pneg %p123
        $region57: #{convolution3d_forward.7} parent=31 // pred_check_branch
          %767 = sbr.rel (%p765) target = $region59
        $region58: #{convolution3d_forward.7} parent=31 // pred_region
          %s768 = smul.u32 4, %s14
          %p769 = scmp.lt.s32.totalorder %s768, 15
          %s770 = scalar_select %p769, %s768, 15
          %s771 = scalar_lea.vmem %s4, %s770
          %s772 = smul.u32 4, %s14
        $region59: #{convolution3d_forward.7} parent=31 // pred_fallthru
          _
        // Predicated region
        $region60: #{convolution3d_forward.7} parent=31 // pred_check
          %p773 = pneg %p149
        $region61: #{convolution3d_forward.7} parent=31 // pred_check_branch
          %775 = sbr.rel (%p773) target = $region63
        $region62: #{convolution3d_forward.7} parent=31 // pred_region
          %s776 = smul.u32 64, %s14
          %p777 = scmp.lt.s32.totalorder %s776, 255
          %s778 = scalar_select %p777, %s776, 255
          %s779 = smul.addr %s778, 4
          %s780 = scalar_lea.vmem %s5, %s779
          %s781 = smul.u32 64, %s14
        $region63: #{convolution3d_forward.7} parent=31 // pred_fallthru
          _
      $region32: #{convolution3d_forward.7} parent=5 // pred_fallthru
        _
      %p782 = scmp.le.s32.totalorder 1, %s14
      %p783 = scmp.lt.s32.totalorder %s14, 5
      %p784 = pnand %p782, %p783
      %p785 = pneg %p784
      // Predicated region
      $region64: #{convolution3d_forward.7} parent=5 // pred_check
        _
      $region65: #{convolution3d_forward.7} parent=5 // pred_check_branch
        %787 = sbr.rel (%p784) target = $region67
      $region66: #{convolution3d_forward.7} parent=5 // pred_region
        %s788 = ssub.s32 %s14, 1
        %s789 = sand.u32 %s90, 1
        %s790 = sand.u32 %s90, 1
        %s791 = smul.addr %s790, 2048
        %s792 = scalar_lea.vmem [#allocation3], %s791
        // Predicated region
        $region68: #{convolution3d_forward.7} parent=66 // pred_check
          %p793 = pneg %p103
        $region69: #{convolution3d_forward.7} parent=66 // pred_check_branch
          %795 = sbr.rel (%p793) target = $region71
        $region70: #{convolution3d_forward.7} parent=66 // pred_region
          _
        $region71: #{convolution3d_forward.7} parent=66 // pred_fallthru
          _
        %p796 = pneg %p35
        %p797 = pneg %p32
        %p798 = pneg %p56
        %p799 = pneg %p53
        %p800 = pneg %p77
        %p801 = pneg %p74
        %s802 = sand.u32 %s90, 1
        %s803 = sand.u32 %s90, 1
        %s804 = smul.addr %s803, 2048
        %s805 = scalar_lea.vmem [#allocation3], %s804
        %p806 = pneg %p103
        %p807 = pneg %p100
        %s808 = smul.u32 4, %s19
        %p809 = scmp.lt.s32.totalorder %s808, 15
        %s810 = scalar_select %p809, %s808, 15
        %s811 = scalar_lea.vmem %s4, %s810
        %p812 = pneg %p129
        %p813 = pneg %p126
        %s814 = smul.u32 64, %s19
        %p815 = scmp.lt.s32.totalorder %s814, 255
        %s816 = scalar_select %p815, %s814, 255
        %s817 = smul.addr %s816, 4
        %s818 = scalar_lea.vmem %s5, %s817
        %p819 = pneg %p155
        %p820 = pneg %p152
        %p821 = pneg %p176
        %p822 = pneg %p173
        %p823 = pneg %p197
        %p824 = pneg %p194
        %s825 = smul.u32 4, %s19
        %s826 = smul.u32 4, %s19
        %p827 = scmp.lt.s32.totalorder %s826, 15
        %s828 = scalar_select %p827, %s826, 15
        %s829 = scalar_lea.vmem %s4, %s828
        %s830 = smul.u32 4, %s19
        %s831 = smul.u32 64, %s19
        %p832 = scmp.lt.s32.totalorder %s831, 255
        %s833 = scalar_select %p832, %s831, 255
        %s834 = smul.addr %s833, 4
        %s835 = scalar_lea.vmem %s5, %s834
        %s836 = smul.u32 64, %s19
        %p837 = scmp.eq.s32.totalorder %s19, 0
        // Predicated region
        $region72: #{convolution3d_forward.7} parent=66 // pred_check
          %p838 = pneg %p837
        $region73: #{convolution3d_forward.7} parent=66 // pred_check_branch
          %840 = sbr.rel (%p838) target = $region75
        $region74: #{convolution3d_forward.7} parent=66 // pred_region
          %v841 = vld [vmem:[%s0] sm:$0x3]
          %v842 = vld [vmem:[%s1] sm:$0xff]
          %v843 = vld [vmem:[%s1 + $0x8] sm:$0xff]
          %v844 = vld [vmem:[%s1 + $0x10] sm:$0xff]
          %v845 = vld [vmem:[%s1 + $0x18] sm:$0xff]
          %v846 = vld [vmem:[%s1 + $0x20] sm:$0xff]
          %v847 = vld [vmem:[%s1 + $0x28] sm:$0xff]
          %v848 = vld [vmem:[%s1 + $0x30] sm:$0xff]
          %v849 = vld [vmem:[%s1 + $0x38] sm:$0xff]
          %v850 = vld [vmem:[%s1 + $0x40] sm:$0xff]
          %v851 = vld [vmem:[%s1 + $0x48] sm:$0xff]
          %v852 = vld [vmem:[%s1 + $0x50] sm:$0xff]
          %v853 = vld [vmem:[%s1 + $0x58] sm:$0xff]
          %v854 = vld [vmem:[%s1 + $0x60] sm:$0xff]
          %v855 = vld [vmem:[%s1 + $0x68] sm:$0xff]
          %v856 = vld [vmem:[%s1 + $0x70] sm:$0xff]
          %v857 = vld [vmem:[%s1 + $0x78] sm:$0xff]
          %v858 = vld [vmem:[%s1 + $0x80] sm:$0xff]
          %v859 = vld [vmem:[%s1 + $0x88] sm:$0xff]
          %v860 = vld [vmem:[%s1 + $0x90] sm:$0xff]
          %v861 = vld [vmem:[%s1 + $0x98] sm:$0xff]
          %v862 = vld [vmem:[%s1 + $0xa0] sm:$0xff]
          %v863 = vld [vmem:[%s1 + $0xa8] sm:$0xff]
          %v864 = vld [vmem:[%s1 + $0xb0] sm:$0xff]
          %v865 = vld [vmem:[%s1 + $0xb8] sm:$0xff]
          %v866 = vld [vmem:[%s1 + $0xc0] sm:$0xff]
          %v867 = vld [vmem:[%s1 + $0xc8] sm:$0xff]
          %v868 = vld [vmem:[%s1 + $0xd0] sm:$0xff]
          %v869 = vld [vmem:[%s1 + $0xd8] sm:$0xff]
          %v870 = vld [vmem:[%s1 + $0xe0] sm:$0xff]
          %v871 = vld [vmem:[%s1 + $0xe8] sm:$0xff]
          %v872 = vld [vmem:[%s1 + $0xf0] sm:$0xff]
          %v873 = vld [vmem:[%s1 + $0xf8] sm:$0xff]
          %v874 = vld [vmem:[%s1 + $0x100] sm:$0xff]
          %v875 = vld [vmem:[%s1 + $0x108] sm:$0xff]
          %v876 = vld [vmem:[%s1 + $0x110] sm:$0xff]
          %v877 = vld [vmem:[%s1 + $0x118] sm:$0xff]
          %v878 = vld [vmem:[%s1 + $0x120] sm:$0xff]
          %v879 = vld [vmem:[%s1 + $0x128] sm:$0xff]
          %v880 = vld [vmem:[%s1 + $0x130] sm:$0xff]
          %v881 = vld [vmem:[%s1 + $0x138] sm:$0xff]
          %v882 = vld [vmem:[%s1 + $0x140] sm:$0xff]
          %v883 = vld [vmem:[%s1 + $0x148] sm:$0xff]
          %v884 = vld [vmem:[%s1 + $0x150] sm:$0xff]
          %v885 = vld [vmem:[%s1 + $0x158] sm:$0xff]
          %v886 = vld [vmem:[%s1 + $0x160] sm:$0xff]
          %v887 = vld [vmem:[%s1 + $0x168] sm:$0xff]
          %v888 = vld [vmem:[%s1 + $0x170] sm:$0xff]
          %v889 = vld [vmem:[%s1 + $0x178] sm:$0xff]
          %v890 = vld [vmem:[%s1 + $0x180] sm:$0xff]
          %v891 = vld [vmem:[%s1 + $0x188] sm:$0xff]
          %v892 = vld [vmem:[%s1 + $0x190] sm:$0xff]
          %v893 = vld [vmem:[%s1 + $0x198] sm:$0xff]
          %v894 = vld [vmem:[%s1 + $0x1a0] sm:$0xff]
          %v895 = vld [vmem:[%s1 + $0x1a8] sm:$0xff]
          %v896 = vld [vmem:[%s1 + $0x1b0] sm:$0xff]
          %v897 = vld [vmem:[%s1 + $0x1b8] sm:$0xff]
          %v898 = vld [vmem:[%s1 + $0x1c0] sm:$0xff]
          %v899 = vld [vmem:[%s1 + $0x1c8] sm:$0xff]
          %v900 = vld [vmem:[%s1 + $0x1d0] sm:$0xff]
          %v901 = vld [vmem:[%s1 + $0x1d8] sm:$0xff]
          %v902 = vld [vmem:[%s1 + $0x1e0] sm:$0xff]
          %v903 = vld [vmem:[%s1 + $0x1e8] sm:$0xff]
          %v904 = vld [vmem:[%s1 + $0x1f0] sm:$0xff]
          %v905 = vld [vmem:[%s1 + $0x1f8] sm:$0xff]
          %v906 = vld [vmem:[%s1 + $0x200] sm:$0xff]
          %v907 = vld [vmem:[%s1 + $0x208] sm:$0xff]
          %v908 = vld [vmem:[%s1 + $0x210] sm:$0xff]
          %v909 = vld [vmem:[%s1 + $0x218] sm:$0xff]
          %v910 = vld [vmem:[%s1 + $0x220] sm:$0xff]
          %v911 = vld [vmem:[%s1 + $0x228] sm:$0xff]
          %v912 = vld [vmem:[%s1 + $0x230] sm:$0xff]
          %v913 = vld [vmem:[%s1 + $0x238] sm:$0xff]
          %v914 = vld [vmem:[%s1 + $0x240] sm:$0xff]
          %v915 = vld [vmem:[%s1 + $0x248] sm:$0xff]
          %v916 = vld [vmem:[%s1 + $0x250] sm:$0xff]
          %v917 = vld [vmem:[%s1 + $0x258] sm:$0xff]
          %v918 = vld [vmem:[%s1 + $0x260] sm:$0xff]
          %v919 = vld [vmem:[%s1 + $0x268] sm:$0xff]
          %v920 = vld [vmem:[%s1 + $0x270] sm:$0xff]
          %v921 = vld [vmem:[%s1 + $0x278] sm:$0xff]
          %v922 = vld [vmem:[%s1 + $0x280] sm:$0xff]
          %v923 = vld [vmem:[%s1 + $0x288] sm:$0xff]
          %v924 = vld [vmem:[%s1 + $0x290] sm:$0xff]
          %v925 = vld [vmem:[%s1 + $0x298] sm:$0xff]
          %v926 = vld [vmem:[%s1 + $0x2a0] sm:$0xff]
          %v927 = vld [vmem:[%s1 + $0x2a8] sm:$0xff]
          %v928 = vld [vmem:[%s1 + $0x2b0] sm:$0xff]
          %v929 = vld [vmem:[%s1 + $0x2b8] sm:$0xff]
          %v930 = vld [vmem:[%s1 + $0x2c0] sm:$0xff]
          %v931 = vld [vmem:[%s1 + $0x2c8] sm:$0xff]
          %v932 = vld [vmem:[%s1 + $0x2d0] sm:$0xff]
          %v933 = vld [vmem:[%s1 + $0x2d8] sm:$0xff]
          %v934 = vld [vmem:[%s1 + $0x2e0] sm:$0xff]
          %v935 = vld [vmem:[%s1 + $0x2e8] sm:$0xff]
          %v936 = vld [vmem:[%s1 + $0x2f0] sm:$0xff]
          %v937 = vld [vmem:[%s1 + $0x2f8] sm:$0xff]
          %v938 = vld [vmem:[%s1 + $0x300] sm:$0xff]
          %v939 = vld [vmem:[%s1 + $0x308] sm:$0xff]
          %v940 = vld [vmem:[%s1 + $0x310] sm:$0xff]
          %v941 = vld [vmem:[%s1 + $0x318] sm:$0xff]
          %v942 = vld [vmem:[%s1 + $0x320] sm:$0xff]
          %v943 = vld [vmem:[%s1 + $0x328] sm:$0xff]
          %v944 = vld [vmem:[%s1 + $0x330] sm:$0xff]
          %v945 = vld [vmem:[%s1 + $0x338] sm:$0xff]
          %v946 = vld [vmem:[%s1 + $0x340] sm:$0xff]
          %v947 = vld [vmem:[%s1 + $0x348] sm:$0xff]
          %v948 = vld [vmem:[%s1 + $0x350] sm:$0xff]
          %v949 = vld [vmem:[%s1 + $0x358] sm:$0xff]
          %v950 = vld [vmem:[%s1 + $0x360] sm:$0xff]
          %v951 = vld [vmem:[%s1 + $0x368] sm:$0xff]
          %v952 = vld [vmem:[%s1 + $0x370] sm:$0xff]
          %v953 = vld [vmem:[%s1 + $0x378] sm:$0xff]
          %v954 = vld [vmem:[%s1 + $0x380] sm:$0xff]
          %v955 = vld [vmem:[%s1 + $0x388] sm:$0xff]
          %v956 = vld [vmem:[%s1 + $0x390] sm:$0xff]
          %v957 = vld [vmem:[%s1 + $0x398] sm:$0xff]
          %v958 = vld [vmem:[%s1 + $0x3a0] sm:$0xff]
          %v959 = vld [vmem:[%s1 + $0x3a8] sm:$0xff]
          %v960 = vld [vmem:[%s1 + $0x3b0] sm:$0xff]
          %v961 = vld [vmem:[%s1 + $0x3b8] sm:$0xff]
          %v962 = vld [vmem:[%s1 + $0x3c0] sm:$0xff]
          %v963 = vld [vmem:[%s1 + $0x3c8] sm:$0xff]
          %v964 = vld [vmem:[%s1 + $0x3d0] sm:$0xff]
          %v965 = vld [vmem:[%s1 + $0x3d8] sm:$0xff]
          %v966 = vld [vmem:[%s1 + $0x3e0] sm:$0xff]
          %v967 = vld [vmem:[%s1 + $0x3e8] sm:$0xff]
          %v968 = vld [vmem:[%s1 + $0x3f0] sm:$0xff]
          %v969 = vld [vmem:[%s1 + $0x3f8] sm:$0xff]
          %v970 = vld [vmem:[%s2] sm:$0xff]
          %v972 = vperm.slane %v970, 0
          %v973 = vperm.slane %v970, 1
          %v974 = vperm.slane %v970, 2
          %v975 = vperm.slane %v970, 3
          %v976 = vperm.slane %v970, 4
          %v977 = vperm.slane %v970, 5
          %v978 = vperm.slane %v970, 6
          %v979 = vperm.slane %v970, 7
          %989 = vst [vmem:[#allocation1] ss:$9 sm:$0xff] %v841
          %v990 = vld [vmem:[#allocation1] sm:$0xff]
          %v991 = vld [vmem:[#allocation1 + $0x9] sm:$0xff]
          %v1122 = vunpack.c.l.b16 %v842
          %v1123 = vunpack.c.h.b16 %v842
          %v1124 = vunpack.c.l.b16 %v843
          %v1125 = vunpack.c.h.b16 %v843
          %v1126 = vunpack.c.l.b16 %v844
          %v1127 = vunpack.c.h.b16 %v844
          %v1128 = vunpack.c.l.b16 %v845
          %v1129 = vunpack.c.h.b16 %v845
          %v1130 = vunpack.c.l.b16 %v846
          %v1131 = vunpack.c.h.b16 %v846
          %v1132 = vunpack.c.l.b16 %v847
          %v1133 = vunpack.c.h.b16 %v847
          %v1134 = vunpack.c.l.b16 %v848
          %v1135 = vunpack.c.h.b16 %v848
          %v1136 = vunpack.c.l.b16 %v849
          %v1137 = vunpack.c.h.b16 %v849
          %v1138 = vunpack.c.l.b16 %v850
          %v1139 = vunpack.c.h.b16 %v850
          %v1140 = vunpack.c.l.b16 %v851
          %v1141 = vunpack.c.h.b16 %v851
          %v1142 = vunpack.c.l.b16 %v852
          %v1143 = vunpack.c.h.b16 %v852
          %v1144 = vunpack.c.l.b16 %v853
          %v1145 = vunpack.c.h.b16 %v853
          %v1146 = vunpack.c.l.b16 %v854
          %v1147 = vunpack.c.h.b16 %v854
          %v1148 = vunpack.c.l.b16 %v855
          %v1149 = vunpack.c.h.b16 %v855
          %v1150 = vunpack.c.l.b16 %v856
          %v1151 = vunpack.c.h.b16 %v856
          %v1152 = vunpack.c.l.b16 %v857
          %v1153 = vunpack.c.h.b16 %v857
          %v1154 = vunpack.c.l.b16 %v858
          %v1155 = vunpack.c.h.b16 %v858
          %v1156 = vunpack.c.l.b16 %v859
          %v1157 = vunpack.c.h.b16 %v859
          %v1158 = vunpack.c.l.b16 %v860
          %v1159 = vunpack.c.h.b16 %v860
          %v1160 = vunpack.c.l.b16 %v861
          %v1161 = vunpack.c.h.b16 %v861
          %v1162 = vunpack.c.l.b16 %v862
          %v1163 = vunpack.c.h.b16 %v862
          %v1164 = vunpack.c.l.b16 %v863
          %v1165 = vunpack.c.h.b16 %v863
          %v1166 = vunpack.c.l.b16 %v864
          %v1167 = vunpack.c.h.b16 %v864
          %v1168 = vunpack.c.l.b16 %v865
          %v1169 = vunpack.c.h.b16 %v865
          %v1170 = vunpack.c.l.b16 %v866
          %v1171 = vunpack.c.h.b16 %v866
          %v1172 = vunpack.c.l.b16 %v867
          %v1173 = vunpack.c.h.b16 %v867
          %v1174 = vunpack.c.l.b16 %v868
          %v1175 = vunpack.c.h.b16 %v868
          %v1176 = vunpack.c.l.b16 %v869
          %v1177 = vunpack.c.h.b16 %v869
          %v1178 = vunpack.c.l.b16 %v870
          %v1179 = vunpack.c.h.b16 %v870
          %v1180 = vunpack.c.l.b16 %v871
          %v1181 = vunpack.c.h.b16 %v871
          %v1182 = vunpack.c.l.b16 %v872
          %v1183 = vunpack.c.h.b16 %v872
          %v1184 = vunpack.c.l.b16 %v873
          %v1185 = vunpack.c.h.b16 %v873
          %v1186 = vunpack.c.l.b16 %v874
          %v1187 = vunpack.c.h.b16 %v874
          %v1188 = vunpack.c.l.b16 %v875
          %v1189 = vunpack.c.h.b16 %v875
          %v1190 = vunpack.c.l.b16 %v876
          %v1191 = vunpack.c.h.b16 %v876
          %v1192 = vunpack.c.l.b16 %v877
          %v1193 = vunpack.c.h.b16 %v877
          %v1194 = vunpack.c.l.b16 %v878
          %v1195 = vunpack.c.h.b16 %v878
          %v1196 = vunpack.c.l.b16 %v879
          %v1197 = vunpack.c.h.b16 %v879
          %v1198 = vunpack.c.l.b16 %v880
          %v1199 = vunpack.c.h.b16 %v880
          %v1200 = vunpack.c.l.b16 %v881
          %v1201 = vunpack.c.h.b16 %v881
          %v1202 = vunpack.c.l.b16 %v882
          %v1203 = vunpack.c.h.b16 %v882
          %v1204 = vunpack.c.l.b16 %v883
          %v1205 = vunpack.c.h.b16 %v883
          %v1206 = vunpack.c.l.b16 %v884
          %v1207 = vunpack.c.h.b16 %v884
          %v1208 = vunpack.c.l.b16 %v885
          %v1209 = vunpack.c.h.b16 %v885
          %v1210 = vunpack.c.l.b16 %v886
          %v1211 = vunpack.c.h.b16 %v886
          %v1212 = vunpack.c.l.b16 %v887
          %v1213 = vunpack.c.h.b16 %v887
          %v1214 = vunpack.c.l.b16 %v888
          %v1215 = vunpack.c.h.b16 %v888
          %v1216 = vunpack.c.l.b16 %v889
          %v1217 = vunpack.c.h.b16 %v889
          %v1218 = vunpack.c.l.b16 %v890
          %v1219 = vunpack.c.h.b16 %v890
          %v1220 = vunpack.c.l.b16 %v891
          %v1221 = vunpack.c.h.b16 %v891
          %v1222 = vunpack.c.l.b16 %v892
          %v1223 = vunpack.c.h.b16 %v892
          %v1224 = vunpack.c.l.b16 %v893
          %v1225 = vunpack.c.h.b16 %v893
          %v1226 = vunpack.c.l.b16 %v894
          %v1227 = vunpack.c.h.b16 %v894
          %v1228 = vunpack.c.l.b16 %v895
          %v1229 = vunpack.c.h.b16 %v895
          %v1230 = vunpack.c.l.b16 %v896
          %v1231 = vunpack.c.h.b16 %v896
          %v1232 = vunpack.c.l.b16 %v897
          %v1233 = vunpack.c.h.b16 %v897
          %v1234 = vunpack.c.l.b16 %v898
          %v1235 = vunpack.c.h.b16 %v898
          %v1236 = vunpack.c.l.b16 %v899
          %v1237 = vunpack.c.h.b16 %v899
          %v1238 = vunpack.c.l.b16 %v900
          %v1239 = vunpack.c.h.b16 %v900
          %v1240 = vunpack.c.l.b16 %v901
          %v1241 = vunpack.c.h.b16 %v901
          %v1242 = vunpack.c.l.b16 %v902
          %v1243 = vunpack.c.h.b16 %v902
          %v1244 = vunpack.c.l.b16 %v903
          %v1245 = vunpack.c.h.b16 %v903
          %v1246 = vunpack.c.l.b16 %v904
          %v1247 = vunpack.c.h.b16 %v904
          %v1248 = vunpack.c.l.b16 %v905
          %v1249 = vunpack.c.h.b16 %v905
          %v1250 = vunpack.c.l.b16 %v906
          %v1251 = vunpack.c.h.b16 %v906
          %v1252 = vunpack.c.l.b16 %v907
          %v1253 = vunpack.c.h.b16 %v907
          %v1254 = vunpack.c.l.b16 %v908
          %v1255 = vunpack.c.h.b16 %v908
          %v1256 = vunpack.c.l.b16 %v909
          %v1257 = vunpack.c.h.b16 %v909
          %v1258 = vunpack.c.l.b16 %v910
          %v1259 = vunpack.c.h.b16 %v910
          %v1260 = vunpack.c.l.b16 %v911
          %v1261 = vunpack.c.h.b16 %v911
          %v1262 = vunpack.c.l.b16 %v912
          %v1263 = vunpack.c.h.b16 %v912
          %v1264 = vunpack.c.l.b16 %v913
          %v1265 = vunpack.c.h.b16 %v913
          %v1266 = vunpack.c.l.b16 %v914
          %v1267 = vunpack.c.h.b16 %v914
          %v1268 = vunpack.c.l.b16 %v915
          %v1269 = vunpack.c.h.b16 %v915
          %v1270 = vunpack.c.l.b16 %v916
          %v1271 = vunpack.c.h.b16 %v916
          %v1272 = vunpack.c.l.b16 %v917
          %v1273 = vunpack.c.h.b16 %v917
          %v1274 = vunpack.c.l.b16 %v918
          %v1275 = vunpack.c.h.b16 %v918
          %v1276 = vunpack.c.l.b16 %v919
          %v1277 = vunpack.c.h.b16 %v919
          %v1278 = vunpack.c.l.b16 %v920
          %v1279 = vunpack.c.h.b16 %v920
          %v1280 = vunpack.c.l.b16 %v921
          %v1281 = vunpack.c.h.b16 %v921
          %v1282 = vunpack.c.l.b16 %v922
          %v1283 = vunpack.c.h.b16 %v922
          %v1284 = vunpack.c.l.b16 %v923
          %v1285 = vunpack.c.h.b16 %v923
          %v1286 = vunpack.c.l.b16 %v924
          %v1287 = vunpack.c.h.b16 %v924
          %v1288 = vunpack.c.l.b16 %v925
          %v1289 = vunpack.c.h.b16 %v925
          %v1290 = vunpack.c.l.b16 %v926
          %v1291 = vunpack.c.h.b16 %v926
          %v1292 = vunpack.c.l.b16 %v927
          %v1293 = vunpack.c.h.b16 %v927
          %v1294 = vunpack.c.l.b16 %v928
          %v1295 = vunpack.c.h.b16 %v928
          %v1296 = vunpack.c.l.b16 %v929
          %v1297 = vunpack.c.h.b16 %v929
          %v1298 = vunpack.c.l.b16 %v930
          %v1299 = vunpack.c.h.b16 %v930
          %v1300 = vunpack.c.l.b16 %v931
          %v1301 = vunpack.c.h.b16 %v931
          %v1302 = vunpack.c.l.b16 %v932
          %v1303 = vunpack.c.h.b16 %v932
          %v1304 = vunpack.c.l.b16 %v933
          %v1305 = vunpack.c.h.b16 %v933
          %v1306 = vunpack.c.l.b16 %v934
          %v1307 = vunpack.c.h.b16 %v934
          %v1308 = vunpack.c.l.b16 %v935
          %v1309 = vunpack.c.h.b16 %v935
          %v1310 = vunpack.c.l.b16 %v936
          %v1311 = vunpack.c.h.b16 %v936
          %v1312 = vunpack.c.l.b16 %v937
          %v1313 = vunpack.c.h.b16 %v937
          %v1314 = vunpack.c.l.b16 %v938
          %v1315 = vunpack.c.h.b16 %v938
          %v1316 = vunpack.c.l.b16 %v939
          %v1317 = vunpack.c.h.b16 %v939
          %v1318 = vunpack.c.l.b16 %v940
          %v1319 = vunpack.c.h.b16 %v940
          %v1320 = vunpack.c.l.b16 %v941
          %v1321 = vunpack.c.h.b16 %v941
          %v1322 = vunpack.c.l.b16 %v942
          %v1323 = vunpack.c.h.b16 %v942
          %v1324 = vunpack.c.l.b16 %v943
          %v1325 = vunpack.c.h.b16 %v943
          %v1326 = vunpack.c.l.b16 %v944
          %v1327 = vunpack.c.h.b16 %v944
          %v1328 = vunpack.c.l.b16 %v945
          %v1329 = vunpack.c.h.b16 %v945
          %v1330 = vunpack.c.l.b16 %v946
          %v1331 = vunpack.c.h.b16 %v946
          %v1332 = vunpack.c.l.b16 %v947
          %v1333 = vunpack.c.h.b16 %v947
          %v1334 = vunpack.c.l.b16 %v948
          %v1335 = vunpack.c.h.b16 %v948
          %v1336 = vunpack.c.l.b16 %v949
          %v1337 = vunpack.c.h.b16 %v949
          %v1338 = vunpack.c.l.b16 %v950
          %v1339 = vunpack.c.h.b16 %v950
          %v1340 = vunpack.c.l.b16 %v951
          %v1341 = vunpack.c.h.b16 %v951
          %v1342 = vunpack.c.l.b16 %v952
          %v1343 = vunpack.c.h.b16 %v952
          %v1344 = vunpack.c.l.b16 %v953
          %v1345 = vunpack.c.h.b16 %v953
          %v1346 = vunpack.c.l.b16 %v954
          %v1347 = vunpack.c.h.b16 %v954
          %v1348 = vunpack.c.l.b16 %v955
          %v1349 = vunpack.c.h.b16 %v955
          %v1350 = vunpack.c.l.b16 %v956
          %v1351 = vunpack.c.h.b16 %v956
          %v1352 = vunpack.c.l.b16 %v957
          %v1353 = vunpack.c.h.b16 %v957
          %v1354 = vunpack.c.l.b16 %v958
          %v1355 = vunpack.c.h.b16 %v958
          %v1356 = vunpack.c.l.b16 %v959
          %v1357 = vunpack.c.h.b16 %v959
          %v1358 = vunpack.c.l.b16 %v960
          %v1359 = vunpack.c.h.b16 %v960
          %v1360 = vunpack.c.l.b16 %v961
          %v1361 = vunpack.c.h.b16 %v961
          %v1362 = vunpack.c.l.b16 %v962
          %v1363 = vunpack.c.h.b16 %v962
          %v1364 = vunpack.c.l.b16 %v963
          %v1365 = vunpack.c.h.b16 %v963
          %v1366 = vunpack.c.l.b16 %v964
          %v1367 = vunpack.c.h.b16 %v964
          %v1368 = vunpack.c.l.b16 %v965
          %v1369 = vunpack.c.h.b16 %v965
          %v1370 = vunpack.c.l.b16 %v966
          %v1371 = vunpack.c.h.b16 %v966
          %v1372 = vunpack.c.l.b16 %v967
          %v1373 = vunpack.c.h.b16 %v967
          %v1374 = vunpack.c.l.b16 %v968
          %v1375 = vunpack.c.h.b16 %v968
          %v1376 = vunpack.c.l.b16 %v969
          %v1377 = vunpack.c.h.b16 %v969
          %v1378 = vpack.c.b16 %v1130, %v1122
          %v1379 = vpack.c.b16 %v1131, %v1123
          %v1380 = vpack.c.b16 %v1132, %v1124
          %v1381 = vpack.c.b16 %v1133, %v1125
          %v1382 = vpack.c.b16 %v1134, %v1126
          %v1383 = vpack.c.b16 %v1135, %v1127
          %v1384 = vpack.c.b16 %v1136, %v1128
          %v1385 = vpack.c.b16 %v1137, %v1129
          %v1386 = vpack.c.b16 %v1146, %v1138
          %v1387 = vpack.c.b16 %v1147, %v1139
          %v1388 = vpack.c.b16 %v1148, %v1140
          %v1389 = vpack.c.b16 %v1149, %v1141
          %v1390 = vpack.c.b16 %v1150, %v1142
          %v1391 = vpack.c.b16 %v1151, %v1143
          %v1392 = vpack.c.b16 %v1152, %v1144
          %v1393 = vpack.c.b16 %v1153, %v1145
          %v1394 = vpack.c.b16 %v1162, %v1154
          %v1395 = vpack.c.b16 %v1163, %v1155
          %v1396 = vpack.c.b16 %v1164, %v1156
          %v1397 = vpack.c.b16 %v1165, %v1157
          %v1398 = vpack.c.b16 %v1166, %v1158
          %v1399 = vpack.c.b16 %v1167, %v1159
          %v1400 = vpack.c.b16 %v1168, %v1160
          %v1401 = vpack.c.b16 %v1169, %v1161
          %v1402 = vpack.c.b16 %v1178, %v1170
          %v1403 = vpack.c.b16 %v1179, %v1171
          %v1404 = vpack.c.b16 %v1180, %v1172
          %v1405 = vpack.c.b16 %v1181, %v1173
          %v1406 = vpack.c.b16 %v1182, %v1174
          %v1407 = vpack.c.b16 %v1183, %v1175
          %v1408 = vpack.c.b16 %v1184, %v1176
          %v1409 = vpack.c.b16 %v1185, %v1177
          %v1410 = vpack.c.b16 %v1194, %v1186
          %v1411 = vpack.c.b16 %v1195, %v1187
          %v1412 = vpack.c.b16 %v1196, %v1188
          %v1413 = vpack.c.b16 %v1197, %v1189
          %v1414 = vpack.c.b16 %v1198, %v1190
          %v1415 = vpack.c.b16 %v1199, %v1191
          %v1416 = vpack.c.b16 %v1200, %v1192
          %v1417 = vpack.c.b16 %v1201, %v1193
          %v1418 = vpack.c.b16 %v1210, %v1202
          %v1419 = vpack.c.b16 %v1211, %v1203
          %v1420 = vpack.c.b16 %v1212, %v1204
          %v1421 = vpack.c.b16 %v1213, %v1205
          %v1422 = vpack.c.b16 %v1214, %v1206
          %v1423 = vpack.c.b16 %v1215, %v1207
          %v1424 = vpack.c.b16 %v1216, %v1208
          %v1425 = vpack.c.b16 %v1217, %v1209
          %v1426 = vpack.c.b16 %v1226, %v1218
          %v1427 = vpack.c.b16 %v1227, %v1219
          %v1428 = vpack.c.b16 %v1228, %v1220
          %v1429 = vpack.c.b16 %v1229, %v1221
          %v1430 = vpack.c.b16 %v1230, %v1222
          %v1431 = vpack.c.b16 %v1231, %v1223
          %v1432 = vpack.c.b16 %v1232, %v1224
          %v1433 = vpack.c.b16 %v1233, %v1225
          %v1434 = vpack.c.b16 %v1242, %v1234
          %v1435 = vpack.c.b16 %v1243, %v1235
          %v1436 = vpack.c.b16 %v1244, %v1236
          %v1437 = vpack.c.b16 %v1245, %v1237
          %v1438 = vpack.c.b16 %v1246, %v1238
          %v1439 = vpack.c.b16 %v1247, %v1239
          %v1440 = vpack.c.b16 %v1248, %v1240
          %v1441 = vpack.c.b16 %v1249, %v1241
          %v1442 = vpack.c.b16 %v1258, %v1250
          %v1443 = vpack.c.b16 %v1259, %v1251
          %v1444 = vpack.c.b16 %v1260, %v1252
          %v1445 = vpack.c.b16 %v1261, %v1253
          %v1446 = vpack.c.b16 %v1262, %v1254
          %v1447 = vpack.c.b16 %v1263, %v1255
          %v1448 = vpack.c.b16 %v1264, %v1256
          %v1449 = vpack.c.b16 %v1265, %v1257
          %v1450 = vpack.c.b16 %v1274, %v1266
          %v1451 = vpack.c.b16 %v1275, %v1267
          %v1452 = vpack.c.b16 %v1276, %v1268
          %v1453 = vpack.c.b16 %v1277, %v1269
          %v1454 = vpack.c.b16 %v1278, %v1270
          %v1455 = vpack.c.b16 %v1279, %v1271
          %v1456 = vpack.c.b16 %v1280, %v1272
          %v1457 = vpack.c.b16 %v1281, %v1273
          %v1458 = vpack.c.b16 %v1290, %v1282
          %v1459 = vpack.c.b16 %v1291, %v1283
          %v1460 = vpack.c.b16 %v1292, %v1284
          %v1461 = vpack.c.b16 %v1293, %v1285
          %v1462 = vpack.c.b16 %v1294, %v1286
          %v1463 = vpack.c.b16 %v1295, %v1287
          %v1464 = vpack.c.b16 %v1296, %v1288
          %v1465 = vpack.c.b16 %v1297, %v1289
          %v1466 = vpack.c.b16 %v1306, %v1298
          %v1467 = vpack.c.b16 %v1307, %v1299
          %v1468 = vpack.c.b16 %v1308, %v1300
          %v1469 = vpack.c.b16 %v1309, %v1301
          %v1470 = vpack.c.b16 %v1310, %v1302
          %v1471 = vpack.c.b16 %v1311, %v1303
          %v1472 = vpack.c.b16 %v1312, %v1304
          %v1473 = vpack.c.b16 %v1313, %v1305
          %v1474 = vpack.c.b16 %v1322, %v1314
          %v1475 = vpack.c.b16 %v1323, %v1315
          %v1476 = vpack.c.b16 %v1324, %v1316
          %v1477 = vpack.c.b16 %v1325, %v1317
          %v1478 = vpack.c.b16 %v1326, %v1318
          %v1479 = vpack.c.b16 %v1327, %v1319
          %v1480 = vpack.c.b16 %v1328, %v1320
          %v1481 = vpack.c.b16 %v1329, %v1321
          %v1482 = vpack.c.b16 %v1338, %v1330
          %v1483 = vpack.c.b16 %v1339, %v1331
          %v1484 = vpack.c.b16 %v1340, %v1332
          %v1485 = vpack.c.b16 %v1341, %v1333
          %v1486 = vpack.c.b16 %v1342, %v1334
          %v1487 = vpack.c.b16 %v1343, %v1335
          %v1488 = vpack.c.b16 %v1344, %v1336
          %v1489 = vpack.c.b16 %v1345, %v1337
          %v1490 = vpack.c.b16 %v1354, %v1346
          %v1491 = vpack.c.b16 %v1355, %v1347
          %v1492 = vpack.c.b16 %v1356, %v1348
          %v1493 = vpack.c.b16 %v1357, %v1349
          %v1494 = vpack.c.b16 %v1358, %v1350
          %v1495 = vpack.c.b16 %v1359, %v1351
          %v1496 = vpack.c.b16 %v1360, %v1352
          %v1497 = vpack.c.b16 %v1361, %v1353
          %v1498 = vpack.c.b16 %v1370, %v1362
          %v1499 = vpack.c.b16 %v1371, %v1363
          %v1500 = vpack.c.b16 %v1372, %v1364
          %v1501 = vpack.c.b16 %v1373, %v1365
          %v1502 = vpack.c.b16 %v1374, %v1366
          %v1503 = vpack.c.b16 %v1375, %v1367
          %v1504 = vpack.c.b16 %v1376, %v1368
          %v1505 = vpack.c.b16 %v1377, %v1369
          %1634 = vmatpush.bf16.msra.mxu0 %v1434
          %1635 = vmatpush.bf16.msra.mxu0 %v1426
          %1636 = vmatpush.bf16.msra.mxu0 %v1418
          %1637 = vmatpush.bf16.msra.mxu0 %v1410
          %1638 = vmatpush.bf16.msra.mxu0 %v1402
          %1639 = vmatpush.bf16.msra.mxu0 %v1394
          %1640 = vmatpush.bf16.msra.mxu0 %v1386
          %1641 = vmatpush.bf16.msra.mxu0 %v1378
          %1642 = vmatmul.bf16.gmra.mxu0 %v990
          %v1643 = vpop.f32.mrf.mxu0
          %v1644 = vadd.f32 %v972, %v1643
          %v1645 = vpop.f32.mrf.mxu0
          %1646 = vdwg.mxu0
          %1647 = vmatpush.bf16.msra.mxu0 %v1498
          %1648 = vmatpush.bf16.msra.mxu0 %v1490
          %1649 = vmatpush.bf16.msra.mxu0 %v1482
          %1650 = vmatpush.bf16.msra.mxu0 %v1474
          %1651 = vmatpush.bf16.msra.mxu0 %v1466
          %1652 = vmatpush.bf16.msra.mxu0 %v1458
          %1653 = vmatpush.bf16.msra.mxu0 %v1450
          %1654 = vmatpush.bf16.msra.mxu0 %v1442
          %1655 = vmatmul.bf16.gmra.mxu0 %v991
          %v1656 = vpop.f32.mrf.mxu0
          %v1657 = vadd.f32 %v1644, %v1656
          %v1658 = vpop.f32.mrf.mxu0
          %1659 = vdwg.mxu0
          %1660 = vmatpush.bf16.msra.mxu0 %v1435
          %1661 = vmatpush.bf16.msra.mxu0 %v1427
          %1662 = vmatpush.bf16.msra.mxu0 %v1419
          %1663 = vmatpush.bf16.msra.mxu0 %v1411
          %1664 = vmatpush.bf16.msra.mxu0 %v1403
          %1665 = vmatpush.bf16.msra.mxu0 %v1395
          %1666 = vmatpush.bf16.msra.mxu0 %v1387
          %1667 = vmatpush.bf16.msra.mxu0 %v1379
          %1668 = vmatmul.bf16.gmra.mxu0 %v990
          %v1669 = vpop.f32.mrf.mxu0
          %v1670 = vadd.f32 %v973, %v1669
          %v1671 = vpop.f32.mrf.mxu0
          %1672 = vdwg.mxu0
          %1673 = vmatpush.bf16.msra.mxu0 %v1499
          %1674 = vmatpush.bf16.msra.mxu0 %v1491
          %1675 = vmatpush.bf16.msra.mxu0 %v1483
          %1676 = vmatpush.bf16.msra.mxu0 %v1475
          %1677 = vmatpush.bf16.msra.mxu0 %v1467
          %1678 = vmatpush.bf16.msra.mxu0 %v1459
          %1679 = vmatpush.bf16.msra.mxu0 %v1451
          %1680 = vmatpush.bf16.msra.mxu0 %v1443
          %1681 = vmatmul.bf16.gmra.mxu0 %v991
          %v1682 = vpop.f32.mrf.mxu0
          %v1683 = vadd.f32 %v1670, %v1682
          %v1684 = vpop.f32.mrf.mxu0
          %1685 = vdwg.mxu0
          %1686 = vmatpush.bf16.msra.mxu0 %v1436
          %1687 = vmatpush.bf16.msra.mxu0 %v1428
          %1688 = vmatpush.bf16.msra.mxu0 %v1420
          %1689 = vmatpush.bf16.msra.mxu0 %v1412
          %1690 = vmatpush.bf16.msra.mxu0 %v1404
          %1691 = vmatpush.bf16.msra.mxu0 %v1396
          %1692 = vmatpush.bf16.msra.mxu0 %v1388
          %1693 = vmatpush.bf16.msra.mxu0 %v1380
          %1694 = vmatmul.bf16.gmra.mxu0 %v990
          %v1695 = vpop.f32.mrf.mxu0
          %v1696 = vadd.f32 %v974, %v1695
          %v1697 = vpop.f32.mrf.mxu0
          %1698 = vdwg.mxu0
          %1699 = vmatpush.bf16.msra.mxu0 %v1500
          %1700 = vmatpush.bf16.msra.mxu0 %v1492
          %1701 = vmatpush.bf16.msra.mxu0 %v1484
          %1702 = vmatpush.bf16.msra.mxu0 %v1476
          %1703 = vmatpush.bf16.msra.mxu0 %v1468
          %1704 = vmatpush.bf16.msra.mxu0 %v1460
          %1705 = vmatpush.bf16.msra.mxu0 %v1452
          %1706 = vmatpush.bf16.msra.mxu0 %v1444
          %1707 = vmatmul.bf16.gmra.mxu0 %v991
          %v1708 = vpop.f32.mrf.mxu0
          %v1709 = vadd.f32 %v1696, %v1708
          %v1710 = vpop.f32.mrf.mxu0
          %1711 = vdwg.mxu0
          %1712 = vmatpush.bf16.msra.mxu0 %v1437
          %1713 = vmatpush.bf16.msra.mxu0 %v1429
          %1714 = vmatpush.bf16.msra.mxu0 %v1421
          %1715 = vmatpush.bf16.msra.mxu0 %v1413
          %1716 = vmatpush.bf16.msra.mxu0 %v1405
          %1717 = vmatpush.bf16.msra.mxu0 %v1397
          %1718 = vmatpush.bf16.msra.mxu0 %v1389
          %1719 = vmatpush.bf16.msra.mxu0 %v1381
          %1720 = vmatmul.bf16.gmra.mxu0 %v990
          %v1721 = vpop.f32.mrf.mxu0
          %v1722 = vadd.f32 %v975, %v1721
          %v1723 = vpop.f32.mrf.mxu0
          %1724 = vdwg.mxu0
          %1725 = vmatpush.bf16.msra.mxu0 %v1501
          %1726 = vmatpush.bf16.msra.mxu0 %v1493
          %1727 = vmatpush.bf16.msra.mxu0 %v1485
          %1728 = vmatpush.bf16.msra.mxu0 %v1477
          %1729 = vmatpush.bf16.msra.mxu0 %v1469
          %1730 = vmatpush.bf16.msra.mxu0 %v1461
          %1731 = vmatpush.bf16.msra.mxu0 %v1453
          %1732 = vmatpush.bf16.msra.mxu0 %v1445
          %1733 = vmatmul.bf16.gmra.mxu0 %v991
          %v1734 = vpop.f32.mrf.mxu0
          %v1735 = vadd.f32 %v1722, %v1734
          %v1736 = vpop.f32.mrf.mxu0
          %1737 = vdwg.mxu0
          %1738 = vmatpush.bf16.msra.mxu0 %v1438
          %1739 = vmatpush.bf16.msra.mxu0 %v1430
          %1740 = vmatpush.bf16.msra.mxu0 %v1422
          %1741 = vmatpush.bf16.msra.mxu0 %v1414
          %1742 = vmatpush.bf16.msra.mxu0 %v1406
          %1743 = vmatpush.bf16.msra.mxu0 %v1398
          %1744 = vmatpush.bf16.msra.mxu0 %v1390
          %1745 = vmatpush.bf16.msra.mxu0 %v1382
          %1746 = vmatmul.bf16.gmra.mxu0 %v990
          %v1747 = vpop.f32.mrf.mxu0
          %v1748 = vadd.f32 %v976, %v1747
          %v1749 = vpop.f32.mrf.mxu0
          %1750 = vdwg.mxu0
          %1751 = vmatpush.bf16.msra.mxu0 %v1502
          %1752 = vmatpush.bf16.msra.mxu0 %v1494
          %1753 = vmatpush.bf16.msra.mxu0 %v1486
          %1754 = vmatpush.bf16.msra.mxu0 %v1478
          %1755 = vmatpush.bf16.msra.mxu0 %v1470
          %1756 = vmatpush.bf16.msra.mxu0 %v1462
          %1757 = vmatpush.bf16.msra.mxu0 %v1454
          %1758 = vmatpush.bf16.msra.mxu0 %v1446
          %1759 = vmatmul.bf16.gmra.mxu0 %v991
          %v1760 = vpop.f32.mrf.mxu0
          %v1761 = vadd.f32 %v1748, %v1760
          %v1762 = vpop.f32.mrf.mxu0
          %1763 = vdwg.mxu0
          %1764 = vmatpush.bf16.msra.mxu0 %v1439
          %1765 = vmatpush.bf16.msra.mxu0 %v1431
          %1766 = vmatpush.bf16.msra.mxu0 %v1423
          %1767 = vmatpush.bf16.msra.mxu0 %v1415
          %1768 = vmatpush.bf16.msra.mxu0 %v1407
          %1769 = vmatpush.bf16.msra.mxu0 %v1399
          %1770 = vmatpush.bf16.msra.mxu0 %v1391
          %1771 = vmatpush.bf16.msra.mxu0 %v1383
          %1772 = vmatmul.bf16.gmra.mxu0 %v990
          %v1773 = vpop.f32.mrf.mxu0
          %v1774 = vadd.f32 %v977, %v1773
          %v1775 = vpop.f32.mrf.mxu0
          %1776 = vdwg.mxu0
          %1777 = vmatpush.bf16.msra.mxu0 %v1503
          %1778 = vmatpush.bf16.msra.mxu0 %v1495
          %1779 = vmatpush.bf16.msra.mxu0 %v1487
          %1780 = vmatpush.bf16.msra.mxu0 %v1479
          %1781 = vmatpush.bf16.msra.mxu0 %v1471
          %1782 = vmatpush.bf16.msra.mxu0 %v1463
          %1783 = vmatpush.bf16.msra.mxu0 %v1455
          %1784 = vmatpush.bf16.msra.mxu0 %v1447
          %1785 = vmatmul.bf16.gmra.mxu0 %v991
          %v1786 = vpop.f32.mrf.mxu0
          %v1787 = vadd.f32 %v1774, %v1786
          %v1788 = vpop.f32.mrf.mxu0
          %1789 = vdwg.mxu0
          %1790 = vmatpush.bf16.msra.mxu0 %v1440
          %1791 = vmatpush.bf16.msra.mxu0 %v1432
          %1792 = vmatpush.bf16.msra.mxu0 %v1424
          %1793 = vmatpush.bf16.msra.mxu0 %v1416
          %1794 = vmatpush.bf16.msra.mxu0 %v1408
          %1795 = vmatpush.bf16.msra.mxu0 %v1400
          %1796 = vmatpush.bf16.msra.mxu0 %v1392
          %1797 = vmatpush.bf16.msra.mxu0 %v1384
          %1798 = vmatmul.bf16.gmra.mxu0 %v990
          %v1799 = vpop.f32.mrf.mxu0
          %v1800 = vadd.f32 %v978, %v1799
          %v1801 = vpop.f32.mrf.mxu0
          %1802 = vdwg.mxu0
          %1803 = vmatpush.bf16.msra.mxu0 %v1504
          %1804 = vmatpush.bf16.msra.mxu0 %v1496
          %1805 = vmatpush.bf16.msra.mxu0 %v1488
          %1806 = vmatpush.bf16.msra.mxu0 %v1480
          %1807 = vmatpush.bf16.msra.mxu0 %v1472
          %1808 = vmatpush.bf16.msra.mxu0 %v1464
          %1809 = vmatpush.bf16.msra.mxu0 %v1456
          %1810 = vmatpush.bf16.msra.mxu0 %v1448
          %1811 = vmatmul.bf16.gmra.mxu0 %v991
          %v1812 = vpop.f32.mrf.mxu0
          %v1813 = vadd.f32 %v1800, %v1812
          %v1814 = vpop.f32.mrf.mxu0
          %1815 = vdwg.mxu0
          %1816 = vmatpush.bf16.msra.mxu0 %v1441
          %1817 = vmatpush.bf16.msra.mxu0 %v1433
          %1818 = vmatpush.bf16.msra.mxu0 %v1425
          %1819 = vmatpush.bf16.msra.mxu0 %v1417
          %1820 = vmatpush.bf16.msra.mxu0 %v1409
          %1821 = vmatpush.bf16.msra.mxu0 %v1401
          %1822 = vmatpush.bf16.msra.mxu0 %v1393
          %1823 = vmatpush.bf16.msra.mxu0 %v1385
          %1824 = vmatmul.bf16.gmra.mxu0 %v990
          %v1825 = vpop.f32.mrf.mxu0
          %v1826 = vadd.f32 %v979, %v1825
          %v1827 = vpop.f32.mrf.mxu0
          %1828 = vdwg.mxu0
          %1829 = vmatpush.bf16.msra.mxu0 %v1505
          %1830 = vmatpush.bf16.msra.mxu0 %v1497
          %1831 = vmatpush.bf16.msra.mxu0 %v1489
          %1832 = vmatpush.bf16.msra.mxu0 %v1481
          %1833 = vmatpush.bf16.msra.mxu0 %v1473
          %1834 = vmatpush.bf16.msra.mxu0 %v1465
          %1835 = vmatpush.bf16.msra.mxu0 %v1457
          %1836 = vmatpush.bf16.msra.mxu0 %v1449
          %1837 = vmatmul.bf16.gmra.mxu0 %v991
          %v1838 = vpop.f32.mrf.mxu0
          %v1839 = vadd.f32 %v1826, %v1838
          %v1840 = vpop.f32.mrf.mxu0
          %1841 = vdwg.mxu0
          %v1842 = vmax.f32 %v1657, 0.0
          %v1843 = vmax.f32 %v1683, 0.0
          %v1844 = vmax.f32 %v1709, 0.0
          %v1845 = vmax.f32 %v1735, 0.0
          %v1846 = vmax.f32 %v1761, 0.0
          %v1847 = vmax.f32 %v1787, 0.0
          %v1848 = vmax.f32 %v1813, 0.0
          %v1849 = vmax.f32 %v1839, 0.0
          %v1850 = vpack.c.bf16 %v1843, %v1842
          %v1851 = vpack.c.bf16 %v1845, %v1844
          %v1852 = vpack.c.bf16 %v1847, %v1846
          %v1853 = vpack.c.bf16 %v1849, %v1848
          %v1858 = vrot.slane %v1850, 3
          %v1859 = vrot.slane %v1851, 6
          %v1860 = vrot.slane %v1851, 1
          %v1861 = vrot.slane %v1852, 4
          %v1862 = vrot.slane %v1852, 7
          %v1863 = vrot.slane %v1853, 2
          %v1864 = vrot.slane %v1853, 5
          %vm1865 = vcmask 1040384
          %v1868 = vsel %vm1865, %v1850, %v1858
          %vm1869 = vcmask 1042434
          %v1872 = vsel %vm1869, %v1859, %v1860
          %vm1873 = vcmask 1041408
          %v1874 = vsel %vm1873, %v1868, %v1872
          %vm1875 = vcmask 1044484
          %v1878 = vsel %vm1875, %v1861, %v1862
          %vm1879 = vcmask 1046534
          %v1882 = vsel %vm1879, %v1863, %v1864
          %vm1883 = vcmask 1045508
          %v1884 = vsel %vm1883, %v1878, %v1882
          %vm1885 = vcmask 1043456
          %v1886 = vsel %vm1885, %v1874, %v1884
          %1888 = vst [vmem:[#allocation2] sm:$0xff] %v1886
          %1889 = vst [vmem:[#allocation4] sm:$0x3] 0.0
        $region75: #{convolution3d_forward.7} parent=66 // pred_fallthru
          _
        %v1890 = vld [vmem:[#allocation2] sm:$0xff]
        %v1891 = vld [vmem:[%s792] sm:$0xff]
        %v1892 = vld [vmem:[%s792 + $0x8] sm:$0xff]
        %v1893 = vld [vmem:[%s792 + $0x10] sm:$0xff]
        %v1894 = vld [vmem:[%s792 + $0x18] sm:$0xff]
        %v1895 = vld [vmem:[%s792 + $0x20] sm:$0xff]
        %v1896 = vld [vmem:[%s792 + $0x28] sm:$0xff]
        %v1897 = vld [vmem:[%s792 + $0x30] sm:$0xff]
        %v1898 = vld [vmem:[%s792 + $0x38] sm:$0xff]
        %v1899 = vld [vmem:[%s792 + $0x40] sm:$0xff]
        %v1900 = vld [vmem:[%s792 + $0x48] sm:$0xff]
        %v1901 = vld [vmem:[%s792 + $0x50] sm:$0xff]
        %v1902 = vld [vmem:[%s792 + $0x58] sm:$0xff]
        %v1903 = vld [vmem:[%s792 + $0x60] sm:$0xff]
        %v1904 = vld [vmem:[%s792 + $0x68] sm:$0xff]
        %v1905 = vld [vmem:[%s792 + $0x70] sm:$0xff]
        %v1906 = vld [vmem:[%s792 + $0x78] sm:$0xff]
        %v1907 = vld [vmem:[%s792 + $0x80] sm:$0xff]
        %v1908 = vld [vmem:[%s792 + $0x88] sm:$0xff]
        %v1909 = vld [vmem:[%s792 + $0x90] sm:$0xff]
        %v1910 = vld [vmem:[%s792 + $0x98] sm:$0xff]
        %v1911 = vld [vmem:[%s792 + $0xa0] sm:$0xff]
        %v1912 = vld [vmem:[%s792 + $0xa8] sm:$0xff]
        %v1913 = vld [vmem:[%s792 + $0xb0] sm:$0xff]
        %v1914 = vld [vmem:[%s792 + $0xb8] sm:$0xff]
        %v1915 = vld [vmem:[%s792 + $0xc0] sm:$0xff]
        %v1916 = vld [vmem:[%s792 + $0xc8] sm:$0xff]
        %v1917 = vld [vmem:[%s792 + $0xd0] sm:$0xff]
        %v1918 = vld [vmem:[%s792 + $0xd8] sm:$0xff]
        %v1919 = vld [vmem:[%s792 + $0xe0] sm:$0xff]
        %v1920 = vld [vmem:[%s792 + $0xe8] sm:$0xff]
        %v1921 = vld [vmem:[%s792 + $0xf0] sm:$0xff]
        %v1922 = vld [vmem:[%s792 + $0xf8] sm:$0xff]
        %v1923 = vld [vmem:[%s792 + $0x100] sm:$0xff]
        %v1924 = vld [vmem:[%s792 + $0x108] sm:$0xff]
        %v1925 = vld [vmem:[%s792 + $0x110] sm:$0xff]
        %v1926 = vld [vmem:[%s792 + $0x118] sm:$0xff]
        %v1927 = vld [vmem:[%s792 + $0x120] sm:$0xff]
        %v1928 = vld [vmem:[%s792 + $0x128] sm:$0xff]
        %v1929 = vld [vmem:[%s792 + $0x130] sm:$0xff]
        %v1930 = vld [vmem:[%s792 + $0x138] sm:$0xff]
        %v1931 = vld [vmem:[%s792 + $0x140] sm:$0xff]
        %v1932 = vld [vmem:[%s792 + $0x148] sm:$0xff]
        %v1933 = vld [vmem:[%s792 + $0x150] sm:$0xff]
        %v1934 = vld [vmem:[%s792 + $0x158] sm:$0xff]
        %v1935 = vld [vmem:[%s792 + $0x160] sm:$0xff]
        %v1936 = vld [vmem:[%s792 + $0x168] sm:$0xff]
        %v1937 = vld [vmem:[%s792 + $0x170] sm:$0xff]
        %v1938 = vld [vmem:[%s792 + $0x178] sm:$0xff]
        %v1939 = vld [vmem:[%s792 + $0x180] sm:$0xff]
        %v1940 = vld [vmem:[%s792 + $0x188] sm:$0xff]
        %v1941 = vld [vmem:[%s792 + $0x190] sm:$0xff]
        %v1942 = vld [vmem:[%s792 + $0x198] sm:$0xff]
        %v1943 = vld [vmem:[%s792 + $0x1a0] sm:$0xff]
        %v1944 = vld [vmem:[%s792 + $0x1a8] sm:$0xff]
        %v1945 = vld [vmem:[%s792 + $0x1b0] sm:$0xff]
        %v1946 = vld [vmem:[%s792 + $0x1b8] sm:$0xff]
        %v1947 = vld [vmem:[%s792 + $0x1c0] sm:$0xff]
        %v1948 = vld [vmem:[%s792 + $0x1c8] sm:$0xff]
        %v1949 = vld [vmem:[%s792 + $0x1d0] sm:$0xff]
        %v1950 = vld [vmem:[%s792 + $0x1d8] sm:$0xff]
        %v1951 = vld [vmem:[%s792 + $0x1e0] sm:$0xff]
        %v1952 = vld [vmem:[%s792 + $0x1e8] sm:$0xff]
        %v1953 = vld [vmem:[%s792 + $0x1f0] sm:$0xff]
        %v1954 = vld [vmem:[%s792 + $0x1f8] sm:$0xff]
        %v1955 = vld [vmem:[%s792 + $0x200] sm:$0xff]
        %v1956 = vld [vmem:[%s792 + $0x208] sm:$0xff]
        %v1957 = vld [vmem:[%s792 + $0x210] sm:$0xff]
        %v1958 = vld [vmem:[%s792 + $0x218] sm:$0xff]
        %v1959 = vld [vmem:[%s792 + $0x220] sm:$0xff]
        %v1960 = vld [vmem:[%s792 + $0x228] sm:$0xff]
        %v1961 = vld [vmem:[%s792 + $0x230] sm:$0xff]
        %v1962 = vld [vmem:[%s792 + $0x238] sm:$0xff]
        %v1963 = vld [vmem:[%s792 + $0x240] sm:$0xff]
        %v1964 = vld [vmem:[%s792 + $0x248] sm:$0xff]
        %v1965 = vld [vmem:[%s792 + $0x250] sm:$0xff]
        %v1966 = vld [vmem:[%s792 + $0x258] sm:$0xff]
        %v1967 = vld [vmem:[%s792 + $0x260] sm:$0xff]
        %v1968 = vld [vmem:[%s792 + $0x268] sm:$0xff]
        %v1969 = vld [vmem:[%s792 + $0x270] sm:$0xff]
        %v1970 = vld [vmem:[%s792 + $0x278] sm:$0xff]
        %v1971 = vld [vmem:[%s792 + $0x280] sm:$0xff]
        %v1972 = vld [vmem:[%s792 + $0x288] sm:$0xff]
        %v1973 = vld [vmem:[%s792 + $0x290] sm:$0xff]
        %v1974 = vld [vmem:[%s792 + $0x298] sm:$0xff]
        %v1975 = vld [vmem:[%s792 + $0x2a0] sm:$0xff]
        %v1976 = vld [vmem:[%s792 + $0x2a8] sm:$0xff]
        %v1977 = vld [vmem:[%s792 + $0x2b0] sm:$0xff]
        %v1978 = vld [vmem:[%s792 + $0x2b8] sm:$0xff]
        %v1979 = vld [vmem:[%s792 + $0x2c0] sm:$0xff]
        %v1980 = vld [vmem:[%s792 + $0x2c8] sm:$0xff]
        %v1981 = vld [vmem:[%s792 + $0x2d0] sm:$0xff]
        %v1982 = vld [vmem:[%s792 + $0x2d8] sm:$0xff]
        %v1983 = vld [vmem:[%s792 + $0x2e0] sm:$0xff]
        %v1984 = vld [vmem:[%s792 + $0x2e8] sm:$0xff]
        %v1985 = vld [vmem:[%s792 + $0x2f0] sm:$0xff]
        %v1986 = vld [vmem:[%s792 + $0x2f8] sm:$0xff]
        %v1987 = vld [vmem:[%s792 + $0x300] sm:$0xff]
        %v1988 = vld [vmem:[%s792 + $0x308] sm:$0xff]
        %v1989 = vld [vmem:[%s792 + $0x310] sm:$0xff]
        %v1990 = vld [vmem:[%s792 + $0x318] sm:$0xff]
        %v1991 = vld [vmem:[%s792 + $0x320] sm:$0xff]
        %v1992 = vld [vmem:[%s792 + $0x328] sm:$0xff]
        %v1993 = vld [vmem:[%s792 + $0x330] sm:$0xff]
        %v1994 = vld [vmem:[%s792 + $0x338] sm:$0xff]
        %v1995 = vld [vmem:[%s792 + $0x340] sm:$0xff]
        %v1996 = vld [vmem:[%s792 + $0x348] sm:$0xff]
        %v1997 = vld [vmem:[%s792 + $0x350] sm:$0xff]
        %v1998 = vld [vmem:[%s792 + $0x358] sm:$0xff]
        %v1999 = vld [vmem:[%s792 + $0x360] sm:$0xff]
        %v2000 = vld [vmem:[%s792 + $0x368] sm:$0xff]
        %v2001 = vld [vmem:[%s792 + $0x370] sm:$0xff]
        %v2002 = vld [vmem:[%s792 + $0x378] sm:$0xff]
        %v2003 = vld [vmem:[%s792 + $0x380] sm:$0xff]
        %v2004 = vld [vmem:[%s792 + $0x388] sm:$0xff]
        %v2005 = vld [vmem:[%s792 + $0x390] sm:$0xff]
        %v2006 = vld [vmem:[%s792 + $0x398] sm:$0xff]
        %v2007 = vld [vmem:[%s792 + $0x3a0] sm:$0xff]
        %v2008 = vld [vmem:[%s792 + $0x3a8] sm:$0xff]
        %v2009 = vld [vmem:[%s792 + $0x3b0] sm:$0xff]
        %v2010 = vld [vmem:[%s792 + $0x3b8] sm:$0xff]
        %v2011 = vld [vmem:[%s792 + $0x3c0] sm:$0xff]
        %v2012 = vld [vmem:[%s792 + $0x3c8] sm:$0xff]
        %v2013 = vld [vmem:[%s792 + $0x3d0] sm:$0xff]
        %v2014 = vld [vmem:[%s792 + $0x3d8] sm:$0xff]
        %v2015 = vld [vmem:[%s792 + $0x3e0] sm:$0xff]
        %v2016 = vld [vmem:[%s792 + $0x3e8] sm:$0xff]
        %v2017 = vld [vmem:[%s792 + $0x3f0] sm:$0xff]
        %v2018 = vld [vmem:[%s792 + $0x3f8] sm:$0xff]
        %v2019 = vld [vmem:[%s792 + $0x400] sm:$0xff]
        %v2020 = vld [vmem:[%s792 + $0x408] sm:$0xff]
        %v2021 = vld [vmem:[%s792 + $0x410] sm:$0xff]
        %v2022 = vld [vmem:[%s792 + $0x418] sm:$0xff]
        %v2023 = vld [vmem:[%s792 + $0x420] sm:$0xff]
        %v2024 = vld [vmem:[%s792 + $0x428] sm:$0xff]
        %v2025 = vld [vmem:[%s792 + $0x430] sm:$0xff]
        %v2026 = vld [vmem:[%s792 + $0x438] sm:$0xff]
        %v2027 = vld [vmem:[%s792 + $0x440] sm:$0xff]
        %v2028 = vld [vmem:[%s792 + $0x448] sm:$0xff]
        %v2029 = vld [vmem:[%s792 + $0x450] sm:$0xff]
        %v2030 = vld [vmem:[%s792 + $0x458] sm:$0xff]
        %v2031 = vld [vmem:[%s792 + $0x460] sm:$0xff]
        %v2032 = vld [vmem:[%s792 + $0x468] sm:$0xff]
        %v2033 = vld [vmem:[%s792 + $0x470] sm:$0xff]
        %v2034 = vld [vmem:[%s792 + $0x478] sm:$0xff]
        %v2035 = vld [vmem:[%s792 + $0x480] sm:$0xff]
        %v2036 = vld [vmem:[%s792 + $0x488] sm:$0xff]
        %v2037 = vld [vmem:[%s792 + $0x490] sm:$0xff]
        %v2038 = vld [vmem:[%s792 + $0x498] sm:$0xff]
        %v2039 = vld [vmem:[%s792 + $0x4a0] sm:$0xff]
        %v2040 = vld [vmem:[%s792 + $0x4a8] sm:$0xff]
        %v2041 = vld [vmem:[%s792 + $0x4b0] sm:$0xff]
        %v2042 = vld [vmem:[%s792 + $0x4b8] sm:$0xff]
        %v2043 = vld [vmem:[%s792 + $0x4c0] sm:$0xff]
        %v2044 = vld [vmem:[%s792 + $0x4c8] sm:$0xff]
        %v2045 = vld [vmem:[%s792 + $0x4d0] sm:$0xff]
        %v2046 = vld [vmem:[%s792 + $0x4d8] sm:$0xff]
        %v2047 = vld [vmem:[%s792 + $0x4e0] sm:$0xff]
        %v2048 = vld [vmem:[%s792 + $0x4e8] sm:$0xff]
        %v2049 = vld [vmem:[%s792 + $0x4f0] sm:$0xff]
        %v2050 = vld [vmem:[%s792 + $0x4f8] sm:$0xff]
        %v2051 = vld [vmem:[%s792 + $0x500] sm:$0xff]
        %v2052 = vld [vmem:[%s792 + $0x508] sm:$0xff]
        %v2053 = vld [vmem:[%s792 + $0x510] sm:$0xff]
        %v2054 = vld [vmem:[%s792 + $0x518] sm:$0xff]
        %v2055 = vld [vmem:[%s792 + $0x520] sm:$0xff]
        %v2056 = vld [vmem:[%s792 + $0x528] sm:$0xff]
        %v2057 = vld [vmem:[%s792 + $0x530] sm:$0xff]
        %v2058 = vld [vmem:[%s792 + $0x538] sm:$0xff]
        %v2059 = vld [vmem:[%s792 + $0x540] sm:$0xff]
        %v2060 = vld [vmem:[%s792 + $0x548] sm:$0xff]
        %v2061 = vld [vmem:[%s792 + $0x550] sm:$0xff]
        %v2062 = vld [vmem:[%s792 + $0x558] sm:$0xff]
        %v2063 = vld [vmem:[%s792 + $0x560] sm:$0xff]
        %v2064 = vld [vmem:[%s792 + $0x568] sm:$0xff]
        %v2065 = vld [vmem:[%s792 + $0x570] sm:$0xff]
        %v2066 = vld [vmem:[%s792 + $0x578] sm:$0xff]
        %v2067 = vld [vmem:[%s792 + $0x580] sm:$0xff]
        %v2068 = vld [vmem:[%s792 + $0x588] sm:$0xff]
        %v2069 = vld [vmem:[%s792 + $0x590] sm:$0xff]
        %v2070 = vld [vmem:[%s792 + $0x598] sm:$0xff]
        %v2071 = vld [vmem:[%s792 + $0x5a0] sm:$0xff]
        %v2072 = vld [vmem:[%s792 + $0x5a8] sm:$0xff]
        %v2073 = vld [vmem:[%s792 + $0x5b0] sm:$0xff]
        %v2074 = vld [vmem:[%s792 + $0x5b8] sm:$0xff]
        %v2075 = vld [vmem:[%s792 + $0x5c0] sm:$0xff]
        %v2076 = vld [vmem:[%s792 + $0x5c8] sm:$0xff]
        %v2077 = vld [vmem:[%s792 + $0x5d0] sm:$0xff]
        %v2078 = vld [vmem:[%s792 + $0x5d8] sm:$0xff]
        %v2079 = vld [vmem:[%s792 + $0x5e0] sm:$0xff]
        %v2080 = vld [vmem:[%s792 + $0x5e8] sm:$0xff]
        %v2081 = vld [vmem:[%s792 + $0x5f0] sm:$0xff]
        %v2082 = vld [vmem:[%s792 + $0x5f8] sm:$0xff]
        %v2083 = vld [vmem:[%s792 + $0x600] sm:$0xff]
        %v2084 = vld [vmem:[%s792 + $0x608] sm:$0xff]
        %v2085 = vld [vmem:[%s792 + $0x610] sm:$0xff]
        %v2086 = vld [vmem:[%s792 + $0x618] sm:$0xff]
        %v2087 = vld [vmem:[%s792 + $0x620] sm:$0xff]
        %v2088 = vld [vmem:[%s792 + $0x628] sm:$0xff]
        %v2089 = vld [vmem:[%s792 + $0x630] sm:$0xff]
        %v2090 = vld [vmem:[%s792 + $0x638] sm:$0xff]
        %v2091 = vld [vmem:[%s792 + $0x640] sm:$0xff]
        %v2092 = vld [vmem:[%s792 + $0x648] sm:$0xff]
        %v2093 = vld [vmem:[%s792 + $0x650] sm:$0xff]
        %v2094 = vld [vmem:[%s792 + $0x658] sm:$0xff]
        %v2095 = vld [vmem:[%s792 + $0x660] sm:$0xff]
        %v2096 = vld [vmem:[%s792 + $0x668] sm:$0xff]
        %v2097 = vld [vmem:[%s792 + $0x670] sm:$0xff]
        %v2098 = vld [vmem:[%s792 + $0x678] sm:$0xff]
        %v2099 = vld [vmem:[%s792 + $0x680] sm:$0xff]
        %v2100 = vld [vmem:[%s792 + $0x688] sm:$0xff]
        %v2101 = vld [vmem:[%s792 + $0x690] sm:$0xff]
        %v2102 = vld [vmem:[%s792 + $0x698] sm:$0xff]
        %v2103 = vld [vmem:[%s792 + $0x6a0] sm:$0xff]
        %v2104 = vld [vmem:[%s792 + $0x6a8] sm:$0xff]
        %v2105 = vld [vmem:[%s792 + $0x6b0] sm:$0xff]
        %v2106 = vld [vmem:[%s792 + $0x6b8] sm:$0xff]
        %v2107 = vld [vmem:[%s792 + $0x6c0] sm:$0xff]
        %v2108 = vld [vmem:[%s792 + $0x6c8] sm:$0xff]
        %v2109 = vld [vmem:[%s792 + $0x6d0] sm:$0xff]
        %v2110 = vld [vmem:[%s792 + $0x6d8] sm:$0xff]
        %v2111 = vld [vmem:[%s792 + $0x6e0] sm:$0xff]
        %v2112 = vld [vmem:[%s792 + $0x6e8] sm:$0xff]
        %v2113 = vld [vmem:[%s792 + $0x6f0] sm:$0xff]
        %v2114 = vld [vmem:[%s792 + $0x6f8] sm:$0xff]
        %v2115 = vld [vmem:[%s792 + $0x700] sm:$0xff]
        %v2116 = vld [vmem:[%s792 + $0x708] sm:$0xff]
        %v2117 = vld [vmem:[%s792 + $0x710] sm:$0xff]
        %v2118 = vld [vmem:[%s792 + $0x718] sm:$0xff]
        %v2119 = vld [vmem:[%s792 + $0x720] sm:$0xff]
        %v2120 = vld [vmem:[%s792 + $0x728] sm:$0xff]
        %v2121 = vld [vmem:[%s792 + $0x730] sm:$0xff]
        %v2122 = vld [vmem:[%s792 + $0x738] sm:$0xff]
        %v2123 = vld [vmem:[%s792 + $0x740] sm:$0xff]
        %v2124 = vld [vmem:[%s792 + $0x748] sm:$0xff]
        %v2125 = vld [vmem:[%s792 + $0x750] sm:$0xff]
        %v2126 = vld [vmem:[%s792 + $0x758] sm:$0xff]
        %v2127 = vld [vmem:[%s792 + $0x760] sm:$0xff]
        %v2128 = vld [vmem:[%s792 + $0x768] sm:$0xff]
        %v2129 = vld [vmem:[%s792 + $0x770] sm:$0xff]
        %v2130 = vld [vmem:[%s792 + $0x778] sm:$0xff]
        %v2131 = vld [vmem:[%s792 + $0x780] sm:$0xff]
        %v2132 = vld [vmem:[%s792 + $0x788] sm:$0xff]
        %v2133 = vld [vmem:[%s792 + $0x790] sm:$0xff]
        %v2134 = vld [vmem:[%s792 + $0x798] sm:$0xff]
        %v2135 = vld [vmem:[%s792 + $0x7a0] sm:$0xff]
        %v2136 = vld [vmem:[%s792 + $0x7a8] sm:$0xff]
        %v2137 = vld [vmem:[%s792 + $0x7b0] sm:$0xff]
        %v2138 = vld [vmem:[%s792 + $0x7b8] sm:$0xff]
        %v2139 = vld [vmem:[%s792 + $0x7c0] sm:$0xff]
        %v2140 = vld [vmem:[%s792 + $0x7c8] sm:$0xff]
        %v2141 = vld [vmem:[%s792 + $0x7d0] sm:$0xff]
        %v2142 = vld [vmem:[%s792 + $0x7d8] sm:$0xff]
        %v2143 = vld [vmem:[%s792 + $0x7e0] sm:$0xff]
        %v2144 = vld [vmem:[%s792 + $0x7e8] sm:$0xff]
        %v2145 = vld [vmem:[%s792 + $0x7f0] sm:$0xff]
        %v2146 = vld [vmem:[%s792 + $0x7f8] sm:$0xff]
        %v2147 = vld [vmem:[%s829] sm:$0xf]
        %v2149 = vperm.slane %v2147, 0
        %v2150 = vperm.slane %v2147, 1
        %v2151 = vperm.slane %v2147, 2
        %v2152 = vperm.slane %v2147, 3
        %2158 = vst [vmem:[#allocation1] ss:$9 sm:$0xff] %v1890
        %v2159 = vld [vmem:[#allocation1] sm:$0xff]
        %v2160 = vld [vmem:[#allocation1 + $0x9] sm:$0xff]
        %v2161 = vld [vmem:[#allocation1 + $0x12] sm:$0xff]
        %v2162 = vld [vmem:[#allocation1 + $0x1b] sm:$0xff]
        %v2163 = vld [vmem:[#allocation1 + $0x24] sm:$0xff]
        %v2164 = vld [vmem:[#allocation1 + $0x2d] sm:$0xff]
        %v2165 = vld [vmem:[#allocation1 + $0x36] sm:$0xff]
        %v2166 = vld [vmem:[#allocation1 + $0x3f] sm:$0xff]
        %v2431 = vunpack.c.l.b16 %v1891
        %v2432 = vunpack.c.h.b16 %v1891
        %v2433 = vunpack.c.l.b16 %v1892
        %v2434 = vunpack.c.h.b16 %v1892
        %v2435 = vunpack.c.l.b16 %v1893
        %v2436 = vunpack.c.h.b16 %v1893
        %v2437 = vunpack.c.l.b16 %v1894
        %v2438 = vunpack.c.h.b16 %v1894
        %v2439 = vunpack.c.l.b16 %v1895
        %v2440 = vunpack.c.h.b16 %v1895
        %v2441 = vunpack.c.l.b16 %v1896
        %v2442 = vunpack.c.h.b16 %v1896
        %v2443 = vunpack.c.l.b16 %v1897
        %v2444 = vunpack.c.h.b16 %v1897
        %v2445 = vunpack.c.l.b16 %v1898
        %v2446 = vunpack.c.h.b16 %v1898
        %v2447 = vunpack.c.l.b16 %v1899
        %v2448 = vunpack.c.h.b16 %v1899
        %v2449 = vunpack.c.l.b16 %v1900
        %v2450 = vunpack.c.h.b16 %v1900
        %v2451 = vunpack.c.l.b16 %v1901
        %v2452 = vunpack.c.h.b16 %v1901
        %v2453 = vunpack.c.l.b16 %v1902
        %v2454 = vunpack.c.h.b16 %v1902
        %v2455 = vunpack.c.l.b16 %v1903
        %v2456 = vunpack.c.h.b16 %v1903
        %v2457 = vunpack.c.l.b16 %v1904
        %v2458 = vunpack.c.h.b16 %v1904
        %v2459 = vunpack.c.l.b16 %v1905
        %v2460 = vunpack.c.h.b16 %v1905
        %v2461 = vunpack.c.l.b16 %v1906
        %v2462 = vunpack.c.h.b16 %v1906
        %v2463 = vunpack.c.l.b16 %v1907
        %v2464 = vunpack.c.h.b16 %v1907
        %v2465 = vunpack.c.l.b16 %v1908
        %v2466 = vunpack.c.h.b16 %v1908
        %v2467 = vunpack.c.l.b16 %v1909
        %v2468 = vunpack.c.h.b16 %v1909
        %v2469 = vunpack.c.l.b16 %v1910
        %v2470 = vunpack.c.h.b16 %v1910
        %v2471 = vunpack.c.l.b16 %v1911
        %v2472 = vunpack.c.h.b16 %v1911
        %v2473 = vunpack.c.l.b16 %v1912
        %v2474 = vunpack.c.h.b16 %v1912
        %v2475 = vunpack.c.l.b16 %v1913
        %v2476 = vunpack.c.h.b16 %v1913
        %v2477 = vunpack.c.l.b16 %v1914
        %v2478 = vunpack.c.h.b16 %v1914
        %v2479 = vunpack.c.l.b16 %v1915
        %v2480 = vunpack.c.h.b16 %v1915
        %v2481 = vunpack.c.l.b16 %v1916
        %v2482 = vunpack.c.h.b16 %v1916
        %v2483 = vunpack.c.l.b16 %v1917
        %v2484 = vunpack.c.h.b16 %v1917
        %v2485 = vunpack.c.l.b16 %v1918
        %v2486 = vunpack.c.h.b16 %v1918
        %v2487 = vunpack.c.l.b16 %v1919
        %v2488 = vunpack.c.h.b16 %v1919
        %v2489 = vunpack.c.l.b16 %v1920
        %v2490 = vunpack.c.h.b16 %v1920
        %v2491 = vunpack.c.l.b16 %v1921
        %v2492 = vunpack.c.h.b16 %v1921
        %v2493 = vunpack.c.l.b16 %v1922
        %v2494 = vunpack.c.h.b16 %v1922
        %v2495 = vunpack.c.l.b16 %v1923
        %v2496 = vunpack.c.h.b16 %v1923
        %v2497 = vunpack.c.l.b16 %v1924
        %v2498 = vunpack.c.h.b16 %v1924
        %v2499 = vunpack.c.l.b16 %v1925
        %v2500 = vunpack.c.h.b16 %v1925
        %v2501 = vunpack.c.l.b16 %v1926
        %v2502 = vunpack.c.h.b16 %v1926
        %v2503 = vunpack.c.l.b16 %v1927
        %v2504 = vunpack.c.h.b16 %v1927
        %v2505 = vunpack.c.l.b16 %v1928
        %v2506 = vunpack.c.h.b16 %v1928
        %v2507 = vunpack.c.l.b16 %v1929
        %v2508 = vunpack.c.h.b16 %v1929
        %v2509 = vunpack.c.l.b16 %v1930
        %v2510 = vunpack.c.h.b16 %v1930
        %v2511 = vunpack.c.l.b16 %v1931
        %v2512 = vunpack.c.h.b16 %v1931
        %v2513 = vunpack.c.l.b16 %v1932
        %v2514 = vunpack.c.h.b16 %v1932
        %v2515 = vunpack.c.l.b16 %v1933
        %v2516 = vunpack.c.h.b16 %v1933
        %v2517 = vunpack.c.l.b16 %v1934
        %v2518 = vunpack.c.h.b16 %v1934
        %v2519 = vunpack.c.l.b16 %v1935
        %v2520 = vunpack.c.h.b16 %v1935
        %v2521 = vunpack.c.l.b16 %v1936
        %v2522 = vunpack.c.h.b16 %v1936
        %v2523 = vunpack.c.l.b16 %v1937
        %v2524 = vunpack.c.h.b16 %v1937
        %v2525 = vunpack.c.l.b16 %v1938
        %v2526 = vunpack.c.h.b16 %v1938
        %v2527 = vunpack.c.l.b16 %v1939
        %v2528 = vunpack.c.h.b16 %v1939
        %v2529 = vunpack.c.l.b16 %v1940
        %v2530 = vunpack.c.h.b16 %v1940
        %v2531 = vunpack.c.l.b16 %v1941
        %v2532 = vunpack.c.h.b16 %v1941
        %v2533 = vunpack.c.l.b16 %v1942
        %v2534 = vunpack.c.h.b16 %v1942
        %v2535 = vunpack.c.l.b16 %v1943
        %v2536 = vunpack.c.h.b16 %v1943
        %v2537 = vunpack.c.l.b16 %v1944
        %v2538 = vunpack.c.h.b16 %v1944
        %v2539 = vunpack.c.l.b16 %v1945
        %v2540 = vunpack.c.h.b16 %v1945
        %v2541 = vunpack.c.l.b16 %v1946
        %v2542 = vunpack.c.h.b16 %v1946
        %v2543 = vunpack.c.l.b16 %v1947
        %v2544 = vunpack.c.h.b16 %v1947
        %v2545 = vunpack.c.l.b16 %v1948
        %v2546 = vunpack.c.h.b16 %v1948
        %v2547 = vunpack.c.l.b16 %v1949
        %v2548 = vunpack.c.h.b16 %v1949
        %v2549 = vunpack.c.l.b16 %v1950
        %v2550 = vunpack.c.h.b16 %v1950
        %v2551 = vunpack.c.l.b16 %v1951
        %v2552 = vunpack.c.h.b16 %v1951
        %v2553 = vunpack.c.l.b16 %v1952
        %v2554 = vunpack.c.h.b16 %v1952
        %v2555 = vunpack.c.l.b16 %v1953
        %v2556 = vunpack.c.h.b16 %v1953
        %v2557 = vunpack.c.l.b16 %v1954
        %v2558 = vunpack.c.h.b16 %v1954
        %v2559 = vunpack.c.l.b16 %v1955
        %v2560 = vunpack.c.h.b16 %v1955
        %v2561 = vunpack.c.l.b16 %v1956
        %v2562 = vunpack.c.h.b16 %v1956
        %v2563 = vunpack.c.l.b16 %v1957
        %v2564 = vunpack.c.h.b16 %v1957
        %v2565 = vunpack.c.l.b16 %v1958
        %v2566 = vunpack.c.h.b16 %v1958
        %v2567 = vunpack.c.l.b16 %v1959
        %v2568 = vunpack.c.h.b16 %v1959
        %v2569 = vunpack.c.l.b16 %v1960
        %v2570 = vunpack.c.h.b16 %v1960
        %v2571 = vunpack.c.l.b16 %v1961
        %v2572 = vunpack.c.h.b16 %v1961
        %v2573 = vunpack.c.l.b16 %v1962
        %v2574 = vunpack.c.h.b16 %v1962
        %v2575 = vunpack.c.l.b16 %v1963
        %v2576 = vunpack.c.h.b16 %v1963
        %v2577 = vunpack.c.l.b16 %v1964
        %v2578 = vunpack.c.h.b16 %v1964
        %v2579 = vunpack.c.l.b16 %v1965
        %v2580 = vunpack.c.h.b16 %v1965
        %v2581 = vunpack.c.l.b16 %v1966
        %v2582 = vunpack.c.h.b16 %v1966
        %v2583 = vunpack.c.l.b16 %v1967
        %v2584 = vunpack.c.h.b16 %v1967
        %v2585 = vunpack.c.l.b16 %v1968
        %v2586 = vunpack.c.h.b16 %v1968
        %v2587 = vunpack.c.l.b16 %v1969
        %v2588 = vunpack.c.h.b16 %v1969
        %v2589 = vunpack.c.l.b16 %v1970
        %v2590 = vunpack.c.h.b16 %v1970
        %v2591 = vunpack.c.l.b16 %v1971
        %v2592 = vunpack.c.h.b16 %v1971
        %v2593 = vunpack.c.l.b16 %v1972
        %v2594 = vunpack.c.h.b16 %v1972
        %v2595 = vunpack.c.l.b16 %v1973
        %v2596 = vunpack.c.h.b16 %v1973
        %v2597 = vunpack.c.l.b16 %v1974
        %v2598 = vunpack.c.h.b16 %v1974
        %v2599 = vunpack.c.l.b16 %v1975
        %v2600 = vunpack.c.h.b16 %v1975
        %v2601 = vunpack.c.l.b16 %v1976
        %v2602 = vunpack.c.h.b16 %v1976
        %v2603 = vunpack.c.l.b16 %v1977
        %v2604 = vunpack.c.h.b16 %v1977
        %v2605 = vunpack.c.l.b16 %v1978
        %v2606 = vunpack.c.h.b16 %v1978
        %v2607 = vunpack.c.l.b16 %v1979
        %v2608 = vunpack.c.h.b16 %v1979
        %v2609 = vunpack.c.l.b16 %v1980
        %v2610 = vunpack.c.h.b16 %v1980
        %v2611 = vunpack.c.l.b16 %v1981
        %v2612 = vunpack.c.h.b16 %v1981
        %v2613 = vunpack.c.l.b16 %v1982
        %v2614 = vunpack.c.h.b16 %v1982
        %v2615 = vunpack.c.l.b16 %v1983
        %v2616 = vunpack.c.h.b16 %v1983
        %v2617 = vunpack.c.l.b16 %v1984
        %v2618 = vunpack.c.h.b16 %v1984
        %v2619 = vunpack.c.l.b16 %v1985
        %v2620 = vunpack.c.h.b16 %v1985
        %v2621 = vunpack.c.l.b16 %v1986
        %v2622 = vunpack.c.h.b16 %v1986
        %v2623 = vunpack.c.l.b16 %v1987
        %v2624 = vunpack.c.h.b16 %v1987
        %v2625 = vunpack.c.l.b16 %v1988
        %v2626 = vunpack.c.h.b16 %v1988
        %v2627 = vunpack.c.l.b16 %v1989
        %v2628 = vunpack.c.h.b16 %v1989
        %v2629 = vunpack.c.l.b16 %v1990
        %v2630 = vunpack.c.h.b16 %v1990
        %v2631 = vunpack.c.l.b16 %v1991
        %v2632 = vunpack.c.h.b16 %v1991
        %v2633 = vunpack.c.l.b16 %v1992
        %v2634 = vunpack.c.h.b16 %v1992
        %v2635 = vunpack.c.l.b16 %v1993
        %v2636 = vunpack.c.h.b16 %v1993
        %v2637 = vunpack.c.l.b16 %v1994
        %v2638 = vunpack.c.h.b16 %v1994
        %v2639 = vunpack.c.l.b16 %v1995
        %v2640 = vunpack.c.h.b16 %v1995
        %v2641 = vunpack.c.l.b16 %v1996
        %v2642 = vunpack.c.h.b16 %v1996
        %v2643 = vunpack.c.l.b16 %v1997
        %v2644 = vunpack.c.h.b16 %v1997
        %v2645 = vunpack.c.l.b16 %v1998
        %v2646 = vunpack.c.h.b16 %v1998
        %v2647 = vunpack.c.l.b16 %v1999
        %v2648 = vunpack.c.h.b16 %v1999
        %v2649 = vunpack.c.l.b16 %v2000
        %v2650 = vunpack.c.h.b16 %v2000
        %v2651 = vunpack.c.l.b16 %v2001
        %v2652 = vunpack.c.h.b16 %v2001
        %v2653 = vunpack.c.l.b16 %v2002
        %v2654 = vunpack.c.h.b16 %v2002
        %v2655 = vunpack.c.l.b16 %v2003
        %v2656 = vunpack.c.h.b16 %v2003
        %v2657 = vunpack.c.l.b16 %v2004
        %v2658 = vunpack.c.h.b16 %v2004
        %v2659 = vunpack.c.l.b16 %v2005
        %v2660 = vunpack.c.h.b16 %v2005
        %v2661 = vunpack.c.l.b16 %v2006
        %v2662 = vunpack.c.h.b16 %v2006
        %v2663 = vunpack.c.l.b16 %v2007
        %v2664 = vunpack.c.h.b16 %v2007
        %v2665 = vunpack.c.l.b16 %v2008
        %v2666 = vunpack.c.h.b16 %v2008
        %v2667 = vunpack.c.l.b16 %v2009
        %v2668 = vunpack.c.h.b16 %v2009
        %v2669 = vunpack.c.l.b16 %v2010
        %v2670 = vunpack.c.h.b16 %v2010
        %v2671 = vunpack.c.l.b16 %v2011
        %v2672 = vunpack.c.h.b16 %v2011
        %v2673 = vunpack.c.l.b16 %v2012
        %v2674 = vunpack.c.h.b16 %v2012
        %v2675 = vunpack.c.l.b16 %v2013
        %v2676 = vunpack.c.h.b16 %v2013
        %v2677 = vunpack.c.l.b16 %v2014
        %v2678 = vunpack.c.h.b16 %v2014
        %v2679 = vunpack.c.l.b16 %v2015
        %v2680 = vunpack.c.h.b16 %v2015
        %v2681 = vunpack.c.l.b16 %v2016
        %v2682 = vunpack.c.h.b16 %v2016
        %v2683 = vunpack.c.l.b16 %v2017
        %v2684 = vunpack.c.h.b16 %v2017
        %v2685 = vunpack.c.l.b16 %v2018
        %v2686 = vunpack.c.h.b16 %v2018
        %v2687 = vunpack.c.l.b16 %v2019
        %v2688 = vunpack.c.h.b16 %v2019
        %v2689 = vunpack.c.l.b16 %v2020
        %v2690 = vunpack.c.h.b16 %v2020
        %v2691 = vunpack.c.l.b16 %v2021
        %v2692 = vunpack.c.h.b16 %v2021
        %v2693 = vunpack.c.l.b16 %v2022
        %v2694 = vunpack.c.h.b16 %v2022
        %v2695 = vunpack.c.l.b16 %v2023
        %v2696 = vunpack.c.h.b16 %v2023
        %v2697 = vunpack.c.l.b16 %v2024
        %v2698 = vunpack.c.h.b16 %v2024
        %v2699 = vunpack.c.l.b16 %v2025
        %v2700 = vunpack.c.h.b16 %v2025
        %v2701 = vunpack.c.l.b16 %v2026
        %v2702 = vunpack.c.h.b16 %v2026
        %v2703 = vunpack.c.l.b16 %v2027
        %v2704 = vunpack.c.h.b16 %v2027
        %v2705 = vunpack.c.l.b16 %v2028
        %v2706 = vunpack.c.h.b16 %v2028
        %v2707 = vunpack.c.l.b16 %v2029
        %v2708 = vunpack.c.h.b16 %v2029
        %v2709 = vunpack.c.l.b16 %v2030
        %v2710 = vunpack.c.h.b16 %v2030
        %v2711 = vunpack.c.l.b16 %v2031
        %v2712 = vunpack.c.h.b16 %v2031
        %v2713 = vunpack.c.l.b16 %v2032
        %v2714 = vunpack.c.h.b16 %v2032
        %v2715 = vunpack.c.l.b16 %v2033
        %v2716 = vunpack.c.h.b16 %v2033
        %v2717 = vunpack.c.l.b16 %v2034
        %v2718 = vunpack.c.h.b16 %v2034
        %v2719 = vunpack.c.l.b16 %v2035
        %v2720 = vunpack.c.h.b16 %v2035
        %v2721 = vunpack.c.l.b16 %v2036
        %v2722 = vunpack.c.h.b16 %v2036
        %v2723 = vunpack.c.l.b16 %v2037
        %v2724 = vunpack.c.h.b16 %v2037
        %v2725 = vunpack.c.l.b16 %v2038
        %v2726 = vunpack.c.h.b16 %v2038
        %v2727 = vunpack.c.l.b16 %v2039
        %v2728 = vunpack.c.h.b16 %v2039
        %v2729 = vunpack.c.l.b16 %v2040
        %v2730 = vunpack.c.h.b16 %v2040
        %v2731 = vunpack.c.l.b16 %v2041
        %v2732 = vunpack.c.h.b16 %v2041
        %v2733 = vunpack.c.l.b16 %v2042
        %v2734 = vunpack.c.h.b16 %v2042
        %v2735 = vunpack.c.l.b16 %v2043
        %v2736 = vunpack.c.h.b16 %v2043
        %v2737 = vunpack.c.l.b16 %v2044
        %v2738 = vunpack.c.h.b16 %v2044
        %v2739 = vunpack.c.l.b16 %v2045
        %v2740 = vunpack.c.h.b16 %v2045
        %v2741 = vunpack.c.l.b16 %v2046
        %v2742 = vunpack.c.h.b16 %v2046
        %v2743 = vunpack.c.l.b16 %v2047
        %v2744 = vunpack.c.h.b16 %v2047
        %v2745 = vunpack.c.l.b16 %v2048
        %v2746 = vunpack.c.h.b16 %v2048
        %v2747 = vunpack.c.l.b16 %v2049
        %v2748 = vunpack.c.h.b16 %v2049
        %v2749 = vunpack.c.l.b16 %v2050
        %v2750 = vunpack.c.h.b16 %v2050
        %v2751 = vunpack.c.l.b16 %v2051
        %v2752 = vunpack.c.h.b16 %v2051
        %v2753 = vunpack.c.l.b16 %v2052
        %v2754 = vunpack.c.h.b16 %v2052
        %v2755 = vunpack.c.l.b16 %v2053
        %v2756 = vunpack.c.h.b16 %v2053
        %v2757 = vunpack.c.l.b16 %v2054
        %v2758 = vunpack.c.h.b16 %v2054
        %v2759 = vunpack.c.l.b16 %v2055
        %v2760 = vunpack.c.h.b16 %v2055
        %v2761 = vunpack.c.l.b16 %v2056
        %v2762 = vunpack.c.h.b16 %v2056
        %v2763 = vunpack.c.l.b16 %v2057
        %v2764 = vunpack.c.h.b16 %v2057
        %v2765 = vunpack.c.l.b16 %v2058
        %v2766 = vunpack.c.h.b16 %v2058
        %v2767 = vunpack.c.l.b16 %v2059
        %v2768 = vunpack.c.h.b16 %v2059
        %v2769 = vunpack.c.l.b16 %v2060
        %v2770 = vunpack.c.h.b16 %v2060
        %v2771 = vunpack.c.l.b16 %v2061
        %v2772 = vunpack.c.h.b16 %v2061
        %v2773 = vunpack.c.l.b16 %v2062
        %v2774 = vunpack.c.h.b16 %v2062
        %v2775 = vunpack.c.l.b16 %v2063
        %v2776 = vunpack.c.h.b16 %v2063
        %v2777 = vunpack.c.l.b16 %v2064
        %v2778 = vunpack.c.h.b16 %v2064
        %v2779 = vunpack.c.l.b16 %v2065
        %v2780 = vunpack.c.h.b16 %v2065
        %v2781 = vunpack.c.l.b16 %v2066
        %v2782 = vunpack.c.h.b16 %v2066
        %v2783 = vunpack.c.l.b16 %v2067
        %v2784 = vunpack.c.h.b16 %v2067
        %v2785 = vunpack.c.l.b16 %v2068
        %v2786 = vunpack.c.h.b16 %v2068
        %v2787 = vunpack.c.l.b16 %v2069
        %v2788 = vunpack.c.h.b16 %v2069
        %v2789 = vunpack.c.l.b16 %v2070
        %v2790 = vunpack.c.h.b16 %v2070
        %v2791 = vunpack.c.l.b16 %v2071
        %v2792 = vunpack.c.h.b16 %v2071
        %v2793 = vunpack.c.l.b16 %v2072
        %v2794 = vunpack.c.h.b16 %v2072
        %v2795 = vunpack.c.l.b16 %v2073
        %v2796 = vunpack.c.h.b16 %v2073
        %v2797 = vunpack.c.l.b16 %v2074
        %v2798 = vunpack.c.h.b16 %v2074
        %v2799 = vunpack.c.l.b16 %v2075
        %v2800 = vunpack.c.h.b16 %v2075
        %v2801 = vunpack.c.l.b16 %v2076
        %v2802 = vunpack.c.h.b16 %v2076
        %v2803 = vunpack.c.l.b16 %v2077
        %v2804 = vunpack.c.h.b16 %v2077
        %v2805 = vunpack.c.l.b16 %v2078
        %v2806 = vunpack.c.h.b16 %v2078
        %v2807 = vunpack.c.l.b16 %v2079
        %v2808 = vunpack.c.h.b16 %v2079
        %v2809 = vunpack.c.l.b16 %v2080
        %v2810 = vunpack.c.h.b16 %v2080
        %v2811 = vunpack.c.l.b16 %v2081
        %v2812 = vunpack.c.h.b16 %v2081
        %v2813 = vunpack.c.l.b16 %v2082
        %v2814 = vunpack.c.h.b16 %v2082
        %v2815 = vunpack.c.l.b16 %v2083
        %v2816 = vunpack.c.h.b16 %v2083
        %v2817 = vunpack.c.l.b16 %v2084
        %v2818 = vunpack.c.h.b16 %v2084
        %v2819 = vunpack.c.l.b16 %v2085
        %v2820 = vunpack.c.h.b16 %v2085
        %v2821 = vunpack.c.l.b16 %v2086
        %v2822 = vunpack.c.h.b16 %v2086
        %v2823 = vunpack.c.l.b16 %v2087
        %v2824 = vunpack.c.h.b16 %v2087
        %v2825 = vunpack.c.l.b16 %v2088
        %v2826 = vunpack.c.h.b16 %v2088
        %v2827 = vunpack.c.l.b16 %v2089
        %v2828 = vunpack.c.h.b16 %v2089
        %v2829 = vunpack.c.l.b16 %v2090
        %v2830 = vunpack.c.h.b16 %v2090
        %v2831 = vunpack.c.l.b16 %v2091
        %v2832 = vunpack.c.h.b16 %v2091
        %v2833 = vunpack.c.l.b16 %v2092
        %v2834 = vunpack.c.h.b16 %v2092
        %v2835 = vunpack.c.l.b16 %v2093
        %v2836 = vunpack.c.h.b16 %v2093
        %v2837 = vunpack.c.l.b16 %v2094
        %v2838 = vunpack.c.h.b16 %v2094
        %v2839 = vunpack.c.l.b16 %v2095
        %v2840 = vunpack.c.h.b16 %v2095
        %v2841 = vunpack.c.l.b16 %v2096
        %v2842 = vunpack.c.h.b16 %v2096
        %v2843 = vunpack.c.l.b16 %v2097
        %v2844 = vunpack.c.h.b16 %v2097
        %v2845 = vunpack.c.l.b16 %v2098
        %v2846 = vunpack.c.h.b16 %v2098
        %v2847 = vunpack.c.l.b16 %v2099
        %v2848 = vunpack.c.h.b16 %v2099
        %v2849 = vunpack.c.l.b16 %v2100
        %v2850 = vunpack.c.h.b16 %v2100
        %v2851 = vunpack.c.l.b16 %v2101
        %v2852 = vunpack.c.h.b16 %v2101
        %v2853 = vunpack.c.l.b16 %v2102
        %v2854 = vunpack.c.h.b16 %v2102
        %v2855 = vunpack.c.l.b16 %v2103
        %v2856 = vunpack.c.h.b16 %v2103
        %v2857 = vunpack.c.l.b16 %v2104
        %v2858 = vunpack.c.h.b16 %v2104
        %v2859 = vunpack.c.l.b16 %v2105
        %v2860 = vunpack.c.h.b16 %v2105
        %v2861 = vunpack.c.l.b16 %v2106
        %v2862 = vunpack.c.h.b16 %v2106
        %v2863 = vunpack.c.l.b16 %v2107
        %v2864 = vunpack.c.h.b16 %v2107
        %v2865 = vunpack.c.l.b16 %v2108
        %v2866 = vunpack.c.h.b16 %v2108
        %v2867 = vunpack.c.l.b16 %v2109
        %v2868 = vunpack.c.h.b16 %v2109
        %v2869 = vunpack.c.l.b16 %v2110
        %v2870 = vunpack.c.h.b16 %v2110
        %v2871 = vunpack.c.l.b16 %v2111
        %v2872 = vunpack.c.h.b16 %v2111
        %v2873 = vunpack.c.l.b16 %v2112
        %v2874 = vunpack.c.h.b16 %v2112
        %v2875 = vunpack.c.l.b16 %v2113
        %v2876 = vunpack.c.h.b16 %v2113
        %v2877 = vunpack.c.l.b16 %v2114
        %v2878 = vunpack.c.h.b16 %v2114
        %v2879 = vunpack.c.l.b16 %v2115
        %v2880 = vunpack.c.h.b16 %v2115
        %v2881 = vunpack.c.l.b16 %v2116
        %v2882 = vunpack.c.h.b16 %v2116
        %v2883 = vunpack.c.l.b16 %v2117
        %v2884 = vunpack.c.h.b16 %v2117
        %v2885 = vunpack.c.l.b16 %v2118
        %v2886 = vunpack.c.h.b16 %v2118
        %v2887 = vunpack.c.l.b16 %v2119
        %v2888 = vunpack.c.h.b16 %v2119
        %v2889 = vunpack.c.l.b16 %v2120
        %v2890 = vunpack.c.h.b16 %v2120
        %v2891 = vunpack.c.l.b16 %v2121
        %v2892 = vunpack.c.h.b16 %v2121
        %v2893 = vunpack.c.l.b16 %v2122
        %v2894 = vunpack.c.h.b16 %v2122
        %v2895 = vunpack.c.l.b16 %v2123
        %v2896 = vunpack.c.h.b16 %v2123
        %v2897 = vunpack.c.l.b16 %v2124
        %v2898 = vunpack.c.h.b16 %v2124
        %v2899 = vunpack.c.l.b16 %v2125
        %v2900 = vunpack.c.h.b16 %v2125
        %v2901 = vunpack.c.l.b16 %v2126
        %v2902 = vunpack.c.h.b16 %v2126
        %v2903 = vunpack.c.l.b16 %v2127
        %v2904 = vunpack.c.h.b16 %v2127
        %v2905 = vunpack.c.l.b16 %v2128
        %v2906 = vunpack.c.h.b16 %v2128
        %v2907 = vunpack.c.l.b16 %v2129
        %v2908 = vunpack.c.h.b16 %v2129
        %v2909 = vunpack.c.l.b16 %v2130
        %v2910 = vunpack.c.h.b16 %v2130
        %v2911 = vunpack.c.l.b16 %v2131
        %v2912 = vunpack.c.h.b16 %v2131
        %v2913 = vunpack.c.l.b16 %v2132
        %v2914 = vunpack.c.h.b16 %v2132
        %v2915 = vunpack.c.l.b16 %v2133
        %v2916 = vunpack.c.h.b16 %v2133
        %v2917 = vunpack.c.l.b16 %v2134
        %v2918 = vunpack.c.h.b16 %v2134
        %v2919 = vunpack.c.l.b16 %v2135
        %v2920 = vunpack.c.h.b16 %v2135
        %v2921 = vunpack.c.l.b16 %v2136
        %v2922 = vunpack.c.h.b16 %v2136
        %v2923 = vunpack.c.l.b16 %v2137
        %v2924 = vunpack.c.h.b16 %v2137
        %v2925 = vunpack.c.l.b16 %v2138
        %v2926 = vunpack.c.h.b16 %v2138
        %v2927 = vunpack.c.l.b16 %v2139
        %v2928 = vunpack.c.h.b16 %v2139
        %v2929 = vunpack.c.l.b16 %v2140
        %v2930 = vunpack.c.h.b16 %v2140
        %v2931 = vunpack.c.l.b16 %v2141
        %v2932 = vunpack.c.h.b16 %v2141
        %v2933 = vunpack.c.l.b16 %v2142
        %v2934 = vunpack.c.h.b16 %v2142
        %v2935 = vunpack.c.l.b16 %v2143
        %v2936 = vunpack.c.h.b16 %v2143
        %v2937 = vunpack.c.l.b16 %v2144
        %v2938 = vunpack.c.h.b16 %v2144
        %v2939 = vunpack.c.l.b16 %v2145
        %v2940 = vunpack.c.h.b16 %v2145
        %v2941 = vunpack.c.l.b16 %v2146
        %v2942 = vunpack.c.h.b16 %v2146
        %v2943 = vpack.c.b16 %v2435, %v2431
        %v2944 = vpack.c.b16 %v2436, %v2432
        %v2945 = vpack.c.b16 %v2437, %v2433
        %v2946 = vpack.c.b16 %v2438, %v2434
        %v2947 = vpack.c.b16 %v2443, %v2439
        %v2948 = vpack.c.b16 %v2444, %v2440
        %v2949 = vpack.c.b16 %v2445, %v2441
        %v2950 = vpack.c.b16 %v2446, %v2442
        %v2951 = vpack.c.b16 %v2451, %v2447
        %v2952 = vpack.c.b16 %v2452, %v2448
        %v2953 = vpack.c.b16 %v2453, %v2449
        %v2954 = vpack.c.b16 %v2454, %v2450
        %v2955 = vpack.c.b16 %v2459, %v2455
        %v2956 = vpack.c.b16 %v2460, %v2456
        %v2957 = vpack.c.b16 %v2461, %v2457
        %v2958 = vpack.c.b16 %v2462, %v2458
        %v2959 = vpack.c.b16 %v2467, %v2463
        %v2960 = vpack.c.b16 %v2468, %v2464
        %v2961 = vpack.c.b16 %v2469, %v2465
        %v2962 = vpack.c.b16 %v2470, %v2466
        %v2963 = vpack.c.b16 %v2475, %v2471
        %v2964 = vpack.c.b16 %v2476, %v2472
        %v2965 = vpack.c.b16 %v2477, %v2473
        %v2966 = vpack.c.b16 %v2478, %v2474
        %v2967 = vpack.c.b16 %v2483, %v2479
        %v2968 = vpack.c.b16 %v2484, %v2480
        %v2969 = vpack.c.b16 %v2485, %v2481
        %v2970 = vpack.c.b16 %v2486, %v2482
        %v2971 = vpack.c.b16 %v2491, %v2487
        %v2972 = vpack.c.b16 %v2492, %v2488
        %v2973 = vpack.c.b16 %v2493, %v2489
        %v2974 = vpack.c.b16 %v2494, %v2490
        %v2975 = vpack.c.b16 %v2499, %v2495
        %v2976 = vpack.c.b16 %v2500, %v2496
        %v2977 = vpack.c.b16 %v2501, %v2497
        %v2978 = vpack.c.b16 %v2502, %v2498
        %v2979 = vpack.c.b16 %v2507, %v2503
        %v2980 = vpack.c.b16 %v2508, %v2504
        %v2981 = vpack.c.b16 %v2509, %v2505
        %v2982 = vpack.c.b16 %v2510, %v2506
        %v2983 = vpack.c.b16 %v2515, %v2511
        %v2984 = vpack.c.b16 %v2516, %v2512
        %v2985 = vpack.c.b16 %v2517, %v2513
        %v2986 = vpack.c.b16 %v2518, %v2514
        %v2987 = vpack.c.b16 %v2523, %v2519
        %v2988 = vpack.c.b16 %v2524, %v2520
        %v2989 = vpack.c.b16 %v2525, %v2521
        %v2990 = vpack.c.b16 %v2526, %v2522
        %v2991 = vpack.c.b16 %v2531, %v2527
        %v2992 = vpack.c.b16 %v2532, %v2528
        %v2993 = vpack.c.b16 %v2533, %v2529
        %v2994 = vpack.c.b16 %v2534, %v2530
        %v2995 = vpack.c.b16 %v2539, %v2535
        %v2996 = vpack.c.b16 %v2540, %v2536
        %v2997 = vpack.c.b16 %v2541, %v2537
        %v2998 = vpack.c.b16 %v2542, %v2538
        %v2999 = vpack.c.b16 %v2547, %v2543
        %v3000 = vpack.c.b16 %v2548, %v2544
        %v3001 = vpack.c.b16 %v2549, %v2545
        %v3002 = vpack.c.b16 %v2550, %v2546
        %v3003 = vpack.c.b16 %v2555, %v2551
        %v3004 = vpack.c.b16 %v2556, %v2552
        %v3005 = vpack.c.b16 %v2557, %v2553
        %v3006 = vpack.c.b16 %v2558, %v2554
        %v3007 = vpack.c.b16 %v2563, %v2559
        %v3008 = vpack.c.b16 %v2564, %v2560
        %v3009 = vpack.c.b16 %v2565, %v2561
        %v3010 = vpack.c.b16 %v2566, %v2562
        %v3011 = vpack.c.b16 %v2571, %v2567
        %v3012 = vpack.c.b16 %v2572, %v2568
        %v3013 = vpack.c.b16 %v2573, %v2569
        %v3014 = vpack.c.b16 %v2574, %v2570
        %v3015 = vpack.c.b16 %v2579, %v2575
        %v3016 = vpack.c.b16 %v2580, %v2576
        %v3017 = vpack.c.b16 %v2581, %v2577
        %v3018 = vpack.c.b16 %v2582, %v2578
        %v3019 = vpack.c.b16 %v2587, %v2583
        %v3020 = vpack.c.b16 %v2588, %v2584
        %v3021 = vpack.c.b16 %v2589, %v2585
        %v3022 = vpack.c.b16 %v2590, %v2586
        %v3023 = vpack.c.b16 %v2595, %v2591
        %v3024 = vpack.c.b16 %v2596, %v2592
        %v3025 = vpack.c.b16 %v2597, %v2593
        %v3026 = vpack.c.b16 %v2598, %v2594
        %v3027 = vpack.c.b16 %v2603, %v2599
        %v3028 = vpack.c.b16 %v2604, %v2600
        %v3029 = vpack.c.b16 %v2605, %v2601
        %v3030 = vpack.c.b16 %v2606, %v2602
        %v3031 = vpack.c.b16 %v2611, %v2607
        %v3032 = vpack.c.b16 %v2612, %v2608
        %v3033 = vpack.c.b16 %v2613, %v2609
        %v3034 = vpack.c.b16 %v2614, %v2610
        %v3035 = vpack.c.b16 %v2619, %v2615
        %v3036 = vpack.c.b16 %v2620, %v2616
        %v3037 = vpack.c.b16 %v2621, %v2617
        %v3038 = vpack.c.b16 %v2622, %v2618
        %v3039 = vpack.c.b16 %v2627, %v2623
        %v3040 = vpack.c.b16 %v2628, %v2624
        %v3041 = vpack.c.b16 %v2629, %v2625
        %v3042 = vpack.c.b16 %v2630, %v2626
        %v3043 = vpack.c.b16 %v2635, %v2631
        %v3044 = vpack.c.b16 %v2636, %v2632
        %v3045 = vpack.c.b16 %v2637, %v2633
        %v3046 = vpack.c.b16 %v2638, %v2634
        %v3047 = vpack.c.b16 %v2643, %v2639
        %v3048 = vpack.c.b16 %v2644, %v2640
        %v3049 = vpack.c.b16 %v2645, %v2641
        %v3050 = vpack.c.b16 %v2646, %v2642
        %v3051 = vpack.c.b16 %v2651, %v2647
        %v3052 = vpack.c.b16 %v2652, %v2648
        %v3053 = vpack.c.b16 %v2653, %v2649
        %v3054 = vpack.c.b16 %v2654, %v2650
        %v3055 = vpack.c.b16 %v2659, %v2655
        %v3056 = vpack.c.b16 %v2660, %v2656
        %v3057 = vpack.c.b16 %v2661, %v2657
        %v3058 = vpack.c.b16 %v2662, %v2658
        %v3059 = vpack.c.b16 %v2667, %v2663
        %v3060 = vpack.c.b16 %v2668, %v2664
        %v3061 = vpack.c.b16 %v2669, %v2665
        %v3062 = vpack.c.b16 %v2670, %v2666
        %v3063 = vpack.c.b16 %v2675, %v2671
        %v3064 = vpack.c.b16 %v2676, %v2672
        %v3065 = vpack.c.b16 %v2677, %v2673
        %v3066 = vpack.c.b16 %v2678, %v2674
        %v3067 = vpack.c.b16 %v2683, %v2679
        %v3068 = vpack.c.b16 %v2684, %v2680
        %v3069 = vpack.c.b16 %v2685, %v2681
        %v3070 = vpack.c.b16 %v2686, %v2682
        %v3071 = vpack.c.b16 %v2691, %v2687
        %v3072 = vpack.c.b16 %v2692, %v2688
        %v3073 = vpack.c.b16 %v2693, %v2689
        %v3074 = vpack.c.b16 %v2694, %v2690
        %v3075 = vpack.c.b16 %v2699, %v2695
        %v3076 = vpack.c.b16 %v2700, %v2696
        %v3077 = vpack.c.b16 %v2701, %v2697
        %v3078 = vpack.c.b16 %v2702, %v2698
        %v3079 = vpack.c.b16 %v2707, %v2703
        %v3080 = vpack.c.b16 %v2708, %v2704
        %v3081 = vpack.c.b16 %v2709, %v2705
        %v3082 = vpack.c.b16 %v2710, %v2706
        %v3083 = vpack.c.b16 %v2715, %v2711
        %v3084 = vpack.c.b16 %v2716, %v2712
        %v3085 = vpack.c.b16 %v2717, %v2713
        %v3086 = vpack.c.b16 %v2718, %v2714
        %v3087 = vpack.c.b16 %v2723, %v2719
        %v3088 = vpack.c.b16 %v2724, %v2720
        %v3089 = vpack.c.b16 %v2725, %v2721
        %v3090 = vpack.c.b16 %v2726, %v2722
        %v3091 = vpack.c.b16 %v2731, %v2727
        %v3092 = vpack.c.b16 %v2732, %v2728
        %v3093 = vpack.c.b16 %v2733, %v2729
        %v3094 = vpack.c.b16 %v2734, %v2730
        %v3095 = vpack.c.b16 %v2739, %v2735
        %v3096 = vpack.c.b16 %v2740, %v2736
        %v3097 = vpack.c.b16 %v2741, %v2737
        %v3098 = vpack.c.b16 %v2742, %v2738
        %v3099 = vpack.c.b16 %v2747, %v2743
        %v3100 = vpack.c.b16 %v2748, %v2744
        %v3101 = vpack.c.b16 %v2749, %v2745
        %v3102 = vpack.c.b16 %v2750, %v2746
        %v3103 = vpack.c.b16 %v2755, %v2751
        %v3104 = vpack.c.b16 %v2756, %v2752
        %v3105 = vpack.c.b16 %v2757, %v2753
        %v3106 = vpack.c.b16 %v2758, %v2754
        %v3107 = vpack.c.b16 %v2763, %v2759
        %v3108 = vpack.c.b16 %v2764, %v2760
        %v3109 = vpack.c.b16 %v2765, %v2761
        %v3110 = vpack.c.b16 %v2766, %v2762
        %v3111 = vpack.c.b16 %v2771, %v2767
        %v3112 = vpack.c.b16 %v2772, %v2768
        %v3113 = vpack.c.b16 %v2773, %v2769
        %v3114 = vpack.c.b16 %v2774, %v2770
        %v3115 = vpack.c.b16 %v2779, %v2775
        %v3116 = vpack.c.b16 %v2780, %v2776
        %v3117 = vpack.c.b16 %v2781, %v2777
        %v3118 = vpack.c.b16 %v2782, %v2778
        %v3119 = vpack.c.b16 %v2787, %v2783
        %v3120 = vpack.c.b16 %v2788, %v2784
        %v3121 = vpack.c.b16 %v2789, %v2785
        %v3122 = vpack.c.b16 %v2790, %v2786
        %v3123 = vpack.c.b16 %v2795, %v2791
        %v3124 = vpack.c.b16 %v2796, %v2792
        %v3125 = vpack.c.b16 %v2797, %v2793
        %v3126 = vpack.c.b16 %v2798, %v2794
        %v3127 = vpack.c.b16 %v2803, %v2799
        %v3128 = vpack.c.b16 %v2804, %v2800
        %v3129 = vpack.c.b16 %v2805, %v2801
        %v3130 = vpack.c.b16 %v2806, %v2802
        %v3131 = vpack.c.b16 %v2811, %v2807
        %v3132 = vpack.c.b16 %v2812, %v2808
        %v3133 = vpack.c.b16 %v2813, %v2809
        %v3134 = vpack.c.b16 %v2814, %v2810
        %v3135 = vpack.c.b16 %v2819, %v2815
        %v3136 = vpack.c.b16 %v2820, %v2816
        %v3137 = vpack.c.b16 %v2821, %v2817
        %v3138 = vpack.c.b16 %v2822, %v2818
        %v3139 = vpack.c.b16 %v2827, %v2823
        %v3140 = vpack.c.b16 %v2828, %v2824
        %v3141 = vpack.c.b16 %v2829, %v2825
        %v3142 = vpack.c.b16 %v2830, %v2826
        %v3143 = vpack.c.b16 %v2835, %v2831
        %v3144 = vpack.c.b16 %v2836, %v2832
        %v3145 = vpack.c.b16 %v2837, %v2833
        %v3146 = vpack.c.b16 %v2838, %v2834
        %v3147 = vpack.c.b16 %v2843, %v2839
        %v3148 = vpack.c.b16 %v2844, %v2840
        %v3149 = vpack.c.b16 %v2845, %v2841
        %v3150 = vpack.c.b16 %v2846, %v2842
        %v3151 = vpack.c.b16 %v2851, %v2847
        %v3152 = vpack.c.b16 %v2852, %v2848
        %v3153 = vpack.c.b16 %v2853, %v2849
        %v3154 = vpack.c.b16 %v2854, %v2850
        %v3155 = vpack.c.b16 %v2859, %v2855
        %v3156 = vpack.c.b16 %v2860, %v2856
        %v3157 = vpack.c.b16 %v2861, %v2857
        %v3158 = vpack.c.b16 %v2862, %v2858
        %v3159 = vpack.c.b16 %v2867, %v2863
        %v3160 = vpack.c.b16 %v2868, %v2864
        %v3161 = vpack.c.b16 %v2869, %v2865
        %v3162 = vpack.c.b16 %v2870, %v2866
        %v3163 = vpack.c.b16 %v2875, %v2871
        %v3164 = vpack.c.b16 %v2876, %v2872
        %v3165 = vpack.c.b16 %v2877, %v2873
        %v3166 = vpack.c.b16 %v2878, %v2874
        %v3167 = vpack.c.b16 %v2883, %v2879
        %v3168 = vpack.c.b16 %v2884, %v2880
        %v3169 = vpack.c.b16 %v2885, %v2881
        %v3170 = vpack.c.b16 %v2886, %v2882
        %v3171 = vpack.c.b16 %v2891, %v2887
        %v3172 = vpack.c.b16 %v2892, %v2888
        %v3173 = vpack.c.b16 %v2893, %v2889
        %v3174 = vpack.c.b16 %v2894, %v2890
        %v3175 = vpack.c.b16 %v2899, %v2895
        %v3176 = vpack.c.b16 %v2900, %v2896
        %v3177 = vpack.c.b16 %v2901, %v2897
        %v3178 = vpack.c.b16 %v2902, %v2898
        %v3179 = vpack.c.b16 %v2907, %v2903
        %v3180 = vpack.c.b16 %v2908, %v2904
        %v3181 = vpack.c.b16 %v2909, %v2905
        %v3182 = vpack.c.b16 %v2910, %v2906
        %v3183 = vpack.c.b16 %v2915, %v2911
        %v3184 = vpack.c.b16 %v2916, %v2912
        %v3185 = vpack.c.b16 %v2917, %v2913
        %v3186 = vpack.c.b16 %v2918, %v2914
        %v3187 = vpack.c.b16 %v2923, %v2919
        %v3188 = vpack.c.b16 %v2924, %v2920
        %v3189 = vpack.c.b16 %v2925, %v2921
        %v3190 = vpack.c.b16 %v2926, %v2922
        %v3191 = vpack.c.b16 %v2931, %v2927
        %v3192 = vpack.c.b16 %v2932, %v2928
        %v3193 = vpack.c.b16 %v2933, %v2929
        %v3194 = vpack.c.b16 %v2934, %v2930
        %v3195 = vpack.c.b16 %v2939, %v2935
        %v3196 = vpack.c.b16 %v2940, %v2936
        %v3197 = vpack.c.b16 %v2941, %v2937
        %v3198 = vpack.c.b16 %v2942, %v2938
        %3455 = vmatpush.bf16.msra.mxu0 %v2971
        %3456 = vmatpush.bf16.msra.mxu0 %v2967
        %3457 = vmatpush.bf16.msra.mxu0 %v2963
        %3458 = vmatpush.bf16.msra.mxu0 %v2959
        %3459 = vmatpush.bf16.msra.mxu0 %v2955
        %3460 = vmatpush.bf16.msra.mxu0 %v2951
        %3461 = vmatpush.bf16.msra.mxu0 %v2947
        %3462 = vmatpush.bf16.msra.mxu0 %v2943
        %3463 = vmatmul.bf16.gmra.mxu0 %v2159
        %v3464 = vpop.f32.mrf.mxu0
        %v3465 = vadd.f32 %v2149, %v3464
        %v3466 = vpop.f32.mrf.mxu0
        %3467 = vdwg.mxu0
        %3468 = vmatpush.bf16.msra.mxu0 %v3003
        %3469 = vmatpush.bf16.msra.mxu0 %v2999
        %3470 = vmatpush.bf16.msra.mxu0 %v2995
        %3471 = vmatpush.bf16.msra.mxu0 %v2991
        %3472 = vmatpush.bf16.msra.mxu0 %v2987
        %3473 = vmatpush.bf16.msra.mxu0 %v2983
        %3474 = vmatpush.bf16.msra.mxu0 %v2979
        %3475 = vmatpush.bf16.msra.mxu0 %v2975
        %3476 = vmatmul.bf16.gmra.mxu0 %v2160
        %v3477 = vpop.f32.mrf.mxu0
        %v3478 = vadd.f32 %v3465, %v3477
        %v3479 = vpop.f32.mrf.mxu0
        %3480 = vdwg.mxu0
        %3481 = vmatpush.bf16.msra.mxu0 %v3035
        %3482 = vmatpush.bf16.msra.mxu0 %v3031
        %3483 = vmatpush.bf16.msra.mxu0 %v3027
        %3484 = vmatpush.bf16.msra.mxu0 %v3023
        %3485 = vmatpush.bf16.msra.mxu0 %v3019
        %3486 = vmatpush.bf16.msra.mxu0 %v3015
        %3487 = vmatpush.bf16.msra.mxu0 %v3011
        %3488 = vmatpush.bf16.msra.mxu0 %v3007
        %3489 = vmatmul.bf16.gmra.mxu0 %v2161
        %v3490 = vpop.f32.mrf.mxu0
        %v3491 = vadd.f32 %v3478, %v3490
        %v3492 = vpop.f32.mrf.mxu0
        %3493 = vdwg.mxu0
        %3494 = vmatpush.bf16.msra.mxu0 %v3067
        %3495 = vmatpush.bf16.msra.mxu0 %v3063
        %3496 = vmatpush.bf16.msra.mxu0 %v3059
        %3497 = vmatpush.bf16.msra.mxu0 %v3055
        %3498 = vmatpush.bf16.msra.mxu0 %v3051
        %3499 = vmatpush.bf16.msra.mxu0 %v3047
        %3500 = vmatpush.bf16.msra.mxu0 %v3043
        %3501 = vmatpush.bf16.msra.mxu0 %v3039
        %3502 = vmatmul.bf16.gmra.mxu0 %v2162
        %v3503 = vpop.f32.mrf.mxu0
        %v3504 = vadd.f32 %v3491, %v3503
        %v3505 = vpop.f32.mrf.mxu0
        %3506 = vdwg.mxu0
        %3507 = vmatpush.bf16.msra.mxu0 %v3099
        %3508 = vmatpush.bf16.msra.mxu0 %v3095
        %3509 = vmatpush.bf16.msra.mxu0 %v3091
        %3510 = vmatpush.bf16.msra.mxu0 %v3087
        %3511 = vmatpush.bf16.msra.mxu0 %v3083
        %3512 = vmatpush.bf16.msra.mxu0 %v3079
        %3513 = vmatpush.bf16.msra.mxu0 %v3075
        %3514 = vmatpush.bf16.msra.mxu0 %v3071
        %3515 = vmatmul.bf16.gmra.mxu0 %v2163
        %v3516 = vpop.f32.mrf.mxu0
        %v3517 = vadd.f32 %v3504, %v3516
        %v3518 = vpop.f32.mrf.mxu0
        %3519 = vdwg.mxu0
        %3520 = vmatpush.bf16.msra.mxu0 %v3131
        %3521 = vmatpush.bf16.msra.mxu0 %v3127
        %3522 = vmatpush.bf16.msra.mxu0 %v3123
        %3523 = vmatpush.bf16.msra.mxu0 %v3119
        %3524 = vmatpush.bf16.msra.mxu0 %v3115
        %3525 = vmatpush.bf16.msra.mxu0 %v3111
        %3526 = vmatpush.bf16.msra.mxu0 %v3107
        %3527 = vmatpush.bf16.msra.mxu0 %v3103
        %3528 = vmatmul.bf16.gmra.mxu0 %v2164
        %v3529 = vpop.f32.mrf.mxu0
        %v3530 = vadd.f32 %v3517, %v3529
        %v3531 = vpop.f32.mrf.mxu0
        %3532 = vdwg.mxu0
        %3533 = vmatpush.bf16.msra.mxu0 %v3163
        %3534 = vmatpush.bf16.msra.mxu0 %v3159
        %3535 = vmatpush.bf16.msra.mxu0 %v3155
        %3536 = vmatpush.bf16.msra.mxu0 %v3151
        %3537 = vmatpush.bf16.msra.mxu0 %v3147
        %3538 = vmatpush.bf16.msra.mxu0 %v3143
        %3539 = vmatpush.bf16.msra.mxu0 %v3139
        %3540 = vmatpush.bf16.msra.mxu0 %v3135
        %3541 = vmatmul.bf16.gmra.mxu0 %v2165
        %v3542 = vpop.f32.mrf.mxu0
        %v3543 = vadd.f32 %v3530, %v3542
        %v3544 = vpop.f32.mrf.mxu0
        %3545 = vdwg.mxu0
        %3546 = vmatpush.bf16.msra.mxu0 %v3195
        %3547 = vmatpush.bf16.msra.mxu0 %v3191
        %3548 = vmatpush.bf16.msra.mxu0 %v3187
        %3549 = vmatpush.bf16.msra.mxu0 %v3183
        %3550 = vmatpush.bf16.msra.mxu0 %v3179
        %3551 = vmatpush.bf16.msra.mxu0 %v3175
        %3552 = vmatpush.bf16.msra.mxu0 %v3171
        %3553 = vmatpush.bf16.msra.mxu0 %v3167
        %3554 = vmatmul.bf16.gmra.mxu0 %v2166
        %v3555 = vpop.f32.mrf.mxu0
        %v3556 = vadd.f32 %v3543, %v3555
        %v3557 = vpop.f32.mrf.mxu0
        %3558 = vdwg.mxu0
        %3559 = vmatpush.bf16.msra.mxu0 %v2972
        %3560 = vmatpush.bf16.msra.mxu0 %v2968
        %3561 = vmatpush.bf16.msra.mxu0 %v2964
        %3562 = vmatpush.bf16.msra.mxu0 %v2960
        %3563 = vmatpush.bf16.msra.mxu0 %v2956
        %3564 = vmatpush.bf16.msra.mxu0 %v2952
        %3565 = vmatpush.bf16.msra.mxu0 %v2948
        %3566 = vmatpush.bf16.msra.mxu0 %v2944
        %3567 = vmatmul.bf16.gmra.mxu0 %v2159
        %v3568 = vpop.f32.mrf.mxu0
        %v3569 = vadd.f32 %v2150, %v3568
        %v3570 = vpop.f32.mrf.mxu0
        %3571 = vdwg.mxu0
        %3572 = vmatpush.bf16.msra.mxu0 %v3004
        %3573 = vmatpush.bf16.msra.mxu0 %v3000
        %3574 = vmatpush.bf16.msra.mxu0 %v2996
        %3575 = vmatpush.bf16.msra.mxu0 %v2992
        %3576 = vmatpush.bf16.msra.mxu0 %v2988
        %3577 = vmatpush.bf16.msra.mxu0 %v2984
        %3578 = vmatpush.bf16.msra.mxu0 %v2980
        %3579 = vmatpush.bf16.msra.mxu0 %v2976
        %3580 = vmatmul.bf16.gmra.mxu0 %v2160
        %v3581 = vpop.f32.mrf.mxu0
        %v3582 = vadd.f32 %v3569, %v3581
        %v3583 = vpop.f32.mrf.mxu0
        %3584 = vdwg.mxu0
        %3585 = vmatpush.bf16.msra.mxu0 %v3036
        %3586 = vmatpush.bf16.msra.mxu0 %v3032
        %3587 = vmatpush.bf16.msra.mxu0 %v3028
        %3588 = vmatpush.bf16.msra.mxu0 %v3024
        %3589 = vmatpush.bf16.msra.mxu0 %v3020
        %3590 = vmatpush.bf16.msra.mxu0 %v3016
        %3591 = vmatpush.bf16.msra.mxu0 %v3012
        %3592 = vmatpush.bf16.msra.mxu0 %v3008
        %3593 = vmatmul.bf16.gmra.mxu0 %v2161
        %v3594 = vpop.f32.mrf.mxu0
        %v3595 = vadd.f32 %v3582, %v3594
        %v3596 = vpop.f32.mrf.mxu0
        %3597 = vdwg.mxu0
        %3598 = vmatpush.bf16.msra.mxu0 %v3068
        %3599 = vmatpush.bf16.msra.mxu0 %v3064
        %3600 = vmatpush.bf16.msra.mxu0 %v3060
        %3601 = vmatpush.bf16.msra.mxu0 %v3056
        %3602 = vmatpush.bf16.msra.mxu0 %v3052
        %3603 = vmatpush.bf16.msra.mxu0 %v3048
        %3604 = vmatpush.bf16.msra.mxu0 %v3044
        %3605 = vmatpush.bf16.msra.mxu0 %v3040
        %3606 = vmatmul.bf16.gmra.mxu0 %v2162
        %v3607 = vpop.f32.mrf.mxu0
        %v3608 = vadd.f32 %v3595, %v3607
        %v3609 = vpop.f32.mrf.mxu0
        %3610 = vdwg.mxu0
        %3611 = vmatpush.bf16.msra.mxu0 %v3100
        %3612 = vmatpush.bf16.msra.mxu0 %v3096
        %3613 = vmatpush.bf16.msra.mxu0 %v3092
        %3614 = vmatpush.bf16.msra.mxu0 %v3088
        %3615 = vmatpush.bf16.msra.mxu0 %v3084
        %3616 = vmatpush.bf16.msra.mxu0 %v3080
        %3617 = vmatpush.bf16.msra.mxu0 %v3076
        %3618 = vmatpush.bf16.msra.mxu0 %v3072
        %3619 = vmatmul.bf16.gmra.mxu0 %v2163
        %v3620 = vpop.f32.mrf.mxu0
        %v3621 = vadd.f32 %v3608, %v3620
        %v3622 = vpop.f32.mrf.mxu0
        %3623 = vdwg.mxu0
        %3624 = vmatpush.bf16.msra.mxu0 %v3132
        %3625 = vmatpush.bf16.msra.mxu0 %v3128
        %3626 = vmatpush.bf16.msra.mxu0 %v3124
        %3627 = vmatpush.bf16.msra.mxu0 %v3120
        %3628 = vmatpush.bf16.msra.mxu0 %v3116
        %3629 = vmatpush.bf16.msra.mxu0 %v3112
        %3630 = vmatpush.bf16.msra.mxu0 %v3108
        %3631 = vmatpush.bf16.msra.mxu0 %v3104
        %3632 = vmatmul.bf16.gmra.mxu0 %v2164
        %v3633 = vpop.f32.mrf.mxu0
        %v3634 = vadd.f32 %v3621, %v3633
        %v3635 = vpop.f32.mrf.mxu0
        %3636 = vdwg.mxu0
        %3637 = vmatpush.bf16.msra.mxu0 %v3164
        %3638 = vmatpush.bf16.msra.mxu0 %v3160
        %3639 = vmatpush.bf16.msra.mxu0 %v3156
        %3640 = vmatpush.bf16.msra.mxu0 %v3152
        %3641 = vmatpush.bf16.msra.mxu0 %v3148
        %3642 = vmatpush.bf16.msra.mxu0 %v3144
        %3643 = vmatpush.bf16.msra.mxu0 %v3140
        %3644 = vmatpush.bf16.msra.mxu0 %v3136
        %3645 = vmatmul.bf16.gmra.mxu0 %v2165
        %v3646 = vpop.f32.mrf.mxu0
        %v3647 = vadd.f32 %v3634, %v3646
        %v3648 = vpop.f32.mrf.mxu0
        %3649 = vdwg.mxu0
        %3650 = vmatpush.bf16.msra.mxu0 %v3196
        %3651 = vmatpush.bf16.msra.mxu0 %v3192
        %3652 = vmatpush.bf16.msra.mxu0 %v3188
        %3653 = vmatpush.bf16.msra.mxu0 %v3184
        %3654 = vmatpush.bf16.msra.mxu0 %v3180
        %3655 = vmatpush.bf16.msra.mxu0 %v3176
        %3656 = vmatpush.bf16.msra.mxu0 %v3172
        %3657 = vmatpush.bf16.msra.mxu0 %v3168
        %3658 = vmatmul.bf16.gmra.mxu0 %v2166
        %v3659 = vpop.f32.mrf.mxu0
        %v3660 = vadd.f32 %v3647, %v3659
        %v3661 = vpop.f32.mrf.mxu0
        %3662 = vdwg.mxu0
        %3663 = vmatpush.bf16.msra.mxu0 %v2973
        %3664 = vmatpush.bf16.msra.mxu0 %v2969
        %3665 = vmatpush.bf16.msra.mxu0 %v2965
        %3666 = vmatpush.bf16.msra.mxu0 %v2961
        %3667 = vmatpush.bf16.msra.mxu0 %v2957
        %3668 = vmatpush.bf16.msra.mxu0 %v2953
        %3669 = vmatpush.bf16.msra.mxu0 %v2949
        %3670 = vmatpush.bf16.msra.mxu0 %v2945
        %3671 = vmatmul.bf16.gmra.mxu0 %v2159
        %v3672 = vpop.f32.mrf.mxu0
        %v3673 = vadd.f32 %v2151, %v3672
        %v3674 = vpop.f32.mrf.mxu0
        %3675 = vdwg.mxu0
        %3676 = vmatpush.bf16.msra.mxu0 %v3005
        %3677 = vmatpush.bf16.msra.mxu0 %v3001
        %3678 = vmatpush.bf16.msra.mxu0 %v2997
        %3679 = vmatpush.bf16.msra.mxu0 %v2993
        %3680 = vmatpush.bf16.msra.mxu0 %v2989
        %3681 = vmatpush.bf16.msra.mxu0 %v2985
        %3682 = vmatpush.bf16.msra.mxu0 %v2981
        %3683 = vmatpush.bf16.msra.mxu0 %v2977
        %3684 = vmatmul.bf16.gmra.mxu0 %v2160
        %v3685 = vpop.f32.mrf.mxu0
        %v3686 = vadd.f32 %v3673, %v3685
        %v3687 = vpop.f32.mrf.mxu0
        %3688 = vdwg.mxu0
        %3689 = vmatpush.bf16.msra.mxu0 %v3037
        %3690 = vmatpush.bf16.msra.mxu0 %v3033
        %3691 = vmatpush.bf16.msra.mxu0 %v3029
        %3692 = vmatpush.bf16.msra.mxu0 %v3025
        %3693 = vmatpush.bf16.msra.mxu0 %v3021
        %3694 = vmatpush.bf16.msra.mxu0 %v3017
        %3695 = vmatpush.bf16.msra.mxu0 %v3013
        %3696 = vmatpush.bf16.msra.mxu0 %v3009
        %3697 = vmatmul.bf16.gmra.mxu0 %v2161
        %v3698 = vpop.f32.mrf.mxu0
        %v3699 = vadd.f32 %v3686, %v3698
        %v3700 = vpop.f32.mrf.mxu0
        %3701 = vdwg.mxu0
        %3702 = vmatpush.bf16.msra.mxu0 %v3069
        %3703 = vmatpush.bf16.msra.mxu0 %v3065
        %3704 = vmatpush.bf16.msra.mxu0 %v3061
        %3705 = vmatpush.bf16.msra.mxu0 %v3057
        %3706 = vmatpush.bf16.msra.mxu0 %v3053
        %3707 = vmatpush.bf16.msra.mxu0 %v3049
        %3708 = vmatpush.bf16.msra.mxu0 %v3045
        %3709 = vmatpush.bf16.msra.mxu0 %v3041
        %3710 = vmatmul.bf16.gmra.mxu0 %v2162
        %v3711 = vpop.f32.mrf.mxu0
        %v3712 = vadd.f32 %v3699, %v3711
        %v3713 = vpop.f32.mrf.mxu0
        %3714 = vdwg.mxu0
        %3715 = vmatpush.bf16.msra.mxu0 %v3101
        %3716 = vmatpush.bf16.msra.mxu0 %v3097
        %3717 = vmatpush.bf16.msra.mxu0 %v3093
        %3718 = vmatpush.bf16.msra.mxu0 %v3089
        %3719 = vmatpush.bf16.msra.mxu0 %v3085
        %3720 = vmatpush.bf16.msra.mxu0 %v3081
        %3721 = vmatpush.bf16.msra.mxu0 %v3077
        %3722 = vmatpush.bf16.msra.mxu0 %v3073
        %3723 = vmatmul.bf16.gmra.mxu0 %v2163
        %v3724 = vpop.f32.mrf.mxu0
        %v3725 = vadd.f32 %v3712, %v3724
        %v3726 = vpop.f32.mrf.mxu0
        %3727 = vdwg.mxu0
        %3728 = vmatpush.bf16.msra.mxu0 %v3133
        %3729 = vmatpush.bf16.msra.mxu0 %v3129
        %3730 = vmatpush.bf16.msra.mxu0 %v3125
        %3731 = vmatpush.bf16.msra.mxu0 %v3121
        %3732 = vmatpush.bf16.msra.mxu0 %v3117
        %3733 = vmatpush.bf16.msra.mxu0 %v3113
        %3734 = vmatpush.bf16.msra.mxu0 %v3109
        %3735 = vmatpush.bf16.msra.mxu0 %v3105
        %3736 = vmatmul.bf16.gmra.mxu0 %v2164
        %v3737 = vpop.f32.mrf.mxu0
        %v3738 = vadd.f32 %v3725, %v3737
        %v3739 = vpop.f32.mrf.mxu0
        %3740 = vdwg.mxu0
        %3741 = vmatpush.bf16.msra.mxu0 %v3165
        %3742 = vmatpush.bf16.msra.mxu0 %v3161
        %3743 = vmatpush.bf16.msra.mxu0 %v3157
        %3744 = vmatpush.bf16.msra.mxu0 %v3153
        %3745 = vmatpush.bf16.msra.mxu0 %v3149
        %3746 = vmatpush.bf16.msra.mxu0 %v3145
        %3747 = vmatpush.bf16.msra.mxu0 %v3141
        %3748 = vmatpush.bf16.msra.mxu0 %v3137
        %3749 = vmatmul.bf16.gmra.mxu0 %v2165
        %v3750 = vpop.f32.mrf.mxu0
        %v3751 = vadd.f32 %v3738, %v3750
        %v3752 = vpop.f32.mrf.mxu0
        %3753 = vdwg.mxu0
        %3754 = vmatpush.bf16.msra.mxu0 %v3197
        %3755 = vmatpush.bf16.msra.mxu0 %v3193
        %3756 = vmatpush.bf16.msra.mxu0 %v3189
        %3757 = vmatpush.bf16.msra.mxu0 %v3185
        %3758 = vmatpush.bf16.msra.mxu0 %v3181
        %3759 = vmatpush.bf16.msra.mxu0 %v3177
        %3760 = vmatpush.bf16.msra.mxu0 %v3173
        %3761 = vmatpush.bf16.msra.mxu0 %v3169
        %3762 = vmatmul.bf16.gmra.mxu0 %v2166
        %v3763 = vpop.f32.mrf.mxu0
        %v3764 = vadd.f32 %v3751, %v3763
        %v3765 = vpop.f32.mrf.mxu0
        %3766 = vdwg.mxu0
        %3767 = vmatpush.bf16.msra.mxu0 %v2974
        %3768 = vmatpush.bf16.msra.mxu0 %v2970
        %3769 = vmatpush.bf16.msra.mxu0 %v2966
        %3770 = vmatpush.bf16.msra.mxu0 %v2962
        %3771 = vmatpush.bf16.msra.mxu0 %v2958
        %3772 = vmatpush.bf16.msra.mxu0 %v2954
        %3773 = vmatpush.bf16.msra.mxu0 %v2950
        %3774 = vmatpush.bf16.msra.mxu0 %v2946
        %3775 = vmatmul.bf16.gmra.mxu0 %v2159
        %v3776 = vpop.f32.mrf.mxu0
        %v3777 = vadd.f32 %v2152, %v3776
        %v3778 = vpop.f32.mrf.mxu0
        %3779 = vdwg.mxu0
        %3780 = vmatpush.bf16.msra.mxu0 %v3006
        %3781 = vmatpush.bf16.msra.mxu0 %v3002
        %3782 = vmatpush.bf16.msra.mxu0 %v2998
        %3783 = vmatpush.bf16.msra.mxu0 %v2994
        %3784 = vmatpush.bf16.msra.mxu0 %v2990
        %3785 = vmatpush.bf16.msra.mxu0 %v2986
        %3786 = vmatpush.bf16.msra.mxu0 %v2982
        %3787 = vmatpush.bf16.msra.mxu0 %v2978
        %3788 = vmatmul.bf16.gmra.mxu0 %v2160
        %v3789 = vpop.f32.mrf.mxu0
        %v3790 = vadd.f32 %v3777, %v3789
        %v3791 = vpop.f32.mrf.mxu0
        %3792 = vdwg.mxu0
        %3793 = vmatpush.bf16.msra.mxu0 %v3038
        %3794 = vmatpush.bf16.msra.mxu0 %v3034
        %3795 = vmatpush.bf16.msra.mxu0 %v3030
        %3796 = vmatpush.bf16.msra.mxu0 %v3026
        %3797 = vmatpush.bf16.msra.mxu0 %v3022
        %3798 = vmatpush.bf16.msra.mxu0 %v3018
        %3799 = vmatpush.bf16.msra.mxu0 %v3014
        %3800 = vmatpush.bf16.msra.mxu0 %v3010
        %3801 = vmatmul.bf16.gmra.mxu0 %v2161
        %v3802 = vpop.f32.mrf.mxu0
        %v3803 = vadd.f32 %v3790, %v3802
        %v3804 = vpop.f32.mrf.mxu0
        %3805 = vdwg.mxu0
        %3806 = vmatpush.bf16.msra.mxu0 %v3070
        %3807 = vmatpush.bf16.msra.mxu0 %v3066
        %3808 = vmatpush.bf16.msra.mxu0 %v3062
        %3809 = vmatpush.bf16.msra.mxu0 %v3058
        %3810 = vmatpush.bf16.msra.mxu0 %v3054
        %3811 = vmatpush.bf16.msra.mxu0 %v3050
        %3812 = vmatpush.bf16.msra.mxu0 %v3046
        %3813 = vmatpush.bf16.msra.mxu0 %v3042
        %3814 = vmatmul.bf16.gmra.mxu0 %v2162
        %v3815 = vpop.f32.mrf.mxu0
        %v3816 = vadd.f32 %v3803, %v3815
        %v3817 = vpop.f32.mrf.mxu0
        %3818 = vdwg.mxu0
        %3819 = vmatpush.bf16.msra.mxu0 %v3102
        %3820 = vmatpush.bf16.msra.mxu0 %v3098
        %3821 = vmatpush.bf16.msra.mxu0 %v3094
        %3822 = vmatpush.bf16.msra.mxu0 %v3090
        %3823 = vmatpush.bf16.msra.mxu0 %v3086
        %3824 = vmatpush.bf16.msra.mxu0 %v3082
        %3825 = vmatpush.bf16.msra.mxu0 %v3078
        %3826 = vmatpush.bf16.msra.mxu0 %v3074
        %3827 = vmatmul.bf16.gmra.mxu0 %v2163
        %v3828 = vpop.f32.mrf.mxu0
        %v3829 = vadd.f32 %v3816, %v3828
        %v3830 = vpop.f32.mrf.mxu0
        %3831 = vdwg.mxu0
        %3832 = vmatpush.bf16.msra.mxu0 %v3134
        %3833 = vmatpush.bf16.msra.mxu0 %v3130
        %3834 = vmatpush.bf16.msra.mxu0 %v3126
        %3835 = vmatpush.bf16.msra.mxu0 %v3122
        %3836 = vmatpush.bf16.msra.mxu0 %v3118
        %3837 = vmatpush.bf16.msra.mxu0 %v3114
        %3838 = vmatpush.bf16.msra.mxu0 %v3110
        %3839 = vmatpush.bf16.msra.mxu0 %v3106
        %3840 = vmatmul.bf16.gmra.mxu0 %v2164
        %v3841 = vpop.f32.mrf.mxu0
        %v3842 = vadd.f32 %v3829, %v3841
        %v3843 = vpop.f32.mrf.mxu0
        %3844 = vdwg.mxu0
        %3845 = vmatpush.bf16.msra.mxu0 %v3166
        %3846 = vmatpush.bf16.msra.mxu0 %v3162
        %3847 = vmatpush.bf16.msra.mxu0 %v3158
        %3848 = vmatpush.bf16.msra.mxu0 %v3154
        %3849 = vmatpush.bf16.msra.mxu0 %v3150
        %3850 = vmatpush.bf16.msra.mxu0 %v3146
        %3851 = vmatpush.bf16.msra.mxu0 %v3142
        %3852 = vmatpush.bf16.msra.mxu0 %v3138
        %3853 = vmatmul.bf16.gmra.mxu0 %v2165
        %v3854 = vpop.f32.mrf.mxu0
        %v3855 = vadd.f32 %v3842, %v3854
        %v3856 = vpop.f32.mrf.mxu0
        %3857 = vdwg.mxu0
        %3858 = vmatpush.bf16.msra.mxu0 %v3198
        %3859 = vmatpush.bf16.msra.mxu0 %v3194
        %3860 = vmatpush.bf16.msra.mxu0 %v3190
        %3861 = vmatpush.bf16.msra.mxu0 %v3186
        %3862 = vmatpush.bf16.msra.mxu0 %v3182
        %3863 = vmatpush.bf16.msra.mxu0 %v3178
        %3864 = vmatpush.bf16.msra.mxu0 %v3174
        %3865 = vmatpush.bf16.msra.mxu0 %v3170
        %3866 = vmatmul.bf16.gmra.mxu0 %v2166
        %v3867 = vpop.f32.mrf.mxu0
        %v3868 = vadd.f32 %v3855, %v3867
        %v3869 = vpop.f32.mrf.mxu0
        %3870 = vdwg.mxu0
        %v3871 = vmax.f32 %v3556, 0.0
        %v3872 = vmax.f32 %v3660, 0.0
        %v3873 = vmax.f32 %v3764, 0.0
        %v3874 = vmax.f32 %v3868, 0.0
        %v3875 = vld [vmem:[#allocation4] sm:$0x3]
        %v3876 = vpack.c.bf16 %v3871, %v3871
        %v3877 = vpack.c.bf16 %v3872, %v3872
        %v3878 = vpack.c.bf16 %v3873, %v3873
        %v3879 = vpack.c.bf16 %v3874, %v3874
        %v3880 = vld [vmem:[%s835] sm:$0xf]
        %v3881 = vld [vmem:[%s835 + $0x4] sm:$0xf]
        %v3882 = vld [vmem:[%s835 + $0x8] sm:$0xf]
        %v3883 = vld [vmem:[%s835 + $0xc] sm:$0xf]
        %v3884 = vld [vmem:[%s835 + $0x10] sm:$0xf]
        %v3885 = vld [vmem:[%s835 + $0x14] sm:$0xf]
        %v3886 = vld [vmem:[%s835 + $0x18] sm:$0xf]
        %v3887 = vld [vmem:[%s835 + $0x1c] sm:$0xf]
        %v3888 = vld [vmem:[%s835 + $0x20] sm:$0xf]
        %v3889 = vld [vmem:[%s835 + $0x24] sm:$0xf]
        %v3890 = vld [vmem:[%s835 + $0x28] sm:$0xf]
        %v3891 = vld [vmem:[%s835 + $0x2c] sm:$0xf]
        %v3892 = vld [vmem:[%s835 + $0x30] sm:$0xf]
        %v3893 = vld [vmem:[%s835 + $0x34] sm:$0xf]
        %v3894 = vld [vmem:[%s835 + $0x38] sm:$0xf]
        %v3895 = vld [vmem:[%s835 + $0x3c] sm:$0xf]
        %v3896 = vld [vmem:[%s835 + $0x40] sm:$0xf]
        %v3897 = vld [vmem:[%s835 + $0x44] sm:$0xf]
        %v3898 = vld [vmem:[%s835 + $0x48] sm:$0xf]
        %v3899 = vld [vmem:[%s835 + $0x4c] sm:$0xf]
        %v3900 = vld [vmem:[%s835 + $0x50] sm:$0xf]
        %v3901 = vld [vmem:[%s835 + $0x54] sm:$0xf]
        %v3902 = vld [vmem:[%s835 + $0x58] sm:$0xf]
        %v3903 = vld [vmem:[%s835 + $0x5c] sm:$0xf]
        %v3904 = vld [vmem:[%s835 + $0x60] sm:$0xf]
        %v3905 = vld [vmem:[%s835 + $0x64] sm:$0xf]
        %v3906 = vld [vmem:[%s835 + $0x68] sm:$0xf]
        %v3907 = vld [vmem:[%s835 + $0x6c] sm:$0xf]
        %v3908 = vld [vmem:[%s835 + $0x70] sm:$0xf]
        %v3909 = vld [vmem:[%s835 + $0x74] sm:$0xf]
        %v3910 = vld [vmem:[%s835 + $0x78] sm:$0xf]
        %v3911 = vld [vmem:[%s835 + $0x7c] sm:$0xf]
        %v3912 = vld [vmem:[%s835 + $0x80] sm:$0xf]
        %v3913 = vld [vmem:[%s835 + $0x84] sm:$0xf]
        %v3914 = vld [vmem:[%s835 + $0x88] sm:$0xf]
        %v3915 = vld [vmem:[%s835 + $0x8c] sm:$0xf]
        %v3916 = vld [vmem:[%s835 + $0x90] sm:$0xf]
        %v3917 = vld [vmem:[%s835 + $0x94] sm:$0xf]
        %v3918 = vld [vmem:[%s835 + $0x98] sm:$0xf]
        %v3919 = vld [vmem:[%s835 + $0x9c] sm:$0xf]
        %v3920 = vld [vmem:[%s835 + $0xa0] sm:$0xf]
        %v3921 = vld [vmem:[%s835 + $0xa4] sm:$0xf]
        %v3922 = vld [vmem:[%s835 + $0xa8] sm:$0xf]
        %v3923 = vld [vmem:[%s835 + $0xac] sm:$0xf]
        %v3924 = vld [vmem:[%s835 + $0xb0] sm:$0xf]
        %v3925 = vld [vmem:[%s835 + $0xb4] sm:$0xf]
        %v3926 = vld [vmem:[%s835 + $0xb8] sm:$0xf]
        %v3927 = vld [vmem:[%s835 + $0xbc] sm:$0xf]
        %v3928 = vld [vmem:[%s835 + $0xc0] sm:$0xf]
        %v3929 = vld [vmem:[%s835 + $0xc4] sm:$0xf]
        %v3930 = vld [vmem:[%s835 + $0xc8] sm:$0xf]
        %v3931 = vld [vmem:[%s835 + $0xcc] sm:$0xf]
        %v3932 = vld [vmem:[%s835 + $0xd0] sm:$0xf]
        %v3933 = vld [vmem:[%s835 + $0xd4] sm:$0xf]
        %v3934 = vld [vmem:[%s835 + $0xd8] sm:$0xf]
        %v3935 = vld [vmem:[%s835 + $0xdc] sm:$0xf]
        %v3936 = vld [vmem:[%s835 + $0xe0] sm:$0xf]
        %v3937 = vld [vmem:[%s835 + $0xe4] sm:$0xf]
        %v3938 = vld [vmem:[%s835 + $0xe8] sm:$0xf]
        %v3939 = vld [vmem:[%s835 + $0xec] sm:$0xf]
        %v3940 = vld [vmem:[%s835 + $0xf0] sm:$0xf]
        %v3941 = vld [vmem:[%s835 + $0xf4] sm:$0xf]
        %v3942 = vld [vmem:[%s835 + $0xf8] sm:$0xf]
        %v3943 = vld [vmem:[%s835 + $0xfc] sm:$0xf]
        %v4008 = vunpack.c.l.b16 %v3880
        %v4009 = vunpack.c.l.b16 %v3881
        %v4010 = vunpack.c.l.b16 %v3882
        %v4011 = vunpack.c.l.b16 %v3883
        %v4012 = vunpack.c.l.b16 %v3884
        %v4013 = vunpack.c.l.b16 %v3885
        %v4014 = vunpack.c.l.b16 %v3886
        %v4015 = vunpack.c.l.b16 %v3887
        %v4016 = vunpack.c.l.b16 %v3888
        %v4017 = vunpack.c.l.b16 %v3889
        %v4018 = vunpack.c.l.b16 %v3890
        %v4019 = vunpack.c.l.b16 %v3891
        %v4020 = vunpack.c.l.b16 %v3892
        %v4021 = vunpack.c.l.b16 %v3893
        %v4022 = vunpack.c.l.b16 %v3894
        %v4023 = vunpack.c.l.b16 %v3895
        %v4024 = vunpack.c.l.b16 %v3896
        %v4025 = vunpack.c.l.b16 %v3897
        %v4026 = vunpack.c.l.b16 %v3898
        %v4027 = vunpack.c.l.b16 %v3899
        %v4028 = vunpack.c.l.b16 %v3900
        %v4029 = vunpack.c.l.b16 %v3901
        %v4030 = vunpack.c.l.b16 %v3902
        %v4031 = vunpack.c.l.b16 %v3903
        %v4032 = vunpack.c.l.b16 %v3904
        %v4033 = vunpack.c.l.b16 %v3905
        %v4034 = vunpack.c.l.b16 %v3906
        %v4035 = vunpack.c.l.b16 %v3907
        %v4036 = vunpack.c.l.b16 %v3908
        %v4037 = vunpack.c.l.b16 %v3909
        %v4038 = vunpack.c.l.b16 %v3910
        %v4039 = vunpack.c.l.b16 %v3911
        %v4040 = vunpack.c.l.b16 %v3912
        %v4041 = vunpack.c.l.b16 %v3913
        %v4042 = vunpack.c.l.b16 %v3914
        %v4043 = vunpack.c.l.b16 %v3915
        %v4044 = vunpack.c.l.b16 %v3916
        %v4045 = vunpack.c.l.b16 %v3917
        %v4046 = vunpack.c.l.b16 %v3918
        %v4047 = vunpack.c.l.b16 %v3919
        %v4048 = vunpack.c.l.b16 %v3920
        %v4049 = vunpack.c.l.b16 %v3921
        %v4050 = vunpack.c.l.b16 %v3922
        %v4051 = vunpack.c.l.b16 %v3923
        %v4052 = vunpack.c.l.b16 %v3924
        %v4053 = vunpack.c.l.b16 %v3925
        %v4054 = vunpack.c.l.b16 %v3926
        %v4055 = vunpack.c.l.b16 %v3927
        %v4056 = vunpack.c.l.b16 %v3928
        %v4057 = vunpack.c.l.b16 %v3929
        %v4058 = vunpack.c.l.b16 %v3930
        %v4059 = vunpack.c.l.b16 %v3931
        %v4060 = vunpack.c.l.b16 %v3932
        %v4061 = vunpack.c.l.b16 %v3933
        %v4062 = vunpack.c.l.b16 %v3934
        %v4063 = vunpack.c.l.b16 %v3935
        %v4064 = vunpack.c.l.b16 %v3936
        %v4065 = vunpack.c.l.b16 %v3937
        %v4066 = vunpack.c.l.b16 %v3938
        %v4067 = vunpack.c.l.b16 %v3939
        %v4068 = vunpack.c.l.b16 %v3940
        %v4069 = vunpack.c.l.b16 %v3941
        %v4070 = vunpack.c.l.b16 %v3942
        %v4071 = vunpack.c.l.b16 %v3943
        %v4072 = vpack.c.b16 %v4009, %v4008
        %v4073 = vpack.c.b16 %v4011, %v4010
        %v4074 = vpack.c.b16 %v4013, %v4012
        %v4075 = vpack.c.b16 %v4015, %v4014
        %v4076 = vpack.c.b16 %v4017, %v4016
        %v4077 = vpack.c.b16 %v4019, %v4018
        %v4078 = vpack.c.b16 %v4021, %v4020
        %v4079 = vpack.c.b16 %v4023, %v4022
        %v4080 = vpack.c.b16 %v4025, %v4024
        %v4081 = vpack.c.b16 %v4027, %v4026
        %v4082 = vpack.c.b16 %v4029, %v4028
        %v4083 = vpack.c.b16 %v4031, %v4030
        %v4084 = vpack.c.b16 %v4033, %v4032
        %v4085 = vpack.c.b16 %v4035, %v4034
        %v4086 = vpack.c.b16 %v4037, %v4036
        %v4087 = vpack.c.b16 %v4039, %v4038
        %v4088 = vpack.c.b16 %v4041, %v4040
        %v4089 = vpack.c.b16 %v4043, %v4042
        %v4090 = vpack.c.b16 %v4045, %v4044
        %v4091 = vpack.c.b16 %v4047, %v4046
        %v4092 = vpack.c.b16 %v4049, %v4048
        %v4093 = vpack.c.b16 %v4051, %v4050
        %v4094 = vpack.c.b16 %v4053, %v4052
        %v4095 = vpack.c.b16 %v4055, %v4054
        %v4096 = vpack.c.b16 %v4057, %v4056
        %v4097 = vpack.c.b16 %v4059, %v4058
        %v4098 = vpack.c.b16 %v4061, %v4060
        %v4099 = vpack.c.b16 %v4063, %v4062
        %v4100 = vpack.c.b16 %v4065, %v4064
        %v4101 = vpack.c.b16 %v4067, %v4066
        %v4102 = vpack.c.b16 %v4069, %v4068
        %v4103 = vpack.c.b16 %v4071, %v4070
        %4136 = vmatpush.bf16.msra.mxu0 %v4079
        %4137 = vmatpush.bf16.msra.mxu0 %v4078
        %4138 = vmatpush.bf16.msra.mxu0 %v4077
        %4139 = vmatpush.bf16.msra.mxu0 %v4076
        %4140 = vmatpush.bf16.msra.mxu0 %v4075
        %4141 = vmatpush.bf16.msra.mxu0 %v4074
        %4142 = vmatpush.bf16.msra.mxu0 %v4073
        %4143 = vmatpush.bf16.msra.mxu0 %v4072
        %4144 = vmatmul.bf16.gmra.mxu0 %v3876
        %v4145 = vpop.f32.mrf.mxu0
        %v4146 = vadd.f32 0.0, %v4145
        %v4147 = vpop.f32.mrf.mxu0
        %4148 = vdwg.mxu0
        %4149 = vmatpush.bf16.msra.mxu0 %v4087
        %4150 = vmatpush.bf16.msra.mxu0 %v4086
        %4151 = vmatpush.bf16.msra.mxu0 %v4085
        %4152 = vmatpush.bf16.msra.mxu0 %v4084
        %4153 = vmatpush.bf16.msra.mxu0 %v4083
        %4154 = vmatpush.bf16.msra.mxu0 %v4082
        %4155 = vmatpush.bf16.msra.mxu0 %v4081
        %4156 = vmatpush.bf16.msra.mxu0 %v4080
        %4157 = vmatmul.bf16.gmra.mxu0 %v3877
        %v4158 = vpop.f32.mrf.mxu0
        %v4159 = vadd.f32 %v4146, %v4158
        %v4160 = vpop.f32.mrf.mxu0
        %4161 = vdwg.mxu0
        %4162 = vmatpush.bf16.msra.mxu0 %v4095
        %4163 = vmatpush.bf16.msra.mxu0 %v4094
        %4164 = vmatpush.bf16.msra.mxu0 %v4093
        %4165 = vmatpush.bf16.msra.mxu0 %v4092
        %4166 = vmatpush.bf16.msra.mxu0 %v4091
        %4167 = vmatpush.bf16.msra.mxu0 %v4090
        %4168 = vmatpush.bf16.msra.mxu0 %v4089
        %4169 = vmatpush.bf16.msra.mxu0 %v4088
        %4170 = vmatmul.bf16.gmra.mxu0 %v3878
        %v4171 = vpop.f32.mrf.mxu0
        %v4172 = vadd.f32 %v4159, %v4171
        %v4173 = vpop.f32.mrf.mxu0
        %4174 = vdwg.mxu0
        %4175 = vmatpush.bf16.msra.mxu0 %v4103
        %4176 = vmatpush.bf16.msra.mxu0 %v4102
        %4177 = vmatpush.bf16.msra.mxu0 %v4101
        %4178 = vmatpush.bf16.msra.mxu0 %v4100
        %4179 = vmatpush.bf16.msra.mxu0 %v4099
        %4180 = vmatpush.bf16.msra.mxu0 %v4098
        %4181 = vmatpush.bf16.msra.mxu0 %v4097
        %4182 = vmatpush.bf16.msra.mxu0 %v4096
        %4183 = vmatmul.bf16.gmra.mxu0 %v3879
        %v4184 = vpop.f32.mrf.mxu0
        %v4185 = vadd.f32 %v4172, %v4184
        %v4186 = vpop.f32.mrf.mxu0
        %4187 = vdwg.mxu0
        %v4188 = vadd.f32 %v3875, %v4185
        %4189 = vst [vmem:[#allocation4] sm:$0x3] %v4188
        %p4190 = scmp.eq.s32.totalorder %s19, 3
        // Predicated region
        $region76: #{convolution3d_forward.7} parent=66 // pred_check
          %p4191 = pneg %p4190
        $region77: #{convolution3d_forward.7} parent=66 // pred_check_branch
          %4193 = sbr.rel (%p4191) target = $region79
        $region78: #{convolution3d_forward.7} parent=66 // pred_region
          %v4194 = vld [vmem:[#allocation4] sm:$0x3]
          %v4195 = vld [vmem:[%s6] sm:$0x1]
          %v4197 = vperm.slane %v4195, 0
          %v4199 = vadd.f32 %v4194, %v4197
          %4200 = vst [vmem:[#allocation4] sm:$0x3] %v4199
        $region79: #{convolution3d_forward.7} parent=66 // pred_fallthru
          _
        // Predicated region
        $region80: #{convolution3d_forward.7} parent=66 // pred_check
          %p4201 = pneg %p194
        $region81: #{convolution3d_forward.7} parent=66 // pred_check_branch
          %4203 = sbr.rel (%p4201) target = $region83
        $region82: #{convolution3d_forward.7} parent=66 // pred_region
          %4205 = vsyncadd [#allocation5], 0
          %s4207 = sshll.u32 [#allocation4], 4
          %s4208 = int_to_ptr.vmem [resolvable:$true] %s4207
          %s4209 = sshll.u32 %s7, 4
          %s4210 = int_to_ptr.hbm [resolvable:$true] %s4209
          %4212 = dma.vmem_to_hbm [thread:$0]  %s4208, 32, %s4210, [#allocation5]
        $region83: #{convolution3d_forward.7} parent=66 // pred_fallthru
          _
        // Predicated region
        $region84: #{convolution3d_forward.7} parent=66 // pred_check
          %p4213 = pneg %p194
        $region85: #{convolution3d_forward.7} parent=66 // pred_check_branch
          %4215 = sbr.rel (%p4213) target = $region87
        $region86: #{convolution3d_forward.7} parent=66 // pred_region
          %4217 = dma.done [#allocation5], 32
        $region87: #{convolution3d_forward.7} parent=66 // pred_fallthru
          _
      $region67: #{convolution3d_forward.7} parent=5 // pred_fallthru
        _
      %p4218 = scmp.le.s32.totalorder 2, %s14
      // Predicated region
      $region88: #{convolution3d_forward.7} parent=5 // pred_check
        %p4219 = pneg %p4218
      $region89: #{convolution3d_forward.7} parent=5 // pred_check_branch
        %4221 = sbr.rel (%p4219) target = $region91
      $region90: #{convolution3d_forward.7} parent=5 // pred_region
        %s4222 = ssub.s32 %s14, 2
      $region91: #{convolution3d_forward.7} parent=5 // pred_fallthru
        _
    $region6: #{convolution3d_forward.7} parent=1 // loop_footer
      %s18 = sadd.s32 1, %s14
    $region7: #{convolution3d_forward.7} parent=1 // loop_footer_branch
      %13 = sbr.rel target = $region3
    $region8: #{convolution3d_forward.7} parent=1 // loop_exit
      _
    %4223 = vsyncpa [#allocation5], 1
    %s4224 = scalar_lea.sflag [#allocation5], 1
    %4225 = vsyncpa %s4224, 1

</llo_original>
